<compile_context>
chip_gen: v7x
topology: tpu7x:2x2x1
jax: 0.10.0
libtpu: 0.0.40
codegen_flags: <defaults>
</compile_context>

<pallas_src>
import functools

import jax
import jax.numpy as jnp
from jax import lax
from jax.experimental import pallas as pl
from jax.experimental.pallas import tpu as pltpu

EPS = 1e-5          # PyTorch InstanceNorm2d default eps
NEG_SLOPE = 0.2     # LeakyReLU negative slope


# ---------------------------------------------------------------------------
# Pallas kernels
# ---------------------------------------------------------------------------
def _matmul_in_lrelu_kernel(x_ref, w_ref, o_ref, *, groups):
    """Fused matmul + InstanceNorm (no affine) + LeakyReLU(0.2).

    x_ref : (1, R, K)      R = spatial positions of one batch element
    w_ref : (K, G*C)       fused weight, G = kernel-position groups
    o_ref : (1, R, G*C)    lane-dense output block

    InstanceNorm statistics are taken over all R rows and all G groups per
    output channel c (exactly PyTorch InstanceNorm2d over the full output).
    """
    x = x_ref[0]                                                     # (R, K)
    y = jnp.dot(x, w_ref[...], preferred_element_type=jnp.float32)   # (R, G*C)

    rows = y.shape[0]
    gc = y.shape[1]
    c = gc // groups
    cnt = jnp.float32(groups * rows)

    # One-pass statistics: column sums / sums-of-squares, then fold groups.
    cs = jnp.sum(y, axis=0, keepdims=True)                           # (1, G*C)
    css = jnp.sum(y * y, axis=0, keepdims=True)                      # (1, G*C)
    if groups == 1:
        s, ss = cs, css
    else:
        s, ss = cs[:, 0:c], css[:, 0:c]
        for g in range(1, groups):
            s = s + cs[:, g * c:(g + 1) * c]
            ss = ss + css[:, g * c:(g + 1) * c]

    mean = s / cnt                                                   # (1, C)
    var = ss / cnt - mean * mean                                     # biased (PyTorch)
    scale = lax.rsqrt(var + EPS)                                     # (1, C)
    shift = -mean * scale
    if groups > 1:
        scale = jnp.concatenate([scale] * groups, axis=1)            # (1, G*C)
        shift = jnp.concatenate([shift] * groups, axis=1)

    yn = y * scale + shift                                           # fused scale/shift
    o_ref[0] = jnp.where(yn >= 0.0, yn, NEG_SLOPE * yn)


def _matmul_bias_kernel(x_ref, w_ref, b_ref, o_ref):
    """Plain matmul + bias (the final 1x1 convolution)."""
    o_ref[0] = (jnp.dot(x_ref[0], w_ref[...], preferred_element_type=jnp.float32)
                + b_ref[...])


# ---------------------------------------------------------------------------
# pallas_call wrappers
# ---------------------------------------------------------------------------
def _fused_matmul_in_lrelu(x, w, *, groups):
    """x: (N, R, K) f32, w: (K, G*C) f32 -> (N, R, G*C) f32."""
    n, r, k = x.shape
    gc = w.shape[1]
    kernel = functools.partial(_matmul_in_lrelu_kernel, groups=groups)
    cost = pl.CostEstimate(
        flops=2 * n * r * k * gc + 8 * n * r * gc,
        transcendentals=n * gc,
        bytes_accessed=4 * (n * r * k + k * gc + n * r * gc),
    )
    return pl.pallas_call(
        kernel,
        out_shape=jax.ShapeDtypeStruct((n, r, gc), jnp.float32),
        grid_spec=pltpu.PrefetchScalarGridSpec(
            num_scalar_prefetch=0,
            grid=(n,),
            in_specs=[
                pl.BlockSpec((1, r, k), lambda i: (i, 0, 0)),
                pl.BlockSpec((k, gc), lambda i: (0, 0)),
            ],
            out_specs=pl.BlockSpec((1, r, gc), lambda i: (i, 0, 0)),
        ),
        compiler_params=pltpu.CompilerParams(dimension_semantics=("parallel",)),
        cost_estimate=cost,
    )(x, w)


def _matmul_bias(x, w, b):
    """x: (N, R, K), w: (K, C), b: (1, C) -> (N, R, C)."""
    n, r, k = x.shape
    c = w.shape[1]
    cost = pl.CostEstimate(
        flops=2 * n * r * k * c,
        transcendentals=0,
        bytes_accessed=4 * (n * r * k + k * c + c + n * r * c),
    )
    return pl.pallas_call(
        _matmul_bias_kernel,
        out_shape=jax.ShapeDtypeStruct((n, r, c), jnp.float32),
        grid_spec=pltpu.PrefetchScalarGridSpec(
            num_scalar_prefetch=0,
            grid=(n,),
            in_specs=[
                pl.BlockSpec((1, r, k), lambda i: (i, 0, 0)),
                pl.BlockSpec((k, c), lambda i: (0, 0)),
                pl.BlockSpec((1, c), lambda i: (0, 0)),
            ],
            out_specs=pl.BlockSpec((1, r, c), lambda i: (i, 0, 0)),
        ),
        compiler_params=pltpu.CompilerParams(dimension_semantics=("parallel",)),
        cost_estimate=cost,
    )(x, w, b)


# ---------------------------------------------------------------------------
# U-Net building blocks (NHWC, PyTorch weight layouts)
# ---------------------------------------------------------------------------
def conv3x3_in_lrelu(x, w_torch):
    """Conv2d(k=3, p=1, no bias) -> InstanceNorm2d -> LeakyReLU(0.2).
    x: (N, H, W, Cin); w_torch: (Cout, Cin, 3, 3) -> (N, H, W, Cout)."""
    n, h, w, cin = x.shape
    cout = w_torch.shape[0]
    xp = jnp.pad(x, ((0, 0), (1, 1), (1, 1), (0, 0)))
    taps = [xp[:, dh:dh + h, dw:dw + w, :] for dh in range(3) for dw in range(3)]
    patches = jnp.concatenate(taps, axis=-1).reshape(n, h * w, 9 * cin)
    # wf[(dh*3+dw)*Cin + ci, co] = w_torch[co, ci, dh, dw]
    wf = jnp.transpose(w_torch, (2, 3, 1, 0)).reshape(9 * cin, cout)
    y = _fused_matmul_in_lrelu(patches, wf, groups=1)
    return y.reshape(n, h, w, cout)


def conv_block(x, w1, w2):
    """ConvBlock: two (conv3x3 -> InstanceNorm -> LeakyReLU -> Dropout) layers."""
    # TODO(synk): train-mode Dropout2d (drop_prob > 0) is not implemented; with
    # drop_prob=0.0 / eval mode it is the identity, matching the reference.
    return conv3x3_in_lrelu(conv3x3_in_lrelu(x, w1), w2)


def transpose_conv_block(x, w_torch):
    """ConvTranspose2d(k=2, s=2, no bias) -> InstanceNorm2d -> LeakyReLU(0.2).
    x: (N, H, W, Cin); w_torch: (Cin, Cout, 2, 2) -> (N, 2H, 2W, Cout).
    Stride == kernel == 2 means no overlap: one fused (HW,Cin)x(Cin,4*Cout)
    matmul with the 4 kernel positions packed along the lane axis."""
    n, h, w, cin = x.shape
    cout = w_torch.shape[1]
    xk = x.reshape(n, h * w, cin)
    # wf[ci, (dh*2+dw)*Cout + co] = w_torch[ci, co, dh, dw]
    wf = jnp.transpose(w_torch, (0, 2, 3, 1)).reshape(cin, 4 * cout)
    y = _fused_matmul_in_lrelu(xk, wf, groups=4)          # (N, HW, 4*Cout)
    y = y.reshape(n, h, w, 2, 2, cout)                    # (n, h, w, dh, dw, c)
    y = jnp.transpose(y, (0, 1, 3, 2, 4, 5))              # (n, h, dh, w, dw, c)
    return y.reshape(n, 2 * h, 2 * w, cout)


def conv1x1_bias(x, w_torch, b):
    """Final Conv2d(k=1, bias=True). x: (N,H,W,Cin); w: (Cout,Cin,1,1)."""
    n, h, w, cin = x.shape
    cout = w_torch.shape[0]
    xk = x.reshape(n, h * w, cin)
    wf = jnp.transpose(w_torch.reshape(cout, cin), (1, 0))
    y = _matmul_bias(xk, wf, b.reshape(1, cout))
    return y.reshape(n, h, w, cout)


def avg_pool2(x):
    """F.avg_pool2d(k=2, s=2) in NHWC (XLA glue)."""
    n, h, w, c = x.shape
    return x.reshape(n, h // 2, 2, w // 2, 2, c).mean(axis=(2, 4))


# ---------------------------------------------------------------------------
# Full U-Net forward (Pallas path)
# ---------------------------------------------------------------------------
def unet_forward(params, image_nchw):
    """image: (N, in_chans, H, W) -> (N, out_chans, H, W)."""
    out = jnp.transpose(image_nchw, (0, 2, 3, 1))          # NHWC inside
    stack = []
    for (w1, w2) in params["down"]:
        out = conv_block(out, w1, w2)
        stack.append(out)
        out = avg_pool2(out)
    out = conv_block(out, *params["bottleneck"])
    for wt, (w1, w2) in zip(params["up_t"], params["up_conv"]):
        skip = stack.pop()
        out = transpose_conv_block(out, wt)
        pad_h = skip.shape[1] - out.shape[1]
        pad_w = skip.shape[2] - out.shape[2]
        if pad_h or pad_w:                                 # mirrors F.pad(..., 'reflect')
            out = jnp.pad(out, ((0, 0), (0, pad_h), (0, pad_w), (0, 0)), mode="reflect")
        out = jnp.concatenate([out, skip], axis=-1)
        out = conv_block(out, w1, w2)
    out = conv1x1_bias(out, params["final_w"], params["final_b"])
    return jnp.transpose(out, (0, 3, 1, 2))                # back to NCHW


# ---------------------------------------------------------------------------
# Parameter construction (PyTorch weight layouts)
# ---------------------------------------------------------------------------
def init_unet_params(key, in_chans, out_chans, chans, num_pool_layers):
    keys = iter(jax.random.split(key, 64))

    def conv_w(cout, cin, k):
        return jax.random.normal(next(keys), (cout, cin, k, k), jnp.float32) * (
            (cin * k * k) ** -0.5)

    def tconv_w(cin, cout):
        return jax.random.normal(next(keys), (cin, cout, 2, 2), jnp.float32) * (
            (cin * 4) ** -0.5)

    def conv_block_w(cin, cout):
        return (conv_w(cout, cin, 3), conv_w(cout, cout, 3))

    down = [conv_block_w(in_chans, chans)]
    ch = chans
    for _ in range(num_pool_layers - 1):
        down.append(conv_block_w(ch, ch * 2))
        ch *= 2
    bottleneck = conv_block_w(ch, ch * 2)
    up_t, up_c = [], []
    for _ in range(num_pool_layers - 1):
        up_t.append(tconv_w(ch * 2, ch))
        up_c.append(conv_block_w(ch * 2, ch))
        ch //= 2
    up_t.append(tconv_w(ch * 2, ch))
    up_c.append(conv_block_w(ch * 2, ch))
    final_w = conv_w(out_chans, ch, 1)
    final_b = 0.1 * jax.random.normal(next(keys), (out_chans,), jnp.float32)
    return dict(down=down, bottleneck=bottleneck, up_t=up_t, up_conv=up_c,
                final_w=final_w, final_b=final_b)


# ---------------------------------------------------------------------------
# Pure-JAX (non-Pallas) reference of the PyTorch forward pass
# ---------------------------------------------------------------------------
def _ref_in_lrelu(y):
    mean = jnp.mean(y, axis=(2, 3), keepdims=True)
    var = jnp.var(y, axis=(2, 3), keepdims=True)
    yn = (y - mean) * lax.rsqrt(var + EPS)
    return jnp.where(yn >= 0.0, yn, NEG_SLOPE * yn)


def _ref_conv3x3(x, w):
    return lax.conv_general_dilated(x, w, window_strides=(1, 1),
                                    padding=((1, 1), (1, 1)),
                                    dimension_numbers=("NCHW", "OIHW", "NCHW"))


def _ref_tconv(x, w):
    n, _, h, wd = x.shape
    cout = w.shape[1]
    # out[n, co, 2h+dh, 2w+dw] = sum_ci x[n, ci, h, w] * W[ci, co, dh, dw]
    y = jnp.einsum("nihw,iodu->nohdwu", x, w)              # (N, Cout, H, dh, W, dw)
    return y.reshape(n, cout, 2 * h, 2 * wd)


def _ref_avgpool(x):
    n, c, h, w = x.shape
    return x.reshape(n, c, h // 2, 2, w // 2, 2).mean(axis=(3, 5))


def unet_reference(params, image):
    def block(x, w1, w2):
        return _ref_in_lrelu(_ref_conv3x3(_ref_in_lrelu(_ref_conv3x3(x, w1)), w2))

    stack = []
    out = image
    for (w1, w2) in params["down"]:
        out = block(out, w1, w2)
        stack.append(out)
        out = _ref_avgpool(out)
    out = block(out, *params["bottleneck"])
    for wt, (w1, w2) in zip(params["up_t"], params["up_conv"]):
        skip = stack.pop()
        out = _ref_in_lrelu(_ref_tconv(out, wt))
        pad_h = skip.shape[2] - out.shape[2]
        pad_w = skip.shape[3] - out.shape[3]
        if pad_h or pad_w:
            out = jnp.pad(out, ((0, 0), (0, 0), (0, pad_h), (0, pad_w)), mode="reflect")
        out = jnp.concatenate([out, skip], axis=1)
        out = block(out, w1, w2)
    cout, cin = params["final_w"].shape[:2]
    y = jnp.einsum("nchw,oc->nohw", out, params["final_w"].reshape(cout, cin))
    return y + params["final_b"].reshape(1, cout, 1, 1)


# ---------------------------------------------------------------------------
if __name__ == "__main__":
    key = jax.random.PRNGKey(0)
    k_param, k_x = jax.random.split(key)

    N, IN_CHANS, OUT_CHANS, H, W = 2, 4, 4, 16, 16
    CHANS, NUM_POOL_LAYERS = 8, 3

    params = init_unet_params(k_param, IN_CHANS, OUT_CHANS, CHANS, NUM_POOL_LAYERS)
    x = jax.random.normal(k_x, (N, IN_CHANS, H, W), dtype=jnp.float32)

    out = jax.jit(unet_forward)(params, x)
    out = jax.block_until_ready(out)

    ref = jax.jit(unet_reference)(params, x)
    ref = jax.block_until_ready(ref)

    assert out.shape == (N, OUT_CHANS, H, W), out.shape
    max_err = float(jnp.max(jnp.abs(out - ref)))
    assert jnp.allclose(out, ref, atol=1e-3, rtol=1e-3), (
        f"mismatch vs reference (max abs err {max_err:.3e})")

    print("KERNEL_OK")
</pallas_src>

<mosaic_0001>
module attributes {stable_mosaic.version = 11 : i64} {
  func.func @_matmul_in_lrelu_kernel(%arg0: i32, %arg1: memref<1x256x36xf32, #tpu.memory_space<vmem>>, %arg2: memref<36x8xf32, #tpu.memory_space<vmem>>, %arg3: memref<1x256x8xf32, #tpu.memory_space<vmem>>) attributes {dimension_semantics = [#tpu.dimension_semantics<parallel>], iteration_bounds = array<i64: 2>, scalar_prefetch = 0 : i64, scratch_operands = 0 : i64, tpu.core_type = #tpu.core_type<tc>, window_params = [{transform_indices = @transform_0, window_bounds = array<i64: 1, 256, 36>}, {pipeline_mode = #tpu.pipeline_mode<synchronous>, transform_indices = @transform_1, window_bounds = array<i64: 36, 8>}, {transform_indices = @transform_2, window_bounds = array<i64: 1, 256, 8>}]} {
    %c0 = arith.constant 0 : index
    %c0_0 = arith.constant 0 : index
    %c0_1 = arith.constant 0 : index
    %0 = vector.load %arg1[%c0, %c0_0, %c0_1] : memref<1x256x36xf32, #tpu.memory_space<vmem>>, vector<1x256x36xf32>
    %1 = vector.shape_cast %0 : vector<1x256x36xf32> to vector<256x36xf32>
    %c0_2 = arith.constant 0 : index
    %c0_3 = arith.constant 0 : index
    %2 = vector.load %arg2[%c0_2, %c0_3] : memref<36x8xf32, #tpu.memory_space<vmem>>, vector<36x8xf32>
    %cst = arith.constant dense<0.000000e+00> : vector<256x8xf32>
    %3 = tpu.matmul %1, %2, %cst {dimension_numbers = #tpu.dot_dimension_numbers<[1], [0], [0], [1], [0, 0, 1, 1], [], []>} : vector<256x36xf32>, vector<36x8xf32>, vector<256x8xf32> -> vector<256x8xf32>
    %cst_4 = arith.constant dense<0.000000e+00> : vector<8xf32>
    %4 = vector.multi_reduction <add>, %3, %cst_4 [0] : vector<256x8xf32> to vector<8xf32>
    %5 = vector.shape_cast %4 : vector<8xf32> to vector<1x8xf32>
    %6 = arith.mulf %3, %3 : vector<256x8xf32>
    %cst_5 = arith.constant dense<0.000000e+00> : vector<8xf32>
    %7 = vector.multi_reduction <add>, %6, %cst_5 [0] : vector<256x8xf32> to vector<8xf32>
    %8 = vector.shape_cast %7 : vector<8xf32> to vector<1x8xf32>
    %cst_6 = arith.constant 2.560000e+02 : f32
    %9 = vector.broadcast %cst_6 : f32 to vector<1x8xf32>
    %10 = arith.divf %5, %9 : vector<1x8xf32>
    %cst_7 = arith.constant 2.560000e+02 : f32
    %11 = vector.broadcast %cst_7 : f32 to vector<1x8xf32>
    %12 = arith.divf %8, %11 : vector<1x8xf32>
    %13 = arith.mulf %10, %10 : vector<1x8xf32>
    %14 = arith.subf %12, %13 : vector<1x8xf32>
    %cst_8 = arith.constant 9.99999974E-6 : f32
    %15 = vector.broadcast %cst_8 : f32 to vector<1x8xf32>
    %16 = arith.addf %14, %15 : vector<1x8xf32>
    %17 = math.rsqrt %16 : vector<1x8xf32>
    %cst_9 = arith.constant 0.000000e+00 : f32
    %18 = vector.broadcast %cst_9 : f32 to vector<1x8xf32>
    %19 = arith.subf %18, %10 : vector<1x8xf32>
    %20 = arith.mulf %19, %17 : vector<1x8xf32>
    %21 = vector.broadcast %17 : vector<1x8xf32> to vector<256x8xf32>
    %22 = arith.mulf %3, %21 : vector<256x8xf32>
    %23 = vector.broadcast %20 : vector<1x8xf32> to vector<256x8xf32>
    %24 = arith.addf %22, %23 : vector<256x8xf32>
    %cst_10 = arith.constant 0.000000e+00 : f32
    %25 = vector.broadcast %cst_10 : f32 to vector<256x8xf32>
    %26 = arith.cmpf oge, %24, %25 : vector<256x8xf32>
    %cst_11 = arith.constant 2.000000e-01 : f32
    %27 = vector.broadcast %cst_11 : f32 to vector<256x8xf32>
    %28 = arith.mulf %27, %24 : vector<256x8xf32>
    %29 = arith.select %26, %24, %28 : vector<256x8xi1>, vector<256x8xf32>
    %c0_12 = arith.constant 0 : index
    %c0_13 = arith.constant 0 : index
    %c0_14 = arith.constant 0 : index
    %30 = vector.load %arg3[%c0_12, %c0_13, %c0_14] : memref<1x256x8xf32, #tpu.memory_space<vmem>>, vector<1x256x8xf32>
    %31 = vector.shape_cast %30 : vector<1x256x8xf32> to vector<256x8xf32>
    %32 = vector.shape_cast %29 : vector<256x8xf32> to vector<1x256x8xf32>
    tpu.vector_store %arg3[%c0_12, %c0_13, %c0_14], %32 {strides = array<i32>} : memref<1x256x8xf32, #tpu.memory_space<vmem>>, vector<1x256x8xf32>,
    return
  }
  func.func @transform_0(%arg0: i32) -> (i32, i32, i32) {
    %c0_i32 = arith.constant 0 : i32
    %c0_i32_0 = arith.constant 0 : i32
    %c0_i32_1 = arith.constant 0 : i32
    return %arg0, %c0_i32, %c0_i32_0 : i32, i32, i32
  }
  func.func @transform_1(%arg0: i32) -> (i32, i32) {
    %c0_i32 = arith.constant 0 : i32
    %c0_i32_0 = arith.constant 0 : i32
    %c0_i32_1 = arith.constant 0 : i32
    return %c0_i32, %c0_i32_0 : i32, i32
  }
  func.func @transform_2(%arg0: i32) -> (i32, i32, i32) {
    %c0_i32 = arith.constant 0 : i32
    %c0_i32_0 = arith.constant 0 : i32
    %c0_i32_1 = arith.constant 0 : i32
    return %arg0, %c0_i32, %c0_i32_0 : i32, i32, i32
  }
}

module attributes {stable_mosaic.version = 11 : i64} {
  func.func @_matmul_in_lrelu_kernel(%arg0: i32, %arg1: memref<1x256x72xf32, #tpu.memory_space<vmem>>, %arg2: memref<72x8xf32, #tpu.memory_space<vmem>>, %arg3: memref<1x256x8xf32, #tpu.memory_space<vmem>>) attributes {dimension_semantics = [#tpu.dimension_semantics<parallel>], iteration_bounds = array<i64: 2>, scalar_prefetch = 0 : i64, scratch_operands = 0 : i64, tpu.core_type = #tpu.core_type<tc>, window_params = [{transform_indices = @transform_0, window_bounds = array<i64: 1, 256, 72>}, {pipeline_mode = #tpu.pipeline_mode<synchronous>, transform_indices = @transform_1, window_bounds = array<i64: 72, 8>}, {transform_indices = @transform_2, window_bounds = array<i64: 1, 256, 8>}]} {
    %c0 = arith.constant 0 : index
    %c0_0 = arith.constant 0 : index
    %c0_1 = arith.constant 0 : index
    %0 = vector.load %arg1[%c0, %c0_0, %c0_1] : memref<1x256x72xf32, #tpu.memory_space<vmem>>, vector<1x256x72xf32>
    %1 = vector.shape_cast %0 : vector<1x256x72xf32> to vector<256x72xf32>
    %c0_2 = arith.constant 0 : index
    %c0_3 = arith.constant 0 : index
    %2 = vector.load %arg2[%c0_2, %c0_3] : memref<72x8xf32, #tpu.memory_space<vmem>>, vector<72x8xf32>
    %cst = arith.constant dense<0.000000e+00> : vector<256x8xf32>
    %3 = tpu.matmul %1, %2, %cst {dimension_numbers = #tpu.dot_dimension_numbers<[1], [0], [0], [1], [0, 0, 1, 1], [], []>} : vector<256x72xf32>, vector<72x8xf32>, vector<256x8xf32> -> vector<256x8xf32>
    %cst_4 = arith.constant dense<0.000000e+00> : vector<8xf32>
    %4 = vector.multi_reduction <add>, %3, %cst_4 [0] : vector<256x8xf32> to vector<8xf32>
    %5 = vector.shape_cast %4 : vector<8xf32> to vector<1x8xf32>
    %6 = arith.mulf %3, %3 : vector<256x8xf32>
    %cst_5 = arith.constant dense<0.000000e+00> : vector<8xf32>
    %7 = vector.multi_reduction <add>, %6, %cst_5 [0] : vector<256x8xf32> to vector<8xf32>
    %8 = vector.shape_cast %7 : vector<8xf32> to vector<1x8xf32>
    %cst_6 = arith.constant 2.560000e+02 : f32
    %9 = vector.broadcast %cst_6 : f32 to vector<1x8xf32>
    %10 = arith.divf %5, %9 : vector<1x8xf32>
    %cst_7 = arith.constant 2.560000e+02 : f32
    %11 = vector.broadcast %cst_7 : f32 to vector<1x8xf32>
    %12 = arith.divf %8, %11 : vector<1x8xf32>
    %13 = arith.mulf %10, %10 : vector<1x8xf32>
    %14 = arith.subf %12, %13 : vector<1x8xf32>
    %cst_8 = arith.constant 9.99999974E-6 : f32
    %15 = vector.broadcast %cst_8 : f32 to vector<1x8xf32>
    %16 = arith.addf %14, %15 : vector<1x8xf32>
    %17 = math.rsqrt %16 : vector<1x8xf32>
    %cst_9 = arith.constant 0.000000e+00 : f32
    %18 = vector.broadcast %cst_9 : f32 to vector<1x8xf32>
    %19 = arith.subf %18, %10 : vector<1x8xf32>
    %20 = arith.mulf %19, %17 : vector<1x8xf32>
    %21 = vector.broadcast %17 : vector<1x8xf32> to vector<256x8xf32>
    %22 = arith.mulf %3, %21 : vector<256x8xf32>
    %23 = vector.broadcast %20 : vector<1x8xf32> to vector<256x8xf32>
    %24 = arith.addf %22, %23 : vector<256x8xf32>
    %cst_10 = arith.constant 0.000000e+00 : f32
    %25 = vector.broadcast %cst_10 : f32 to vector<256x8xf32>
    %26 = arith.cmpf oge, %24, %25 : vector<256x8xf32>
    %cst_11 = arith.constant 2.000000e-01 : f32
    %27 = vector.broadcast %cst_11 : f32 to vector<256x8xf32>
    %28 = arith.mulf %27, %24 : vector<256x8xf32>
    %29 = arith.select %26, %24, %28 : vector<256x8xi1>, vector<256x8xf32>
    %c0_12 = arith.constant 0 : index
    %c0_13 = arith.constant 0 : index
    %c0_14 = arith.constant 0 : index
    %30 = vector.load %arg3[%c0_12, %c0_13, %c0_14] : memref<1x256x8xf32, #tpu.memory_space<vmem>>, vector<1x256x8xf32>
    %31 = vector.shape_cast %30 : vector<1x256x8xf32> to vector<256x8xf32>
    %32 = vector.shape_cast %29 : vector<256x8xf32> to vector<1x256x8xf32>
    tpu.vector_store %arg3[%c0_12, %c0_13, %c0_14], %32 {strides = array<i32>} : memref<1x256x8xf32, #tpu.memory_space<vmem>>, vector<1x256x8xf32>,
    return
  }
  func.func @transform_0(%arg0: i32) -> (i32, i32, i32) {
    %c0_i32 = arith.constant 0 : i32
    %c0_i32_0 = arith.constant 0 : i32
    %c0_i32_1 = arith.constant 0 : i32
    return %arg0, %c0_i32, %c0_i32_0 : i32, i32, i32
  }
  func.func @transform_1(%arg0: i32) -> (i32, i32) {
    %c0_i32 = arith.constant 0 : i32
    %c0_i32_0 = arith.constant 0 : i32
    %c0_i32_1 = arith.constant 0 : i32
    return %c0_i32, %c0_i32_0 : i32, i32
  }
  func.func @transform_2(%arg0: i32) -> (i32, i32, i32) {
    %c0_i32 = arith.constant 0 : i32
    %c0_i32_0 = arith.constant 0 : i32
    %c0_i32_1 = arith.constant 0 : i32
    return %arg0, %c0_i32, %c0_i32_0 : i32, i32, i32
  }
}

module attributes {stable_mosaic.version = 11 : i64} {
  func.func @_matmul_in_lrelu_kernel(%arg0: i32, %arg1: memref<1x64x72xf32, #tpu.memory_space<vmem>>, %arg2: memref<72x16xf32, #tpu.memory_space<vmem>>, %arg3: memref<1x64x16xf32, #tpu.memory_space<vmem>>) attributes {dimension_semantics = [#tpu.dimension_semantics<parallel>], iteration_bounds = array<i64: 2>, scalar_prefetch = 0 : i64, scratch_operands = 0 : i64, tpu.core_type = #tpu.core_type<tc>, window_params = [{transform_indices = @transform_0, window_bounds = array<i64: 1, 64, 72>}, {pipeline_mode = #tpu.pipeline_mode<synchronous>, transform_indices = @transform_1, window_bounds = array<i64: 72, 16>}, {transform_indices = @transform_2, window_bounds = array<i64: 1, 64, 16>}]} {
    %c0 = arith.constant 0 : index
    %c0_0 = arith.constant 0 : index
    %c0_1 = arith.constant 0 : index
    %0 = vector.load %arg1[%c0, %c0_0, %c0_1] : memref<1x64x72xf32, #tpu.memory_space<vmem>>, vector<1x64x72xf32>
    %1 = vector.shape_cast %0 : vector<1x64x72xf32> to vector<64x72xf32>
    %c0_2 = arith.constant 0 : index
    %c0_3 = arith.constant 0 : index
    %2 = vector.load %arg2[%c0_2, %c0_3] : memref<72x16xf32, #tpu.memory_space<vmem>>, vector<72x16xf32>
    %cst = arith.constant dense<0.000000e+00> : vector<64x16xf32>
    %3 = tpu.matmul %1, %2, %cst {dimension_numbers = #tpu.dot_dimension_numbers<[1], [0], [0], [1], [0, 0, 1, 1], [], []>} : vector<64x72xf32>, vector<72x16xf32>, vector<64x16xf32> -> vector<64x16xf32>
    %cst_4 = arith.constant dense<0.000000e+00> : vector<16xf32>
    %4 = vector.multi_reduction <add>, %3, %cst_4 [0] : vector<64x16xf32> to vector<16xf32>
    %5 = vector.shape_cast %4 : vector<16xf32> to vector<1x16xf32>
    %6 = arith.mulf %3, %3 : vector<64x16xf32>
    %cst_5 = arith.constant dense<0.000000e+00> : vector<16xf32>
    %7 = vector.multi_reduction <add>, %6, %cst_5 [0] : vector<64x16xf32> to vector<16xf32>
    %8 = vector.shape_cast %7 : vector<16xf32> to vector<1x16xf32>
    %cst_6 = arith.constant 6.400000e+01 : f32
    %9 = vector.broadcast %cst_6 : f32 to vector<1x16xf32>
    %10 = arith.divf %5, %9 : vector<1x16xf32>
    %cst_7 = arith.constant 6.400000e+01 : f32
    %11 = vector.broadcast %cst_7 : f32 to vector<1x16xf32>
    %12 = arith.divf %8, %11 : vector<1x16xf32>
    %13 = arith.mulf %10, %10 : vector<1x16xf32>
    %14 = arith.subf %12, %13 : vector<1x16xf32>
    %cst_8 = arith.constant 9.99999974E-6 : f32
    %15 = vector.broadcast %cst_8 : f32 to vector<1x16xf32>
    %16 = arith.addf %14, %15 : vector<1x16xf32>
    %17 = math.rsqrt %16 : vector<1x16xf32>
    %cst_9 = arith.constant 0.000000e+00 : f32
    %18 = vector.broadcast %cst_9 : f32 to vector<1x16xf32>
    %19 = arith.subf %18, %10 : vector<1x16xf32>
    %20 = arith.mulf %19, %17 : vector<1x16xf32>
    %21 = vector.broadcast %17 : vector<1x16xf32> to vector<64x16xf32>
    %22 = arith.mulf %3, %21 : vector<64x16xf32>
    %23 = vector.broadcast %20 : vector<1x16xf32> to vector<64x16xf32>
    %24 = arith.addf %22, %23 : vector<64x16xf32>
    %cst_10 = arith.constant 0.000000e+00 : f32
    %25 = vector.broadcast %cst_10 : f32 to vector<64x16xf32>
    %26 = arith.cmpf oge, %24, %25 : vector<64x16xf32>
    %cst_11 = arith.constant 2.000000e-01 : f32
    %27 = vector.broadcast %cst_11 : f32 to vector<64x16xf32>
    %28 = arith.mulf %27, %24 : vector<64x16xf32>
    %29 = arith.select %26, %24, %28 : vector<64x16xi1>, vector<64x16xf32>
    %c0_12 = arith.constant 0 : index
    %c0_13 = arith.constant 0 : index
    %c0_14 = arith.constant 0 : index
    %30 = vector.load %arg3[%c0_12, %c0_13, %c0_14] : memref<1x64x16xf32, #tpu.memory_space<vmem>>, vector<1x64x16xf32>
    %31 = vector.shape_cast %30 : vector<1x64x16xf32> to vector<64x16xf32>
    %32 = vector.shape_cast %29 : vector<64x16xf32> to vector<1x64x16xf32>
    tpu.vector_store %arg3[%c0_12, %c0_13, %c0_14], %32 {strides = array<i32>} : memref<1x64x16xf32, #tpu.memory_space<vmem>>, vector<1x64x16xf32>,
    return
  }
  func.func @transform_0(%arg0: i32) -> (i32, i32, i32) {
    %c0_i32 = arith.constant 0 : i32
    %c0_i32_0 = arith.constant 0 : i32
    %c0_i32_1 = arith.constant 0 : i32
    return %arg0, %c0_i32, %c0_i32_0 : i32, i32, i32
  }
  func.func @transform_1(%arg0: i32) -> (i32, i32) {
    %c0_i32 = arith.constant 0 : i32
    %c0_i32_0 = arith.constant 0 : i32
    %c0_i32_1 = arith.constant 0 : i32
    return %c0_i32, %c0_i32_0 : i32, i32
  }
  func.func @transform_2(%arg0: i32) -> (i32, i32, i32) {
    %c0_i32 = arith.constant 0 : i32
    %c0_i32_0 = arith.constant 0 : i32
    %c0_i32_1 = arith.constant 0 : i32
    return %arg0, %c0_i32, %c0_i32_0 : i32, i32, i32
  }
}

module attributes {stable_mosaic.version = 11 : i64} {
  func.func @_matmul_in_lrelu_kernel(%arg0: i32, %arg1: memref<1x64x144xf32, #tpu.memory_space<vmem>>, %arg2: memref<144x16xf32, #tpu.memory_space<vmem>>, %arg3: memref<1x64x16xf32, #tpu.memory_space<vmem>>) attributes {dimension_semantics = [#tpu.dimension_semantics<parallel>], iteration_bounds = array<i64: 2>, scalar_prefetch = 0 : i64, scratch_operands = 0 : i64, tpu.core_type = #tpu.core_type<tc>, window_params = [{transform_indices = @transform_0, window_bounds = array<i64: 1, 64, 144>}, {pipeline_mode = #tpu.pipeline_mode<synchronous>, transform_indices = @transform_1, window_bounds = array<i64: 144, 16>}, {transform_indices = @transform_2, window_bounds = array<i64: 1, 64, 16>}]} {
    %c0 = arith.constant 0 : index
    %c0_0 = arith.constant 0 : index
    %c0_1 = arith.constant 0 : index
    %0 = vector.load %arg1[%c0, %c0_0, %c0_1] : memref<1x64x144xf32, #tpu.memory_space<vmem>>, vector<1x64x144xf32>
    %1 = vector.shape_cast %0 : vector<1x64x144xf32> to vector<64x144xf32>
    %c0_2 = arith.constant 0 : index
    %c0_3 = arith.constant 0 : index
    %2 = vector.load %arg2[%c0_2, %c0_3] : memref<144x16xf32, #tpu.memory_space<vmem>>, vector<144x16xf32>
    %cst = arith.constant dense<0.000000e+00> : vector<64x16xf32>
    %3 = tpu.matmul %1, %2, %cst {dimension_numbers = #tpu.dot_dimension_numbers<[1], [0], [0], [1], [0, 0, 1, 1], [], []>} : vector<64x144xf32>, vector<144x16xf32>, vector<64x16xf32> -> vector<64x16xf32>
    %cst_4 = arith.constant dense<0.000000e+00> : vector<16xf32>
    %4 = vector.multi_reduction <add>, %3, %cst_4 [0] : vector<64x16xf32> to vector<16xf32>
    %5 = vector.shape_cast %4 : vector<16xf32> to vector<1x16xf32>
    %6 = arith.mulf %3, %3 : vector<64x16xf32>
    %cst_5 = arith.constant dense<0.000000e+00> : vector<16xf32>
    %7 = vector.multi_reduction <add>, %6, %cst_5 [0] : vector<64x16xf32> to vector<16xf32>
    %8 = vector.shape_cast %7 : vector<16xf32> to vector<1x16xf32>
    %cst_6 = arith.constant 6.400000e+01 : f32
    %9 = vector.broadcast %cst_6 : f32 to vector<1x16xf32>
    %10 = arith.divf %5, %9 : vector<1x16xf32>
    %cst_7 = arith.constant 6.400000e+01 : f32
    %11 = vector.broadcast %cst_7 : f32 to vector<1x16xf32>
    %12 = arith.divf %8, %11 : vector<1x16xf32>
    %13 = arith.mulf %10, %10 : vector<1x16xf32>
    %14 = arith.subf %12, %13 : vector<1x16xf32>
    %cst_8 = arith.constant 9.99999974E-6 : f32
    %15 = vector.broadcast %cst_8 : f32 to vector<1x16xf32>
    %16 = arith.addf %14, %15 : vector<1x16xf32>
    %17 = math.rsqrt %16 : vector<1x16xf32>
    %cst_9 = arith.constant 0.000000e+00 : f32
    %18 = vector.broadcast %cst_9 : f32 to vector<1x16xf32>
    %19 = arith.subf %18, %10 : vector<1x16xf32>
    %20 = arith.mulf %19, %17 : vector<1x16xf32>
    %21 = vector.broadcast %17 : vector<1x16xf32> to vector<64x16xf32>
    %22 = arith.mulf %3, %21 : vector<64x16xf32>
    %23 = vector.broadcast %20 : vector<1x16xf32> to vector<64x16xf32>
    %24 = arith.addf %22, %23 : vector<64x16xf32>
    %cst_10 = arith.constant 0.000000e+00 : f32
    %25 = vector.broadcast %cst_10 : f32 to vector<64x16xf32>
    %26 = arith.cmpf oge, %24, %25 : vector<64x16xf32>
    %cst_11 = arith.constant 2.000000e-01 : f32
    %27 = vector.broadcast %cst_11 : f32 to vector<64x16xf32>
    %28 = arith.mulf %27, %24 : vector<64x16xf32>
    %29 = arith.select %26, %24, %28 : vector<64x16xi1>, vector<64x16xf32>
    %c0_12 = arith.constant 0 : index
    %c0_13 = arith.constant 0 : index
    %c0_14 = arith.constant 0 : index
    %30 = vector.load %arg3[%c0_12, %c0_13, %c0_14] : memref<1x64x16xf32, #tpu.memory_space<vmem>>, vector<1x64x16xf32>
    %31 = vector.shape_cast %30 : vector<1x64x16xf32> to vector<64x16xf32>
    %32 = vector.shape_cast %29 : vector<64x16xf32> to vector<1x64x16xf32>
    tpu.vector_store %arg3[%c0_12, %c0_13, %c0_14], %32 {strides = array<i32>} : memref<1x64x16xf32, #tpu.memory_space<vmem>>, vector<1x64x16xf32>,
    return
  }
  func.func @transform_0(%arg0: i32) -> (i32, i32, i32) {
    %c0_i32 = arith.constant 0 : i32
    %c0_i32_0 = arith.constant 0 : i32
    %c0_i32_1 = arith.constant 0 : i32
    return %arg0, %c0_i32, %c0_i32_0 : i32, i32, i32
  }
  func.func @transform_1(%arg0: i32) -> (i32, i32) {
    %c0_i32 = arith.constant 0 : i32
    %c0_i32_0 = arith.constant 0 : i32
    %c0_i32_1 = arith.constant 0 : i32
    return %c0_i32, %c0_i32_0 : i32, i32
  }
  func.func @transform_2(%arg0: i32) -> (i32, i32, i32) {
    %c0_i32 = arith.constant 0 : i32
    %c0_i32_0 = arith.constant 0 : i32
    %c0_i32_1 = arith.constant 0 : i32
    return %arg0, %c0_i32, %c0_i32_0 : i32, i32, i32
  }
}

module attributes {stable_mosaic.version = 11 : i64} {
  func.func @_matmul_in_lrelu_kernel(%arg0: i32, %arg1: memref<1x16x144xf32, #tpu.memory_space<vmem>>, %arg2: memref<144x32xf32, #tpu.memory_space<vmem>>, %arg3: memref<1x16x32xf32, #tpu.memory_space<vmem>>) attributes {dimension_semantics = [#tpu.dimension_semantics<parallel>], iteration_bounds = array<i64: 2>, scalar_prefetch = 0 : i64, scratch_operands = 0 : i64, tpu.core_type = #tpu.core_type<tc>, window_params = [{transform_indices = @transform_0, window_bounds = array<i64: 1, 16, 144>}, {pipeline_mode = #tpu.pipeline_mode<synchronous>, transform_indices = @transform_1, window_bounds = array<i64: 144, 32>}, {transform_indices = @transform_2, window_bounds = array<i64: 1, 16, 32>}]} {
    %c0 = arith.constant 0 : index
    %c0_0 = arith.constant 0 : index
    %c0_1 = arith.constant 0 : index
    %0 = vector.load %arg1[%c0, %c0_0, %c0_1] : memref<1x16x144xf32, #tpu.memory_space<vmem>>, vector<1x16x144xf32>
    %1 = vector.shape_cast %0 : vector<1x16x144xf32> to vector<16x144xf32>
    %c0_2 = arith.constant 0 : index
    %c0_3 = arith.constant 0 : index
    %2 = vector.load %arg2[%c0_2, %c0_3] : memref<144x32xf32, #tpu.memory_space<vmem>>, vector<144x32xf32>
    %cst = arith.constant dense<0.000000e+00> : vector<16x32xf32>
    %3 = tpu.matmul %1, %2, %cst {dimension_numbers = #tpu.dot_dimension_numbers<[1], [0], [0], [1], [0, 0, 1, 1], [], []>} : vector<16x144xf32>, vector<144x32xf32>, vector<16x32xf32> -> vector<16x32xf32>
    %cst_4 = arith.constant dense<0.000000e+00> : vector<32xf32>
    %4 = vector.multi_reduction <add>, %3, %cst_4 [0] : vector<16x32xf32> to vector<32xf32>
    %5 = vector.shape_cast %4 : vector<32xf32> to vector<1x32xf32>
    %6 = arith.mulf %3, %3 : vector<16x32xf32>
    %cst_5 = arith.constant dense<0.000000e+00> : vector<32xf32>
    %7 = vector.multi_reduction <add>, %6, %cst_5 [0] : vector<16x32xf32> to vector<32xf32>
    %8 = vector.shape_cast %7 : vector<32xf32> to vector<1x32xf32>
    %cst_6 = arith.constant 1.600000e+01 : f32
    %9 = vector.broadcast %cst_6 : f32 to vector<1x32xf32>
    %10 = arith.divf %5, %9 : vector<1x32xf32>
    %cst_7 = arith.constant 1.600000e+01 : f32
    %11 = vector.broadcast %cst_7 : f32 to vector<1x32xf32>
    %12 = arith.divf %8, %11 : vector<1x32xf32>
    %13 = arith.mulf %10, %10 : vector<1x32xf32>
    %14 = arith.subf %12, %13 : vector<1x32xf32>
    %cst_8 = arith.constant 9.99999974E-6 : f32
    %15 = vector.broadcast %cst_8 : f32 to vector<1x32xf32>
    %16 = arith.addf %14, %15 : vector<1x32xf32>
    %17 = math.rsqrt %16 : vector<1x32xf32>
    %cst_9 = arith.constant 0.000000e+00 : f32
    %18 = vector.broadcast %cst_9 : f32 to vector<1x32xf32>
    %19 = arith.subf %18, %10 : vector<1x32xf32>
    %20 = arith.mulf %19, %17 : vector<1x32xf32>
    %21 = vector.broadcast %17 : vector<1x32xf32> to vector<16x32xf32>
    %22 = arith.mulf %3, %21 : vector<16x32xf32>
    %23 = vector.broadcast %20 : vector<1x32xf32> to vector<16x32xf32>
    %24 = arith.addf %22, %23 : vector<16x32xf32>
    %cst_10 = arith.constant 0.000000e+00 : f32
    %25 = vector.broadcast %cst_10 : f32 to vector<16x32xf32>
    %26 = arith.cmpf oge, %24, %25 : vector<16x32xf32>
    %cst_11 = arith.constant 2.000000e-01 : f32
    %27 = vector.broadcast %cst_11 : f32 to vector<16x32xf32>
    %28 = arith.mulf %27, %24 : vector<16x32xf32>
    %29 = arith.select %26, %24, %28 : vector<16x32xi1>, vector<16x32xf32>
    %c0_12 = arith.constant 0 : index
    %c0_13 = arith.constant 0 : index
    %c0_14 = arith.constant 0 : index
    %30 = vector.load %arg3[%c0_12, %c0_13, %c0_14] : memref<1x16x32xf32, #tpu.memory_space<vmem>>, vector<1x16x32xf32>
    %31 = vector.shape_cast %30 : vector<1x16x32xf32> to vector<16x32xf32>
    %32 = vector.shape_cast %29 : vector<16x32xf32> to vector<1x16x32xf32>
    tpu.vector_store %arg3[%c0_12, %c0_13, %c0_14], %32 {strides = array<i32>} : memref<1x16x32xf32, #tpu.memory_space<vmem>>, vector<1x16x32xf32>,
    return
  }
  func.func @transform_0(%arg0: i32) -> (i32, i32, i32) {
    %c0_i32 = arith.constant 0 : i32
    %c0_i32_0 = arith.constant 0 : i32
    %c0_i32_1 = arith.constant 0 : i32
    return %arg0, %c0_i32, %c0_i32_0 : i32, i32, i32
  }
  func.func @transform_1(%arg0: i32) -> (i32, i32) {
    %c0_i32 = arith.constant 0 : i32
    %c0_i32_0 = arith.constant 0 : i32
    %c0_i32_1 = arith.constant 0 : i32
    return %c0_i32, %c0_i32_0 : i32, i32
  }
  func.func @transform_2(%arg0: i32) -> (i32, i32, i32) {
    %c0_i32 = arith.constant 0 : i32
    %c0_i32_0 = arith.constant 0 : i32
    %c0_i32_1 = arith.constant 0 : i32
    return %arg0, %c0_i32, %c0_i32_0 : i32, i32, i32
  }
}

module attributes {stable_mosaic.version = 11 : i64} {
  func.func @_matmul_in_lrelu_kernel(%arg0: i32, %arg1: memref<1x16x288xf32, #tpu.memory_space<vmem>>, %arg2: memref<288x32xf32, #tpu.memory_space<vmem>>, %arg3: memref<1x16x32xf32, #tpu.memory_space<vmem>>) attributes {dimension_semantics = [#tpu.dimension_semantics<parallel>], iteration_bounds = array<i64: 2>, scalar_prefetch = 0 : i64, scratch_operands = 0 : i64, tpu.core_type = #tpu.core_type<tc>, window_params = [{transform_indices = @transform_0, window_bounds = array<i64: 1, 16, 288>}, {pipeline_mode = #tpu.pipeline_mode<synchronous>, transform_indices = @transform_1, window_bounds = array<i64: 288, 32>}, {transform_indices = @transform_2, window_bounds = array<i64: 1, 16, 32>}]} {
    %c0 = arith.constant 0 : index
    %c0_0 = arith.constant 0 : index
    %c0_1 = arith.constant 0 : index
    %0 = vector.load %arg1[%c0, %c0_0, %c0_1] : memref<1x16x288xf32, #tpu.memory_space<vmem>>, vector<1x16x288xf32>
    %1 = vector.shape_cast %0 : vector<1x16x288xf32> to vector<16x288xf32>
    %c0_2 = arith.constant 0 : index
    %c0_3 = arith.constant 0 : index
    %2 = vector.load %arg2[%c0_2, %c0_3] : memref<288x32xf32, #tpu.memory_space<vmem>>, vector<288x32xf32>
    %cst = arith.constant dense<0.000000e+00> : vector<16x32xf32>
    %3 = tpu.matmul %1, %2, %cst {dimension_numbers = #tpu.dot_dimension_numbers<[1], [0], [0], [1], [0, 0, 1, 1], [], []>} : vector<16x288xf32>, vector<288x32xf32>, vector<16x32xf32> -> vector<16x32xf32>
    %cst_4 = arith.constant dense<0.000000e+00> : vector<32xf32>
    %4 = vector.multi_reduction <add>, %3, %cst_4 [0] : vector<16x32xf32> to vector<32xf32>
    %5 = vector.shape_cast %4 : vector<32xf32> to vector<1x32xf32>
    %6 = arith.mulf %3, %3 : vector<16x32xf32>
    %cst_5 = arith.constant dense<0.000000e+00> : vector<32xf32>
    %7 = vector.multi_reduction <add>, %6, %cst_5 [0] : vector<16x32xf32> to vector<32xf32>
    %8 = vector.shape_cast %7 : vector<32xf32> to vector<1x32xf32>
    %cst_6 = arith.constant 1.600000e+01 : f32
    %9 = vector.broadcast %cst_6 : f32 to vector<1x32xf32>
    %10 = arith.divf %5, %9 : vector<1x32xf32>
    %cst_7 = arith.constant 1.600000e+01 : f32
    %11 = vector.broadcast %cst_7 : f32 to vector<1x32xf32>
    %12 = arith.divf %8, %11 : vector<1x32xf32>
    %13 = arith.mulf %10, %10 : vector<1x32xf32>
    %14 = arith.subf %12, %13 : vector<1x32xf32>
    %cst_8 = arith.constant 9.99999974E-6 : f32
    %15 = vector.broadcast %cst_8 : f32 to vector<1x32xf32>
    %16 = arith.addf %14, %15 : vector<1x32xf32>
    %17 = math.rsqrt %16 : vector<1x32xf32>
    %cst_9 = arith.constant 0.000000e+00 : f32
    %18 = vector.broadcast %cst_9 : f32 to vector<1x32xf32>
    %19 = arith.subf %18, %10 : vector<1x32xf32>
    %20 = arith.mulf %19, %17 : vector<1x32xf32>
    %21 = vector.broadcast %17 : vector<1x32xf32> to vector<16x32xf32>
    %22 = arith.mulf %3, %21 : vector<16x32xf32>
    %23 = vector.broadcast %20 : vector<1x32xf32> to vector<16x32xf32>
    %24 = arith.addf %22, %23 : vector<16x32xf32>
    %cst_10 = arith.constant 0.000000e+00 : f32
    %25 = vector.broadcast %cst_10 : f32 to vector<16x32xf32>
    %26 = arith.cmpf oge, %24, %25 : vector<16x32xf32>
    %cst_11 = arith.constant 2.000000e-01 : f32
    %27 = vector.broadcast %cst_11 : f32 to vector<16x32xf32>
    %28 = arith.mulf %27, %24 : vector<16x32xf32>
    %29 = arith.select %26, %24, %28 : vector<16x32xi1>, vector<16x32xf32>
    %c0_12 = arith.constant 0 : index
    %c0_13 = arith.constant 0 : index
    %c0_14 = arith.constant 0 : index
    %30 = vector.load %arg3[%c0_12, %c0_13, %c0_14] : memref<1x16x32xf32, #tpu.memory_space<vmem>>, vector<1x16x32xf32>
    %31 = vector.shape_cast %30 : vector<1x16x32xf32> to vector<16x32xf32>
    %32 = vector.shape_cast %29 : vector<16x32xf32> to vector<1x16x32xf32>
    tpu.vector_store %arg3[%c0_12, %c0_13, %c0_14], %32 {strides = array<i32>} : memref<1x16x32xf32, #tpu.memory_space<vmem>>, vector<1x16x32xf32>,
    return
  }
  func.func @transform_0(%arg0: i32) -> (i32, i32, i32) {
    %c0_i32 = arith.constant 0 : i32
    %c0_i32_0 = arith.constant 0 : i32
    %c0_i32_1 = arith.constant 0 : i32
    return %arg0, %c0_i32, %c0_i32_0 : i32, i32, i32
  }
  func.func @transform_1(%arg0: i32) -> (i32, i32) {
    %c0_i32 = arith.constant 0 : i32
    %c0_i32_0 = arith.constant 0 : i32
    %c0_i32_1 = arith.constant 0 : i32
    return %c0_i32, %c0_i32_0 : i32, i32
  }
  func.func @transform_2(%arg0: i32) -> (i32, i32, i32) {
    %c0_i32 = arith.constant 0 : i32
    %c0_i32_0 = arith.constant 0 : i32
    %c0_i32_1 = arith.constant 0 : i32
    return %arg0, %c0_i32, %c0_i32_0 : i32, i32, i32
  }
}

module attributes {stable_mosaic.version = 11 : i64} {
  func.func @_matmul_in_lrelu_kernel(%arg0: i32, %arg1: memref<1x4x576xf32, #tpu.memory_space<vmem>>, %arg2: memref<576x64xf32, #tpu.memory_space<vmem>>, %arg3: memref<1x4x64xf32, #tpu.memory_space<vmem>>) attributes {dimension_semantics = [#tpu.dimension_semantics<parallel>], iteration_bounds = array<i64: 2>, scalar_prefetch = 0 : i64, scratch_operands = 0 : i64, tpu.core_type = #tpu.core_type<tc>, window_params = [{transform_indices = @transform_0, window_bounds = array<i64: 1, 4, 576>}, {pipeline_mode = #tpu.pipeline_mode<synchronous>, transform_indices = @transform_1, window_bounds = array<i64: 576, 64>}, {transform_indices = @transform_2, window_bounds = array<i64: 1, 4, 64>}]} {
    %c0 = arith.constant 0 : index
    %c0_0 = arith.constant 0 : index
    %c0_1 = arith.constant 0 : index
    %0 = vector.load %arg1[%c0, %c0_0, %c0_1] : memref<1x4x576xf32, #tpu.memory_space<vmem>>, vector<1x4x576xf32>
    %1 = vector.shape_cast %0 : vector<1x4x576xf32> to vector<4x576xf32>
    %c0_2 = arith.constant 0 : index
    %c0_3 = arith.constant 0 : index
    %2 = vector.load %arg2[%c0_2, %c0_3] : memref<576x64xf32, #tpu.memory_space<vmem>>, vector<576x64xf32>
    %cst = arith.constant dense<0.000000e+00> : vector<4x64xf32>
    %3 = tpu.matmul %1, %2, %cst {dimension_numbers = #tpu.dot_dimension_numbers<[1], [0], [0], [1], [0, 0, 1, 1], [], []>} : vector<4x576xf32>, vector<576x64xf32>, vector<4x64xf32> -> vector<4x64xf32>
    %cst_4 = arith.constant dense<0.000000e+00> : vector<64xf32>
    %4 = vector.multi_reduction <add>, %3, %cst_4 [0] : vector<4x64xf32> to vector<64xf32>
    %5 = vector.shape_cast %4 : vector<64xf32> to vector<1x64xf32>
    %6 = arith.mulf %3, %3 : vector<4x64xf32>
    %cst_5 = arith.constant dense<0.000000e+00> : vector<64xf32>
    %7 = vector.multi_reduction <add>, %6, %cst_5 [0] : vector<4x64xf32> to vector<64xf32>
    %8 = vector.shape_cast %7 : vector<64xf32> to vector<1x64xf32>
    %cst_6 = arith.constant 4.000000e+00 : f32
    %9 = vector.broadcast %cst_6 : f32 to vector<1x64xf32>
    %10 = arith.divf %5, %9 : vector<1x64xf32>
    %cst_7 = arith.constant 4.000000e+00 : f32
    %11 = vector.broadcast %cst_7 : f32 to vector<1x64xf32>
    %12 = arith.divf %8, %11 : vector<1x64xf32>
    %13 = arith.mulf %10, %10 : vector<1x64xf32>
    %14 = arith.subf %12, %13 : vector<1x64xf32>
    %cst_8 = arith.constant 9.99999974E-6 : f32
    %15 = vector.broadcast %cst_8 : f32 to vector<1x64xf32>
    %16 = arith.addf %14, %15 : vector<1x64xf32>
    %17 = math.rsqrt %16 : vector<1x64xf32>
    %cst_9 = arith.constant 0.000000e+00 : f32
    %18 = vector.broadcast %cst_9 : f32 to vector<1x64xf32>
    %19 = arith.subf %18, %10 : vector<1x64xf32>
    %20 = arith.mulf %19, %17 : vector<1x64xf32>
    %21 = vector.broadcast %17 : vector<1x64xf32> to vector<4x64xf32>
    %22 = arith.mulf %3, %21 : vector<4x64xf32>
    %23 = vector.broadcast %20 : vector<1x64xf32> to vector<4x64xf32>
    %24 = arith.addf %22, %23 : vector<4x64xf32>
    %cst_10 = arith.constant 0.000000e+00 : f32
    %25 = vector.broadcast %cst_10 : f32 to vector<4x64xf32>
    %26 = arith.cmpf oge, %24, %25 : vector<4x64xf32>
    %cst_11 = arith.constant 2.000000e-01 : f32
    %27 = vector.broadcast %cst_11 : f32 to vector<4x64xf32>
    %28 = arith.mulf %27, %24 : vector<4x64xf32>
    %29 = arith.select %26, %24, %28 : vector<4x64xi1>, vector<4x64xf32>
    %c0_12 = arith.constant 0 : index
    %c0_13 = arith.constant 0 : index
    %c0_14 = arith.constant 0 : index
    %30 = vector.load %arg3[%c0_12, %c0_13, %c0_14] : memref<1x4x64xf32, #tpu.memory_space<vmem>>, vector<1x4x64xf32>
    %31 = vector.shape_cast %30 : vector<1x4x64xf32> to vector<4x64xf32>
    %32 = vector.shape_cast %29 : vector<4x64xf32> to vector<1x4x64xf32>
    tpu.vector_store %arg3[%c0_12, %c0_13, %c0_14], %32 {strides = array<i32>} : memref<1x4x64xf32, #tpu.memory_space<vmem>>, vector<1x4x64xf32>,
    return
  }
  func.func @transform_0(%arg0: i32) -> (i32, i32, i32) {
    %c0_i32 = arith.constant 0 : i32
    %c0_i32_0 = arith.constant 0 : i32
    %c0_i32_1 = arith.constant 0 : i32
    return %arg0, %c0_i32, %c0_i32_0 : i32, i32, i32
  }
  func.func @transform_1(%arg0: i32) -> (i32, i32) {
    %c0_i32 = arith.constant 0 : i32
    %c0_i32_0 = arith.constant 0 : i32
    %c0_i32_1 = arith.constant 0 : i32
    return %c0_i32, %c0_i32_0 : i32, i32
  }
  func.func @transform_2(%arg0: i32) -> (i32, i32, i32) {
    %c0_i32 = arith.constant 0 : i32
    %c0_i32_0 = arith.constant 0 : i32
    %c0_i32_1 = arith.constant 0 : i32
    return %arg0, %c0_i32, %c0_i32_0 : i32, i32, i32
  }
}

module attributes {stable_mosaic.version = 11 : i64} {
  func.func @_matmul_in_lrelu_kernel(%arg0: i32, %arg1: memref<1x4x288xf32, #tpu.memory_space<vmem>>, %arg2: memref<288x64xf32, #tpu.memory_space<vmem>>, %arg3: memref<1x4x64xf32, #tpu.memory_space<vmem>>) attributes {dimension_semantics = [#tpu.dimension_semantics<parallel>], iteration_bounds = array<i64: 2>, scalar_prefetch = 0 : i64, scratch_operands = 0 : i64, tpu.core_type = #tpu.core_type<tc>, window_params = [{transform_indices = @transform_0, window_bounds = array<i64: 1, 4, 288>}, {pipeline_mode = #tpu.pipeline_mode<synchronous>, transform_indices = @transform_1, window_bounds = array<i64: 288, 64>}, {transform_indices = @transform_2, window_bounds = array<i64: 1, 4, 64>}]} {
    %c0 = arith.constant 0 : index
    %c0_0 = arith.constant 0 : index
    %c0_1 = arith.constant 0 : index
    %0 = vector.load %arg1[%c0, %c0_0, %c0_1] : memref<1x4x288xf32, #tpu.memory_space<vmem>>, vector<1x4x288xf32>
    %1 = vector.shape_cast %0 : vector<1x4x288xf32> to vector<4x288xf32>
    %c0_2 = arith.constant 0 : index
    %c0_3 = arith.constant 0 : index
    %2 = vector.load %arg2[%c0_2, %c0_3] : memref<288x64xf32, #tpu.memory_space<vmem>>, vector<288x64xf32>
    %cst = arith.constant dense<0.000000e+00> : vector<4x64xf32>
    %3 = tpu.matmul %1, %2, %cst {dimension_numbers = #tpu.dot_dimension_numbers<[1], [0], [0], [1], [0, 0, 1, 1], [], []>} : vector<4x288xf32>, vector<288x64xf32>, vector<4x64xf32> -> vector<4x64xf32>
    %cst_4 = arith.constant dense<0.000000e+00> : vector<64xf32>
    %4 = vector.multi_reduction <add>, %3, %cst_4 [0] : vector<4x64xf32> to vector<64xf32>
    %5 = vector.shape_cast %4 : vector<64xf32> to vector<1x64xf32>
    %6 = arith.mulf %3, %3 : vector<4x64xf32>
    %cst_5 = arith.constant dense<0.000000e+00> : vector<64xf32>
    %7 = vector.multi_reduction <add>, %6, %cst_5 [0] : vector<4x64xf32> to vector<64xf32>
    %8 = vector.shape_cast %7 : vector<64xf32> to vector<1x64xf32>
    %cst_6 = arith.constant 4.000000e+00 : f32
    %9 = vector.broadcast %cst_6 : f32 to vector<1x64xf32>
    %10 = arith.divf %5, %9 : vector<1x64xf32>
    %cst_7 = arith.constant 4.000000e+00 : f32
    %11 = vector.broadcast %cst_7 : f32 to vector<1x64xf32>
    %12 = arith.divf %8, %11 : vector<1x64xf32>
    %13 = arith.mulf %10, %10 : vector<1x64xf32>
    %14 = arith.subf %12, %13 : vector<1x64xf32>
    %cst_8 = arith.constant 9.99999974E-6 : f32
    %15 = vector.broadcast %cst_8 : f32 to vector<1x64xf32>
    %16 = arith.addf %14, %15 : vector<1x64xf32>
    %17 = math.rsqrt %16 : vector<1x64xf32>
    %cst_9 = arith.constant 0.000000e+00 : f32
    %18 = vector.broadcast %cst_9 : f32 to vector<1x64xf32>
    %19 = arith.subf %18, %10 : vector<1x64xf32>
    %20 = arith.mulf %19, %17 : vector<1x64xf32>
    %21 = vector.broadcast %17 : vector<1x64xf32> to vector<4x64xf32>
    %22 = arith.mulf %3, %21 : vector<4x64xf32>
    %23 = vector.broadcast %20 : vector<1x64xf32> to vector<4x64xf32>
    %24 = arith.addf %22, %23 : vector<4x64xf32>
    %cst_10 = arith.constant 0.000000e+00 : f32
    %25 = vector.broadcast %cst_10 : f32 to vector<4x64xf32>
    %26 = arith.cmpf oge, %24, %25 : vector<4x64xf32>
    %cst_11 = arith.constant 2.000000e-01 : f32
    %27 = vector.broadcast %cst_11 : f32 to vector<4x64xf32>
    %28 = arith.mulf %27, %24 : vector<4x64xf32>
    %29 = arith.select %26, %24, %28 : vector<4x64xi1>, vector<4x64xf32>
    %c0_12 = arith.constant 0 : index
    %c0_13 = arith.constant 0 : index
    %c0_14 = arith.constant 0 : index
    %30 = vector.load %arg3[%c0_12, %c0_13, %c0_14] : memref<1x4x64xf32, #tpu.memory_space<vmem>>, vector<1x4x64xf32>
    %31 = vector.shape_cast %30 : vector<1x4x64xf32> to vector<4x64xf32>
    %32 = vector.shape_cast %29 : vector<4x64xf32> to vector<1x4x64xf32>
    tpu.vector_store %arg3[%c0_12, %c0_13, %c0_14], %32 {strides = array<i32>} : memref<1x4x64xf32, #tpu.memory_space<vmem>>, vector<1x4x64xf32>,
    return
  }
  func.func @transform_0(%arg0: i32) -> (i32, i32, i32) {
    %c0_i32 = arith.constant 0 : i32
    %c0_i32_0 = arith.constant 0 : i32
    %c0_i32_1 = arith.constant 0 : i32
    return %arg0, %c0_i32, %c0_i32_0 : i32, i32, i32
  }
  func.func @transform_1(%arg0: i32) -> (i32, i32) {
    %c0_i32 = arith.constant 0 : i32
    %c0_i32_0 = arith.constant 0 : i32
    %c0_i32_1 = arith.constant 0 : i32
    return %c0_i32, %c0_i32_0 : i32, i32
  }
  func.func @transform_2(%arg0: i32) -> (i32, i32, i32) {
    %c0_i32 = arith.constant 0 : i32
    %c0_i32_0 = arith.constant 0 : i32
    %c0_i32_1 = arith.constant 0 : i32
    return %arg0, %c0_i32, %c0_i32_0 : i32, i32, i32
  }
}

module attributes {stable_mosaic.version = 11 : i64} {
  func.func @_matmul_in_lrelu_kernel(%arg0: i32, %arg1: memref<1x4x64xf32, #tpu.memory_space<vmem>>, %arg2: memref<64x128xf32, #tpu.memory_space<vmem>>, %arg3: memref<1x4x128xf32, #tpu.memory_space<vmem>>) attributes {dimension_semantics = [#tpu.dimension_semantics<parallel>], iteration_bounds = array<i64: 2>, scalar_prefetch = 0 : i64, scratch_operands = 0 : i64, tpu.core_type = #tpu.core_type<tc>, window_params = [{transform_indices = @transform_0, window_bounds = array<i64: 1, 4, 64>}, {pipeline_mode = #tpu.pipeline_mode<synchronous>, transform_indices = @transform_1, window_bounds = array<i64: 64, 128>}, {transform_indices = @transform_2, window_bounds = array<i64: 1, 4, 128>}]} {
    %c0 = arith.constant 0 : index
    %c0_0 = arith.constant 0 : index
    %c0_1 = arith.constant 0 : index
    %0 = vector.load %arg1[%c0, %c0_0, %c0_1] : memref<1x4x64xf32, #tpu.memory_space<vmem>>, vector<1x4x64xf32>
    %1 = vector.shape_cast %0 : vector<1x4x64xf32> to vector<4x64xf32>
    %c0_2 = arith.constant 0 : index
    %c0_3 = arith.constant 0 : index
    %2 = vector.load %arg2[%c0_2, %c0_3] : memref<64x128xf32, #tpu.memory_space<vmem>>, vector<64x128xf32>
    %cst = arith.constant dense<0.000000e+00> : vector<4x128xf32>
    %3 = tpu.matmul %1, %2, %cst {dimension_numbers = #tpu.dot_dimension_numbers<[1], [0], [0], [1], [0, 0, 1, 1], [], []>} : vector<4x64xf32>, vector<64x128xf32>, vector<4x128xf32> -> vector<4x128xf32>
    %cst_4 = arith.constant dense<0.000000e+00> : vector<128xf32>
    %4 = vector.multi_reduction <add>, %3, %cst_4 [0] : vector<4x128xf32> to vector<128xf32>
    %5 = vector.shape_cast %4 : vector<128xf32> to vector<1x128xf32>
    %6 = arith.mulf %3, %3 : vector<4x128xf32>
    %cst_5 = arith.constant dense<0.000000e+00> : vector<128xf32>
    %7 = vector.multi_reduction <add>, %6, %cst_5 [0] : vector<4x128xf32> to vector<128xf32>
    %8 = vector.shape_cast %7 : vector<128xf32> to vector<1x128xf32>
    %9 = vector.extract_strided_slice %5 {offsets = [0, 0], sizes = [1, 32], strides = [1, 1]} : vector<1x128xf32> to vector<1x32xf32>
    %10 = vector.extract_strided_slice %8 {offsets = [0, 0], sizes = [1, 32], strides = [1, 1]} : vector<1x128xf32> to vector<1x32xf32>
    %11 = vector.extract_strided_slice %5 {offsets = [0, 32], sizes = [1, 32], strides = [1, 1]} : vector<1x128xf32> to vector<1x32xf32>
    %12 = arith.addf %9, %11 : vector<1x32xf32>
    %13 = vector.extract_strided_slice %8 {offsets = [0, 32], sizes = [1, 32], strides = [1, 1]} : vector<1x128xf32> to vector<1x32xf32>
    %14 = arith.addf %10, %13 : vector<1x32xf32>
    %15 = vector.extract_strided_slice %5 {offsets = [0, 64], sizes = [1, 32], strides = [1, 1]} : vector<1x128xf32> to vector<1x32xf32>
    %16 = arith.addf %12, %15 : vector<1x32xf32>
    %17 = vector.extract_strided_slice %8 {offsets = [0, 64], sizes = [1, 32], strides = [1, 1]} : vector<1x128xf32> to vector<1x32xf32>
    %18 = arith.addf %14, %17 : vector<1x32xf32>
    %19 = vector.extract_strided_slice %5 {offsets = [0, 96], sizes = [1, 32], strides = [1, 1]} : vector<1x128xf32> to vector<1x32xf32>
    %20 = arith.addf %16, %19 : vector<1x32xf32>
    %21 = vector.extract_strided_slice %8 {offsets = [0, 96], sizes = [1, 32], strides = [1, 1]} : vector<1x128xf32> to vector<1x32xf32>
    %22 = arith.addf %18, %21 : vector<1x32xf32>
    %cst_6 = arith.constant 1.600000e+01 : f32
    %23 = vector.broadcast %cst_6 : f32 to vector<1x32xf32>
    %24 = arith.divf %20, %23 : vector<1x32xf32>
    %cst_7 = arith.constant 1.600000e+01 : f32
    %25 = vector.broadcast %cst_7 : f32 to vector<1x32xf32>
    %26 = arith.divf %22, %25 : vector<1x32xf32>
    %27 = arith.mulf %24, %24 : vector<1x32xf32>
    %28 = arith.subf %26, %27 : vector<1x32xf32>
    %cst_8 = arith.constant 9.99999974E-6 : f32
    %29 = vector.broadcast %cst_8 : f32 to vector<1x32xf32>
    %30 = arith.addf %28, %29 : vector<1x32xf32>
    %31 = math.rsqrt %30 : vector<1x32xf32>
    %cst_9 = arith.constant 0.000000e+00 : f32
    %32 = vector.broadcast %cst_9 : f32 to vector<1x32xf32>
    %33 = arith.subf %32, %24 : vector<1x32xf32>
    %34 = arith.mulf %33, %31 : vector<1x32xf32>
    %35 = tpu.concatenate %31, %31, %31, %31 in 1 : vector<1x32xf32>, vector<1x32xf32>, vector<1x32xf32>, vector<1x32xf32> -> vector<1x128xf32>
    %36 = tpu.concatenate %34, %34, %34, %34 in 1 : vector<1x32xf32>, vector<1x32xf32>, vector<1x32xf32>, vector<1x32xf32> -> vector<1x128xf32>
    %37 = vector.broadcast %35 : vector<1x128xf32> to vector<4x128xf32>
    %38 = arith.mulf %3, %37 : vector<4x128xf32>
    %39 = vector.broadcast %36 : vector<1x128xf32> to vector<4x128xf32>
    %40 = arith.addf %38, %39 : vector<4x128xf32>
    %cst_10 = arith.constant 0.000000e+00 : f32
    %41 = vector.broadcast %cst_10 : f32 to vector<4x128xf32>
    %42 = arith.cmpf oge, %40, %41 : vector<4x128xf32>
    %cst_11 = arith.constant 2.000000e-01 : f32
    %43 = vector.broadcast %cst_11 : f32 to vector<4x128xf32>
    %44 = arith.mulf %43, %40 : vector<4x128xf32>
    %45 = arith.select %42, %40, %44 : vector<4x128xi1>, vector<4x128xf32>
    %c0_12 = arith.constant 0 : index
    %c0_13 = arith.constant 0 : index
    %c0_14 = arith.constant 0 : index
    %46 = vector.load %arg3[%c0_12, %c0_13, %c0_14] : memref<1x4x128xf32, #tpu.memory_space<vmem>>, vector<1x4x128xf32>
    %47 = vector.shape_cast %46 : vector<1x4x128xf32> to vector<4x128xf32>
    %48 = vector.shape_cast %45 : vector<4x128xf32> to vector<1x4x128xf32>
    tpu.vector_store %arg3[%c0_12, %c0_13, %c0_14], %48 {strides = array<i32>} : memref<1x4x128xf32, #tpu.memory_space<vmem>>, vector<1x4x128xf32>,
    return
  }
  func.func @transform_0(%arg0: i32) -> (i32, i32, i32) {
    %c0_i32 = arith.constant 0 : i32
    %c0_i32_0 = arith.constant 0 : i32
    %c0_i32_1 = arith.constant 0 : i32
    return %arg0, %c0_i32, %c0_i32_0 : i32, i32, i32
  }
  func.func @transform_1(%arg0: i32) -> (i32, i32) {
    %c0_i32 = arith.constant 0 : i32
    %c0_i32_0 = arith.constant 0 : i32
    %c0_i32_1 = arith.constant 0 : i32
    return %c0_i32, %c0_i32_0 : i32, i32
  }
  func.func @transform_2(%arg0: i32) -> (i32, i32, i32) {
    %c0_i32 = arith.constant 0 : i32
    %c0_i32_0 = arith.constant 0 : i32
    %c0_i32_1 = arith.constant 0 : i32
    return %arg0, %c0_i32, %c0_i32_0 : i32, i32, i32
  }
}

module attributes {stable_mosaic.version = 11 : i64} {
  func.func @_matmul_in_lrelu_kernel(%arg0: i32, %arg1: memref<1x16x576xf32, #tpu.memory_space<vmem>>, %arg2: memref<576x32xf32, #tpu.memory_space<vmem>>, %arg3: memref<1x16x32xf32, #tpu.memory_space<vmem>>) attributes {dimension_semantics = [#tpu.dimension_semantics<parallel>], iteration_bounds = array<i64: 2>, scalar_prefetch = 0 : i64, scratch_operands = 0 : i64, tpu.core_type = #tpu.core_type<tc>, window_params = [{transform_indices = @transform_0, window_bounds = array<i64: 1, 16, 576>}, {pipeline_mode = #tpu.pipeline_mode<synchronous>, transform_indices = @transform_1, window_bounds = array<i64: 576, 32>}, {transform_indices = @transform_2, window_bounds = array<i64: 1, 16, 32>}]} {
    %c0 = arith.constant 0 : index
    %c0_0 = arith.constant 0 : index
    %c0_1 = arith.constant 0 : index
    %0 = vector.load %arg1[%c0, %c0_0, %c0_1] : memref<1x16x576xf32, #tpu.memory_space<vmem>>, vector<1x16x576xf32>
    %1 = vector.shape_cast %0 : vector<1x16x576xf32> to vector<16x576xf32>
    %c0_2 = arith.constant 0 : index
    %c0_3 = arith.constant 0 : index
    %2 = vector.load %arg2[%c0_2, %c0_3] : memref<576x32xf32, #tpu.memory_space<vmem>>, vector<576x32xf32>
    %cst = arith.constant dense<0.000000e+00> : vector<16x32xf32>
    %3 = tpu.matmul %1, %2, %cst {dimension_numbers = #tpu.dot_dimension_numbers<[1], [0], [0], [1], [0, 0, 1, 1], [], []>} : vector<16x576xf32>, vector<576x32xf32>, vector<16x32xf32> -> vector<16x32xf32>
    %cst_4 = arith.constant dense<0.000000e+00> : vector<32xf32>
    %4 = vector.multi_reduction <add>, %3, %cst_4 [0] : vector<16x32xf32> to vector<32xf32>
    %5 = vector.shape_cast %4 : vector<32xf32> to vector<1x32xf32>
    %6 = arith.mulf %3, %3 : vector<16x32xf32>
    %cst_5 = arith.constant dense<0.000000e+00> : vector<32xf32>
    %7 = vector.multi_reduction <add>, %6, %cst_5 [0] : vector<16x32xf32> to vector<32xf32>
    %8 = vector.shape_cast %7 : vector<32xf32> to vector<1x32xf32>
    %cst_6 = arith.constant 1.600000e+01 : f32
    %9 = vector.broadcast %cst_6 : f32 to vector<1x32xf32>
    %10 = arith.divf %5, %9 : vector<1x32xf32>
    %cst_7 = arith.constant 1.600000e+01 : f32
    %11 = vector.broadcast %cst_7 : f32 to vector<1x32xf32>
    %12 = arith.divf %8, %11 : vector<1x32xf32>
    %13 = arith.mulf %10, %10 : vector<1x32xf32>
    %14 = arith.subf %12, %13 : vector<1x32xf32>
    %cst_8 = arith.constant 9.99999974E-6 : f32
    %15 = vector.broadcast %cst_8 : f32 to vector<1x32xf32>
    %16 = arith.addf %14, %15 : vector<1x32xf32>
    %17 = math.rsqrt %16 : vector<1x32xf32>
    %cst_9 = arith.constant 0.000000e+00 : f32
    %18 = vector.broadcast %cst_9 : f32 to vector<1x32xf32>
    %19 = arith.subf %18, %10 : vector<1x32xf32>
    %20 = arith.mulf %19, %17 : vector<1x32xf32>
    %21 = vector.broadcast %17 : vector<1x32xf32> to vector<16x32xf32>
    %22 = arith.mulf %3, %21 : vector<16x32xf32>
    %23 = vector.broadcast %20 : vector<1x32xf32> to vector<16x32xf32>
    %24 = arith.addf %22, %23 : vector<16x32xf32>
    %cst_10 = arith.constant 0.000000e+00 : f32
    %25 = vector.broadcast %cst_10 : f32 to vector<16x32xf32>
    %26 = arith.cmpf oge, %24, %25 : vector<16x32xf32>
    %cst_11 = arith.constant 2.000000e-01 : f32
    %27 = vector.broadcast %cst_11 : f32 to vector<16x32xf32>
    %28 = arith.mulf %27, %24 : vector<16x32xf32>
    %29 = arith.select %26, %24, %28 : vector<16x32xi1>, vector<16x32xf32>
    %c0_12 = arith.constant 0 : index
    %c0_13 = arith.constant 0 : index
    %c0_14 = arith.constant 0 : index
    %30 = vector.load %arg3[%c0_12, %c0_13, %c0_14] : memref<1x16x32xf32, #tpu.memory_space<vmem>>, vector<1x16x32xf32>
    %31 = vector.shape_cast %30 : vector<1x16x32xf32> to vector<16x32xf32>
    %32 = vector.shape_cast %29 : vector<16x32xf32> to vector<1x16x32xf32>
    tpu.vector_store %arg3[%c0_12, %c0_13, %c0_14], %32 {strides = array<i32>} : memref<1x16x32xf32, #tpu.memory_space<vmem>>, vector<1x16x32xf32>,
    return
  }
  func.func @transform_0(%arg0: i32) -> (i32, i32, i32) {
    %c0_i32 = arith.constant 0 : i32
    %c0_i32_0 = arith.constant 0 : i32
    %c0_i32_1 = arith.constant 0 : i32
    return %arg0, %c0_i32, %c0_i32_0 : i32, i32, i32
  }
  func.func @transform_1(%arg0: i32) -> (i32, i32) {
    %c0_i32 = arith.constant 0 : i32
    %c0_i32_0 = arith.constant 0 : i32
    %c0_i32_1 = arith.constant 0 : i32
    return %c0_i32, %c0_i32_0 : i32, i32
  }
  func.func @transform_2(%arg0: i32) -> (i32, i32, i32) {
    %c0_i32 = arith.constant 0 : i32
    %c0_i32_0 = arith.constant 0 : i32
    %c0_i32_1 = arith.constant 0 : i32
    return %arg0, %c0_i32, %c0_i32_0 : i32, i32, i32
  }
}

module attributes {stable_mosaic.version = 11 : i64} {
  func.func @_matmul_in_lrelu_kernel(%arg0: i32, %arg1: memref<1x16x32xf32, #tpu.memory_space<vmem>>, %arg2: memref<32x64xf32, #tpu.memory_space<vmem>>, %arg3: memref<1x16x64xf32, #tpu.memory_space<vmem>>) attributes {dimension_semantics = [#tpu.dimension_semantics<parallel>], iteration_bounds = array<i64: 2>, scalar_prefetch = 0 : i64, scratch_operands = 0 : i64, tpu.core_type = #tpu.core_type<tc>, window_params = [{transform_indices = @transform_0, window_bounds = array<i64: 1, 16, 32>}, {pipeline_mode = #tpu.pipeline_mode<synchronous>, transform_indices = @transform_1, window_bounds = array<i64: 32, 64>}, {transform_indices = @transform_2, window_bounds = array<i64: 1, 16, 64>}]} {
    %c0 = arith.constant 0 : index
    %c0_0 = arith.constant 0 : index
    %c0_1 = arith.constant 0 : index
    %0 = vector.load %arg1[%c0, %c0_0, %c0_1] : memref<1x16x32xf32, #tpu.memory_space<vmem>>, vector<1x16x32xf32>
    %1 = vector.shape_cast %0 : vector<1x16x32xf32> to vector<16x32xf32>
    %c0_2 = arith.constant 0 : index
    %c0_3 = arith.constant 0 : index
    %2 = vector.load %arg2[%c0_2, %c0_3] : memref<32x64xf32, #tpu.memory_space<vmem>>, vector<32x64xf32>
    %cst = arith.constant dense<0.000000e+00> : vector<16x64xf32>
    %3 = tpu.matmul %1, %2, %cst {dimension_numbers = #tpu.dot_dimension_numbers<[1], [0], [0], [1], [0, 0, 1, 1], [], []>} : vector<16x32xf32>, vector<32x64xf32>, vector<16x64xf32> -> vector<16x64xf32>
    %cst_4 = arith.constant dense<0.000000e+00> : vector<64xf32>
    %4 = vector.multi_reduction <add>, %3, %cst_4 [0] : vector<16x64xf32> to vector<64xf32>
    %5 = vector.shape_cast %4 : vector<64xf32> to vector<1x64xf32>
    %6 = arith.mulf %3, %3 : vector<16x64xf32>
    %cst_5 = arith.constant dense<0.000000e+00> : vector<64xf32>
    %7 = vector.multi_reduction <add>, %6, %cst_5 [0] : vector<16x64xf32> to vector<64xf32>
    %8 = vector.shape_cast %7 : vector<64xf32> to vector<1x64xf32>
    %9 = vector.extract_strided_slice %5 {offsets = [0, 0], sizes = [1, 16], strides = [1, 1]} : vector<1x64xf32> to vector<1x16xf32>
    %10 = vector.extract_strided_slice %8 {offsets = [0, 0], sizes = [1, 16], strides = [1, 1]} : vector<1x64xf32> to vector<1x16xf32>
    %11 = vector.extract_strided_slice %5 {offsets = [0, 16], sizes = [1, 16], strides = [1, 1]} : vector<1x64xf32> to vector<1x16xf32>
    %12 = arith.addf %9, %11 : vector<1x16xf32>
    %13 = vector.extract_strided_slice %8 {offsets = [0, 16], sizes = [1, 16], strides = [1, 1]} : vector<1x64xf32> to vector<1x16xf32>
    %14 = arith.addf %10, %13 : vector<1x16xf32>
    %15 = vector.extract_strided_slice %5 {offsets = [0, 32], sizes = [1, 16], strides = [1, 1]} : vector<1x64xf32> to vector<1x16xf32>
    %16 = arith.addf %12, %15 : vector<1x16xf32>
    %17 = vector.extract_strided_slice %8 {offsets = [0, 32], sizes = [1, 16], strides = [1, 1]} : vector<1x64xf32> to vector<1x16xf32>
    %18 = arith.addf %14, %17 : vector<1x16xf32>
    %19 = vector.extract_strided_slice %5 {offsets = [0, 48], sizes = [1, 16], strides = [1, 1]} : vector<1x64xf32> to vector<1x16xf32>
    %20 = arith.addf %16, %19 : vector<1x16xf32>
    %21 = vector.extract_strided_slice %8 {offsets = [0, 48], sizes = [1, 16], strides = [1, 1]} : vector<1x64xf32> to vector<1x16xf32>
    %22 = arith.addf %18, %21 : vector<1x16xf32>
    %cst_6 = arith.constant 6.400000e+01 : f32
    %23 = vector.broadcast %cst_6 : f32 to vector<1x16xf32>
    %24 = arith.divf %20, %23 : vector<1x16xf32>
    %cst_7 = arith.constant 6.400000e+01 : f32
    %25 = vector.broadcast %cst_7 : f32 to vector<1x16xf32>
    %26 = arith.divf %22, %25 : vector<1x16xf32>
    %27 = arith.mulf %24, %24 : vector<1x16xf32>
    %28 = arith.subf %26, %27 : vector<1x16xf32>
    %cst_8 = arith.constant 9.99999974E-6 : f32
    %29 = vector.broadcast %cst_8 : f32 to vector<1x16xf32>
    %30 = arith.addf %28, %29 : vector<1x16xf32>
    %31 = math.rsqrt %30 : vector<1x16xf32>
    %cst_9 = arith.constant 0.000000e+00 : f32
    %32 = vector.broadcast %cst_9 : f32 to vector<1x16xf32>
    %33 = arith.subf %32, %24 : vector<1x16xf32>
    %34 = arith.mulf %33, %31 : vector<1x16xf32>
    %35 = tpu.concatenate %31, %31, %31, %31 in 1 : vector<1x16xf32>, vector<1x16xf32>, vector<1x16xf32>, vector<1x16xf32> -> vector<1x64xf32>
    %36 = tpu.concatenate %34, %34, %34, %34 in 1 : vector<1x16xf32>, vector<1x16xf32>, vector<1x16xf32>, vector<1x16xf32> -> vector<1x64xf32>
    %37 = vector.broadcast %35 : vector<1x64xf32> to vector<16x64xf32>
    %38 = arith.mulf %3, %37 : vector<16x64xf32>
    %39 = vector.broadcast %36 : vector<1x64xf32> to vector<16x64xf32>
    %40 = arith.addf %38, %39 : vector<16x64xf32>
    %cst_10 = arith.constant 0.000000e+00 : f32
    %41 = vector.broadcast %cst_10 : f32 to vector<16x64xf32>
    %42 = arith.cmpf oge, %40, %41 : vector<16x64xf32>
    %cst_11 = arith.constant 2.000000e-01 : f32
    %43 = vector.broadcast %cst_11 : f32 to vector<16x64xf32>
    %44 = arith.mulf %43, %40 : vector<16x64xf32>
    %45 = arith.select %42, %40, %44 : vector<16x64xi1>, vector<16x64xf32>
    %c0_12 = arith.constant 0 : index
    %c0_13 = arith.constant 0 : index
    %c0_14 = arith.constant 0 : index
    %46 = vector.load %arg3[%c0_12, %c0_13, %c0_14] : memref<1x16x64xf32, #tpu.memory_space<vmem>>, vector<1x16x64xf32>
    %47 = vector.shape_cast %46 : vector<1x16x64xf32> to vector<16x64xf32>
    %48 = vector.shape_cast %45 : vector<16x64xf32> to vector<1x16x64xf32>
    tpu.vector_store %arg3[%c0_12, %c0_13, %c0_14], %48 {strides = array<i32>} : memref<1x16x64xf32, #tpu.memory_space<vmem>>, vector<1x16x64xf32>,
    return
  }
  func.func @transform_0(%arg0: i32) -> (i32, i32, i32) {
    %c0_i32 = arith.constant 0 : i32
    %c0_i32_0 = arith.constant 0 : i32
    %c0_i32_1 = arith.constant 0 : i32
    return %arg0, %c0_i32, %c0_i32_0 : i32, i32, i32
  }
  func.func @transform_1(%arg0: i32) -> (i32, i32) {
    %c0_i32 = arith.constant 0 : i32
    %c0_i32_0 = arith.constant 0 : i32
    %c0_i32_1 = arith.constant 0 : i32
    return %c0_i32, %c0_i32_0 : i32, i32
  }
  func.func @transform_2(%arg0: i32) -> (i32, i32, i32) {
    %c0_i32 = arith.constant 0 : i32
    %c0_i32_0 = arith.constant 0 : i32
    %c0_i32_1 = arith.constant 0 : i32
    return %arg0, %c0_i32, %c0_i32_0 : i32, i32, i32
  }
}

module attributes {stable_mosaic.version = 11 : i64} {
  func.func @_matmul_in_lrelu_kernel(%arg0: i32, %arg1: memref<1x64x288xf32, #tpu.memory_space<vmem>>, %arg2: memref<288x16xf32, #tpu.memory_space<vmem>>, %arg3: memref<1x64x16xf32, #tpu.memory_space<vmem>>) attributes {dimension_semantics = [#tpu.dimension_semantics<parallel>], iteration_bounds = array<i64: 2>, scalar_prefetch = 0 : i64, scratch_operands = 0 : i64, tpu.core_type = #tpu.core_type<tc>, window_params = [{transform_indices = @transform_0, window_bounds = array<i64: 1, 64, 288>}, {pipeline_mode = #tpu.pipeline_mode<synchronous>, transform_indices = @transform_1, window_bounds = array<i64: 288, 16>}, {transform_indices = @transform_2, window_bounds = array<i64: 1, 64, 16>}]} {
    %c0 = arith.constant 0 : index
    %c0_0 = arith.constant 0 : index
    %c0_1 = arith.constant 0 : index
    %0 = vector.load %arg1[%c0, %c0_0, %c0_1] : memref<1x64x288xf32, #tpu.memory_space<vmem>>, vector<1x64x288xf32>
    %1 = vector.shape_cast %0 : vector<1x64x288xf32> to vector<64x288xf32>
    %c0_2 = arith.constant 0 : index
    %c0_3 = arith.constant 0 : index
    %2 = vector.load %arg2[%c0_2, %c0_3] : memref<288x16xf32, #tpu.memory_space<vmem>>, vector<288x16xf32>
    %cst = arith.constant dense<0.000000e+00> : vector<64x16xf32>
    %3 = tpu.matmul %1, %2, %cst {dimension_numbers = #tpu.dot_dimension_numbers<[1], [0], [0], [1], [0, 0, 1, 1], [], []>} : vector<64x288xf32>, vector<288x16xf32>, vector<64x16xf32> -> vector<64x16xf32>
    %cst_4 = arith.constant dense<0.000000e+00> : vector<16xf32>
    %4 = vector.multi_reduction <add>, %3, %cst_4 [0] : vector<64x16xf32> to vector<16xf32>
    %5 = vector.shape_cast %4 : vector<16xf32> to vector<1x16xf32>
    %6 = arith.mulf %3, %3 : vector<64x16xf32>
    %cst_5 = arith.constant dense<0.000000e+00> : vector<16xf32>
    %7 = vector.multi_reduction <add>, %6, %cst_5 [0] : vector<64x16xf32> to vector<16xf32>
    %8 = vector.shape_cast %7 : vector<16xf32> to vector<1x16xf32>
    %cst_6 = arith.constant 6.400000e+01 : f32
    %9 = vector.broadcast %cst_6 : f32 to vector<1x16xf32>
    %10 = arith.divf %5, %9 : vector<1x16xf32>
    %cst_7 = arith.constant 6.400000e+01 : f32
    %11 = vector.broadcast %cst_7 : f32 to vector<1x16xf32>
    %12 = arith.divf %8, %11 : vector<1x16xf32>
    %13 = arith.mulf %10, %10 : vector<1x16xf32>
    %14 = arith.subf %12, %13 : vector<1x16xf32>
    %cst_8 = arith.constant 9.99999974E-6 : f32
    %15 = vector.broadcast %cst_8 : f32 to vector<1x16xf32>
    %16 = arith.addf %14, %15 : vector<1x16xf32>
    %17 = math.rsqrt %16 : vector<1x16xf32>
    %cst_9 = arith.constant 0.000000e+00 : f32
    %18 = vector.broadcast %cst_9 : f32 to vector<1x16xf32>
    %19 = arith.subf %18, %10 : vector<1x16xf32>
    %20 = arith.mulf %19, %17 : vector<1x16xf32>
    %21 = vector.broadcast %17 : vector<1x16xf32> to vector<64x16xf32>
    %22 = arith.mulf %3, %21 : vector<64x16xf32>
    %23 = vector.broadcast %20 : vector<1x16xf32> to vector<64x16xf32>
    %24 = arith.addf %22, %23 : vector<64x16xf32>
    %cst_10 = arith.constant 0.000000e+00 : f32
    %25 = vector.broadcast %cst_10 : f32 to vector<64x16xf32>
    %26 = arith.cmpf oge, %24, %25 : vector<64x16xf32>
    %cst_11 = arith.constant 2.000000e-01 : f32
    %27 = vector.broadcast %cst_11 : f32 to vector<64x16xf32>
    %28 = arith.mulf %27, %24 : vector<64x16xf32>
    %29 = arith.select %26, %24, %28 : vector<64x16xi1>, vector<64x16xf32>
    %c0_12 = arith.constant 0 : index
    %c0_13 = arith.constant 0 : index
    %c0_14 = arith.constant 0 : index
    %30 = vector.load %arg3[%c0_12, %c0_13, %c0_14] : memref<1x64x16xf32, #tpu.memory_space<vmem>>, vector<1x64x16xf32>
    %31 = vector.shape_cast %30 : vector<1x64x16xf32> to vector<64x16xf32>
    %32 = vector.shape_cast %29 : vector<64x16xf32> to vector<1x64x16xf32>
    tpu.vector_store %arg3[%c0_12, %c0_13, %c0_14], %32 {strides = array<i32>} : memref<1x64x16xf32, #tpu.memory_space<vmem>>, vector<1x64x16xf32>,
    return
  }
  func.func @transform_0(%arg0: i32) -> (i32, i32, i32) {
    %c0_i32 = arith.constant 0 : i32
    %c0_i32_0 = arith.constant 0 : i32
    %c0_i32_1 = arith.constant 0 : i32
    return %arg0, %c0_i32, %c0_i32_0 : i32, i32, i32
  }
  func.func @transform_1(%arg0: i32) -> (i32, i32) {
    %c0_i32 = arith.constant 0 : i32
    %c0_i32_0 = arith.constant 0 : i32
    %c0_i32_1 = arith.constant 0 : i32
    return %c0_i32, %c0_i32_0 : i32, i32
  }
  func.func @transform_2(%arg0: i32) -> (i32, i32, i32) {
    %c0_i32 = arith.constant 0 : i32
    %c0_i32_0 = arith.constant 0 : i32
    %c0_i32_1 = arith.constant 0 : i32
    return %arg0, %c0_i32, %c0_i32_0 : i32, i32, i32
  }
}

module attributes {stable_mosaic.version = 11 : i64} {
  func.func @_matmul_in_lrelu_kernel(%arg0: i32, %arg1: memref<1x64x16xf32, #tpu.memory_space<vmem>>, %arg2: memref<16x32xf32, #tpu.memory_space<vmem>>, %arg3: memref<1x64x32xf32, #tpu.memory_space<vmem>>) attributes {dimension_semantics = [#tpu.dimension_semantics<parallel>], iteration_bounds = array<i64: 2>, scalar_prefetch = 0 : i64, scratch_operands = 0 : i64, tpu.core_type = #tpu.core_type<tc>, window_params = [{transform_indices = @transform_0, window_bounds = array<i64: 1, 64, 16>}, {pipeline_mode = #tpu.pipeline_mode<synchronous>, transform_indices = @transform_1, window_bounds = array<i64: 16, 32>}, {transform_indices = @transform_2, window_bounds = array<i64: 1, 64, 32>}]} {
    %c0 = arith.constant 0 : index
    %c0_0 = arith.constant 0 : index
    %c0_1 = arith.constant 0 : index
    %0 = vector.load %arg1[%c0, %c0_0, %c0_1] : memref<1x64x16xf32, #tpu.memory_space<vmem>>, vector<1x64x16xf32>
    %1 = vector.shape_cast %0 : vector<1x64x16xf32> to vector<64x16xf32>
    %c0_2 = arith.constant 0 : index
    %c0_3 = arith.constant 0 : index
    %2 = vector.load %arg2[%c0_2, %c0_3] : memref<16x32xf32, #tpu.memory_space<vmem>>, vector<16x32xf32>
    %cst = arith.constant dense<0.000000e+00> : vector<64x32xf32>
    %3 = tpu.matmul %1, %2, %cst {dimension_numbers = #tpu.dot_dimension_numbers<[1], [0], [0], [1], [0, 0, 1, 1], [], []>} : vector<64x16xf32>, vector<16x32xf32>, vector<64x32xf32> -> vector<64x32xf32>
    %cst_4 = arith.constant dense<0.000000e+00> : vector<32xf32>
    %4 = vector.multi_reduction <add>, %3, %cst_4 [0] : vector<64x32xf32> to vector<32xf32>
    %5 = vector.shape_cast %4 : vector<32xf32> to vector<1x32xf32>
    %6 = arith.mulf %3, %3 : vector<64x32xf32>
    %cst_5 = arith.constant dense<0.000000e+00> : vector<32xf32>
    %7 = vector.multi_reduction <add>, %6, %cst_5 [0] : vector<64x32xf32> to vector<32xf32>
    %8 = vector.shape_cast %7 : vector<32xf32> to vector<1x32xf32>
    %9 = vector.extract_strided_slice %5 {offsets = [0, 0], sizes = [1, 8], strides = [1, 1]} : vector<1x32xf32> to vector<1x8xf32>
    %10 = vector.extract_strided_slice %8 {offsets = [0, 0], sizes = [1, 8], strides = [1, 1]} : vector<1x32xf32> to vector<1x8xf32>
    %11 = vector.extract_strided_slice %5 {offsets = [0, 8], sizes = [1, 8], strides = [1, 1]} : vector<1x32xf32> to vector<1x8xf32>
    %12 = arith.addf %9, %11 : vector<1x8xf32>
    %13 = vector.extract_strided_slice %8 {offsets = [0, 8], sizes = [1, 8], strides = [1, 1]} : vector<1x32xf32> to vector<1x8xf32>
    %14 = arith.addf %10, %13 : vector<1x8xf32>
    %15 = vector.extract_strided_slice %5 {offsets = [0, 16], sizes = [1, 8], strides = [1, 1]} : vector<1x32xf32> to vector<1x8xf32>
    %16 = arith.addf %12, %15 : vector<1x8xf32>
    %17 = vector.extract_strided_slice %8 {offsets = [0, 16], sizes = [1, 8], strides = [1, 1]} : vector<1x32xf32> to vector<1x8xf32>
    %18 = arith.addf %14, %17 : vector<1x8xf32>
    %19 = vector.extract_strided_slice %5 {offsets = [0, 24], sizes = [1, 8], strides = [1, 1]} : vector<1x32xf32> to vector<1x8xf32>
    %20 = arith.addf %16, %19 : vector<1x8xf32>
    %21 = vector.extract_strided_slice %8 {offsets = [0, 24], sizes = [1, 8], strides = [1, 1]} : vector<1x32xf32> to vector<1x8xf32>
    %22 = arith.addf %18, %21 : vector<1x8xf32>
    %cst_6 = arith.constant 2.560000e+02 : f32
    %23 = vector.broadcast %cst_6 : f32 to vector<1x8xf32>
    %24 = arith.divf %20, %23 : vector<1x8xf32>
    %cst_7 = arith.constant 2.560000e+02 : f32
    %25 = vector.broadcast %cst_7 : f32 to vector<1x8xf32>
    %26 = arith.divf %22, %25 : vector<1x8xf32>
    %27 = arith.mulf %24, %24 : vector<1x8xf32>
    %28 = arith.subf %26, %27 : vector<1x8xf32>
    %cst_8 = arith.constant 9.99999974E-6 : f32
    %29 = vector.broadcast %cst_8 : f32 to vector<1x8xf32>
    %30 = arith.addf %28, %29 : vector<1x8xf32>
    %31 = math.rsqrt %30 : vector<1x8xf32>
    %cst_9 = arith.constant 0.000000e+00 : f32
    %32 = vector.broadcast %cst_9 : f32 to vector<1x8xf32>
    %33 = arith.subf %32, %24 : vector<1x8xf32>
    %34 = arith.mulf %33, %31 : vector<1x8xf32>
    %35 = tpu.concatenate %31, %31, %31, %31 in 1 : vector<1x8xf32>, vector<1x8xf32>, vector<1x8xf32>, vector<1x8xf32> -> vector<1x32xf32>
    %36 = tpu.concatenate %34, %34, %34, %34 in 1 : vector<1x8xf32>, vector<1x8xf32>, vector<1x8xf32>, vector<1x8xf32> -> vector<1x32xf32>
    %37 = vector.broadcast %35 : vector<1x32xf32> to vector<64x32xf32>
    %38 = arith.mulf %3, %37 : vector<64x32xf32>
    %39 = vector.broadcast %36 : vector<1x32xf32> to vector<64x32xf32>
    %40 = arith.addf %38, %39 : vector<64x32xf32>
    %cst_10 = arith.constant 0.000000e+00 : f32
    %41 = vector.broadcast %cst_10 : f32 to vector<64x32xf32>
    %42 = arith.cmpf oge, %40, %41 : vector<64x32xf32>
    %cst_11 = arith.constant 2.000000e-01 : f32
    %43 = vector.broadcast %cst_11 : f32 to vector<64x32xf32>
    %44 = arith.mulf %43, %40 : vector<64x32xf32>
    %45 = arith.select %42, %40, %44 : vector<64x32xi1>, vector<64x32xf32>
    %c0_12 = arith.constant 0 : index
    %c0_13 = arith.constant 0 : index
    %c0_14 = arith.constant 0 : index
    %46 = vector.load %arg3[%c0_12, %c0_13, %c0_14] : memref<1x64x32xf32, #tpu.memory_space<vmem>>, vector<1x64x32xf32>
    %47 = vector.shape_cast %46 : vector<1x64x32xf32> to vector<64x32xf32>
    %48 = vector.shape_cast %45 : vector<64x32xf32> to vector<1x64x32xf32>
    tpu.vector_store %arg3[%c0_12, %c0_13, %c0_14], %48 {strides = array<i32>} : memref<1x64x32xf32, #tpu.memory_space<vmem>>, vector<1x64x32xf32>,
    return
  }
  func.func @transform_0(%arg0: i32) -> (i32, i32, i32) {
    %c0_i32 = arith.constant 0 : i32
    %c0_i32_0 = arith.constant 0 : i32
    %c0_i32_1 = arith.constant 0 : i32
    return %arg0, %c0_i32, %c0_i32_0 : i32, i32, i32
  }
  func.func @transform_1(%arg0: i32) -> (i32, i32) {
    %c0_i32 = arith.constant 0 : i32
    %c0_i32_0 = arith.constant 0 : i32
    %c0_i32_1 = arith.constant 0 : i32
    return %c0_i32, %c0_i32_0 : i32, i32
  }
  func.func @transform_2(%arg0: i32) -> (i32, i32, i32) {
    %c0_i32 = arith.constant 0 : i32
    %c0_i32_0 = arith.constant 0 : i32
    %c0_i32_1 = arith.constant 0 : i32
    return %arg0, %c0_i32, %c0_i32_0 : i32, i32, i32
  }
}

module attributes {stable_mosaic.version = 11 : i64} {
  func.func @_matmul_in_lrelu_kernel(%arg0: i32, %arg1: memref<1x256x144xf32, #tpu.memory_space<vmem>>, %arg2: memref<144x8xf32, #tpu.memory_space<vmem>>, %arg3: memref<1x256x8xf32, #tpu.memory_space<vmem>>) attributes {dimension_semantics = [#tpu.dimension_semantics<parallel>], iteration_bounds = array<i64: 2>, scalar_prefetch = 0 : i64, scratch_operands = 0 : i64, tpu.core_type = #tpu.core_type<tc>, window_params = [{transform_indices = @transform_0, window_bounds = array<i64: 1, 256, 144>}, {pipeline_mode = #tpu.pipeline_mode<synchronous>, transform_indices = @transform_1, window_bounds = array<i64: 144, 8>}, {transform_indices = @transform_2, window_bounds = array<i64: 1, 256, 8>}]} {
    %c0 = arith.constant 0 : index
    %c0_0 = arith.constant 0 : index
    %c0_1 = arith.constant 0 : index
    %0 = vector.load %arg1[%c0, %c0_0, %c0_1] : memref<1x256x144xf32, #tpu.memory_space<vmem>>, vector<1x256x144xf32>
    %1 = vector.shape_cast %0 : vector<1x256x144xf32> to vector<256x144xf32>
    %c0_2 = arith.constant 0 : index
    %c0_3 = arith.constant 0 : index
    %2 = vector.load %arg2[%c0_2, %c0_3] : memref<144x8xf32, #tpu.memory_space<vmem>>, vector<144x8xf32>
    %cst = arith.constant dense<0.000000e+00> : vector<256x8xf32>
    %3 = tpu.matmul %1, %2, %cst {dimension_numbers = #tpu.dot_dimension_numbers<[1], [0], [0], [1], [0, 0, 1, 1], [], []>} : vector<256x144xf32>, vector<144x8xf32>, vector<256x8xf32> -> vector<256x8xf32>
    %cst_4 = arith.constant dense<0.000000e+00> : vector<8xf32>
    %4 = vector.multi_reduction <add>, %3, %cst_4 [0] : vector<256x8xf32> to vector<8xf32>
    %5 = vector.shape_cast %4 : vector<8xf32> to vector<1x8xf32>
    %6 = arith.mulf %3, %3 : vector<256x8xf32>
    %cst_5 = arith.constant dense<0.000000e+00> : vector<8xf32>
    %7 = vector.multi_reduction <add>, %6, %cst_5 [0] : vector<256x8xf32> to vector<8xf32>
    %8 = vector.shape_cast %7 : vector<8xf32> to vector<1x8xf32>
    %cst_6 = arith.constant 2.560000e+02 : f32
    %9 = vector.broadcast %cst_6 : f32 to vector<1x8xf32>
    %10 = arith.divf %5, %9 : vector<1x8xf32>
    %cst_7 = arith.constant 2.560000e+02 : f32
    %11 = vector.broadcast %cst_7 : f32 to vector<1x8xf32>
    %12 = arith.divf %8, %11 : vector<1x8xf32>
    %13 = arith.mulf %10, %10 : vector<1x8xf32>
    %14 = arith.subf %12, %13 : vector<1x8xf32>
    %cst_8 = arith.constant 9.99999974E-6 : f32
    %15 = vector.broadcast %cst_8 : f32 to vector<1x8xf32>
    %16 = arith.addf %14, %15 : vector<1x8xf32>
    %17 = math.rsqrt %16 : vector<1x8xf32>
    %cst_9 = arith.constant 0.000000e+00 : f32
    %18 = vector.broadcast %cst_9 : f32 to vector<1x8xf32>
    %19 = arith.subf %18, %10 : vector<1x8xf32>
    %20 = arith.mulf %19, %17 : vector<1x8xf32>
    %21 = vector.broadcast %17 : vector<1x8xf32> to vector<256x8xf32>
    %22 = arith.mulf %3, %21 : vector<256x8xf32>
    %23 = vector.broadcast %20 : vector<1x8xf32> to vector<256x8xf32>
    %24 = arith.addf %22, %23 : vector<256x8xf32>
    %cst_10 = arith.constant 0.000000e+00 : f32
    %25 = vector.broadcast %cst_10 : f32 to vector<256x8xf32>
    %26 = arith.cmpf oge, %24, %25 : vector<256x8xf32>
    %cst_11 = arith.constant 2.000000e-01 : f32
    %27 = vector.broadcast %cst_11 : f32 to vector<256x8xf32>
    %28 = arith.mulf %27, %24 : vector<256x8xf32>
    %29 = arith.select %26, %24, %28 : vector<256x8xi1>, vector<256x8xf32>
    %c0_12 = arith.constant 0 : index
    %c0_13 = arith.constant 0 : index
    %c0_14 = arith.constant 0 : index
    %30 = vector.load %arg3[%c0_12, %c0_13, %c0_14] : memref<1x256x8xf32, #tpu.memory_space<vmem>>, vector<1x256x8xf32>
    %31 = vector.shape_cast %30 : vector<1x256x8xf32> to vector<256x8xf32>
    %32 = vector.shape_cast %29 : vector<256x8xf32> to vector<1x256x8xf32>
    tpu.vector_store %arg3[%c0_12, %c0_13, %c0_14], %32 {strides = array<i32>} : memref<1x256x8xf32, #tpu.memory_space<vmem>>, vector<1x256x8xf32>,
    return
  }
  func.func @transform_0(%arg0: i32) -> (i32, i32, i32) {
    %c0_i32 = arith.constant 0 : i32
    %c0_i32_0 = arith.constant 0 : i32
    %c0_i32_1 = arith.constant 0 : i32
    return %arg0, %c0_i32, %c0_i32_0 : i32, i32, i32
  }
  func.func @transform_1(%arg0: i32) -> (i32, i32) {
    %c0_i32 = arith.constant 0 : i32
    %c0_i32_0 = arith.constant 0 : i32
    %c0_i32_1 = arith.constant 0 : i32
    return %c0_i32, %c0_i32_0 : i32, i32
  }
  func.func @transform_2(%arg0: i32) -> (i32, i32, i32) {
    %c0_i32 = arith.constant 0 : i32
    %c0_i32_0 = arith.constant 0 : i32
    %c0_i32_1 = arith.constant 0 : i32
    return %arg0, %c0_i32, %c0_i32_0 : i32, i32, i32
  }
}

module attributes {stable_mosaic.version = 11 : i64} {
  func.func @_matmul_bias_kernel(%arg0: i32, %arg1: memref<1x256x8xf32, #tpu.memory_space<vmem>>, %arg2: memref<8x4xf32, #tpu.memory_space<vmem>>, %arg3: memref<1x4xf32, #tpu.memory_space<vmem>>, %arg4: memref<1x256x4xf32, #tpu.memory_space<vmem>>) attributes {dimension_semantics = [#tpu.dimension_semantics<parallel>], iteration_bounds = array<i64: 2>, scalar_prefetch = 0 : i64, scratch_operands = 0 : i64, tpu.core_type = #tpu.core_type<tc>, window_params = [{transform_indices = @transform_0, window_bounds = array<i64: 1, 256, 8>}, {pipeline_mode = #tpu.pipeline_mode<synchronous>, transform_indices = @transform_1, window_bounds = array<i64: 8, 4>}, {pipeline_mode = #tpu.pipeline_mode<synchronous>, transform_indices = @transform_2, window_bounds = array<i64: 1, 4>}, {transform_indices = @transform_3, window_bounds = array<i64: 1, 256, 4>}]} {
    %c0 = arith.constant 0 : index
    %c0_0 = arith.constant 0 : index
    %c0_1 = arith.constant 0 : index
    %0 = vector.load %arg1[%c0, %c0_0, %c0_1] : memref<1x256x8xf32, #tpu.memory_space<vmem>>, vector<1x256x8xf32>
    %1 = vector.shape_cast %0 : vector<1x256x8xf32> to vector<256x8xf32>
    %c0_2 = arith.constant 0 : index
    %c0_3 = arith.constant 0 : index
    %2 = vector.load %arg2[%c0_2, %c0_3] : memref<8x4xf32, #tpu.memory_space<vmem>>, vector<8x4xf32>
    %cst = arith.constant dense<0.000000e+00> : vector<256x4xf32>
    %3 = tpu.matmul %1, %2, %cst {dimension_numbers = #tpu.dot_dimension_numbers<[1], [0], [0], [1], [0, 0, 1, 1], [], []>} : vector<256x8xf32>, vector<8x4xf32>, vector<256x4xf32> -> vector<256x4xf32>
    %c0_4 = arith.constant 0 : index
    %c0_5 = arith.constant 0 : index
    %4 = vector.load %arg3[%c0_4, %c0_5] : memref<1x4xf32, #tpu.memory_space<vmem>>, vector<1x4xf32>
    %5 = vector.broadcast %4 : vector<1x4xf32> to vector<256x4xf32>
    %6 = arith.addf %3, %5 : vector<256x4xf32>
    %c0_6 = arith.constant 0 : index
    %c0_7 = arith.constant 0 : index
    %c0_8 = arith.constant 0 : index
    %7 = vector.load %arg4[%c0_6, %c0_7, %c0_8] : memref<1x256x4xf32, #tpu.memory_space<vmem>>, vector<1x256x4xf32>
    %8 = vector.shape_cast %7 : vector<1x256x4xf32> to vector<256x4xf32>
    %9 = vector.shape_cast %6 : vector<256x4xf32> to vector<1x256x4xf32>
    tpu.vector_store %arg4[%c0_6, %c0_7, %c0_8], %9 {strides = array<i32>} : memref<1x256x4xf32, #tpu.memory_space<vmem>>, vector<1x256x4xf32>,
    return
  }
  func.func @transform_0(%arg0: i32) -> (i32, i32, i32) {
    %c0_i32 = arith.constant 0 : i32
    %c0_i32_0 = arith.constant 0 : i32
    %c0_i32_1 = arith.constant 0 : i32
    return %arg0, %c0_i32, %c0_i32_0 : i32, i32, i32
  }
  func.func @transform_1(%arg0: i32) -> (i32, i32) {
    %c0_i32 = arith.constant 0 : i32
    %c0_i32_0 = arith.constant 0 : i32
    %c0_i32_1 = arith.constant 0 : i32
    return %c0_i32, %c0_i32_0 : i32, i32
  }
  func.func @transform_2(%arg0: i32) -> (i32, i32) {
    %c0_i32 = arith.constant 0 : i32
    %c0_i32_0 = arith.constant 0 : i32
    %c0_i32_1 = arith.constant 0 : i32
    return %c0_i32, %c0_i32_0 : i32, i32
  }
  func.func @transform_3(%arg0: i32) -> (i32, i32, i32) {
    %c0_i32 = arith.constant 0 : i32
    %c0_i32_0 = arith.constant 0 : i32
    %c0_i32_1 = arith.constant 0 : i32
    return %arg0, %c0_i32, %c0_i32_0 : i32, i32, i32
  }
}

</mosaic_0001>

<llo_original>
// kernel: unet_forward.18
$region0: #{unet_forward.18}
  #allocation0 [shape = 'u32[]', space=smem, size = 0x4, offset = 0x4, fixed_abs, tag = 'smem constant byte address 0x4 - core index']
  #allocation1 [shape = 'u32[144,128]{1,0:T(1,128)}', space=vmem, size = 0x12000, scoped, tag = 'internal scratch']
  %s0 = inlined_call_operand.vmem [shape: f32[2,256,36], index: 0, kind: input, shape index: {}]
  %s1 = inlined_call_operand.vmem [shape: f32[36,8], index: 1, kind: input, shape index: {}]
  %s2 = inlined_call_operand.vmem [shape: f32[2,256,8], index: 2, kind: output, shape index: {}]
  %s3 = sld [smem:[#allocation0]]
  $region41: #{unet_forward.18} parent=0
    _
  %s5 = ssub.s32 1, %s3
  %s6 = scalar_select 0, %s5, %s3
  loop: start=0, step=1, limit=4
  $region2: #{unet_forward.18} parent=0 // loop_pre_header
    _
  $region3: #{unet_forward.18} parent=0 // loop_header
    %s8 = sphi 0, %s12
    %p9 = scmp.ge.s32.totalorder %s8, 4
    %s18 = sphi 0, %s20
    %s21 = sphi 0, %s18
    %s22 = sphi 0, %s21
    %s38 = sphi 0, %s22
    %s42 = sphi 0, %s42
    %s44 = sphi 0, %s42
    %s45 = sphi 0, %s44
    %s59 = sphi 0, %s45
    %s65 = sphi 0, %s67
    %s68 = sphi 0, %s65
    %s69 = sphi 0, %s68
    %s85 = sphi 0, %s69
  $region4: #{unet_forward.18} parent=0 // loop_header_branch
    %11 = sbr.rel (%p9) target = $region8
  $region5: #{unet_forward.18} parent=0 // loop_body
    %s13 = ssub.s32 %s8, 1
    %s14 = ssub.s32 %s8, 2
    %s15 = sadd.s32 %s8, 1
    %s16 = ssub.s32 %s8, %s15
    %p17 = scmp.eq.s32.totalorder %s16, 0
    %s19 = sadd.s32 %s18, 1
    %s20 = scalar_select %p17, %s18, %s19
    %p23 = pneg %p17
    %p24 = scmp.eq.s32.totalorder %s8, 1
    %p25 = por %p23, %p24
    %p26 = scmp.ne.s32.totalorder %s18, %s21
    %p27 = scmp.eq.s32.totalorder %s8, 0
    %p28 = por %p26, %p27
    %p29 = scmp.ne.s32.totalorder %s18, %s21
    %p30 = scmp.eq.s32.totalorder %s13, 1
    %p31 = por %p29, %p30
    %p32 = scmp.ne.s32.totalorder %s21, %s22
    %p33 = scmp.eq.s32.totalorder %s13, 0
    %p34 = por %p32, %p33
    %p35 = scmp.ne.s32.totalorder %s21, %s22
    %p36 = scmp.eq.s32.totalorder %s14, 1
    %p37 = por %p35, %p36
    %p39 = scmp.ne.s32.totalorder %s22, %s38
    %p40 = scmp.eq.s32.totalorder %s14, 0
    %p41 = por %p39, %p40
    %s43 = sadd.s32 %s42, 1
    %p46 = scmp.eq.s32.totalorder %s8, 1
    %p47 = scmp.ne.s32.totalorder %s42, %s44
    %p48 = scmp.eq.s32.totalorder %s8, 0
    %p49 = por %p47, %p48
    %p50 = scmp.ne.s32.totalorder %s42, %s44
    %p51 = scmp.eq.s32.totalorder %s13, 1
    %p52 = por %p50, %p51
    %p53 = scmp.ne.s32.totalorder %s44, %s45
    %p54 = scmp.eq.s32.totalorder %s13, 0
    %p55 = por %p53, %p54
    %p56 = scmp.ne.s32.totalorder %s44, %s45
    %p57 = scmp.eq.s32.totalorder %s14, 1
    %p58 = por %p56, %p57
    %p60 = scmp.ne.s32.totalorder %s45, %s59
    %p61 = scmp.eq.s32.totalorder %s14, 0
    %p62 = por %p60, %p61
    %s63 = ssub.s32 %s8, %s15
    %p64 = scmp.eq.s32.totalorder %s63, 0
    %s66 = sadd.s32 %s65, 1
    %s67 = scalar_select %p64, %s65, %s66
    %p70 = pneg %p64
    %p71 = scmp.eq.s32.totalorder %s8, 1
    %p72 = por %p70, %p71
    %p73 = scmp.ne.s32.totalorder %s65, %s68
    %p74 = scmp.eq.s32.totalorder %s8, 0
    %p75 = por %p73, %p74
    %p76 = scmp.ne.s32.totalorder %s65, %s68
    %p77 = scmp.eq.s32.totalorder %s13, 1
    %p78 = por %p76, %p77
    %p79 = scmp.ne.s32.totalorder %s68, %s69
    %p80 = scmp.eq.s32.totalorder %s13, 0
    %p81 = por %p79, %p80
    %p82 = scmp.ne.s32.totalorder %s68, %s69
    %p83 = scmp.eq.s32.totalorder %s14, 1
    %p84 = por %p82, %p83
    %p86 = scmp.ne.s32.totalorder %s69, %s85
    %p87 = scmp.eq.s32.totalorder %s14, 0
    %p88 = por %p86, %p87
    %p89 = scmp.le.s32.totalorder 1, %s8
    %p90 = scmp.lt.s32.totalorder %s8, 3
    %p91 = pnand %p89, %p90
    %p92 = pneg %p91
    // Predicated region
    $region9: #{unet_forward.18} parent=5 // pred_check
      _
    $region10: #{unet_forward.18} parent=5 // pred_check_branch
      %94 = sbr.rel (%p91) target = $region12
    $region11: #{unet_forward.18} parent=5 // pred_region
      %s95 = ssub.s32 %s8, 1
      // Predicated region
      $region13: #{unet_forward.18} parent=11 // pred_check
        %p96 = pneg %p55
      $region14: #{unet_forward.18} parent=11 // pred_check_branch
        %98 = sbr.rel (%p96) target = $region16
      $region15: #{unet_forward.18} parent=11 // pred_region
        _
      $region16: #{unet_forward.18} parent=11 // pred_fallthru
        _
    $region12: #{unet_forward.18} parent=5 // pred_fallthru
      _
    %p99 = scmp.lt.s32.totalorder %s8, 2
    // Predicated region
    $region17: #{unet_forward.18} parent=5 // pred_check
      %p100 = pneg %p99
    $region18: #{unet_forward.18} parent=5 // pred_check_branch
      %102 = sbr.rel (%p100) target = $region20
    $region19: #{unet_forward.18} parent=5 // pred_region
      // Predicated region
      $region21: #{unet_forward.18} parent=19 // pred_check
        %p103 = pneg %p28
      $region22: #{unet_forward.18} parent=19 // pred_check_branch
        %105 = sbr.rel (%p103) target = $region24
      $region23: #{unet_forward.18} parent=19 // pred_region
        %p106 = scmp.lt.s32.totalorder %s8, 1
        %s107 = scalar_select %p106, %s8, 1
        %s108 = smul.addr %s107, 32
        %s109 = smul.addr %s108, 8
        %s110 = scalar_lea.vmem %s0, %s109
      $region24: #{unet_forward.18} parent=19 // pred_fallthru
        _
    $region20: #{unet_forward.18} parent=5 // pred_fallthru
      _
    %p111 = scmp.le.s32.totalorder 1, %s8
    %p112 = scmp.lt.s32.totalorder %s8, 3
    %p113 = pnand %p111, %p112
    %p114 = pneg %p113
    // Predicated region
    $region25: #{unet_forward.18} parent=5 // pred_check
      _
    $region26: #{unet_forward.18} parent=5 // pred_check_branch
      %116 = sbr.rel (%p113) target = $region28
    $region27: #{unet_forward.18} parent=5 // pred_region
      %s117 = ssub.s32 %s8, 1
      %p118 = scmp.lt.s32.totalorder %s13, 1
      %s119 = scalar_select %p118, %s13, 1
      %s120 = smul.addr %s119, 32
      %s121 = smul.addr %s120, 8
      %s122 = scalar_lea.vmem %s0, %s121
      %p123 = pneg %p34
      %p124 = pneg %p31
      %p125 = pneg %p55
      %p126 = pneg %p52
      %p127 = pneg %p81
      %p128 = pneg %p78
      %p129 = scmp.lt.s32.totalorder %s13, 1
      %s130 = scalar_select %p129, %s13, 1
      %s131 = smul.addr %s130, 32
      %s132 = smul.addr %s131, 8
      %s133 = scalar_lea.vmem %s2, %s132
      %p134 = scmp.lt.s32.totalorder %s13, 1
      %s135 = scalar_select %p134, %s13, 1
      %s136 = smul.addr %s135, 32
      %s137 = smul.addr %s136, 8
      %s138 = scalar_lea.vmem %s0, %s137
      %p139 = scmp.lt.s32.totalorder %s13, 1
      %s140 = scalar_select %p139, %s13, 1
      %s141 = smul.addr %s140, 32
      %s142 = smul.addr %s141, 8
      %s143 = scalar_lea.vmem %s2, %s142
      %v144 = vld [vmem:[%s138] sm:$0xff]
      %v145 = vld [vmem:[%s138 + $0x8] sm:$0xff]
      %v146 = vld [vmem:[%s138 + $0x10] sm:$0xff]
      %v147 = vld [vmem:[%s138 + $0x18] sm:$0xff]
      %v148 = vld [vmem:[%s138 + $0x20] sm:$0xff]
      %v149 = vld [vmem:[%s138 + $0x28] sm:$0xff]
      %v150 = vld [vmem:[%s138 + $0x30] sm:$0xff]
      %v151 = vld [vmem:[%s138 + $0x38] sm:$0xff]
      %v152 = vld [vmem:[%s138 + $0x40] sm:$0xff]
      %v153 = vld [vmem:[%s138 + $0x48] sm:$0xff]
      %v154 = vld [vmem:[%s138 + $0x50] sm:$0xff]
      %v155 = vld [vmem:[%s138 + $0x58] sm:$0xff]
      %v156 = vld [vmem:[%s138 + $0x60] sm:$0xff]
      %v157 = vld [vmem:[%s138 + $0x68] sm:$0xff]
      %v158 = vld [vmem:[%s138 + $0x70] sm:$0xff]
      %v159 = vld [vmem:[%s138 + $0x78] sm:$0xff]
      %v160 = vld [vmem:[%s138 + $0x80] sm:$0xff]
      %v161 = vld [vmem:[%s138 + $0x88] sm:$0xff]
      %v162 = vld [vmem:[%s138 + $0x90] sm:$0xff]
      %v163 = vld [vmem:[%s138 + $0x98] sm:$0xff]
      %v164 = vld [vmem:[%s138 + $0xa0] sm:$0xff]
      %v165 = vld [vmem:[%s138 + $0xa8] sm:$0xff]
      %v166 = vld [vmem:[%s138 + $0xb0] sm:$0xff]
      %v167 = vld [vmem:[%s138 + $0xb8] sm:$0xff]
      %v168 = vld [vmem:[%s138 + $0xc0] sm:$0xff]
      %v169 = vld [vmem:[%s138 + $0xc8] sm:$0xff]
      %v170 = vld [vmem:[%s138 + $0xd0] sm:$0xff]
      %v171 = vld [vmem:[%s138 + $0xd8] sm:$0xff]
      %v172 = vld [vmem:[%s138 + $0xe0] sm:$0xff]
      %v173 = vld [vmem:[%s138 + $0xe8] sm:$0xff]
      %v174 = vld [vmem:[%s138 + $0xf0] sm:$0xff]
      %v175 = vld [vmem:[%s138 + $0xf8] sm:$0xff]
      %v176 = vld [vmem:[%s1] sm:$0xff]
      %v177 = vld [vmem:[%s1 + $0x8] sm:$0xff]
      %v178 = vld [vmem:[%s1 + $0x10] sm:$0xff]
      %v179 = vld [vmem:[%s1 + $0x18] sm:$0xff]
      %v180 = vld [vmem:[%s1 + $0x20] sm:$0xf]
      %vm181 = vcmask 293888
      %v183 = vsel %vm181, %v144, 0
      %v186 = vsel %vm181, %v145, 0
      %v189 = vsel %vm181, %v146, 0
      %v192 = vsel %vm181, %v147, 0
      %v195 = vsel %vm181, %v148, 0
      %v198 = vsel %vm181, %v149, 0
      %v201 = vsel %vm181, %v150, 0
      %v204 = vsel %vm181, %v151, 0
      %v207 = vsel %vm181, %v152, 0
      %v210 = vsel %vm181, %v153, 0
      %v213 = vsel %vm181, %v154, 0
      %v216 = vsel %vm181, %v155, 0
      %v219 = vsel %vm181, %v156, 0
      %v222 = vsel %vm181, %v157, 0
      %v225 = vsel %vm181, %v158, 0
      %v228 = vsel %vm181, %v159, 0
      %v231 = vsel %vm181, %v160, 0
      %v234 = vsel %vm181, %v161, 0
      %v237 = vsel %vm181, %v162, 0
      %v240 = vsel %vm181, %v163, 0
      %v243 = vsel %vm181, %v164, 0
      %v246 = vsel %vm181, %v165, 0
      %v249 = vsel %vm181, %v166, 0
      %v252 = vsel %vm181, %v167, 0
      %v255 = vsel %vm181, %v168, 0
      %v258 = vsel %vm181, %v169, 0
      %v261 = vsel %vm181, %v170, 0
      %v264 = vsel %vm181, %v171, 0
      %v267 = vsel %vm181, %v172, 0
      %v270 = vsel %vm181, %v173, 0
      %v273 = vsel %vm181, %v174, 0
      %v276 = vsel %vm181, %v175, 0
      %vm278 = vcmask 1043456
      %v280 = vsel %vm278, %v180, 0
      %282 = vmatprep.subr.mxu0 0.0
      %283 = vmatpush1.msra.mxu0 %v176
      %284 = vmatprep.subr.mxu0 0.0
      %285 = vmatpush1.msra.mxu0 %v177
      %286 = vmatprep.subr.mxu0 0.0
      %287 = vmatpush1.msra.mxu0 %v178
      %288 = vmatprep.subr.mxu0 0.0
      %289 = vmatpush1.msra.mxu0 %v179
      %290 = vmatprep.subr.mxu0 0.0
      %291 = vmatpush1.msra.mxu0 %v280
      %292 = vmatprep.subr.mxu0 0.0
      %293 = vmatpush1.msra.mxu0 0.0
      %294 = vmatprep.subr.mxu0 0.0
      %295 = vmatpush1.msra.mxu0 0.0
      %296 = vmatprep.subr.mxu0 0.0
      %297 = vmatpush1.msra.mxu0 0.0
      %298 = vmatprep.subr.mxu0 0.0
      %299 = vmatpush1.msra.mxu0 0.0
      %300 = vmatprep.subr.mxu0 0.0
      %301 = vmatpush1.msra.mxu0 0.0
      %302 = vmatprep.subr.mxu0 0.0
      %303 = vmatpush1.msra.mxu0 0.0
      %304 = vmatprep.subr.mxu0 0.0
      %305 = vmatpush1.msra.mxu0 0.0
      %306 = vmatprep.subr.mxu0 0.0
      %307 = vmatpush1.msra.mxu0 0.0
      %308 = vmatprep.subr.mxu0 0.0
      %309 = vmatpush1.msra.mxu0 0.0
      %310 = vmatprep.subr.mxu0 0.0
      %311 = vmatpush1.msra.mxu0 0.0
      %312 = vmatprep.subr.mxu0 0.0
      %313 = vmatpush1.msra.mxu0 0.0
      %314 = vmatprep.subr.mxu0 0.0
      %315 = vmatpush1.msra.mxu0 0.0
      %316 = vmatprep.subr.mxu0 0.0
      %317 = vmatpush1.msra.mxu0 0.0
      %318 = vmatprep.subr.mxu0 0.0
      %319 = vmatpush1.msra.mxu0 0.0
      %320 = vmatprep.subr.mxu0 0.0
      %321 = vmatpush1.msra.mxu0 0.0
      %322 = vmatprep.subr.mxu0 0.0
      %323 = vmatpush1.msra.mxu0 0.0
      %324 = vmatprep.subr.mxu0 0.0
      %325 = vmatpush1.msra.mxu0 0.0
      %326 = vmatprep.subr.mxu0 0.0
      %327 = vmatpush1.msra.mxu0 0.0
      %328 = vmatprep.subr.mxu0 0.0
      %329 = vmatpush1.msra.mxu0 0.0
      %330 = vmatprep.subr.mxu0 0.0
      %331 = vmatpush1.msra.mxu0 0.0
      %332 = vmatprep.subr.mxu0 0.0
      %333 = vmatpush1.msra.mxu0 0.0
      %334 = vmatprep.subr.mxu0 0.0
      %335 = vmatpush1.msra.mxu0 0.0
      %336 = vmatprep.subr.mxu0 0.0
      %337 = vmatpush1.msra.mxu0 0.0
      %338 = vmatprep.subr.mxu0 0.0
      %339 = vmatpush1.msra.mxu0 0.0
      %340 = vmatprep.subr.mxu0 0.0
      %341 = vmatpush1.msra.mxu0 0.0
      %342 = vmatprep.subr.mxu0 0.0
      %343 = vmatpush1.msra.mxu0 0.0
      %344 = vmatprep.subr.mxu0 0.0
      %345 = vmatpush1.msra.mxu0 0.0
      %346 = vmatprep.mubr.f32.mxu0 0.0
      %347 = vmatmul.mubr.f32.gmra.mrb[0].mxu0 %v183
      %v348 = vpop.f32.mrb[0].mxu0
      %v349 = vadd.f32 0.0, %v348
      %v350 = vpop.f32.mrb[0].mxu0
      %351 = vmatprep.mubr.f32.mxu0 0.0
      %352 = vmatmul.mubr.f32.gmra.mrb[0].mxu0 %v186
      %v353 = vpop.f32.mrb[0].mxu0
      %v354 = vadd.f32 0.0, %v353
      %v355 = vpop.f32.mrb[0].mxu0
      %356 = vmatprep.mubr.f32.mxu0 0.0
      %357 = vmatmul.mubr.f32.gmra.mrb[0].mxu0 %v189
      %v358 = vpop.f32.mrb[0].mxu0
      %v359 = vadd.f32 0.0, %v358
      %v360 = vpop.f32.mrb[0].mxu0
      %361 = vmatprep.mubr.f32.mxu0 0.0
      %362 = vmatmul.mubr.f32.gmra.mrb[0].mxu0 %v192
      %v363 = vpop.f32.mrb[0].mxu0
      %v364 = vadd.f32 0.0, %v363
      %v365 = vpop.f32.mrb[0].mxu0
      %366 = vmatprep.mubr.f32.mxu0 0.0
      %367 = vmatmul.mubr.f32.gmra.mrb[0].mxu0 %v195
      %v368 = vpop.f32.mrb[0].mxu0
      %v369 = vadd.f32 0.0, %v368
      %v370 = vpop.f32.mrb[0].mxu0
      %371 = vmatprep.mubr.f32.mxu0 0.0
      %372 = vmatmul.mubr.f32.gmra.mrb[0].mxu0 %v198
      %v373 = vpop.f32.mrb[0].mxu0
      %v374 = vadd.f32 0.0, %v373
      %v375 = vpop.f32.mrb[0].mxu0
      %376 = vmatprep.mubr.f32.mxu0 0.0
      %377 = vmatmul.mubr.f32.gmra.mrb[0].mxu0 %v201
      %v378 = vpop.f32.mrb[0].mxu0
      %v379 = vadd.f32 0.0, %v378
      %v380 = vpop.f32.mrb[0].mxu0
      %381 = vmatprep.mubr.f32.mxu0 0.0
      %382 = vmatmul.mubr.f32.gmra.mrb[0].mxu0 %v204
      %v383 = vpop.f32.mrb[0].mxu0
      %v384 = vadd.f32 0.0, %v383
      %v385 = vpop.f32.mrb[0].mxu0
      %386 = vmatprep.mubr.f32.mxu0 0.0
      %387 = vmatmul.mubr.f32.gmra.mrb[0].mxu0 %v207
      %v388 = vpop.f32.mrb[0].mxu0
      %v389 = vadd.f32 0.0, %v388
      %v390 = vpop.f32.mrb[0].mxu0
      %391 = vmatprep.mubr.f32.mxu0 0.0
      %392 = vmatmul.mubr.f32.gmra.mrb[0].mxu0 %v210
      %v393 = vpop.f32.mrb[0].mxu0
      %v394 = vadd.f32 0.0, %v393
      %v395 = vpop.f32.mrb[0].mxu0
      %396 = vmatprep.mubr.f32.mxu0 0.0
      %397 = vmatmul.mubr.f32.gmra.mrb[0].mxu0 %v213
      %v398 = vpop.f32.mrb[0].mxu0
      %v399 = vadd.f32 0.0, %v398
      %v400 = vpop.f32.mrb[0].mxu0
      %401 = vmatprep.mubr.f32.mxu0 0.0
      %402 = vmatmul.mubr.f32.gmra.mrb[0].mxu0 %v216
      %v403 = vpop.f32.mrb[0].mxu0
      %v404 = vadd.f32 0.0, %v403
      %v405 = vpop.f32.mrb[0].mxu0
      %406 = vmatprep.mubr.f32.mxu0 0.0
      %407 = vmatmul.mubr.f32.gmra.mrb[0].mxu0 %v219
      %v408 = vpop.f32.mrb[0].mxu0
      %v409 = vadd.f32 0.0, %v408
      %v410 = vpop.f32.mrb[0].mxu0
      %411 = vmatprep.mubr.f32.mxu0 0.0
      %412 = vmatmul.mubr.f32.gmra.mrb[0].mxu0 %v222
      %v413 = vpop.f32.mrb[0].mxu0
      %v414 = vadd.f32 0.0, %v413
      %v415 = vpop.f32.mrb[0].mxu0
      %416 = vmatprep.mubr.f32.mxu0 0.0
      %417 = vmatmul.mubr.f32.gmra.mrb[0].mxu0 %v225
      %v418 = vpop.f32.mrb[0].mxu0
      %v419 = vadd.f32 0.0, %v418
      %v420 = vpop.f32.mrb[0].mxu0
      %421 = vmatprep.mubr.f32.mxu0 0.0
      %422 = vmatmul.mubr.f32.gmra.mrb[0].mxu0 %v228
      %v423 = vpop.f32.mrb[0].mxu0
      %v424 = vadd.f32 0.0, %v423
      %v425 = vpop.f32.mrb[0].mxu0
      %426 = vmatprep.mubr.f32.mxu0 0.0
      %427 = vmatmul.mubr.f32.gmra.mrb[0].mxu0 %v231
      %v428 = vpop.f32.mrb[0].mxu0
      %v429 = vadd.f32 0.0, %v428
      %v430 = vpop.f32.mrb[0].mxu0
      %431 = vmatprep.mubr.f32.mxu0 0.0
      %432 = vmatmul.mubr.f32.gmra.mrb[0].mxu0 %v234
      %v433 = vpop.f32.mrb[0].mxu0
      %v434 = vadd.f32 0.0, %v433
      %v435 = vpop.f32.mrb[0].mxu0
      %436 = vmatprep.mubr.f32.mxu0 0.0
      %437 = vmatmul.mubr.f32.gmra.mrb[0].mxu0 %v237
      %v438 = vpop.f32.mrb[0].mxu0
      %v439 = vadd.f32 0.0, %v438
      %v440 = vpop.f32.mrb[0].mxu0
      %441 = vmatprep.mubr.f32.mxu0 0.0
      %442 = vmatmul.mubr.f32.gmra.mrb[0].mxu0 %v240
      %v443 = vpop.f32.mrb[0].mxu0
      %v444 = vadd.f32 0.0, %v443
      %v445 = vpop.f32.mrb[0].mxu0
      %446 = vmatprep.mubr.f32.mxu0 0.0
      %447 = vmatmul.mubr.f32.gmra.mrb[0].mxu0 %v243
      %v448 = vpop.f32.mrb[0].mxu0
      %v449 = vadd.f32 0.0, %v448
      %v450 = vpop.f32.mrb[0].mxu0
      %451 = vmatprep.mubr.f32.mxu0 0.0
      %452 = vmatmul.mubr.f32.gmra.mrb[0].mxu0 %v246
      %v453 = vpop.f32.mrb[0].mxu0
      %v454 = vadd.f32 0.0, %v453
      %v455 = vpop.f32.mrb[0].mxu0
      %456 = vmatprep.mubr.f32.mxu0 0.0
      %457 = vmatmul.mubr.f32.gmra.mrb[0].mxu0 %v249
      %v458 = vpop.f32.mrb[0].mxu0
      %v459 = vadd.f32 0.0, %v458
      %v460 = vpop.f32.mrb[0].mxu0
      %461 = vmatprep.mubr.f32.mxu0 0.0
      %462 = vmatmul.mubr.f32.gmra.mrb[0].mxu0 %v252
      %v463 = vpop.f32.mrb[0].mxu0
      %v464 = vadd.f32 0.0, %v463
      %v465 = vpop.f32.mrb[0].mxu0
      %466 = vmatprep.mubr.f32.mxu0 0.0
      %467 = vmatmul.mubr.f32.gmra.mrb[0].mxu0 %v255
      %v468 = vpop.f32.mrb[0].mxu0
      %v469 = vadd.f32 0.0, %v468
      %v470 = vpop.f32.mrb[0].mxu0
      %471 = vmatprep.mubr.f32.mxu0 0.0
      %472 = vmatmul.mubr.f32.gmra.mrb[0].mxu0 %v258
      %v473 = vpop.f32.mrb[0].mxu0
      %v474 = vadd.f32 0.0, %v473
      %v475 = vpop.f32.mrb[0].mxu0
      %476 = vmatprep.mubr.f32.mxu0 0.0
      %477 = vmatmul.mubr.f32.gmra.mrb[0].mxu0 %v261
      %v478 = vpop.f32.mrb[0].mxu0
      %v479 = vadd.f32 0.0, %v478
      %v480 = vpop.f32.mrb[0].mxu0
      %481 = vmatprep.mubr.f32.mxu0 0.0
      %482 = vmatmul.mubr.f32.gmra.mrb[0].mxu0 %v264
      %v483 = vpop.f32.mrb[0].mxu0
      %v484 = vadd.f32 0.0, %v483
      %v485 = vpop.f32.mrb[0].mxu0
      %486 = vmatprep.mubr.f32.mxu0 0.0
      %487 = vmatmul.mubr.f32.gmra.mrb[0].mxu0 %v267
      %v488 = vpop.f32.mrb[0].mxu0
      %v489 = vadd.f32 0.0, %v488
      %v490 = vpop.f32.mrb[0].mxu0
      %491 = vmatprep.mubr.f32.mxu0 0.0
      %492 = vmatmul.mubr.f32.gmra.mrb[0].mxu0 %v270
      %v493 = vpop.f32.mrb[0].mxu0
      %v494 = vadd.f32 0.0, %v493
      %v495 = vpop.f32.mrb[0].mxu0
      %496 = vmatprep.mubr.f32.mxu0 0.0
      %497 = vmatmul.mubr.f32.gmra.mrb[0].mxu0 %v273
      %v498 = vpop.f32.mrb[0].mxu0
      %v499 = vadd.f32 0.0, %v498
      %v500 = vpop.f32.mrb[0].mxu0
      %501 = vmatprep.mubr.f32.mxu0 0.0
      %502 = vmatmul.mubr.f32.gmra.mrb[0].mxu0 %v276
      %v503 = vpop.f32.mrb[0].mxu0
      %v504 = vadd.f32 0.0, %v503
      %v505 = vpop.f32.mrb[0].mxu0
      %506 = vdwg.mxu0
      %vm507 = vcmask 64512
      %v508 = vsel %vm507, %v349, 0.0
      %v509 = vsel %vm507, %v354, 0.0
      %v510 = vadd.f32 %v508, %v509
      %v511 = vsel %vm507, %v359, 0.0
      %v512 = vadd.f32 %v510, %v511
      %v513 = vsel %vm507, %v364, 0.0
      %v514 = vadd.f32 %v512, %v513
      %v515 = vsel %vm507, %v369, 0.0
      %v516 = vadd.f32 %v514, %v515
      %v517 = vsel %vm507, %v374, 0.0
      %v518 = vadd.f32 %v516, %v517
      %v519 = vsel %vm507, %v379, 0.0
      %v520 = vadd.f32 %v518, %v519
      %v521 = vsel %vm507, %v384, 0.0
      %v522 = vadd.f32 %v520, %v521
      %v523 = vsel %vm507, %v389, 0.0
      %v524 = vadd.f32 %v522, %v523
      %v525 = vsel %vm507, %v394, 0.0
      %v526 = vadd.f32 %v524, %v525
      %v527 = vsel %vm507, %v399, 0.0
      %v528 = vadd.f32 %v526, %v527
      %v529 = vsel %vm507, %v404, 0.0
      %v530 = vadd.f32 %v528, %v529
      %v531 = vsel %vm507, %v409, 0.0
      %v532 = vadd.f32 %v530, %v531
      %v533 = vsel %vm507, %v414, 0.0
      %v534 = vadd.f32 %v532, %v533
      %v535 = vsel %vm507, %v419, 0.0
      %v536 = vadd.f32 %v534, %v535
      %v537 = vsel %vm507, %v424, 0.0
      %v538 = vadd.f32 %v536, %v537
      %v539 = vsel %vm507, %v429, 0.0
      %v540 = vadd.f32 %v538, %v539
      %v541 = vsel %vm507, %v434, 0.0
      %v542 = vadd.f32 %v540, %v541
      %v543 = vsel %vm507, %v439, 0.0
      %v544 = vadd.f32 %v542, %v543
      %v545 = vsel %vm507, %v444, 0.0
      %v546 = vadd.f32 %v544, %v545
      %v547 = vsel %vm507, %v449, 0.0
      %v548 = vadd.f32 %v546, %v547
      %v549 = vsel %vm507, %v454, 0.0
      %v550 = vadd.f32 %v548, %v549
      %v551 = vsel %vm507, %v459, 0.0
      %v552 = vadd.f32 %v550, %v551
      %v553 = vsel %vm507, %v464, 0.0
      %v554 = vadd.f32 %v552, %v553
      %v555 = vsel %vm507, %v469, 0.0
      %v556 = vadd.f32 %v554, %v555
      %v557 = vsel %vm507, %v474, 0.0
      %v558 = vadd.f32 %v556, %v557
      %v559 = vsel %vm507, %v479, 0.0
      %v560 = vadd.f32 %v558, %v559
      %v561 = vsel %vm507, %v484, 0.0
      %v562 = vadd.f32 %v560, %v561
      %v563 = vsel %vm507, %v489, 0.0
      %v564 = vadd.f32 %v562, %v563
      %v565 = vsel %vm507, %v494, 0.0
      %v566 = vadd.f32 %v564, %v565
      %v567 = vsel %vm507, %v499, 0.0
      %v568 = vadd.f32 %v566, %v567
      %v569 = vsel %vm507, %v504, 0.0
      %v570 = vadd.f32 %v568, %v569
      %v571 = vrot.slane %v570, 4
      %v572 = vadd.f32 %v570, %v571
      %v573 = vrot.slane %v572, 2
      %v574 = vadd.f32 %v572, %v573
      %v575 = vrot.slane %v574, 1
      %v576 = vadd.f32 %v574, %v575
      %v577 = vmul.f32 %v349, %v349
      %v578 = vmul.f32 %v354, %v354
      %v579 = vmul.f32 %v359, %v359
      %v580 = vmul.f32 %v364, %v364
      %v581 = vmul.f32 %v369, %v369
      %v582 = vmul.f32 %v374, %v374
      %v583 = vmul.f32 %v379, %v379
      %v584 = vmul.f32 %v384, %v384
      %v585 = vmul.f32 %v389, %v389
      %v586 = vmul.f32 %v394, %v394
      %v587 = vmul.f32 %v399, %v399
      %v588 = vmul.f32 %v404, %v404
      %v589 = vmul.f32 %v409, %v409
      %v590 = vmul.f32 %v414, %v414
      %v591 = vmul.f32 %v419, %v419
      %v592 = vmul.f32 %v424, %v424
      %v593 = vmul.f32 %v429, %v429
      %v594 = vmul.f32 %v434, %v434
      %v595 = vmul.f32 %v439, %v439
      %v596 = vmul.f32 %v444, %v444
      %v597 = vmul.f32 %v449, %v449
      %v598 = vmul.f32 %v454, %v454
      %v599 = vmul.f32 %v459, %v459
      %v600 = vmul.f32 %v464, %v464
      %v601 = vmul.f32 %v469, %v469
      %v602 = vmul.f32 %v474, %v474
      %v603 = vmul.f32 %v479, %v479
      %v604 = vmul.f32 %v484, %v484
      %v605 = vmul.f32 %v489, %v489
      %v606 = vmul.f32 %v494, %v494
      %v607 = vmul.f32 %v499, %v499
      %v608 = vmul.f32 %v504, %v504
      %v609 = vsel %vm507, %v577, 0.0
      %v610 = vsel %vm507, %v578, 0.0
      %v611 = vadd.f32 %v609, %v610
      %v612 = vsel %vm507, %v579, 0.0
      %v613 = vadd.f32 %v611, %v612
      %v614 = vsel %vm507, %v580, 0.0
      %v615 = vadd.f32 %v613, %v614
      %v616 = vsel %vm507, %v581, 0.0
      %v617 = vadd.f32 %v615, %v616
      %v618 = vsel %vm507, %v582, 0.0
      %v619 = vadd.f32 %v617, %v618
      %v620 = vsel %vm507, %v583, 0.0
      %v621 = vadd.f32 %v619, %v620
      %v622 = vsel %vm507, %v584, 0.0
      %v623 = vadd.f32 %v621, %v622
      %v624 = vsel %vm507, %v585, 0.0
      %v625 = vadd.f32 %v623, %v624
      %v626 = vsel %vm507, %v586, 0.0
      %v627 = vadd.f32 %v625, %v626
      %v628 = vsel %vm507, %v587, 0.0
      %v629 = vadd.f32 %v627, %v628
      %v630 = vsel %vm507, %v588, 0.0
      %v631 = vadd.f32 %v629, %v630
      %v632 = vsel %vm507, %v589, 0.0
      %v633 = vadd.f32 %v631, %v632
      %v634 = vsel %vm507, %v590, 0.0
      %v635 = vadd.f32 %v633, %v634
      %v636 = vsel %vm507, %v591, 0.0
      %v637 = vadd.f32 %v635, %v636
      %v638 = vsel %vm507, %v592, 0.0
      %v639 = vadd.f32 %v637, %v638
      %v640 = vsel %vm507, %v593, 0.0
      %v641 = vadd.f32 %v639, %v640
      %v642 = vsel %vm507, %v594, 0.0
      %v643 = vadd.f32 %v641, %v642
      %v644 = vsel %vm507, %v595, 0.0
      %v645 = vadd.f32 %v643, %v644
      %v646 = vsel %vm507, %v596, 0.0
      %v647 = vadd.f32 %v645, %v646
      %v648 = vsel %vm507, %v597, 0.0
      %v649 = vadd.f32 %v647, %v648
      %v650 = vsel %vm507, %v598, 0.0
      %v651 = vadd.f32 %v649, %v650
      %v652 = vsel %vm507, %v599, 0.0
      %v653 = vadd.f32 %v651, %v652
      %v654 = vsel %vm507, %v600, 0.0
      %v655 = vadd.f32 %v653, %v654
      %v656 = vsel %vm507, %v601, 0.0
      %v657 = vadd.f32 %v655, %v656
      %v658 = vsel %vm507, %v602, 0.0
      %v659 = vadd.f32 %v657, %v658
      %v660 = vsel %vm507, %v603, 0.0
      %v661 = vadd.f32 %v659, %v660
      %v662 = vsel %vm507, %v604, 0.0
      %v663 = vadd.f32 %v661, %v662
      %v664 = vsel %vm507, %v605, 0.0
      %v665 = vadd.f32 %v663, %v664
      %v666 = vsel %vm507, %v606, 0.0
      %v667 = vadd.f32 %v665, %v666
      %v668 = vsel %vm507, %v607, 0.0
      %v669 = vadd.f32 %v667, %v668
      %v670 = vsel %vm507, %v608, 0.0
      %v671 = vadd.f32 %v669, %v670
      %v672 = vrot.slane %v671, 4
      %v673 = vadd.f32 %v671, %v672
      %v674 = vrot.slane %v673, 2
      %v675 = vadd.f32 %v673, %v674
      %v676 = vrot.slane %v675, 1
      %v677 = vadd.f32 %v675, %v676
      %v678 = vrcp.pop 256.0
      %v679 = vmul.f32 %v576, %v678
      %v680 = vmul.f32 %v677, %v678
      %v681 = vmul.f32 %v679, %v679
      %v682 = vsub.f32 %v680, %v681
      %v683 = vadd.f32 %v682, 1e-05
      %v684 = vrsqrt.pop %v683
      %v685 = vsub.f32 0.0, %v679
      %v686 = vmul.f32 %v685, %v684
      %v687 = vmul.f32 %v349, %v684
      %v688 = vmul.f32 %v354, %v684
      %v689 = vmul.f32 %v359, %v684
      %v690 = vmul.f32 %v364, %v684
      %v691 = vmul.f32 %v369, %v684
      %v692 = vmul.f32 %v374, %v684
      %v693 = vmul.f32 %v379, %v684
      %v694 = vmul.f32 %v384, %v684
      %v695 = vmul.f32 %v389, %v684
      %v696 = vmul.f32 %v394, %v684
      %v697 = vmul.f32 %v399, %v684
      %v698 = vmul.f32 %v404, %v684
      %v699 = vmul.f32 %v409, %v684
      %v700 = vmul.f32 %v414, %v684
      %v701 = vmul.f32 %v419, %v684
      %v702 = vmul.f32 %v424, %v684
      %v703 = vmul.f32 %v429, %v684
      %v704 = vmul.f32 %v434, %v684
      %v705 = vmul.f32 %v439, %v684
      %v706 = vmul.f32 %v444, %v684
      %v707 = vmul.f32 %v449, %v684
      %v708 = vmul.f32 %v454, %v684
      %v709 = vmul.f32 %v459, %v684
      %v710 = vmul.f32 %v464, %v684
      %v711 = vmul.f32 %v469, %v684
      %v712 = vmul.f32 %v474, %v684
      %v713 = vmul.f32 %v479, %v684
      %v714 = vmul.f32 %v484, %v684
      %v715 = vmul.f32 %v489, %v684
      %v716 = vmul.f32 %v494, %v684
      %v717 = vmul.f32 %v499, %v684
      %v718 = vmul.f32 %v504, %v684
      %v719 = vadd.f32 %v687, %v686
      %v720 = vadd.f32 %v688, %v686
      %v721 = vadd.f32 %v689, %v686
      %v722 = vadd.f32 %v690, %v686
      %v723 = vadd.f32 %v691, %v686
      %v724 = vadd.f32 %v692, %v686
      %v725 = vadd.f32 %v693, %v686
      %v726 = vadd.f32 %v694, %v686
      %v727 = vadd.f32 %v695, %v686
      %v728 = vadd.f32 %v696, %v686
      %v729 = vadd.f32 %v697, %v686
      %v730 = vadd.f32 %v698, %v686
      %v731 = vadd.f32 %v699, %v686
      %v732 = vadd.f32 %v700, %v686
      %v733 = vadd.f32 %v701, %v686
      %v734 = vadd.f32 %v702, %v686
      %v735 = vadd.f32 %v703, %v686
      %v736 = vadd.f32 %v704, %v686
      %v737 = vadd.f32 %v705, %v686
      %v738 = vadd.f32 %v706, %v686
      %v739 = vadd.f32 %v707, %v686
      %v740 = vadd.f32 %v708, %v686
      %v741 = vadd.f32 %v709, %v686
      %v742 = vadd.f32 %v710, %v686
      %v743 = vadd.f32 %v711, %v686
      %v744 = vadd.f32 %v712, %v686
      %v745 = vadd.f32 %v713, %v686
      %v746 = vadd.f32 %v714, %v686
      %v747 = vadd.f32 %v715, %v686
      %v748 = vadd.f32 %v716, %v686
      %v749 = vadd.f32 %v717, %v686
      %v750 = vadd.f32 %v718, %v686
      %vm751 = vcmp.ge.f32.partialorder %v719, 0.0
      %vm752 = vcmp.ge.f32.partialorder %v720, 0.0
      %vm753 = vcmp.ge.f32.partialorder %v721, 0.0
      %vm754 = vcmp.ge.f32.partialorder %v722, 0.0
      %vm755 = vcmp.ge.f32.partialorder %v723, 0.0
      %vm756 = vcmp.ge.f32.partialorder %v724, 0.0
      %vm757 = vcmp.ge.f32.partialorder %v725, 0.0
      %vm758 = vcmp.ge.f32.partialorder %v726, 0.0
      %vm759 = vcmp.ge.f32.partialorder %v727, 0.0
      %vm760 = vcmp.ge.f32.partialorder %v728, 0.0
      %vm761 = vcmp.ge.f32.partialorder %v729, 0.0
      %vm762 = vcmp.ge.f32.partialorder %v730, 0.0
      %vm763 = vcmp.ge.f32.partialorder %v731, 0.0
      %vm764 = vcmp.ge.f32.partialorder %v732, 0.0
      %vm765 = vcmp.ge.f32.partialorder %v733, 0.0
      %vm766 = vcmp.ge.f32.partialorder %v734, 0.0
      %vm767 = vcmp.ge.f32.partialorder %v735, 0.0
      %vm768 = vcmp.ge.f32.partialorder %v736, 0.0
      %vm769 = vcmp.ge.f32.partialorder %v737, 0.0
      %vm770 = vcmp.ge.f32.partialorder %v738, 0.0
      %vm771 = vcmp.ge.f32.partialorder %v739, 0.0
      %vm772 = vcmp.ge.f32.partialorder %v740, 0.0
      %vm773 = vcmp.ge.f32.partialorder %v741, 0.0
      %vm774 = vcmp.ge.f32.partialorder %v742, 0.0
      %vm775 = vcmp.ge.f32.partialorder %v743, 0.0
      %vm776 = vcmp.ge.f32.partialorder %v744, 0.0
      %vm777 = vcmp.ge.f32.partialorder %v745, 0.0
      %vm778 = vcmp.ge.f32.partialorder %v746, 0.0
      %vm779 = vcmp.ge.f32.partialorder %v747, 0.0
      %vm780 = vcmp.ge.f32.partialorder %v748, 0.0
      %vm781 = vcmp.ge.f32.partialorder %v749, 0.0
      %vm782 = vcmp.ge.f32.partialorder %v750, 0.0
      %v783 = vmul.f32 %v719, 0.2
      %v784 = vmul.f32 %v720, 0.2
      %v785 = vmul.f32 %v721, 0.2
      %v786 = vmul.f32 %v722, 0.2
      %v787 = vmul.f32 %v723, 0.2
      %v788 = vmul.f32 %v724, 0.2
      %v789 = vmul.f32 %v725, 0.2
      %v790 = vmul.f32 %v726, 0.2
      %v791 = vmul.f32 %v727, 0.2
      %v792 = vmul.f32 %v728, 0.2
      %v793 = vmul.f32 %v729, 0.2
      %v794 = vmul.f32 %v730, 0.2
      %v795 = vmul.f32 %v731, 0.2
      %v796 = vmul.f32 %v732, 0.2
      %v797 = vmul.f32 %v733, 0.2
      %v798 = vmul.f32 %v734, 0.2
      %v799 = vmul.f32 %v735, 0.2
      %v800 = vmul.f32 %v736, 0.2
      %v801 = vmul.f32 %v737, 0.2
      %v802 = vmul.f32 %v738, 0.2
      %v803 = vmul.f32 %v739, 0.2
      %v804 = vmul.f32 %v740, 0.2
      %v805 = vmul.f32 %v741, 0.2
      %v806 = vmul.f32 %v742, 0.2
      %v807 = vmul.f32 %v743, 0.2
      %v808 = vmul.f32 %v744, 0.2
      %v809 = vmul.f32 %v745, 0.2
      %v810 = vmul.f32 %v746, 0.2
      %v811 = vmul.f32 %v747, 0.2
      %v812 = vmul.f32 %v748, 0.2
      %v813 = vmul.f32 %v749, 0.2
      %v814 = vmul.f32 %v750, 0.2
      %v815 = vsel %vm751, %v719, %v783
      %v816 = vsel %vm752, %v720, %v784
      %v817 = vsel %vm753, %v721, %v785
      %v818 = vsel %vm754, %v722, %v786
      %v819 = vsel %vm755, %v723, %v787
      %v820 = vsel %vm756, %v724, %v788
      %v821 = vsel %vm757, %v725, %v789
      %v822 = vsel %vm758, %v726, %v790
      %v823 = vsel %vm759, %v727, %v791
      %v824 = vsel %vm760, %v728, %v792
      %v825 = vsel %vm761, %v729, %v793
      %v826 = vsel %vm762, %v730, %v794
      %v827 = vsel %vm763, %v731, %v795
      %v828 = vsel %vm764, %v732, %v796
      %v829 = vsel %vm765, %v733, %v797
      %v830 = vsel %vm766, %v734, %v798
      %v831 = vsel %vm767, %v735, %v799
      %v832 = vsel %vm768, %v736, %v800
      %v833 = vsel %vm769, %v737, %v801
      %v834 = vsel %vm770, %v738, %v802
      %v835 = vsel %vm771, %v739, %v803
      %v836 = vsel %vm772, %v740, %v804
      %v837 = vsel %vm773, %v741, %v805
      %v838 = vsel %vm774, %v742, %v806
      %v839 = vsel %vm775, %v743, %v807
      %v840 = vsel %vm776, %v744, %v808
      %v841 = vsel %vm777, %v745, %v809
      %v842 = vsel %vm778, %v746, %v810
      %v843 = vsel %vm779, %v747, %v811
      %v844 = vsel %vm780, %v748, %v812
      %v845 = vsel %vm781, %v749, %v813
      %v846 = vsel %vm782, %v750, %v814
      %847 = vst.msk [vmem:[%s143] sm:$0xff] %vm507, %v815
      %848 = vst.msk [vmem:[%s143 + $0x8] sm:$0xff] %vm507, %v816
      %849 = vst.msk [vmem:[%s143 + $0x10] sm:$0xff] %vm507, %v817
      %850 = vst.msk [vmem:[%s143 + $0x18] sm:$0xff] %vm507, %v818
      %851 = vst.msk [vmem:[%s143 + $0x20] sm:$0xff] %vm507, %v819
      %852 = vst.msk [vmem:[%s143 + $0x28] sm:$0xff] %vm507, %v820
      %853 = vst.msk [vmem:[%s143 + $0x30] sm:$0xff] %vm507, %v821
      %854 = vst.msk [vmem:[%s143 + $0x38] sm:$0xff] %vm507, %v822
      %855 = vst.msk [vmem:[%s143 + $0x40] sm:$0xff] %vm507, %v823
      %856 = vst.msk [vmem:[%s143 + $0x48] sm:$0xff] %vm507, %v824
      %857 = vst.msk [vmem:[%s143 + $0x50] sm:$0xff] %vm507, %v825
      %858 = vst.msk [vmem:[%s143 + $0x58] sm:$0xff] %vm507, %v826
      %859 = vst.msk [vmem:[%s143 + $0x60] sm:$0xff] %vm507, %v827
      %860 = vst.msk [vmem:[%s143 + $0x68] sm:$0xff] %vm507, %v828
      %861 = vst.msk [vmem:[%s143 + $0x70] sm:$0xff] %vm507, %v829
      %862 = vst.msk [vmem:[%s143 + $0x78] sm:$0xff] %vm507, %v830
      %863 = vst.msk [vmem:[%s143 + $0x80] sm:$0xff] %vm507, %v831
      %864 = vst.msk [vmem:[%s143 + $0x88] sm:$0xff] %vm507, %v832
      %865 = vst.msk [vmem:[%s143 + $0x90] sm:$0xff] %vm507, %v833
      %866 = vst.msk [vmem:[%s143 + $0x98] sm:$0xff] %vm507, %v834
      %867 = vst.msk [vmem:[%s143 + $0xa0] sm:$0xff] %vm507, %v835
      %868 = vst.msk [vmem:[%s143 + $0xa8] sm:$0xff] %vm507, %v836
      %869 = vst.msk [vmem:[%s143 + $0xb0] sm:$0xff] %vm507, %v837
      %870 = vst.msk [vmem:[%s143 + $0xb8] sm:$0xff] %vm507, %v838
      %871 = vst.msk [vmem:[%s143 + $0xc0] sm:$0xff] %vm507, %v839
      %872 = vst.msk [vmem:[%s143 + $0xc8] sm:$0xff] %vm507, %v840
      %873 = vst.msk [vmem:[%s143 + $0xd0] sm:$0xff] %vm507, %v841
      %874 = vst.msk [vmem:[%s143 + $0xd8] sm:$0xff] %vm507, %v842
      %875 = vst.msk [vmem:[%s143 + $0xe0] sm:$0xff] %vm507, %v843
      %876 = vst.msk [vmem:[%s143 + $0xe8] sm:$0xff] %vm507, %v844
      %877 = vst.msk [vmem:[%s143 + $0xf0] sm:$0xff] %vm507, %v845
      %878 = vst.msk [vmem:[%s143 + $0xf8] sm:$0xff] %vm507, %v846
      %p879 = scmp.lt.s32.totalorder %s13, 1
      %s880 = scalar_select %p879, %s13, 1
      %s881 = smul.addr %s880, 32
      %s882 = smul.addr %s881, 8
      %s883 = scalar_lea.vmem %s2, %s882
      // Predicated region
      $region29: #{unet_forward.18} parent=27 // pred_check
        %p884 = pneg %p78
      $region30: #{unet_forward.18} parent=27 // pred_check_branch
        %886 = sbr.rel (%p884) target = $region32
      $region31: #{unet_forward.18} parent=27 // pred_region
        _
      $region32: #{unet_forward.18} parent=27 // pred_fallthru
        _
    $region28: #{unet_forward.18} parent=5 // pred_fallthru
      _
    %p887 = scmp.le.s32.totalorder 2, %s8
    // Predicated region
    $region33: #{unet_forward.18} parent=5 // pred_check
      %p888 = pneg %p887
    $region34: #{unet_forward.18} parent=5 // pred_check_branch
      %890 = sbr.rel (%p888) target = $region36
    $region35: #{unet_forward.18} parent=5 // pred_region
      %s891 = ssub.s32 %s8, 2
      // Predicated region
      $region37: #{unet_forward.18} parent=35 // pred_check
        %p892 = pneg %p84
      $region38: #{unet_forward.18} parent=35 // pred_check_branch
        %894 = sbr.rel (%p892) target = $region40
      $region39: #{unet_forward.18} parent=35 // pred_region
        %p895 = scmp.lt.s32.totalorder %s14, 1
        %s896 = scalar_select %p895, %s14, 1
        %s897 = smul.addr %s896, 32
        %s898 = smul.addr %s897, 8
        %s899 = scalar_lea.vmem %s2, %s898
      $region40: #{unet_forward.18} parent=35 // pred_fallthru
        _
    $region36: #{unet_forward.18} parent=5 // pred_fallthru
      _
  $region6: #{unet_forward.18} parent=0 // loop_footer
    %s12 = sadd.s32 1, %s8
  $region7: #{unet_forward.18} parent=0 // loop_footer_branch
    %7 = sbr.rel target = $region3
  $region8: #{unet_forward.18} parent=0 // loop_exit
    _

// kernel: unet_forward.19
$region0: #{unet_forward.19}
  #allocation0 [shape = 'u32[]', space=smem, size = 0x4, offset = 0x4, fixed_abs, tag = 'smem constant byte address 0x4 - core index']
  #allocation1 [shape = 'u32[144,128]{1,0:T(1,128)}', space=vmem, size = 0x12000, scoped, tag = 'internal scratch']
  %s0 = inlined_call_operand.vmem [shape: f32[2,256,72], index: 0, kind: input, shape index: {}]
  %s1 = inlined_call_operand.vmem [shape: f32[72,8], index: 1, kind: input, shape index: {}]
  %s2 = inlined_call_operand.vmem [shape: f32[2,256,8], index: 2, kind: output, shape index: {}]
  %s3 = sld [smem:[#allocation0]]
  $region41: #{unet_forward.19} parent=0
    _
  %s5 = ssub.s32 1, %s3
  %s6 = scalar_select 0, %s5, %s3
  loop: start=0, step=1, limit=4
  $region2: #{unet_forward.19} parent=0 // loop_pre_header
    _
  $region3: #{unet_forward.19} parent=0 // loop_header
    %s8 = sphi 0, %s12
    %p9 = scmp.ge.s32.totalorder %s8, 4
    %s18 = sphi 0, %s20
    %s21 = sphi 0, %s18
    %s22 = sphi 0, %s21
    %s38 = sphi 0, %s22
    %s42 = sphi 0, %s42
    %s44 = sphi 0, %s42
    %s45 = sphi 0, %s44
    %s59 = sphi 0, %s45
    %s65 = sphi 0, %s67
    %s68 = sphi 0, %s65
    %s69 = sphi 0, %s68
    %s85 = sphi 0, %s69
  $region4: #{unet_forward.19} parent=0 // loop_header_branch
    %11 = sbr.rel (%p9) target = $region8
  $region5: #{unet_forward.19} parent=0 // loop_body
    %s13 = ssub.s32 %s8, 1
    %s14 = ssub.s32 %s8, 2
    %s15 = sadd.s32 %s8, 1
    %s16 = ssub.s32 %s8, %s15
    %p17 = scmp.eq.s32.totalorder %s16, 0
    %s19 = sadd.s32 %s18, 1
    %s20 = scalar_select %p17, %s18, %s19
    %p23 = pneg %p17
    %p24 = scmp.eq.s32.totalorder %s8, 1
    %p25 = por %p23, %p24
    %p26 = scmp.ne.s32.totalorder %s18, %s21
    %p27 = scmp.eq.s32.totalorder %s8, 0
    %p28 = por %p26, %p27
    %p29 = scmp.ne.s32.totalorder %s18, %s21
    %p30 = scmp.eq.s32.totalorder %s13, 1
    %p31 = por %p29, %p30
    %p32 = scmp.ne.s32.totalorder %s21, %s22
    %p33 = scmp.eq.s32.totalorder %s13, 0
    %p34 = por %p32, %p33
    %p35 = scmp.ne.s32.totalorder %s21, %s22
    %p36 = scmp.eq.s32.totalorder %s14, 1
    %p37 = por %p35, %p36
    %p39 = scmp.ne.s32.totalorder %s22, %s38
    %p40 = scmp.eq.s32.totalorder %s14, 0
    %p41 = por %p39, %p40
    %s43 = sadd.s32 %s42, 1
    %p46 = scmp.eq.s32.totalorder %s8, 1
    %p47 = scmp.ne.s32.totalorder %s42, %s44
    %p48 = scmp.eq.s32.totalorder %s8, 0
    %p49 = por %p47, %p48
    %p50 = scmp.ne.s32.totalorder %s42, %s44
    %p51 = scmp.eq.s32.totalorder %s13, 1
    %p52 = por %p50, %p51
    %p53 = scmp.ne.s32.totalorder %s44, %s45
    %p54 = scmp.eq.s32.totalorder %s13, 0
    %p55 = por %p53, %p54
    %p56 = scmp.ne.s32.totalorder %s44, %s45
    %p57 = scmp.eq.s32.totalorder %s14, 1
    %p58 = por %p56, %p57
    %p60 = scmp.ne.s32.totalorder %s45, %s59
    %p61 = scmp.eq.s32.totalorder %s14, 0
    %p62 = por %p60, %p61
    %s63 = ssub.s32 %s8, %s15
    %p64 = scmp.eq.s32.totalorder %s63, 0
    %s66 = sadd.s32 %s65, 1
    %s67 = scalar_select %p64, %s65, %s66
    %p70 = pneg %p64
    %p71 = scmp.eq.s32.totalorder %s8, 1
    %p72 = por %p70, %p71
    %p73 = scmp.ne.s32.totalorder %s65, %s68
    %p74 = scmp.eq.s32.totalorder %s8, 0
    %p75 = por %p73, %p74
    %p76 = scmp.ne.s32.totalorder %s65, %s68
    %p77 = scmp.eq.s32.totalorder %s13, 1
    %p78 = por %p76, %p77
    %p79 = scmp.ne.s32.totalorder %s68, %s69
    %p80 = scmp.eq.s32.totalorder %s13, 0
    %p81 = por %p79, %p80
    %p82 = scmp.ne.s32.totalorder %s68, %s69
    %p83 = scmp.eq.s32.totalorder %s14, 1
    %p84 = por %p82, %p83
    %p86 = scmp.ne.s32.totalorder %s69, %s85
    %p87 = scmp.eq.s32.totalorder %s14, 0
    %p88 = por %p86, %p87
    %p89 = scmp.le.s32.totalorder 1, %s8
    %p90 = scmp.lt.s32.totalorder %s8, 3
    %p91 = pnand %p89, %p90
    %p92 = pneg %p91
    // Predicated region
    $region9: #{unet_forward.19} parent=5 // pred_check
      _
    $region10: #{unet_forward.19} parent=5 // pred_check_branch
      %94 = sbr.rel (%p91) target = $region12
    $region11: #{unet_forward.19} parent=5 // pred_region
      %s95 = ssub.s32 %s8, 1
      // Predicated region
      $region13: #{unet_forward.19} parent=11 // pred_check
        %p96 = pneg %p55
      $region14: #{unet_forward.19} parent=11 // pred_check_branch
        %98 = sbr.rel (%p96) target = $region16
      $region15: #{unet_forward.19} parent=11 // pred_region
        _
      $region16: #{unet_forward.19} parent=11 // pred_fallthru
        _
    $region12: #{unet_forward.19} parent=5 // pred_fallthru
      _
    %p99 = scmp.lt.s32.totalorder %s8, 2
    // Predicated region
    $region17: #{unet_forward.19} parent=5 // pred_check
      %p100 = pneg %p99
    $region18: #{unet_forward.19} parent=5 // pred_check_branch
      %102 = sbr.rel (%p100) target = $region20
    $region19: #{unet_forward.19} parent=5 // pred_region
      // Predicated region
      $region21: #{unet_forward.19} parent=19 // pred_check
        %p103 = pneg %p28
      $region22: #{unet_forward.19} parent=19 // pred_check_branch
        %105 = sbr.rel (%p103) target = $region24
      $region23: #{unet_forward.19} parent=19 // pred_region
        %p106 = scmp.lt.s32.totalorder %s8, 1
        %s107 = scalar_select %p106, %s8, 1
        %s108 = smul.addr %s107, 32
        %s109 = smul.addr %s108, 8
        %s110 = scalar_lea.vmem %s0, %s109
      $region24: #{unet_forward.19} parent=19 // pred_fallthru
        _
    $region20: #{unet_forward.19} parent=5 // pred_fallthru
      _
    %p111 = scmp.le.s32.totalorder 1, %s8
    %p112 = scmp.lt.s32.totalorder %s8, 3
    %p113 = pnand %p111, %p112
    %p114 = pneg %p113
    // Predicated region
    $region25: #{unet_forward.19} parent=5 // pred_check
      _
    $region26: #{unet_forward.19} parent=5 // pred_check_branch
      %116 = sbr.rel (%p113) target = $region28
    $region27: #{unet_forward.19} parent=5 // pred_region
      %s117 = ssub.s32 %s8, 1
      %p118 = scmp.lt.s32.totalorder %s13, 1
      %s119 = scalar_select %p118, %s13, 1
      %s120 = smul.addr %s119, 32
      %s121 = smul.addr %s120, 8
      %s122 = scalar_lea.vmem %s0, %s121
      %p123 = pneg %p34
      %p124 = pneg %p31
      %p125 = pneg %p55
      %p126 = pneg %p52
      %p127 = pneg %p81
      %p128 = pneg %p78
      %p129 = scmp.lt.s32.totalorder %s13, 1
      %s130 = scalar_select %p129, %s13, 1
      %s131 = smul.addr %s130, 32
      %s132 = smul.addr %s131, 8
      %s133 = scalar_lea.vmem %s2, %s132
      %p134 = scmp.lt.s32.totalorder %s13, 1
      %s135 = scalar_select %p134, %s13, 1
      %s136 = smul.addr %s135, 32
      %s137 = smul.addr %s136, 8
      %s138 = scalar_lea.vmem %s0, %s137
      %p139 = scmp.lt.s32.totalorder %s13, 1
      %s140 = scalar_select %p139, %s13, 1
      %s141 = smul.addr %s140, 32
      %s142 = smul.addr %s141, 8
      %s143 = scalar_lea.vmem %s2, %s142
      %v144 = vld [vmem:[%s138] sm:$0xff]
      %v145 = vld [vmem:[%s138 + $0x8] sm:$0xff]
      %v146 = vld [vmem:[%s138 + $0x10] sm:$0xff]
      %v147 = vld [vmem:[%s138 + $0x18] sm:$0xff]
      %v148 = vld [vmem:[%s138 + $0x20] sm:$0xff]
      %v149 = vld [vmem:[%s138 + $0x28] sm:$0xff]
      %v150 = vld [vmem:[%s138 + $0x30] sm:$0xff]
      %v151 = vld [vmem:[%s138 + $0x38] sm:$0xff]
      %v152 = vld [vmem:[%s138 + $0x40] sm:$0xff]
      %v153 = vld [vmem:[%s138 + $0x48] sm:$0xff]
      %v154 = vld [vmem:[%s138 + $0x50] sm:$0xff]
      %v155 = vld [vmem:[%s138 + $0x58] sm:$0xff]
      %v156 = vld [vmem:[%s138 + $0x60] sm:$0xff]
      %v157 = vld [vmem:[%s138 + $0x68] sm:$0xff]
      %v158 = vld [vmem:[%s138 + $0x70] sm:$0xff]
      %v159 = vld [vmem:[%s138 + $0x78] sm:$0xff]
      %v160 = vld [vmem:[%s138 + $0x80] sm:$0xff]
      %v161 = vld [vmem:[%s138 + $0x88] sm:$0xff]
      %v162 = vld [vmem:[%s138 + $0x90] sm:$0xff]
      %v163 = vld [vmem:[%s138 + $0x98] sm:$0xff]
      %v164 = vld [vmem:[%s138 + $0xa0] sm:$0xff]
      %v165 = vld [vmem:[%s138 + $0xa8] sm:$0xff]
      %v166 = vld [vmem:[%s138 + $0xb0] sm:$0xff]
      %v167 = vld [vmem:[%s138 + $0xb8] sm:$0xff]
      %v168 = vld [vmem:[%s138 + $0xc0] sm:$0xff]
      %v169 = vld [vmem:[%s138 + $0xc8] sm:$0xff]
      %v170 = vld [vmem:[%s138 + $0xd0] sm:$0xff]
      %v171 = vld [vmem:[%s138 + $0xd8] sm:$0xff]
      %v172 = vld [vmem:[%s138 + $0xe0] sm:$0xff]
      %v173 = vld [vmem:[%s138 + $0xe8] sm:$0xff]
      %v174 = vld [vmem:[%s138 + $0xf0] sm:$0xff]
      %v175 = vld [vmem:[%s138 + $0xf8] sm:$0xff]
      %v176 = vld [vmem:[%s1] sm:$0xff]
      %v177 = vld [vmem:[%s1 + $0x8] sm:$0xff]
      %v178 = vld [vmem:[%s1 + $0x10] sm:$0xff]
      %v179 = vld [vmem:[%s1 + $0x18] sm:$0xff]
      %v180 = vld [vmem:[%s1 + $0x20] sm:$0xff]
      %v181 = vld [vmem:[%s1 + $0x28] sm:$0xff]
      %v182 = vld [vmem:[%s1 + $0x30] sm:$0xff]
      %v183 = vld [vmem:[%s1 + $0x38] sm:$0xff]
      %v184 = vld [vmem:[%s1 + $0x40] sm:$0xff]
      %vm185 = vcmask 588800
      %v187 = vsel %vm185, %v144, 0
      %v190 = vsel %vm185, %v145, 0
      %v193 = vsel %vm185, %v146, 0
      %v196 = vsel %vm185, %v147, 0
      %v199 = vsel %vm185, %v148, 0
      %v202 = vsel %vm185, %v149, 0
      %v205 = vsel %vm185, %v150, 0
      %v208 = vsel %vm185, %v151, 0
      %v211 = vsel %vm185, %v152, 0
      %v214 = vsel %vm185, %v153, 0
      %v217 = vsel %vm185, %v154, 0
      %v220 = vsel %vm185, %v155, 0
      %v223 = vsel %vm185, %v156, 0
      %v226 = vsel %vm185, %v157, 0
      %v229 = vsel %vm185, %v158, 0
      %v232 = vsel %vm185, %v159, 0
      %v235 = vsel %vm185, %v160, 0
      %v238 = vsel %vm185, %v161, 0
      %v241 = vsel %vm185, %v162, 0
      %v244 = vsel %vm185, %v163, 0
      %v247 = vsel %vm185, %v164, 0
      %v250 = vsel %vm185, %v165, 0
      %v253 = vsel %vm185, %v166, 0
      %v256 = vsel %vm185, %v167, 0
      %v259 = vsel %vm185, %v168, 0
      %v262 = vsel %vm185, %v169, 0
      %v265 = vsel %vm185, %v170, 0
      %v268 = vsel %vm185, %v171, 0
      %v271 = vsel %vm185, %v172, 0
      %v274 = vsel %vm185, %v173, 0
      %v277 = vsel %vm185, %v174, 0
      %v280 = vsel %vm185, %v175, 0
      %282 = vmatprep.subr.mxu0 0.0
      %283 = vmatpush1.msra.mxu0 %v176
      %284 = vmatprep.subr.mxu0 0.0
      %285 = vmatpush1.msra.mxu0 %v177
      %286 = vmatprep.subr.mxu0 0.0
      %287 = vmatpush1.msra.mxu0 %v178
      %288 = vmatprep.subr.mxu0 0.0
      %289 = vmatpush1.msra.mxu0 %v179
      %290 = vmatprep.subr.mxu0 0.0
      %291 = vmatpush1.msra.mxu0 %v180
      %292 = vmatprep.subr.mxu0 0.0
      %293 = vmatpush1.msra.mxu0 %v181
      %294 = vmatprep.subr.mxu0 0.0
      %295 = vmatpush1.msra.mxu0 %v182
      %296 = vmatprep.subr.mxu0 0.0
      %297 = vmatpush1.msra.mxu0 %v183
      %298 = vmatprep.subr.mxu0 0.0
      %299 = vmatpush1.msra.mxu0 %v184
      %300 = vmatprep.subr.mxu0 0.0
      %301 = vmatpush1.msra.mxu0 0.0
      %302 = vmatprep.subr.mxu0 0.0
      %303 = vmatpush1.msra.mxu0 0.0
      %304 = vmatprep.subr.mxu0 0.0
      %305 = vmatpush1.msra.mxu0 0.0
      %306 = vmatprep.subr.mxu0 0.0
      %307 = vmatpush1.msra.mxu0 0.0
      %308 = vmatprep.subr.mxu0 0.0
      %309 = vmatpush1.msra.mxu0 0.0
      %310 = vmatprep.subr.mxu0 0.0
      %311 = vmatpush1.msra.mxu0 0.0
      %312 = vmatprep.subr.mxu0 0.0
      %313 = vmatpush1.msra.mxu0 0.0
      %314 = vmatprep.subr.mxu0 0.0
      %315 = vmatpush1.msra.mxu0 0.0
      %316 = vmatprep.subr.mxu0 0.0
      %317 = vmatpush1.msra.mxu0 0.0
      %318 = vmatprep.subr.mxu0 0.0
      %319 = vmatpush1.msra.mxu0 0.0
      %320 = vmatprep.subr.mxu0 0.0
      %321 = vmatpush1.msra.mxu0 0.0
      %322 = vmatprep.subr.mxu0 0.0
      %323 = vmatpush1.msra.mxu0 0.0
      %324 = vmatprep.subr.mxu0 0.0
      %325 = vmatpush1.msra.mxu0 0.0
      %326 = vmatprep.subr.mxu0 0.0
      %327 = vmatpush1.msra.mxu0 0.0
      %328 = vmatprep.subr.mxu0 0.0
      %329 = vmatpush1.msra.mxu0 0.0
      %330 = vmatprep.subr.mxu0 0.0
      %331 = vmatpush1.msra.mxu0 0.0
      %332 = vmatprep.subr.mxu0 0.0
      %333 = vmatpush1.msra.mxu0 0.0
      %334 = vmatprep.subr.mxu0 0.0
      %335 = vmatpush1.msra.mxu0 0.0
      %336 = vmatprep.subr.mxu0 0.0
      %337 = vmatpush1.msra.mxu0 0.0
      %338 = vmatprep.subr.mxu0 0.0
      %339 = vmatpush1.msra.mxu0 0.0
      %340 = vmatprep.subr.mxu0 0.0
      %341 = vmatpush1.msra.mxu0 0.0
      %342 = vmatprep.subr.mxu0 0.0
      %343 = vmatpush1.msra.mxu0 0.0
      %344 = vmatprep.subr.mxu0 0.0
      %345 = vmatpush1.msra.mxu0 0.0
      %346 = vmatprep.mubr.f32.mxu0 0.0
      %347 = vmatmul.mubr.f32.gmra.mrb[0].mxu0 %v187
      %v348 = vpop.f32.mrb[0].mxu0
      %v349 = vadd.f32 0.0, %v348
      %v350 = vpop.f32.mrb[0].mxu0
      %351 = vmatprep.mubr.f32.mxu0 0.0
      %352 = vmatmul.mubr.f32.gmra.mrb[0].mxu0 %v190
      %v353 = vpop.f32.mrb[0].mxu0
      %v354 = vadd.f32 0.0, %v353
      %v355 = vpop.f32.mrb[0].mxu0
      %356 = vmatprep.mubr.f32.mxu0 0.0
      %357 = vmatmul.mubr.f32.gmra.mrb[0].mxu0 %v193
      %v358 = vpop.f32.mrb[0].mxu0
      %v359 = vadd.f32 0.0, %v358
      %v360 = vpop.f32.mrb[0].mxu0
      %361 = vmatprep.mubr.f32.mxu0 0.0
      %362 = vmatmul.mubr.f32.gmra.mrb[0].mxu0 %v196
      %v363 = vpop.f32.mrb[0].mxu0
      %v364 = vadd.f32 0.0, %v363
      %v365 = vpop.f32.mrb[0].mxu0
      %366 = vmatprep.mubr.f32.mxu0 0.0
      %367 = vmatmul.mubr.f32.gmra.mrb[0].mxu0 %v199
      %v368 = vpop.f32.mrb[0].mxu0
      %v369 = vadd.f32 0.0, %v368
      %v370 = vpop.f32.mrb[0].mxu0
      %371 = vmatprep.mubr.f32.mxu0 0.0
      %372 = vmatmul.mubr.f32.gmra.mrb[0].mxu0 %v202
      %v373 = vpop.f32.mrb[0].mxu0
      %v374 = vadd.f32 0.0, %v373
      %v375 = vpop.f32.mrb[0].mxu0
      %376 = vmatprep.mubr.f32.mxu0 0.0
      %377 = vmatmul.mubr.f32.gmra.mrb[0].mxu0 %v205
      %v378 = vpop.f32.mrb[0].mxu0
      %v379 = vadd.f32 0.0, %v378
      %v380 = vpop.f32.mrb[0].mxu0
      %381 = vmatprep.mubr.f32.mxu0 0.0
      %382 = vmatmul.mubr.f32.gmra.mrb[0].mxu0 %v208
      %v383 = vpop.f32.mrb[0].mxu0
      %v384 = vadd.f32 0.0, %v383
      %v385 = vpop.f32.mrb[0].mxu0
      %386 = vmatprep.mubr.f32.mxu0 0.0
      %387 = vmatmul.mubr.f32.gmra.mrb[0].mxu0 %v211
      %v388 = vpop.f32.mrb[0].mxu0
      %v389 = vadd.f32 0.0, %v388
      %v390 = vpop.f32.mrb[0].mxu0
      %391 = vmatprep.mubr.f32.mxu0 0.0
      %392 = vmatmul.mubr.f32.gmra.mrb[0].mxu0 %v214
      %v393 = vpop.f32.mrb[0].mxu0
      %v394 = vadd.f32 0.0, %v393
      %v395 = vpop.f32.mrb[0].mxu0
      %396 = vmatprep.mubr.f32.mxu0 0.0
      %397 = vmatmul.mubr.f32.gmra.mrb[0].mxu0 %v217
      %v398 = vpop.f32.mrb[0].mxu0
      %v399 = vadd.f32 0.0, %v398
      %v400 = vpop.f32.mrb[0].mxu0
      %401 = vmatprep.mubr.f32.mxu0 0.0
      %402 = vmatmul.mubr.f32.gmra.mrb[0].mxu0 %v220
      %v403 = vpop.f32.mrb[0].mxu0
      %v404 = vadd.f32 0.0, %v403
      %v405 = vpop.f32.mrb[0].mxu0
      %406 = vmatprep.mubr.f32.mxu0 0.0
      %407 = vmatmul.mubr.f32.gmra.mrb[0].mxu0 %v223
      %v408 = vpop.f32.mrb[0].mxu0
      %v409 = vadd.f32 0.0, %v408
      %v410 = vpop.f32.mrb[0].mxu0
      %411 = vmatprep.mubr.f32.mxu0 0.0
      %412 = vmatmul.mubr.f32.gmra.mrb[0].mxu0 %v226
      %v413 = vpop.f32.mrb[0].mxu0
      %v414 = vadd.f32 0.0, %v413
      %v415 = vpop.f32.mrb[0].mxu0
      %416 = vmatprep.mubr.f32.mxu0 0.0
      %417 = vmatmul.mubr.f32.gmra.mrb[0].mxu0 %v229
      %v418 = vpop.f32.mrb[0].mxu0
      %v419 = vadd.f32 0.0, %v418
      %v420 = vpop.f32.mrb[0].mxu0
      %421 = vmatprep.mubr.f32.mxu0 0.0
      %422 = vmatmul.mubr.f32.gmra.mrb[0].mxu0 %v232
      %v423 = vpop.f32.mrb[0].mxu0
      %v424 = vadd.f32 0.0, %v423
      %v425 = vpop.f32.mrb[0].mxu0
      %426 = vmatprep.mubr.f32.mxu0 0.0
      %427 = vmatmul.mubr.f32.gmra.mrb[0].mxu0 %v235
      %v428 = vpop.f32.mrb[0].mxu0
      %v429 = vadd.f32 0.0, %v428
      %v430 = vpop.f32.mrb[0].mxu0
      %431 = vmatprep.mubr.f32.mxu0 0.0
      %432 = vmatmul.mubr.f32.gmra.mrb[0].mxu0 %v238
      %v433 = vpop.f32.mrb[0].mxu0
      %v434 = vadd.f32 0.0, %v433
      %v435 = vpop.f32.mrb[0].mxu0
      %436 = vmatprep.mubr.f32.mxu0 0.0
      %437 = vmatmul.mubr.f32.gmra.mrb[0].mxu0 %v241
      %v438 = vpop.f32.mrb[0].mxu0
      %v439 = vadd.f32 0.0, %v438
      %v440 = vpop.f32.mrb[0].mxu0
      %441 = vmatprep.mubr.f32.mxu0 0.0
      %442 = vmatmul.mubr.f32.gmra.mrb[0].mxu0 %v244
      %v443 = vpop.f32.mrb[0].mxu0
      %v444 = vadd.f32 0.0, %v443
      %v445 = vpop.f32.mrb[0].mxu0
      %446 = vmatprep.mubr.f32.mxu0 0.0
      %447 = vmatmul.mubr.f32.gmra.mrb[0].mxu0 %v247
      %v448 = vpop.f32.mrb[0].mxu0
      %v449 = vadd.f32 0.0, %v448
      %v450 = vpop.f32.mrb[0].mxu0
      %451 = vmatprep.mubr.f32.mxu0 0.0
      %452 = vmatmul.mubr.f32.gmra.mrb[0].mxu0 %v250
      %v453 = vpop.f32.mrb[0].mxu0
      %v454 = vadd.f32 0.0, %v453
      %v455 = vpop.f32.mrb[0].mxu0
      %456 = vmatprep.mubr.f32.mxu0 0.0
      %457 = vmatmul.mubr.f32.gmra.mrb[0].mxu0 %v253
      %v458 = vpop.f32.mrb[0].mxu0
      %v459 = vadd.f32 0.0, %v458
      %v460 = vpop.f32.mrb[0].mxu0
      %461 = vmatprep.mubr.f32.mxu0 0.0
      %462 = vmatmul.mubr.f32.gmra.mrb[0].mxu0 %v256
      %v463 = vpop.f32.mrb[0].mxu0
      %v464 = vadd.f32 0.0, %v463
      %v465 = vpop.f32.mrb[0].mxu0
      %466 = vmatprep.mubr.f32.mxu0 0.0
      %467 = vmatmul.mubr.f32.gmra.mrb[0].mxu0 %v259
      %v468 = vpop.f32.mrb[0].mxu0
      %v469 = vadd.f32 0.0, %v468
      %v470 = vpop.f32.mrb[0].mxu0
      %471 = vmatprep.mubr.f32.mxu0 0.0
      %472 = vmatmul.mubr.f32.gmra.mrb[0].mxu0 %v262
      %v473 = vpop.f32.mrb[0].mxu0
      %v474 = vadd.f32 0.0, %v473
      %v475 = vpop.f32.mrb[0].mxu0
      %476 = vmatprep.mubr.f32.mxu0 0.0
      %477 = vmatmul.mubr.f32.gmra.mrb[0].mxu0 %v265
      %v478 = vpop.f32.mrb[0].mxu0
      %v479 = vadd.f32 0.0, %v478
      %v480 = vpop.f32.mrb[0].mxu0
      %481 = vmatprep.mubr.f32.mxu0 0.0
      %482 = vmatmul.mubr.f32.gmra.mrb[0].mxu0 %v268
      %v483 = vpop.f32.mrb[0].mxu0
      %v484 = vadd.f32 0.0, %v483
      %v485 = vpop.f32.mrb[0].mxu0
      %486 = vmatprep.mubr.f32.mxu0 0.0
      %487 = vmatmul.mubr.f32.gmra.mrb[0].mxu0 %v271
      %v488 = vpop.f32.mrb[0].mxu0
      %v489 = vadd.f32 0.0, %v488
      %v490 = vpop.f32.mrb[0].mxu0
      %491 = vmatprep.mubr.f32.mxu0 0.0
      %492 = vmatmul.mubr.f32.gmra.mrb[0].mxu0 %v274
      %v493 = vpop.f32.mrb[0].mxu0
      %v494 = vadd.f32 0.0, %v493
      %v495 = vpop.f32.mrb[0].mxu0
      %496 = vmatprep.mubr.f32.mxu0 0.0
      %497 = vmatmul.mubr.f32.gmra.mrb[0].mxu0 %v277
      %v498 = vpop.f32.mrb[0].mxu0
      %v499 = vadd.f32 0.0, %v498
      %v500 = vpop.f32.mrb[0].mxu0
      %501 = vmatprep.mubr.f32.mxu0 0.0
      %502 = vmatmul.mubr.f32.gmra.mrb[0].mxu0 %v280
      %v503 = vpop.f32.mrb[0].mxu0
      %v504 = vadd.f32 0.0, %v503
      %v505 = vpop.f32.mrb[0].mxu0
      %506 = vdwg.mxu0
      %vm507 = vcmask 64512
      %v508 = vsel %vm507, %v349, 0.0
      %v509 = vsel %vm507, %v354, 0.0
      %v510 = vadd.f32 %v508, %v509
      %v511 = vsel %vm507, %v359, 0.0
      %v512 = vadd.f32 %v510, %v511
      %v513 = vsel %vm507, %v364, 0.0
      %v514 = vadd.f32 %v512, %v513
      %v515 = vsel %vm507, %v369, 0.0
      %v516 = vadd.f32 %v514, %v515
      %v517 = vsel %vm507, %v374, 0.0
      %v518 = vadd.f32 %v516, %v517
      %v519 = vsel %vm507, %v379, 0.0
      %v520 = vadd.f32 %v518, %v519
      %v521 = vsel %vm507, %v384, 0.0
      %v522 = vadd.f32 %v520, %v521
      %v523 = vsel %vm507, %v389, 0.0
      %v524 = vadd.f32 %v522, %v523
      %v525 = vsel %vm507, %v394, 0.0
      %v526 = vadd.f32 %v524, %v525
      %v527 = vsel %vm507, %v399, 0.0
      %v528 = vadd.f32 %v526, %v527
      %v529 = vsel %vm507, %v404, 0.0
      %v530 = vadd.f32 %v528, %v529
      %v531 = vsel %vm507, %v409, 0.0
      %v532 = vadd.f32 %v530, %v531
      %v533 = vsel %vm507, %v414, 0.0
      %v534 = vadd.f32 %v532, %v533
      %v535 = vsel %vm507, %v419, 0.0
      %v536 = vadd.f32 %v534, %v535
      %v537 = vsel %vm507, %v424, 0.0
      %v538 = vadd.f32 %v536, %v537
      %v539 = vsel %vm507, %v429, 0.0
      %v540 = vadd.f32 %v538, %v539
      %v541 = vsel %vm507, %v434, 0.0
      %v542 = vadd.f32 %v540, %v541
      %v543 = vsel %vm507, %v439, 0.0
      %v544 = vadd.f32 %v542, %v543
      %v545 = vsel %vm507, %v444, 0.0
      %v546 = vadd.f32 %v544, %v545
      %v547 = vsel %vm507, %v449, 0.0
      %v548 = vadd.f32 %v546, %v547
      %v549 = vsel %vm507, %v454, 0.0
      %v550 = vadd.f32 %v548, %v549
      %v551 = vsel %vm507, %v459, 0.0
      %v552 = vadd.f32 %v550, %v551
      %v553 = vsel %vm507, %v464, 0.0
      %v554 = vadd.f32 %v552, %v553
      %v555 = vsel %vm507, %v469, 0.0
      %v556 = vadd.f32 %v554, %v555
      %v557 = vsel %vm507, %v474, 0.0
      %v558 = vadd.f32 %v556, %v557
      %v559 = vsel %vm507, %v479, 0.0
      %v560 = vadd.f32 %v558, %v559
      %v561 = vsel %vm507, %v484, 0.0
      %v562 = vadd.f32 %v560, %v561
      %v563 = vsel %vm507, %v489, 0.0
      %v564 = vadd.f32 %v562, %v563
      %v565 = vsel %vm507, %v494, 0.0
      %v566 = vadd.f32 %v564, %v565
      %v567 = vsel %vm507, %v499, 0.0
      %v568 = vadd.f32 %v566, %v567
      %v569 = vsel %vm507, %v504, 0.0
      %v570 = vadd.f32 %v568, %v569
      %v571 = vrot.slane %v570, 4
      %v572 = vadd.f32 %v570, %v571
      %v573 = vrot.slane %v572, 2
      %v574 = vadd.f32 %v572, %v573
      %v575 = vrot.slane %v574, 1
      %v576 = vadd.f32 %v574, %v575
      %v577 = vmul.f32 %v349, %v349
      %v578 = vmul.f32 %v354, %v354
      %v579 = vmul.f32 %v359, %v359
      %v580 = vmul.f32 %v364, %v364
      %v581 = vmul.f32 %v369, %v369
      %v582 = vmul.f32 %v374, %v374
      %v583 = vmul.f32 %v379, %v379
      %v584 = vmul.f32 %v384, %v384
      %v585 = vmul.f32 %v389, %v389
      %v586 = vmul.f32 %v394, %v394
      %v587 = vmul.f32 %v399, %v399
      %v588 = vmul.f32 %v404, %v404
      %v589 = vmul.f32 %v409, %v409
      %v590 = vmul.f32 %v414, %v414
      %v591 = vmul.f32 %v419, %v419
      %v592 = vmul.f32 %v424, %v424
      %v593 = vmul.f32 %v429, %v429
      %v594 = vmul.f32 %v434, %v434
      %v595 = vmul.f32 %v439, %v439
      %v596 = vmul.f32 %v444, %v444
      %v597 = vmul.f32 %v449, %v449
      %v598 = vmul.f32 %v454, %v454
      %v599 = vmul.f32 %v459, %v459
      %v600 = vmul.f32 %v464, %v464
      %v601 = vmul.f32 %v469, %v469
      %v602 = vmul.f32 %v474, %v474
      %v603 = vmul.f32 %v479, %v479
      %v604 = vmul.f32 %v484, %v484
      %v605 = vmul.f32 %v489, %v489
      %v606 = vmul.f32 %v494, %v494
      %v607 = vmul.f32 %v499, %v499
      %v608 = vmul.f32 %v504, %v504
      %v609 = vsel %vm507, %v577, 0.0
      %v610 = vsel %vm507, %v578, 0.0
      %v611 = vadd.f32 %v609, %v610
      %v612 = vsel %vm507, %v579, 0.0
      %v613 = vadd.f32 %v611, %v612
      %v614 = vsel %vm507, %v580, 0.0
      %v615 = vadd.f32 %v613, %v614
      %v616 = vsel %vm507, %v581, 0.0
      %v617 = vadd.f32 %v615, %v616
      %v618 = vsel %vm507, %v582, 0.0
      %v619 = vadd.f32 %v617, %v618
      %v620 = vsel %vm507, %v583, 0.0
      %v621 = vadd.f32 %v619, %v620
      %v622 = vsel %vm507, %v584, 0.0
      %v623 = vadd.f32 %v621, %v622
      %v624 = vsel %vm507, %v585, 0.0
      %v625 = vadd.f32 %v623, %v624
      %v626 = vsel %vm507, %v586, 0.0
      %v627 = vadd.f32 %v625, %v626
      %v628 = vsel %vm507, %v587, 0.0
      %v629 = vadd.f32 %v627, %v628
      %v630 = vsel %vm507, %v588, 0.0
      %v631 = vadd.f32 %v629, %v630
      %v632 = vsel %vm507, %v589, 0.0
      %v633 = vadd.f32 %v631, %v632
      %v634 = vsel %vm507, %v590, 0.0
      %v635 = vadd.f32 %v633, %v634
      %v636 = vsel %vm507, %v591, 0.0
      %v637 = vadd.f32 %v635, %v636
      %v638 = vsel %vm507, %v592, 0.0
      %v639 = vadd.f32 %v637, %v638
      %v640 = vsel %vm507, %v593, 0.0
      %v641 = vadd.f32 %v639, %v640
      %v642 = vsel %vm507, %v594, 0.0
      %v643 = vadd.f32 %v641, %v642
      %v644 = vsel %vm507, %v595, 0.0
      %v645 = vadd.f32 %v643, %v644
      %v646 = vsel %vm507, %v596, 0.0
      %v647 = vadd.f32 %v645, %v646
      %v648 = vsel %vm507, %v597, 0.0
      %v649 = vadd.f32 %v647, %v648
      %v650 = vsel %vm507, %v598, 0.0
      %v651 = vadd.f32 %v649, %v650
      %v652 = vsel %vm507, %v599, 0.0
      %v653 = vadd.f32 %v651, %v652
      %v654 = vsel %vm507, %v600, 0.0
      %v655 = vadd.f32 %v653, %v654
      %v656 = vsel %vm507, %v601, 0.0
      %v657 = vadd.f32 %v655, %v656
      %v658 = vsel %vm507, %v602, 0.0
      %v659 = vadd.f32 %v657, %v658
      %v660 = vsel %vm507, %v603, 0.0
      %v661 = vadd.f32 %v659, %v660
      %v662 = vsel %vm507, %v604, 0.0
      %v663 = vadd.f32 %v661, %v662
      %v664 = vsel %vm507, %v605, 0.0
      %v665 = vadd.f32 %v663, %v664
      %v666 = vsel %vm507, %v606, 0.0
      %v667 = vadd.f32 %v665, %v666
      %v668 = vsel %vm507, %v607, 0.0
      %v669 = vadd.f32 %v667, %v668
      %v670 = vsel %vm507, %v608, 0.0
      %v671 = vadd.f32 %v669, %v670
      %v672 = vrot.slane %v671, 4
      %v673 = vadd.f32 %v671, %v672
      %v674 = vrot.slane %v673, 2
      %v675 = vadd.f32 %v673, %v674
      %v676 = vrot.slane %v675, 1
      %v677 = vadd.f32 %v675, %v676
      %v678 = vrcp.pop 256.0
      %v679 = vmul.f32 %v576, %v678
      %v680 = vmul.f32 %v677, %v678
      %v681 = vmul.f32 %v679, %v679
      %v682 = vsub.f32 %v680, %v681
      %v683 = vadd.f32 %v682, 1e-05
      %v684 = vrsqrt.pop %v683
      %v685 = vsub.f32 0.0, %v679
      %v686 = vmul.f32 %v685, %v684
      %v687 = vmul.f32 %v349, %v684
      %v688 = vmul.f32 %v354, %v684
      %v689 = vmul.f32 %v359, %v684
      %v690 = vmul.f32 %v364, %v684
      %v691 = vmul.f32 %v369, %v684
      %v692 = vmul.f32 %v374, %v684
      %v693 = vmul.f32 %v379, %v684
      %v694 = vmul.f32 %v384, %v684
      %v695 = vmul.f32 %v389, %v684
      %v696 = vmul.f32 %v394, %v684
      %v697 = vmul.f32 %v399, %v684
      %v698 = vmul.f32 %v404, %v684
      %v699 = vmul.f32 %v409, %v684
      %v700 = vmul.f32 %v414, %v684
      %v701 = vmul.f32 %v419, %v684
      %v702 = vmul.f32 %v424, %v684
      %v703 = vmul.f32 %v429, %v684
      %v704 = vmul.f32 %v434, %v684
      %v705 = vmul.f32 %v439, %v684
      %v706 = vmul.f32 %v444, %v684
      %v707 = vmul.f32 %v449, %v684
      %v708 = vmul.f32 %v454, %v684
      %v709 = vmul.f32 %v459, %v684
      %v710 = vmul.f32 %v464, %v684
      %v711 = vmul.f32 %v469, %v684
      %v712 = vmul.f32 %v474, %v684
      %v713 = vmul.f32 %v479, %v684
      %v714 = vmul.f32 %v484, %v684
      %v715 = vmul.f32 %v489, %v684
      %v716 = vmul.f32 %v494, %v684
      %v717 = vmul.f32 %v499, %v684
      %v718 = vmul.f32 %v504, %v684
      %v719 = vadd.f32 %v687, %v686
      %v720 = vadd.f32 %v688, %v686
      %v721 = vadd.f32 %v689, %v686
      %v722 = vadd.f32 %v690, %v686
      %v723 = vadd.f32 %v691, %v686
      %v724 = vadd.f32 %v692, %v686
      %v725 = vadd.f32 %v693, %v686
      %v726 = vadd.f32 %v694, %v686
      %v727 = vadd.f32 %v695, %v686
      %v728 = vadd.f32 %v696, %v686
      %v729 = vadd.f32 %v697, %v686
      %v730 = vadd.f32 %v698, %v686
      %v731 = vadd.f32 %v699, %v686
      %v732 = vadd.f32 %v700, %v686
      %v733 = vadd.f32 %v701, %v686
      %v734 = vadd.f32 %v702, %v686
      %v735 = vadd.f32 %v703, %v686
      %v736 = vadd.f32 %v704, %v686
      %v737 = vadd.f32 %v705, %v686
      %v738 = vadd.f32 %v706, %v686
      %v739 = vadd.f32 %v707, %v686
      %v740 = vadd.f32 %v708, %v686
      %v741 = vadd.f32 %v709, %v686
      %v742 = vadd.f32 %v710, %v686
      %v743 = vadd.f32 %v711, %v686
      %v744 = vadd.f32 %v712, %v686
      %v745 = vadd.f32 %v713, %v686
      %v746 = vadd.f32 %v714, %v686
      %v747 = vadd.f32 %v715, %v686
      %v748 = vadd.f32 %v716, %v686
      %v749 = vadd.f32 %v717, %v686
      %v750 = vadd.f32 %v718, %v686
      %vm751 = vcmp.ge.f32.partialorder %v719, 0.0
      %vm752 = vcmp.ge.f32.partialorder %v720, 0.0
      %vm753 = vcmp.ge.f32.partialorder %v721, 0.0
      %vm754 = vcmp.ge.f32.partialorder %v722, 0.0
      %vm755 = vcmp.ge.f32.partialorder %v723, 0.0
      %vm756 = vcmp.ge.f32.partialorder %v724, 0.0
      %vm757 = vcmp.ge.f32.partialorder %v725, 0.0
      %vm758 = vcmp.ge.f32.partialorder %v726, 0.0
      %vm759 = vcmp.ge.f32.partialorder %v727, 0.0
      %vm760 = vcmp.ge.f32.partialorder %v728, 0.0
      %vm761 = vcmp.ge.f32.partialorder %v729, 0.0
      %vm762 = vcmp.ge.f32.partialorder %v730, 0.0
      %vm763 = vcmp.ge.f32.partialorder %v731, 0.0
      %vm764 = vcmp.ge.f32.partialorder %v732, 0.0
      %vm765 = vcmp.ge.f32.partialorder %v733, 0.0
      %vm766 = vcmp.ge.f32.partialorder %v734, 0.0
      %vm767 = vcmp.ge.f32.partialorder %v735, 0.0
      %vm768 = vcmp.ge.f32.partialorder %v736, 0.0
      %vm769 = vcmp.ge.f32.partialorder %v737, 0.0
      %vm770 = vcmp.ge.f32.partialorder %v738, 0.0
      %vm771 = vcmp.ge.f32.partialorder %v739, 0.0
      %vm772 = vcmp.ge.f32.partialorder %v740, 0.0
      %vm773 = vcmp.ge.f32.partialorder %v741, 0.0
      %vm774 = vcmp.ge.f32.partialorder %v742, 0.0
      %vm775 = vcmp.ge.f32.partialorder %v743, 0.0
      %vm776 = vcmp.ge.f32.partialorder %v744, 0.0
      %vm777 = vcmp.ge.f32.partialorder %v745, 0.0
      %vm778 = vcmp.ge.f32.partialorder %v746, 0.0
      %vm779 = vcmp.ge.f32.partialorder %v747, 0.0
      %vm780 = vcmp.ge.f32.partialorder %v748, 0.0
      %vm781 = vcmp.ge.f32.partialorder %v749, 0.0
      %vm782 = vcmp.ge.f32.partialorder %v750, 0.0
      %v783 = vmul.f32 %v719, 0.2
      %v784 = vmul.f32 %v720, 0.2
      %v785 = vmul.f32 %v721, 0.2
      %v786 = vmul.f32 %v722, 0.2
      %v787 = vmul.f32 %v723, 0.2
      %v788 = vmul.f32 %v724, 0.2
      %v789 = vmul.f32 %v725, 0.2
      %v790 = vmul.f32 %v726, 0.2
      %v791 = vmul.f32 %v727, 0.2
      %v792 = vmul.f32 %v728, 0.2
      %v793 = vmul.f32 %v729, 0.2
      %v794 = vmul.f32 %v730, 0.2
      %v795 = vmul.f32 %v731, 0.2
      %v796 = vmul.f32 %v732, 0.2
      %v797 = vmul.f32 %v733, 0.2
      %v798 = vmul.f32 %v734, 0.2
      %v799 = vmul.f32 %v735, 0.2
      %v800 = vmul.f32 %v736, 0.2
      %v801 = vmul.f32 %v737, 0.2
      %v802 = vmul.f32 %v738, 0.2
      %v803 = vmul.f32 %v739, 0.2
      %v804 = vmul.f32 %v740, 0.2
      %v805 = vmul.f32 %v741, 0.2
      %v806 = vmul.f32 %v742, 0.2
      %v807 = vmul.f32 %v743, 0.2
      %v808 = vmul.f32 %v744, 0.2
      %v809 = vmul.f32 %v745, 0.2
      %v810 = vmul.f32 %v746, 0.2
      %v811 = vmul.f32 %v747, 0.2
      %v812 = vmul.f32 %v748, 0.2
      %v813 = vmul.f32 %v749, 0.2
      %v814 = vmul.f32 %v750, 0.2
      %v815 = vsel %vm751, %v719, %v783
      %v816 = vsel %vm752, %v720, %v784
      %v817 = vsel %vm753, %v721, %v785
      %v818 = vsel %vm754, %v722, %v786
      %v819 = vsel %vm755, %v723, %v787
      %v820 = vsel %vm756, %v724, %v788
      %v821 = vsel %vm757, %v725, %v789
      %v822 = vsel %vm758, %v726, %v790
      %v823 = vsel %vm759, %v727, %v791
      %v824 = vsel %vm760, %v728, %v792
      %v825 = vsel %vm761, %v729, %v793
      %v826 = vsel %vm762, %v730, %v794
      %v827 = vsel %vm763, %v731, %v795
      %v828 = vsel %vm764, %v732, %v796
      %v829 = vsel %vm765, %v733, %v797
      %v830 = vsel %vm766, %v734, %v798
      %v831 = vsel %vm767, %v735, %v799
      %v832 = vsel %vm768, %v736, %v800
      %v833 = vsel %vm769, %v737, %v801
      %v834 = vsel %vm770, %v738, %v802
      %v835 = vsel %vm771, %v739, %v803
      %v836 = vsel %vm772, %v740, %v804
      %v837 = vsel %vm773, %v741, %v805
      %v838 = vsel %vm774, %v742, %v806
      %v839 = vsel %vm775, %v743, %v807
      %v840 = vsel %vm776, %v744, %v808
      %v841 = vsel %vm777, %v745, %v809
      %v842 = vsel %vm778, %v746, %v810
      %v843 = vsel %vm779, %v747, %v811
      %v844 = vsel %vm780, %v748, %v812
      %v845 = vsel %vm781, %v749, %v813
      %v846 = vsel %vm782, %v750, %v814
      %847 = vst.msk [vmem:[%s143] sm:$0xff] %vm507, %v815
      %848 = vst.msk [vmem:[%s143 + $0x8] sm:$0xff] %vm507, %v816
      %849 = vst.msk [vmem:[%s143 + $0x10] sm:$0xff] %vm507, %v817
      %850 = vst.msk [vmem:[%s143 + $0x18] sm:$0xff] %vm507, %v818
      %851 = vst.msk [vmem:[%s143 + $0x20] sm:$0xff] %vm507, %v819
      %852 = vst.msk [vmem:[%s143 + $0x28] sm:$0xff] %vm507, %v820
      %853 = vst.msk [vmem:[%s143 + $0x30] sm:$0xff] %vm507, %v821
      %854 = vst.msk [vmem:[%s143 + $0x38] sm:$0xff] %vm507, %v822
      %855 = vst.msk [vmem:[%s143 + $0x40] sm:$0xff] %vm507, %v823
      %856 = vst.msk [vmem:[%s143 + $0x48] sm:$0xff] %vm507, %v824
      %857 = vst.msk [vmem:[%s143 + $0x50] sm:$0xff] %vm507, %v825
      %858 = vst.msk [vmem:[%s143 + $0x58] sm:$0xff] %vm507, %v826
      %859 = vst.msk [vmem:[%s143 + $0x60] sm:$0xff] %vm507, %v827
      %860 = vst.msk [vmem:[%s143 + $0x68] sm:$0xff] %vm507, %v828
      %861 = vst.msk [vmem:[%s143 + $0x70] sm:$0xff] %vm507, %v829
      %862 = vst.msk [vmem:[%s143 + $0x78] sm:$0xff] %vm507, %v830
      %863 = vst.msk [vmem:[%s143 + $0x80] sm:$0xff] %vm507, %v831
      %864 = vst.msk [vmem:[%s143 + $0x88] sm:$0xff] %vm507, %v832
      %865 = vst.msk [vmem:[%s143 + $0x90] sm:$0xff] %vm507, %v833
      %866 = vst.msk [vmem:[%s143 + $0x98] sm:$0xff] %vm507, %v834
      %867 = vst.msk [vmem:[%s143 + $0xa0] sm:$0xff] %vm507, %v835
      %868 = vst.msk [vmem:[%s143 + $0xa8] sm:$0xff] %vm507, %v836
      %869 = vst.msk [vmem:[%s143 + $0xb0] sm:$0xff] %vm507, %v837
      %870 = vst.msk [vmem:[%s143 + $0xb8] sm:$0xff] %vm507, %v838
      %871 = vst.msk [vmem:[%s143 + $0xc0] sm:$0xff] %vm507, %v839
      %872 = vst.msk [vmem:[%s143 + $0xc8] sm:$0xff] %vm507, %v840
      %873 = vst.msk [vmem:[%s143 + $0xd0] sm:$0xff] %vm507, %v841
      %874 = vst.msk [vmem:[%s143 + $0xd8] sm:$0xff] %vm507, %v842
      %875 = vst.msk [vmem:[%s143 + $0xe0] sm:$0xff] %vm507, %v843
      %876 = vst.msk [vmem:[%s143 + $0xe8] sm:$0xff] %vm507, %v844
      %877 = vst.msk [vmem:[%s143 + $0xf0] sm:$0xff] %vm507, %v845
      %878 = vst.msk [vmem:[%s143 + $0xf8] sm:$0xff] %vm507, %v846
      %p879 = scmp.lt.s32.totalorder %s13, 1
      %s880 = scalar_select %p879, %s13, 1
      %s881 = smul.addr %s880, 32
      %s882 = smul.addr %s881, 8
      %s883 = scalar_lea.vmem %s2, %s882
      // Predicated region
      $region29: #{unet_forward.19} parent=27 // pred_check
        %p884 = pneg %p78
      $region30: #{unet_forward.19} parent=27 // pred_check_branch
        %886 = sbr.rel (%p884) target = $region32
      $region31: #{unet_forward.19} parent=27 // pred_region
        _
      $region32: #{unet_forward.19} parent=27 // pred_fallthru
        _
    $region28: #{unet_forward.19} parent=5 // pred_fallthru
      _
    %p887 = scmp.le.s32.totalorder 2, %s8
    // Predicated region
    $region33: #{unet_forward.19} parent=5 // pred_check
      %p888 = pneg %p887
    $region34: #{unet_forward.19} parent=5 // pred_check_branch
      %890 = sbr.rel (%p888) target = $region36
    $region35: #{unet_forward.19} parent=5 // pred_region
      %s891 = ssub.s32 %s8, 2
      // Predicated region
      $region37: #{unet_forward.19} parent=35 // pred_check
        %p892 = pneg %p84
      $region38: #{unet_forward.19} parent=35 // pred_check_branch
        %894 = sbr.rel (%p892) target = $region40
      $region39: #{unet_forward.19} parent=35 // pred_region
        %p895 = scmp.lt.s32.totalorder %s14, 1
        %s896 = scalar_select %p895, %s14, 1
        %s897 = smul.addr %s896, 32
        %s898 = smul.addr %s897, 8
        %s899 = scalar_lea.vmem %s2, %s898
      $region40: #{unet_forward.19} parent=35 // pred_fallthru
        _
    $region36: #{unet_forward.19} parent=5 // pred_fallthru
      _
  $region6: #{unet_forward.19} parent=0 // loop_footer
    %s12 = sadd.s32 1, %s8
  $region7: #{unet_forward.19} parent=0 // loop_footer_branch
    %7 = sbr.rel target = $region3
  $region8: #{unet_forward.19} parent=0 // loop_exit
    _

// kernel: unet_forward.20
$region0: #{unet_forward.20}
  #allocation0 [shape = 'u32[]', space=smem, size = 0x4, offset = 0x4, fixed_abs, tag = 'smem constant byte address 0x4 - core index']
  #allocation1 [shape = 'u32[144,128]{1,0:T(1,128)}', space=vmem, size = 0x12000, scoped, tag = 'internal scratch']
  %s0 = inlined_call_operand.vmem [shape: f32[2,64,72], index: 0, kind: input, shape index: {}]
  %s1 = inlined_call_operand.vmem [shape: f32[72,16], index: 1, kind: input, shape index: {}]
  %s2 = inlined_call_operand.vmem [shape: f32[2,64,16], index: 2, kind: output, shape index: {}]
  %s3 = sld [smem:[#allocation0]]
  $region41: #{unet_forward.20} parent=0
    _
  %s5 = ssub.s32 1, %s3
  %s6 = scalar_select 0, %s5, %s3
  loop: start=0, step=1, limit=4
  $region2: #{unet_forward.20} parent=0 // loop_pre_header
    _
  $region3: #{unet_forward.20} parent=0 // loop_header
    %s8 = sphi 0, %s12
    %p9 = scmp.ge.s32.totalorder %s8, 4
    %s18 = sphi 0, %s20
    %s21 = sphi 0, %s18
    %s22 = sphi 0, %s21
    %s38 = sphi 0, %s22
    %s42 = sphi 0, %s42
    %s44 = sphi 0, %s42
    %s45 = sphi 0, %s44
    %s59 = sphi 0, %s45
    %s65 = sphi 0, %s67
    %s68 = sphi 0, %s65
    %s69 = sphi 0, %s68
    %s85 = sphi 0, %s69
  $region4: #{unet_forward.20} parent=0 // loop_header_branch
    %11 = sbr.rel (%p9) target = $region8
  $region5: #{unet_forward.20} parent=0 // loop_body
    %s13 = ssub.s32 %s8, 1
    %s14 = ssub.s32 %s8, 2
    %s15 = sadd.s32 %s8, 1
    %s16 = ssub.s32 %s8, %s15
    %p17 = scmp.eq.s32.totalorder %s16, 0
    %s19 = sadd.s32 %s18, 1
    %s20 = scalar_select %p17, %s18, %s19
    %p23 = pneg %p17
    %p24 = scmp.eq.s32.totalorder %s8, 1
    %p25 = por %p23, %p24
    %p26 = scmp.ne.s32.totalorder %s18, %s21
    %p27 = scmp.eq.s32.totalorder %s8, 0
    %p28 = por %p26, %p27
    %p29 = scmp.ne.s32.totalorder %s18, %s21
    %p30 = scmp.eq.s32.totalorder %s13, 1
    %p31 = por %p29, %p30
    %p32 = scmp.ne.s32.totalorder %s21, %s22
    %p33 = scmp.eq.s32.totalorder %s13, 0
    %p34 = por %p32, %p33
    %p35 = scmp.ne.s32.totalorder %s21, %s22
    %p36 = scmp.eq.s32.totalorder %s14, 1
    %p37 = por %p35, %p36
    %p39 = scmp.ne.s32.totalorder %s22, %s38
    %p40 = scmp.eq.s32.totalorder %s14, 0
    %p41 = por %p39, %p40
    %s43 = sadd.s32 %s42, 1
    %p46 = scmp.eq.s32.totalorder %s8, 1
    %p47 = scmp.ne.s32.totalorder %s42, %s44
    %p48 = scmp.eq.s32.totalorder %s8, 0
    %p49 = por %p47, %p48
    %p50 = scmp.ne.s32.totalorder %s42, %s44
    %p51 = scmp.eq.s32.totalorder %s13, 1
    %p52 = por %p50, %p51
    %p53 = scmp.ne.s32.totalorder %s44, %s45
    %p54 = scmp.eq.s32.totalorder %s13, 0
    %p55 = por %p53, %p54
    %p56 = scmp.ne.s32.totalorder %s44, %s45
    %p57 = scmp.eq.s32.totalorder %s14, 1
    %p58 = por %p56, %p57
    %p60 = scmp.ne.s32.totalorder %s45, %s59
    %p61 = scmp.eq.s32.totalorder %s14, 0
    %p62 = por %p60, %p61
    %s63 = ssub.s32 %s8, %s15
    %p64 = scmp.eq.s32.totalorder %s63, 0
    %s66 = sadd.s32 %s65, 1
    %s67 = scalar_select %p64, %s65, %s66
    %p70 = pneg %p64
    %p71 = scmp.eq.s32.totalorder %s8, 1
    %p72 = por %p70, %p71
    %p73 = scmp.ne.s32.totalorder %s65, %s68
    %p74 = scmp.eq.s32.totalorder %s8, 0
    %p75 = por %p73, %p74
    %p76 = scmp.ne.s32.totalorder %s65, %s68
    %p77 = scmp.eq.s32.totalorder %s13, 1
    %p78 = por %p76, %p77
    %p79 = scmp.ne.s32.totalorder %s68, %s69
    %p80 = scmp.eq.s32.totalorder %s13, 0
    %p81 = por %p79, %p80
    %p82 = scmp.ne.s32.totalorder %s68, %s69
    %p83 = scmp.eq.s32.totalorder %s14, 1
    %p84 = por %p82, %p83
    %p86 = scmp.ne.s32.totalorder %s69, %s85
    %p87 = scmp.eq.s32.totalorder %s14, 0
    %p88 = por %p86, %p87
    %p89 = scmp.le.s32.totalorder 1, %s8
    %p90 = scmp.lt.s32.totalorder %s8, 3
    %p91 = pnand %p89, %p90
    %p92 = pneg %p91
    // Predicated region
    $region9: #{unet_forward.20} parent=5 // pred_check
      _
    $region10: #{unet_forward.20} parent=5 // pred_check_branch
      %94 = sbr.rel (%p91) target = $region12
    $region11: #{unet_forward.20} parent=5 // pred_region
      %s95 = ssub.s32 %s8, 1
      // Predicated region
      $region13: #{unet_forward.20} parent=11 // pred_check
        %p96 = pneg %p55
      $region14: #{unet_forward.20} parent=11 // pred_check_branch
        %98 = sbr.rel (%p96) target = $region16
      $region15: #{unet_forward.20} parent=11 // pred_region
        _
      $region16: #{unet_forward.20} parent=11 // pred_fallthru
        _
    $region12: #{unet_forward.20} parent=5 // pred_fallthru
      _
    %p99 = scmp.lt.s32.totalorder %s8, 2
    // Predicated region
    $region17: #{unet_forward.20} parent=5 // pred_check
      %p100 = pneg %p99
    $region18: #{unet_forward.20} parent=5 // pred_check_branch
      %102 = sbr.rel (%p100) target = $region20
    $region19: #{unet_forward.20} parent=5 // pred_region
      // Predicated region
      $region21: #{unet_forward.20} parent=19 // pred_check
        %p103 = pneg %p28
      $region22: #{unet_forward.20} parent=19 // pred_check_branch
        %105 = sbr.rel (%p103) target = $region24
      $region23: #{unet_forward.20} parent=19 // pred_region
        %p106 = scmp.lt.s32.totalorder %s8, 1
        %s107 = scalar_select %p106, %s8, 1
        %s108 = smul.addr %s107, 8
        %s109 = smul.addr %s108, 8
        %s110 = scalar_lea.vmem %s0, %s109
      $region24: #{unet_forward.20} parent=19 // pred_fallthru
        _
    $region20: #{unet_forward.20} parent=5 // pred_fallthru
      _
    %p111 = scmp.le.s32.totalorder 1, %s8
    %p112 = scmp.lt.s32.totalorder %s8, 3
    %p113 = pnand %p111, %p112
    %p114 = pneg %p113
    // Predicated region
    $region25: #{unet_forward.20} parent=5 // pred_check
      _
    $region26: #{unet_forward.20} parent=5 // pred_check_branch
      %116 = sbr.rel (%p113) target = $region28
    $region27: #{unet_forward.20} parent=5 // pred_region
      %s117 = ssub.s32 %s8, 1
      %p118 = scmp.lt.s32.totalorder %s13, 1
      %s119 = scalar_select %p118, %s13, 1
      %s120 = smul.addr %s119, 8
      %s121 = smul.addr %s120, 8
      %s122 = scalar_lea.vmem %s0, %s121
      %p123 = pneg %p34
      %p124 = pneg %p31
      %p125 = pneg %p55
      %p126 = pneg %p52
      %p127 = pneg %p81
      %p128 = pneg %p78
      %p129 = scmp.lt.s32.totalorder %s13, 1
      %s130 = scalar_select %p129, %s13, 1
      %s131 = smul.addr %s130, 8
      %s132 = smul.addr %s131, 8
      %s133 = scalar_lea.vmem %s2, %s132
      %p134 = scmp.lt.s32.totalorder %s13, 1
      %s135 = scalar_select %p134, %s13, 1
      %s136 = smul.addr %s135, 8
      %s137 = smul.addr %s136, 8
      %s138 = scalar_lea.vmem %s0, %s137
      %p139 = scmp.lt.s32.totalorder %s13, 1
      %s140 = scalar_select %p139, %s13, 1
      %s141 = smul.addr %s140, 8
      %s142 = smul.addr %s141, 8
      %s143 = scalar_lea.vmem %s2, %s142
      %v144 = vld [vmem:[%s138] sm:$0xff]
      %v145 = vld [vmem:[%s138 + $0x8] sm:$0xff]
      %v146 = vld [vmem:[%s138 + $0x10] sm:$0xff]
      %v147 = vld [vmem:[%s138 + $0x18] sm:$0xff]
      %v148 = vld [vmem:[%s138 + $0x20] sm:$0xff]
      %v149 = vld [vmem:[%s138 + $0x28] sm:$0xff]
      %v150 = vld [vmem:[%s138 + $0x30] sm:$0xff]
      %v151 = vld [vmem:[%s138 + $0x38] sm:$0xff]
      %v152 = vld [vmem:[%s1] sm:$0xff]
      %v153 = vld [vmem:[%s1 + $0x8] sm:$0xff]
      %v154 = vld [vmem:[%s1 + $0x10] sm:$0xff]
      %v155 = vld [vmem:[%s1 + $0x18] sm:$0xff]
      %v156 = vld [vmem:[%s1 + $0x20] sm:$0xff]
      %v157 = vld [vmem:[%s1 + $0x28] sm:$0xff]
      %v158 = vld [vmem:[%s1 + $0x30] sm:$0xff]
      %v159 = vld [vmem:[%s1 + $0x38] sm:$0xff]
      %v160 = vld [vmem:[%s1 + $0x40] sm:$0xff]
      %vm161 = vcmask 588800
      %v163 = vsel %vm161, %v144, 0
      %v166 = vsel %vm161, %v145, 0
      %v169 = vsel %vm161, %v146, 0
      %v172 = vsel %vm161, %v147, 0
      %v175 = vsel %vm161, %v148, 0
      %v178 = vsel %vm161, %v149, 0
      %v181 = vsel %vm161, %v150, 0
      %v184 = vsel %vm161, %v151, 0
      %186 = vmatprep.subr.mxu0 0.0
      %187 = vmatpush1.msra.mxu0 %v152
      %188 = vmatprep.subr.mxu0 0.0
      %189 = vmatpush1.msra.mxu0 %v153
      %190 = vmatprep.subr.mxu0 0.0
      %191 = vmatpush1.msra.mxu0 %v154
      %192 = vmatprep.subr.mxu0 0.0
      %193 = vmatpush1.msra.mxu0 %v155
      %194 = vmatprep.subr.mxu0 0.0
      %195 = vmatpush1.msra.mxu0 %v156
      %196 = vmatprep.subr.mxu0 0.0
      %197 = vmatpush1.msra.mxu0 %v157
      %198 = vmatprep.subr.mxu0 0.0
      %199 = vmatpush1.msra.mxu0 %v158
      %200 = vmatprep.subr.mxu0 0.0
      %201 = vmatpush1.msra.mxu0 %v159
      %202 = vmatprep.subr.mxu0 0.0
      %203 = vmatpush1.msra.mxu0 %v160
      %204 = vmatprep.subr.mxu0 0.0
      %205 = vmatpush1.msra.mxu0 0.0
      %206 = vmatprep.subr.mxu0 0.0
      %207 = vmatpush1.msra.mxu0 0.0
      %208 = vmatprep.subr.mxu0 0.0
      %209 = vmatpush1.msra.mxu0 0.0
      %210 = vmatprep.subr.mxu0 0.0
      %211 = vmatpush1.msra.mxu0 0.0
      %212 = vmatprep.subr.mxu0 0.0
      %213 = vmatpush1.msra.mxu0 0.0
      %214 = vmatprep.subr.mxu0 0.0
      %215 = vmatpush1.msra.mxu0 0.0
      %216 = vmatprep.subr.mxu0 0.0
      %217 = vmatpush1.msra.mxu0 0.0
      %218 = vmatprep.subr.mxu0 0.0
      %219 = vmatpush1.msra.mxu0 0.0
      %220 = vmatprep.subr.mxu0 0.0
      %221 = vmatpush1.msra.mxu0 0.0
      %222 = vmatprep.subr.mxu0 0.0
      %223 = vmatpush1.msra.mxu0 0.0
      %224 = vmatprep.subr.mxu0 0.0
      %225 = vmatpush1.msra.mxu0 0.0
      %226 = vmatprep.subr.mxu0 0.0
      %227 = vmatpush1.msra.mxu0 0.0
      %228 = vmatprep.subr.mxu0 0.0
      %229 = vmatpush1.msra.mxu0 0.0
      %230 = vmatprep.subr.mxu0 0.0
      %231 = vmatpush1.msra.mxu0 0.0
      %232 = vmatprep.subr.mxu0 0.0
      %233 = vmatpush1.msra.mxu0 0.0
      %234 = vmatprep.subr.mxu0 0.0
      %235 = vmatpush1.msra.mxu0 0.0
      %236 = vmatprep.subr.mxu0 0.0
      %237 = vmatpush1.msra.mxu0 0.0
      %238 = vmatprep.subr.mxu0 0.0
      %239 = vmatpush1.msra.mxu0 0.0
      %240 = vmatprep.subr.mxu0 0.0
      %241 = vmatpush1.msra.mxu0 0.0
      %242 = vmatprep.subr.mxu0 0.0
      %243 = vmatpush1.msra.mxu0 0.0
      %244 = vmatprep.subr.mxu0 0.0
      %245 = vmatpush1.msra.mxu0 0.0
      %246 = vmatprep.subr.mxu0 0.0
      %247 = vmatpush1.msra.mxu0 0.0
      %248 = vmatprep.subr.mxu0 0.0
      %249 = vmatpush1.msra.mxu0 0.0
      %250 = vmatprep.mubr.f32.mxu0 0.0
      %251 = vmatmul.mubr.f32.gmra.mrb[0].mxu0 %v163
      %v252 = vpop.f32.mrb[0].mxu0
      %v253 = vadd.f32 0.0, %v252
      %v254 = vpop.f32.mrb[0].mxu0
      %255 = vmatprep.mubr.f32.mxu0 0.0
      %256 = vmatmul.mubr.f32.gmra.mrb[0].mxu0 %v166
      %v257 = vpop.f32.mrb[0].mxu0
      %v258 = vadd.f32 0.0, %v257
      %v259 = vpop.f32.mrb[0].mxu0
      %260 = vmatprep.mubr.f32.mxu0 0.0
      %261 = vmatmul.mubr.f32.gmra.mrb[0].mxu0 %v169
      %v262 = vpop.f32.mrb[0].mxu0
      %v263 = vadd.f32 0.0, %v262
      %v264 = vpop.f32.mrb[0].mxu0
      %265 = vmatprep.mubr.f32.mxu0 0.0
      %266 = vmatmul.mubr.f32.gmra.mrb[0].mxu0 %v172
      %v267 = vpop.f32.mrb[0].mxu0
      %v268 = vadd.f32 0.0, %v267
      %v269 = vpop.f32.mrb[0].mxu0
      %270 = vmatprep.mubr.f32.mxu0 0.0
      %271 = vmatmul.mubr.f32.gmra.mrb[0].mxu0 %v175
      %v272 = vpop.f32.mrb[0].mxu0
      %v273 = vadd.f32 0.0, %v272
      %v274 = vpop.f32.mrb[0].mxu0
      %275 = vmatprep.mubr.f32.mxu0 0.0
      %276 = vmatmul.mubr.f32.gmra.mrb[0].mxu0 %v178
      %v277 = vpop.f32.mrb[0].mxu0
      %v278 = vadd.f32 0.0, %v277
      %v279 = vpop.f32.mrb[0].mxu0
      %280 = vmatprep.mubr.f32.mxu0 0.0
      %281 = vmatmul.mubr.f32.gmra.mrb[0].mxu0 %v181
      %v282 = vpop.f32.mrb[0].mxu0
      %v283 = vadd.f32 0.0, %v282
      %v284 = vpop.f32.mrb[0].mxu0
      %285 = vmatprep.mubr.f32.mxu0 0.0
      %286 = vmatmul.mubr.f32.gmra.mrb[0].mxu0 %v184
      %v287 = vpop.f32.mrb[0].mxu0
      %v288 = vadd.f32 0.0, %v287
      %v289 = vpop.f32.mrb[0].mxu0
      %290 = vdwg.mxu0
      %vm291 = vcmask 130048
      %v292 = vsel %vm291, %v253, 0.0
      %v293 = vsel %vm291, %v258, 0.0
      %v294 = vadd.f32 %v292, %v293
      %v295 = vsel %vm291, %v263, 0.0
      %v296 = vadd.f32 %v294, %v295
      %v297 = vsel %vm291, %v268, 0.0
      %v298 = vadd.f32 %v296, %v297
      %v299 = vsel %vm291, %v273, 0.0
      %v300 = vadd.f32 %v298, %v299
      %v301 = vsel %vm291, %v278, 0.0
      %v302 = vadd.f32 %v300, %v301
      %v303 = vsel %vm291, %v283, 0.0
      %v304 = vadd.f32 %v302, %v303
      %v305 = vsel %vm291, %v288, 0.0
      %v306 = vadd.f32 %v304, %v305
      %v307 = vrot.slane %v306, 4
      %v308 = vadd.f32 %v306, %v307
      %v309 = vrot.slane %v308, 2
      %v310 = vadd.f32 %v308, %v309
      %v311 = vrot.slane %v310, 1
      %v312 = vadd.f32 %v310, %v311
      %v313 = vmul.f32 %v253, %v253
      %v314 = vmul.f32 %v258, %v258
      %v315 = vmul.f32 %v263, %v263
      %v316 = vmul.f32 %v268, %v268
      %v317 = vmul.f32 %v273, %v273
      %v318 = vmul.f32 %v278, %v278
      %v319 = vmul.f32 %v283, %v283
      %v320 = vmul.f32 %v288, %v288
      %v321 = vsel %vm291, %v313, 0.0
      %v322 = vsel %vm291, %v314, 0.0
      %v323 = vadd.f32 %v321, %v322
      %v324 = vsel %vm291, %v315, 0.0
      %v325 = vadd.f32 %v323, %v324
      %v326 = vsel %vm291, %v316, 0.0
      %v327 = vadd.f32 %v325, %v326
      %v328 = vsel %vm291, %v317, 0.0
      %v329 = vadd.f32 %v327, %v328
      %v330 = vsel %vm291, %v318, 0.0
      %v331 = vadd.f32 %v329, %v330
      %v332 = vsel %vm291, %v319, 0.0
      %v333 = vadd.f32 %v331, %v332
      %v334 = vsel %vm291, %v320, 0.0
      %v335 = vadd.f32 %v333, %v334
      %v336 = vrot.slane %v335, 4
      %v337 = vadd.f32 %v335, %v336
      %v338 = vrot.slane %v337, 2
      %v339 = vadd.f32 %v337, %v338
      %v340 = vrot.slane %v339, 1
      %v341 = vadd.f32 %v339, %v340
      %v342 = vrcp.pop 64.0
      %v343 = vmul.f32 %v312, %v342
      %v344 = vmul.f32 %v341, %v342
      %v345 = vmul.f32 %v343, %v343
      %v346 = vsub.f32 %v344, %v345
      %v347 = vadd.f32 %v346, 1e-05
      %v348 = vrsqrt.pop %v347
      %v349 = vsub.f32 0.0, %v343
      %v350 = vmul.f32 %v349, %v348
      %v351 = vmul.f32 %v253, %v348
      %v352 = vmul.f32 %v258, %v348
      %v353 = vmul.f32 %v263, %v348
      %v354 = vmul.f32 %v268, %v348
      %v355 = vmul.f32 %v273, %v348
      %v356 = vmul.f32 %v278, %v348
      %v357 = vmul.f32 %v283, %v348
      %v358 = vmul.f32 %v288, %v348
      %v359 = vadd.f32 %v351, %v350
      %v360 = vadd.f32 %v352, %v350
      %v361 = vadd.f32 %v353, %v350
      %v362 = vadd.f32 %v354, %v350
      %v363 = vadd.f32 %v355, %v350
      %v364 = vadd.f32 %v356, %v350
      %v365 = vadd.f32 %v357, %v350
      %v366 = vadd.f32 %v358, %v350
      %vm367 = vcmp.ge.f32.partialorder %v359, 0.0
      %vm368 = vcmp.ge.f32.partialorder %v360, 0.0
      %vm369 = vcmp.ge.f32.partialorder %v361, 0.0
      %vm370 = vcmp.ge.f32.partialorder %v362, 0.0
      %vm371 = vcmp.ge.f32.partialorder %v363, 0.0
      %vm372 = vcmp.ge.f32.partialorder %v364, 0.0
      %vm373 = vcmp.ge.f32.partialorder %v365, 0.0
      %vm374 = vcmp.ge.f32.partialorder %v366, 0.0
      %v375 = vmul.f32 %v359, 0.2
      %v376 = vmul.f32 %v360, 0.2
      %v377 = vmul.f32 %v361, 0.2
      %v378 = vmul.f32 %v362, 0.2
      %v379 = vmul.f32 %v363, 0.2
      %v380 = vmul.f32 %v364, 0.2
      %v381 = vmul.f32 %v365, 0.2
      %v382 = vmul.f32 %v366, 0.2
      %v383 = vsel %vm367, %v359, %v375
      %v384 = vsel %vm368, %v360, %v376
      %v385 = vsel %vm369, %v361, %v377
      %v386 = vsel %vm370, %v362, %v378
      %v387 = vsel %vm371, %v363, %v379
      %v388 = vsel %vm372, %v364, %v380
      %v389 = vsel %vm373, %v365, %v381
      %v390 = vsel %vm374, %v366, %v382
      %391 = vst.msk [vmem:[%s143] sm:$0xff] %vm291, %v383
      %392 = vst.msk [vmem:[%s143 + $0x8] sm:$0xff] %vm291, %v384
      %393 = vst.msk [vmem:[%s143 + $0x10] sm:$0xff] %vm291, %v385
      %394 = vst.msk [vmem:[%s143 + $0x18] sm:$0xff] %vm291, %v386
      %395 = vst.msk [vmem:[%s143 + $0x20] sm:$0xff] %vm291, %v387
      %396 = vst.msk [vmem:[%s143 + $0x28] sm:$0xff] %vm291, %v388
      %397 = vst.msk [vmem:[%s143 + $0x30] sm:$0xff] %vm291, %v389
      %398 = vst.msk [vmem:[%s143 + $0x38] sm:$0xff] %vm291, %v390
      %p399 = scmp.lt.s32.totalorder %s13, 1
      %s400 = scalar_select %p399, %s13, 1
      %s401 = smul.addr %s400, 8
      %s402 = smul.addr %s401, 8
      %s403 = scalar_lea.vmem %s2, %s402
      // Predicated region
      $region29: #{unet_forward.20} parent=27 // pred_check
        %p404 = pneg %p78
      $region30: #{unet_forward.20} parent=27 // pred_check_branch
        %406 = sbr.rel (%p404) target = $region32
      $region31: #{unet_forward.20} parent=27 // pred_region
        _
      $region32: #{unet_forward.20} parent=27 // pred_fallthru
        _
    $region28: #{unet_forward.20} parent=5 // pred_fallthru
      _
    %p407 = scmp.le.s32.totalorder 2, %s8
    // Predicated region
    $region33: #{unet_forward.20} parent=5 // pred_check
      %p408 = pneg %p407
    $region34: #{unet_forward.20} parent=5 // pred_check_branch
      %410 = sbr.rel (%p408) target = $region36
    $region35: #{unet_forward.20} parent=5 // pred_region
      %s411 = ssub.s32 %s8, 2
      // Predicated region
      $region37: #{unet_forward.20} parent=35 // pred_check
        %p412 = pneg %p84
      $region38: #{unet_forward.20} parent=35 // pred_check_branch
        %414 = sbr.rel (%p412) target = $region40
      $region39: #{unet_forward.20} parent=35 // pred_region
        %p415 = scmp.lt.s32.totalorder %s14, 1
        %s416 = scalar_select %p415, %s14, 1
        %s417 = smul.addr %s416, 8
        %s418 = smul.addr %s417, 8
        %s419 = scalar_lea.vmem %s2, %s418
      $region40: #{unet_forward.20} parent=35 // pred_fallthru
        _
    $region36: #{unet_forward.20} parent=5 // pred_fallthru
      _
  $region6: #{unet_forward.20} parent=0 // loop_footer
    %s12 = sadd.s32 1, %s8
  $region7: #{unet_forward.20} parent=0 // loop_footer_branch
    %7 = sbr.rel target = $region3
  $region8: #{unet_forward.20} parent=0 // loop_exit
    _

// kernel: unet_forward.21
$region0: #{unet_forward.21}
  #allocation0 [shape = 'u32[]', space=smem, size = 0x4, offset = 0x4, fixed_abs, tag = 'smem constant byte address 0x4 - core index']
  #allocation1 [shape = 'u32[144,128]{1,0:T(1,128)}', space=vmem, size = 0x12000, scoped, tag = 'internal scratch']
  %s0 = inlined_call_operand.vmem [shape: f32[2,64,144], index: 0, kind: input, shape index: {}]
  %s1 = inlined_call_operand.vmem [shape: f32[144,16], index: 1, kind: input, shape index: {}]
  %s2 = inlined_call_operand.vmem [shape: f32[2,64,16], index: 2, kind: output, shape index: {}]
  %s3 = sld [smem:[#allocation0]]
  $region41: #{unet_forward.21} parent=0
    _
  %s5 = ssub.s32 1, %s3
  %s6 = scalar_select 0, %s5, %s3
  loop: start=0, step=1, limit=4
  $region2: #{unet_forward.21} parent=0 // loop_pre_header
    _
  $region3: #{unet_forward.21} parent=0 // loop_header
    %s8 = sphi 0, %s12
    %p9 = scmp.ge.s32.totalorder %s8, 4
    %s18 = sphi 0, %s20
    %s21 = sphi 0, %s18
    %s22 = sphi 0, %s21
    %s38 = sphi 0, %s22
    %s42 = sphi 0, %s42
    %s44 = sphi 0, %s42
    %s45 = sphi 0, %s44
    %s59 = sphi 0, %s45
    %s65 = sphi 0, %s67
    %s68 = sphi 0, %s65
    %s69 = sphi 0, %s68
    %s85 = sphi 0, %s69
  $region4: #{unet_forward.21} parent=0 // loop_header_branch
    %11 = sbr.rel (%p9) target = $region8
  $region5: #{unet_forward.21} parent=0 // loop_body
    %s13 = ssub.s32 %s8, 1
    %s14 = ssub.s32 %s8, 2
    %s15 = sadd.s32 %s8, 1
    %s16 = ssub.s32 %s8, %s15
    %p17 = scmp.eq.s32.totalorder %s16, 0
    %s19 = sadd.s32 %s18, 1
    %s20 = scalar_select %p17, %s18, %s19
    %p23 = pneg %p17
    %p24 = scmp.eq.s32.totalorder %s8, 1
    %p25 = por %p23, %p24
    %p26 = scmp.ne.s32.totalorder %s18, %s21
    %p27 = scmp.eq.s32.totalorder %s8, 0
    %p28 = por %p26, %p27
    %p29 = scmp.ne.s32.totalorder %s18, %s21
    %p30 = scmp.eq.s32.totalorder %s13, 1
    %p31 = por %p29, %p30
    %p32 = scmp.ne.s32.totalorder %s21, %s22
    %p33 = scmp.eq.s32.totalorder %s13, 0
    %p34 = por %p32, %p33
    %p35 = scmp.ne.s32.totalorder %s21, %s22
    %p36 = scmp.eq.s32.totalorder %s14, 1
    %p37 = por %p35, %p36
    %p39 = scmp.ne.s32.totalorder %s22, %s38
    %p40 = scmp.eq.s32.totalorder %s14, 0
    %p41 = por %p39, %p40
    %s43 = sadd.s32 %s42, 1
    %p46 = scmp.eq.s32.totalorder %s8, 1
    %p47 = scmp.ne.s32.totalorder %s42, %s44
    %p48 = scmp.eq.s32.totalorder %s8, 0
    %p49 = por %p47, %p48
    %p50 = scmp.ne.s32.totalorder %s42, %s44
    %p51 = scmp.eq.s32.totalorder %s13, 1
    %p52 = por %p50, %p51
    %p53 = scmp.ne.s32.totalorder %s44, %s45
    %p54 = scmp.eq.s32.totalorder %s13, 0
    %p55 = por %p53, %p54
    %p56 = scmp.ne.s32.totalorder %s44, %s45
    %p57 = scmp.eq.s32.totalorder %s14, 1
    %p58 = por %p56, %p57
    %p60 = scmp.ne.s32.totalorder %s45, %s59
    %p61 = scmp.eq.s32.totalorder %s14, 0
    %p62 = por %p60, %p61
    %s63 = ssub.s32 %s8, %s15
    %p64 = scmp.eq.s32.totalorder %s63, 0
    %s66 = sadd.s32 %s65, 1
    %s67 = scalar_select %p64, %s65, %s66
    %p70 = pneg %p64
    %p71 = scmp.eq.s32.totalorder %s8, 1
    %p72 = por %p70, %p71
    %p73 = scmp.ne.s32.totalorder %s65, %s68
    %p74 = scmp.eq.s32.totalorder %s8, 0
    %p75 = por %p73, %p74
    %p76 = scmp.ne.s32.totalorder %s65, %s68
    %p77 = scmp.eq.s32.totalorder %s13, 1
    %p78 = por %p76, %p77
    %p79 = scmp.ne.s32.totalorder %s68, %s69
    %p80 = scmp.eq.s32.totalorder %s13, 0
    %p81 = por %p79, %p80
    %p82 = scmp.ne.s32.totalorder %s68, %s69
    %p83 = scmp.eq.s32.totalorder %s14, 1
    %p84 = por %p82, %p83
    %p86 = scmp.ne.s32.totalorder %s69, %s85
    %p87 = scmp.eq.s32.totalorder %s14, 0
    %p88 = por %p86, %p87
    %p89 = scmp.le.s32.totalorder 1, %s8
    %p90 = scmp.lt.s32.totalorder %s8, 3
    %p91 = pnand %p89, %p90
    %p92 = pneg %p91
    // Predicated region
    $region9: #{unet_forward.21} parent=5 // pred_check
      _
    $region10: #{unet_forward.21} parent=5 // pred_check_branch
      %94 = sbr.rel (%p91) target = $region12
    $region11: #{unet_forward.21} parent=5 // pred_region
      %s95 = ssub.s32 %s8, 1
      // Predicated region
      $region13: #{unet_forward.21} parent=11 // pred_check
        %p96 = pneg %p55
      $region14: #{unet_forward.21} parent=11 // pred_check_branch
        %98 = sbr.rel (%p96) target = $region16
      $region15: #{unet_forward.21} parent=11 // pred_region
        _
      $region16: #{unet_forward.21} parent=11 // pred_fallthru
        _
    $region12: #{unet_forward.21} parent=5 // pred_fallthru
      _
    %p99 = scmp.lt.s32.totalorder %s8, 2
    // Predicated region
    $region17: #{unet_forward.21} parent=5 // pred_check
      %p100 = pneg %p99
    $region18: #{unet_forward.21} parent=5 // pred_check_branch
      %102 = sbr.rel (%p100) target = $region20
    $region19: #{unet_forward.21} parent=5 // pred_region
      // Predicated region
      $region21: #{unet_forward.21} parent=19 // pred_check
        %p103 = pneg %p28
      $region22: #{unet_forward.21} parent=19 // pred_check_branch
        %105 = sbr.rel (%p103) target = $region24
      $region23: #{unet_forward.21} parent=19 // pred_region
        %p106 = scmp.lt.s32.totalorder %s8, 1
        %s107 = scalar_select %p106, %s8, 1
        %s108 = smul.addr %s107, 16
        %s109 = smul.addr %s108, 8
        %s110 = scalar_lea.vmem %s0, %s109
      $region24: #{unet_forward.21} parent=19 // pred_fallthru
        _
    $region20: #{unet_forward.21} parent=5 // pred_fallthru
      _
    %p111 = scmp.le.s32.totalorder 1, %s8
    %p112 = scmp.lt.s32.totalorder %s8, 3
    %p113 = pnand %p111, %p112
    %p114 = pneg %p113
    // Predicated region
    $region25: #{unet_forward.21} parent=5 // pred_check
      _
    $region26: #{unet_forward.21} parent=5 // pred_check_branch
      %116 = sbr.rel (%p113) target = $region28
    $region27: #{unet_forward.21} parent=5 // pred_region
      %s117 = ssub.s32 %s8, 1
      %p118 = scmp.lt.s32.totalorder %s13, 1
      %s119 = scalar_select %p118, %s13, 1
      %s120 = smul.addr %s119, 16
      %s121 = smul.addr %s120, 8
      %s122 = scalar_lea.vmem %s0, %s121
      %p123 = pneg %p34
      %p124 = pneg %p31
      %p125 = pneg %p55
      %p126 = pneg %p52
      %p127 = pneg %p81
      %p128 = pneg %p78
      %p129 = scmp.lt.s32.totalorder %s13, 1
      %s130 = scalar_select %p129, %s13, 1
      %s131 = smul.addr %s130, 8
      %s132 = smul.addr %s131, 8
      %s133 = scalar_lea.vmem %s2, %s132
      %p134 = scmp.lt.s32.totalorder %s13, 1
      %s135 = scalar_select %p134, %s13, 1
      %s136 = smul.addr %s135, 16
      %s137 = smul.addr %s136, 8
      %s138 = scalar_lea.vmem %s0, %s137
      %p139 = scmp.lt.s32.totalorder %s13, 1
      %s140 = scalar_select %p139, %s13, 1
      %s141 = smul.addr %s140, 8
      %s142 = smul.addr %s141, 8
      %s143 = scalar_lea.vmem %s2, %s142
      %v144 = vld [vmem:[%s138] sm:$0xff]
      %v145 = vld [vmem:[%s138 + $0x8] sm:$0xff]
      %v146 = vld [vmem:[%s138 + $0x10] sm:$0xff]
      %v147 = vld [vmem:[%s138 + $0x18] sm:$0xff]
      %v148 = vld [vmem:[%s138 + $0x20] sm:$0xff]
      %v149 = vld [vmem:[%s138 + $0x28] sm:$0xff]
      %v150 = vld [vmem:[%s138 + $0x30] sm:$0xff]
      %v151 = vld [vmem:[%s138 + $0x38] sm:$0xff]
      %v152 = vld [vmem:[%s138 + $0x40] sm:$0xff]
      %v153 = vld [vmem:[%s138 + $0x48] sm:$0xff]
      %v154 = vld [vmem:[%s138 + $0x50] sm:$0xff]
      %v155 = vld [vmem:[%s138 + $0x58] sm:$0xff]
      %v156 = vld [vmem:[%s138 + $0x60] sm:$0xff]
      %v157 = vld [vmem:[%s138 + $0x68] sm:$0xff]
      %v158 = vld [vmem:[%s138 + $0x70] sm:$0xff]
      %v159 = vld [vmem:[%s138 + $0x78] sm:$0xff]
      %v160 = vld [vmem:[%s1] sm:$0xff]
      %v161 = vld [vmem:[%s1 + $0x8] sm:$0xff]
      %v162 = vld [vmem:[%s1 + $0x10] sm:$0xff]
      %v163 = vld [vmem:[%s1 + $0x18] sm:$0xff]
      %v164 = vld [vmem:[%s1 + $0x20] sm:$0xff]
      %v165 = vld [vmem:[%s1 + $0x28] sm:$0xff]
      %v166 = vld [vmem:[%s1 + $0x30] sm:$0xff]
      %v167 = vld [vmem:[%s1 + $0x38] sm:$0xff]
      %v168 = vld [vmem:[%s1 + $0x40] sm:$0xff]
      %v169 = vld [vmem:[%s1 + $0x48] sm:$0xff]
      %v170 = vld [vmem:[%s1 + $0x50] sm:$0xff]
      %v171 = vld [vmem:[%s1 + $0x58] sm:$0xff]
      %v172 = vld [vmem:[%s1 + $0x60] sm:$0xff]
      %v173 = vld [vmem:[%s1 + $0x68] sm:$0xff]
      %v174 = vld [vmem:[%s1 + $0x70] sm:$0xff]
      %v175 = vld [vmem:[%s1 + $0x78] sm:$0xff]
      %v176 = vld [vmem:[%s1 + $0x80] sm:$0xff]
      %v177 = vld [vmem:[%s1 + $0x88] sm:$0xff]
      %vm178 = vcmask 130048
      %v180 = vsel %vm178, %v145, 0
      %v183 = vsel %vm178, %v147, 0
      %v186 = vsel %vm178, %v149, 0
      %v189 = vsel %vm178, %v151, 0
      %v192 = vsel %vm178, %v153, 0
      %v195 = vsel %vm178, %v155, 0
      %v198 = vsel %vm178, %v157, 0
      %v201 = vsel %vm178, %v159, 0
      %203 = vmatprep.subr.mxu0 0.0
      %204 = vmatpush1.msra.mxu0 %v160
      %205 = vmatprep.subr.mxu0 0.0
      %206 = vmatpush1.msra.mxu0 %v161
      %207 = vmatprep.subr.mxu0 0.0
      %208 = vmatpush1.msra.mxu0 %v162
      %209 = vmatprep.subr.mxu0 0.0
      %210 = vmatpush1.msra.mxu0 %v163
      %211 = vmatprep.subr.mxu0 0.0
      %212 = vmatpush1.msra.mxu0 %v164
      %213 = vmatprep.subr.mxu0 0.0
      %214 = vmatpush1.msra.mxu0 %v165
      %215 = vmatprep.subr.mxu0 0.0
      %216 = vmatpush1.msra.mxu0 %v166
      %217 = vmatprep.subr.mxu0 0.0
      %218 = vmatpush1.msra.mxu0 %v167
      %219 = vmatprep.subr.mxu0 0.0
      %220 = vmatpush1.msra.mxu0 %v168
      %221 = vmatprep.subr.mxu0 0.0
      %222 = vmatpush1.msra.mxu0 %v169
      %223 = vmatprep.subr.mxu0 0.0
      %224 = vmatpush1.msra.mxu0 %v170
      %225 = vmatprep.subr.mxu0 0.0
      %226 = vmatpush1.msra.mxu0 %v171
      %227 = vmatprep.subr.mxu0 0.0
      %228 = vmatpush1.msra.mxu0 %v172
      %229 = vmatprep.subr.mxu0 0.0
      %230 = vmatpush1.msra.mxu0 %v173
      %231 = vmatprep.subr.mxu0 0.0
      %232 = vmatpush1.msra.mxu0 %v174
      %233 = vmatprep.subr.mxu0 0.0
      %234 = vmatpush1.msra.mxu0 %v175
      %235 = vmatprep.subr.mxu0 0.0
      %236 = vmatpush1.msra.mxu0 %v176
      %237 = vmatprep.subr.mxu0 0.0
      %238 = vmatpush1.msra.mxu0 %v177
      %239 = vmatprep.subr.mxu0 0.0
      %240 = vmatpush1.msra.mxu0 0.0
      %241 = vmatprep.subr.mxu0 0.0
      %242 = vmatpush1.msra.mxu0 0.0
      %243 = vmatprep.subr.mxu0 0.0
      %244 = vmatpush1.msra.mxu0 0.0
      %245 = vmatprep.subr.mxu0 0.0
      %246 = vmatpush1.msra.mxu0 0.0
      %247 = vmatprep.subr.mxu0 0.0
      %248 = vmatpush1.msra.mxu0 0.0
      %249 = vmatprep.subr.mxu0 0.0
      %250 = vmatpush1.msra.mxu0 0.0
      %251 = vmatprep.subr.mxu0 0.0
      %252 = vmatpush1.msra.mxu0 0.0
      %253 = vmatprep.subr.mxu0 0.0
      %254 = vmatpush1.msra.mxu0 0.0
      %255 = vmatprep.subr.mxu0 0.0
      %256 = vmatpush1.msra.mxu0 0.0
      %257 = vmatprep.subr.mxu0 0.0
      %258 = vmatpush1.msra.mxu0 0.0
      %259 = vmatprep.subr.mxu0 0.0
      %260 = vmatpush1.msra.mxu0 0.0
      %261 = vmatprep.subr.mxu0 0.0
      %262 = vmatpush1.msra.mxu0 0.0
      %263 = vmatprep.subr.mxu0 0.0
      %264 = vmatpush1.msra.mxu0 0.0
      %265 = vmatprep.subr.mxu0 0.0
      %266 = vmatpush1.msra.mxu0 0.0
      %267 = vmatprep.mubr.f32.mxu0 %v180
      %268 = vmatmul.mubr.f32.gmra.mrb[0].mxu0 %v144
      %v269 = vpop.f32.mrb[0].mxu0
      %v270 = vadd.f32 0.0, %v269
      %v271 = vpop.f32.mrb[0].mxu0
      %272 = vmatprep.mubr.f32.mxu0 %v183
      %273 = vmatmul.mubr.f32.gmra.mrb[0].mxu0 %v146
      %v274 = vpop.f32.mrb[0].mxu0
      %v275 = vadd.f32 0.0, %v274
      %v276 = vpop.f32.mrb[0].mxu0
      %277 = vmatprep.mubr.f32.mxu0 %v186
      %278 = vmatmul.mubr.f32.gmra.mrb[0].mxu0 %v148
      %v279 = vpop.f32.mrb[0].mxu0
      %v280 = vadd.f32 0.0, %v279
      %v281 = vpop.f32.mrb[0].mxu0
      %282 = vmatprep.mubr.f32.mxu0 %v189
      %283 = vmatmul.mubr.f32.gmra.mrb[0].mxu0 %v150
      %v284 = vpop.f32.mrb[0].mxu0
      %v285 = vadd.f32 0.0, %v284
      %v286 = vpop.f32.mrb[0].mxu0
      %287 = vmatprep.mubr.f32.mxu0 %v192
      %288 = vmatmul.mubr.f32.gmra.mrb[0].mxu0 %v152
      %v289 = vpop.f32.mrb[0].mxu0
      %v290 = vadd.f32 0.0, %v289
      %v291 = vpop.f32.mrb[0].mxu0
      %292 = vmatprep.mubr.f32.mxu0 %v195
      %293 = vmatmul.mubr.f32.gmra.mrb[0].mxu0 %v154
      %v294 = vpop.f32.mrb[0].mxu0
      %v295 = vadd.f32 0.0, %v294
      %v296 = vpop.f32.mrb[0].mxu0
      %297 = vmatprep.mubr.f32.mxu0 %v198
      %298 = vmatmul.mubr.f32.gmra.mrb[0].mxu0 %v156
      %v299 = vpop.f32.mrb[0].mxu0
      %v300 = vadd.f32 0.0, %v299
      %v301 = vpop.f32.mrb[0].mxu0
      %302 = vmatprep.mubr.f32.mxu0 %v201
      %303 = vmatmul.mubr.f32.gmra.mrb[0].mxu0 %v158
      %v304 = vpop.f32.mrb[0].mxu0
      %v305 = vadd.f32 0.0, %v304
      %v306 = vpop.f32.mrb[0].mxu0
      %307 = vdwg.mxu0
      %v308 = vsel %vm178, %v270, 0.0
      %v309 = vsel %vm178, %v275, 0.0
      %v310 = vadd.f32 %v308, %v309
      %v311 = vsel %vm178, %v280, 0.0
      %v312 = vadd.f32 %v310, %v311
      %v313 = vsel %vm178, %v285, 0.0
      %v314 = vadd.f32 %v312, %v313
      %v315 = vsel %vm178, %v290, 0.0
      %v316 = vadd.f32 %v314, %v315
      %v317 = vsel %vm178, %v295, 0.0
      %v318 = vadd.f32 %v316, %v317
      %v319 = vsel %vm178, %v300, 0.0
      %v320 = vadd.f32 %v318, %v319
      %v321 = vsel %vm178, %v305, 0.0
      %v322 = vadd.f32 %v320, %v321
      %v323 = vrot.slane %v322, 4
      %v324 = vadd.f32 %v322, %v323
      %v325 = vrot.slane %v324, 2
      %v326 = vadd.f32 %v324, %v325
      %v327 = vrot.slane %v326, 1
      %v328 = vadd.f32 %v326, %v327
      %v329 = vmul.f32 %v270, %v270
      %v330 = vmul.f32 %v275, %v275
      %v331 = vmul.f32 %v280, %v280
      %v332 = vmul.f32 %v285, %v285
      %v333 = vmul.f32 %v290, %v290
      %v334 = vmul.f32 %v295, %v295
      %v335 = vmul.f32 %v300, %v300
      %v336 = vmul.f32 %v305, %v305
      %v337 = vsel %vm178, %v329, 0.0
      %v338 = vsel %vm178, %v330, 0.0
      %v339 = vadd.f32 %v337, %v338
      %v340 = vsel %vm178, %v331, 0.0
      %v341 = vadd.f32 %v339, %v340
      %v342 = vsel %vm178, %v332, 0.0
      %v343 = vadd.f32 %v341, %v342
      %v344 = vsel %vm178, %v333, 0.0
      %v345 = vadd.f32 %v343, %v344
      %v346 = vsel %vm178, %v334, 0.0
      %v347 = vadd.f32 %v345, %v346
      %v348 = vsel %vm178, %v335, 0.0
      %v349 = vadd.f32 %v347, %v348
      %v350 = vsel %vm178, %v336, 0.0
      %v351 = vadd.f32 %v349, %v350
      %v352 = vrot.slane %v351, 4
      %v353 = vadd.f32 %v351, %v352
      %v354 = vrot.slane %v353, 2
      %v355 = vadd.f32 %v353, %v354
      %v356 = vrot.slane %v355, 1
      %v357 = vadd.f32 %v355, %v356
      %v358 = vrcp.pop 64.0
      %v359 = vmul.f32 %v328, %v358
      %v360 = vmul.f32 %v357, %v358
      %v361 = vmul.f32 %v359, %v359
      %v362 = vsub.f32 %v360, %v361
      %v363 = vadd.f32 %v362, 1e-05
      %v364 = vrsqrt.pop %v363
      %v365 = vsub.f32 0.0, %v359
      %v366 = vmul.f32 %v365, %v364
      %v367 = vmul.f32 %v270, %v364
      %v368 = vmul.f32 %v275, %v364
      %v369 = vmul.f32 %v280, %v364
      %v370 = vmul.f32 %v285, %v364
      %v371 = vmul.f32 %v290, %v364
      %v372 = vmul.f32 %v295, %v364
      %v373 = vmul.f32 %v300, %v364
      %v374 = vmul.f32 %v305, %v364
      %v375 = vadd.f32 %v367, %v366
      %v376 = vadd.f32 %v368, %v366
      %v377 = vadd.f32 %v369, %v366
      %v378 = vadd.f32 %v370, %v366
      %v379 = vadd.f32 %v371, %v366
      %v380 = vadd.f32 %v372, %v366
      %v381 = vadd.f32 %v373, %v366
      %v382 = vadd.f32 %v374, %v366
      %vm383 = vcmp.ge.f32.partialorder %v375, 0.0
      %vm384 = vcmp.ge.f32.partialorder %v376, 0.0
      %vm385 = vcmp.ge.f32.partialorder %v377, 0.0
      %vm386 = vcmp.ge.f32.partialorder %v378, 0.0
      %vm387 = vcmp.ge.f32.partialorder %v379, 0.0
      %vm388 = vcmp.ge.f32.partialorder %v380, 0.0
      %vm389 = vcmp.ge.f32.partialorder %v381, 0.0
      %vm390 = vcmp.ge.f32.partialorder %v382, 0.0
      %v391 = vmul.f32 %v375, 0.2
      %v392 = vmul.f32 %v376, 0.2
      %v393 = vmul.f32 %v377, 0.2
      %v394 = vmul.f32 %v378, 0.2
      %v395 = vmul.f32 %v379, 0.2
      %v396 = vmul.f32 %v380, 0.2
      %v397 = vmul.f32 %v381, 0.2
      %v398 = vmul.f32 %v382, 0.2
      %v399 = vsel %vm383, %v375, %v391
      %v400 = vsel %vm384, %v376, %v392
      %v401 = vsel %vm385, %v377, %v393
      %v402 = vsel %vm386, %v378, %v394
      %v403 = vsel %vm387, %v379, %v395
      %v404 = vsel %vm388, %v380, %v396
      %v405 = vsel %vm389, %v381, %v397
      %v406 = vsel %vm390, %v382, %v398
      %407 = vst.msk [vmem:[%s143] sm:$0xff] %vm178, %v399
      %408 = vst.msk [vmem:[%s143 + $0x8] sm:$0xff] %vm178, %v400
      %409 = vst.msk [vmem:[%s143 + $0x10] sm:$0xff] %vm178, %v401
      %410 = vst.msk [vmem:[%s143 + $0x18] sm:$0xff] %vm178, %v402
      %411 = vst.msk [vmem:[%s143 + $0x20] sm:$0xff] %vm178, %v403
      %412 = vst.msk [vmem:[%s143 + $0x28] sm:$0xff] %vm178, %v404
      %413 = vst.msk [vmem:[%s143 + $0x30] sm:$0xff] %vm178, %v405
      %414 = vst.msk [vmem:[%s143 + $0x38] sm:$0xff] %vm178, %v406
      %p415 = scmp.lt.s32.totalorder %s13, 1
      %s416 = scalar_select %p415, %s13, 1
      %s417 = smul.addr %s416, 8
      %s418 = smul.addr %s417, 8
      %s419 = scalar_lea.vmem %s2, %s418
      // Predicated region
      $region29: #{unet_forward.21} parent=27 // pred_check
        %p420 = pneg %p78
      $region30: #{unet_forward.21} parent=27 // pred_check_branch
        %422 = sbr.rel (%p420) target = $region32
      $region31: #{unet_forward.21} parent=27 // pred_region
        _
      $region32: #{unet_forward.21} parent=27 // pred_fallthru
        _
    $region28: #{unet_forward.21} parent=5 // pred_fallthru
      _
    %p423 = scmp.le.s32.totalorder 2, %s8
    // Predicated region
    $region33: #{unet_forward.21} parent=5 // pred_check
      %p424 = pneg %p423
    $region34: #{unet_forward.21} parent=5 // pred_check_branch
      %426 = sbr.rel (%p424) target = $region36
    $region35: #{unet_forward.21} parent=5 // pred_region
      %s427 = ssub.s32 %s8, 2
      // Predicated region
      $region37: #{unet_forward.21} parent=35 // pred_check
        %p428 = pneg %p84
      $region38: #{unet_forward.21} parent=35 // pred_check_branch
        %430 = sbr.rel (%p428) target = $region40
      $region39: #{unet_forward.21} parent=35 // pred_region
        %p431 = scmp.lt.s32.totalorder %s14, 1
        %s432 = scalar_select %p431, %s14, 1
        %s433 = smul.addr %s432, 8
        %s434 = smul.addr %s433, 8
        %s435 = scalar_lea.vmem %s2, %s434
      $region40: #{unet_forward.21} parent=35 // pred_fallthru
        _
    $region36: #{unet_forward.21} parent=5 // pred_fallthru
      _
  $region6: #{unet_forward.21} parent=0 // loop_footer
    %s12 = sadd.s32 1, %s8
  $region7: #{unet_forward.21} parent=0 // loop_footer_branch
    %7 = sbr.rel target = $region3
  $region8: #{unet_forward.21} parent=0 // loop_exit
    _

// kernel: unet_forward.22
$region0: #{unet_forward.22}
  #allocation0 [shape = 'u32[]', space=smem, size = 0x4, offset = 0x4, fixed_abs, tag = 'smem constant byte address 0x4 - core index']
  #allocation1 [shape = 'u32[144,128]{1,0:T(1,128)}', space=vmem, size = 0x12000, scoped, tag = 'internal scratch']
  %s0 = inlined_call_operand.vmem [shape: f32[2,16,144], index: 0, kind: input, shape index: {}]
  %s1 = inlined_call_operand.vmem [shape: f32[144,32], index: 1, kind: input, shape index: {}]
  %s2 = inlined_call_operand.vmem [shape: f32[2,16,32], index: 2, kind: output, shape index: {}]
  %s3 = sld [smem:[#allocation0]]
  $region41: #{unet_forward.22} parent=0
    _
  %s5 = ssub.s32 1, %s3
  %s6 = scalar_select 0, %s5, %s3
  loop: start=0, step=1, limit=4
  $region2: #{unet_forward.22} parent=0 // loop_pre_header
    _
  $region3: #{unet_forward.22} parent=0 // loop_header
    %s8 = sphi 0, %s12
    %p9 = scmp.ge.s32.totalorder %s8, 4
    %s18 = sphi 0, %s20
    %s21 = sphi 0, %s18
    %s22 = sphi 0, %s21
    %s38 = sphi 0, %s22
    %s42 = sphi 0, %s42
    %s44 = sphi 0, %s42
    %s45 = sphi 0, %s44
    %s59 = sphi 0, %s45
    %s65 = sphi 0, %s67
    %s68 = sphi 0, %s65
    %s69 = sphi 0, %s68
    %s85 = sphi 0, %s69
  $region4: #{unet_forward.22} parent=0 // loop_header_branch
    %11 = sbr.rel (%p9) target = $region8
  $region5: #{unet_forward.22} parent=0 // loop_body
    %s13 = ssub.s32 %s8, 1
    %s14 = ssub.s32 %s8, 2
    %s15 = sadd.s32 %s8, 1
    %s16 = ssub.s32 %s8, %s15
    %p17 = scmp.eq.s32.totalorder %s16, 0
    %s19 = sadd.s32 %s18, 1
    %s20 = scalar_select %p17, %s18, %s19
    %p23 = pneg %p17
    %p24 = scmp.eq.s32.totalorder %s8, 1
    %p25 = por %p23, %p24
    %p26 = scmp.ne.s32.totalorder %s18, %s21
    %p27 = scmp.eq.s32.totalorder %s8, 0
    %p28 = por %p26, %p27
    %p29 = scmp.ne.s32.totalorder %s18, %s21
    %p30 = scmp.eq.s32.totalorder %s13, 1
    %p31 = por %p29, %p30
    %p32 = scmp.ne.s32.totalorder %s21, %s22
    %p33 = scmp.eq.s32.totalorder %s13, 0
    %p34 = por %p32, %p33
    %p35 = scmp.ne.s32.totalorder %s21, %s22
    %p36 = scmp.eq.s32.totalorder %s14, 1
    %p37 = por %p35, %p36
    %p39 = scmp.ne.s32.totalorder %s22, %s38
    %p40 = scmp.eq.s32.totalorder %s14, 0
    %p41 = por %p39, %p40
    %s43 = sadd.s32 %s42, 1
    %p46 = scmp.eq.s32.totalorder %s8, 1
    %p47 = scmp.ne.s32.totalorder %s42, %s44
    %p48 = scmp.eq.s32.totalorder %s8, 0
    %p49 = por %p47, %p48
    %p50 = scmp.ne.s32.totalorder %s42, %s44
    %p51 = scmp.eq.s32.totalorder %s13, 1
    %p52 = por %p50, %p51
    %p53 = scmp.ne.s32.totalorder %s44, %s45
    %p54 = scmp.eq.s32.totalorder %s13, 0
    %p55 = por %p53, %p54
    %p56 = scmp.ne.s32.totalorder %s44, %s45
    %p57 = scmp.eq.s32.totalorder %s14, 1
    %p58 = por %p56, %p57
    %p60 = scmp.ne.s32.totalorder %s45, %s59
    %p61 = scmp.eq.s32.totalorder %s14, 0
    %p62 = por %p60, %p61
    %s63 = ssub.s32 %s8, %s15
    %p64 = scmp.eq.s32.totalorder %s63, 0
    %s66 = sadd.s32 %s65, 1
    %s67 = scalar_select %p64, %s65, %s66
    %p70 = pneg %p64
    %p71 = scmp.eq.s32.totalorder %s8, 1
    %p72 = por %p70, %p71
    %p73 = scmp.ne.s32.totalorder %s65, %s68
    %p74 = scmp.eq.s32.totalorder %s8, 0
    %p75 = por %p73, %p74
    %p76 = scmp.ne.s32.totalorder %s65, %s68
    %p77 = scmp.eq.s32.totalorder %s13, 1
    %p78 = por %p76, %p77
    %p79 = scmp.ne.s32.totalorder %s68, %s69
    %p80 = scmp.eq.s32.totalorder %s13, 0
    %p81 = por %p79, %p80
    %p82 = scmp.ne.s32.totalorder %s68, %s69
    %p83 = scmp.eq.s32.totalorder %s14, 1
    %p84 = por %p82, %p83
    %p86 = scmp.ne.s32.totalorder %s69, %s85
    %p87 = scmp.eq.s32.totalorder %s14, 0
    %p88 = por %p86, %p87
    %p89 = scmp.le.s32.totalorder 1, %s8
    %p90 = scmp.lt.s32.totalorder %s8, 3
    %p91 = pnand %p89, %p90
    %p92 = pneg %p91
    // Predicated region
    $region9: #{unet_forward.22} parent=5 // pred_check
      _
    $region10: #{unet_forward.22} parent=5 // pred_check_branch
      %94 = sbr.rel (%p91) target = $region12
    $region11: #{unet_forward.22} parent=5 // pred_region
      %s95 = ssub.s32 %s8, 1
      // Predicated region
      $region13: #{unet_forward.22} parent=11 // pred_check
        %p96 = pneg %p55
      $region14: #{unet_forward.22} parent=11 // pred_check_branch
        %98 = sbr.rel (%p96) target = $region16
      $region15: #{unet_forward.22} parent=11 // pred_region
        _
      $region16: #{unet_forward.22} parent=11 // pred_fallthru
        _
    $region12: #{unet_forward.22} parent=5 // pred_fallthru
      _
    %p99 = scmp.lt.s32.totalorder %s8, 2
    // Predicated region
    $region17: #{unet_forward.22} parent=5 // pred_check
      %p100 = pneg %p99
    $region18: #{unet_forward.22} parent=5 // pred_check_branch
      %102 = sbr.rel (%p100) target = $region20
    $region19: #{unet_forward.22} parent=5 // pred_region
      // Predicated region
      $region21: #{unet_forward.22} parent=19 // pred_check
        %p103 = pneg %p28
      $region22: #{unet_forward.22} parent=19 // pred_check_branch
        %105 = sbr.rel (%p103) target = $region24
      $region23: #{unet_forward.22} parent=19 // pred_region
        %p106 = scmp.lt.s32.totalorder %s8, 1
        %s107 = scalar_select %p106, %s8, 1
        %s108 = smul.addr %s107, 4
        %s109 = smul.addr %s108, 8
        %s110 = scalar_lea.vmem %s0, %s109
      $region24: #{unet_forward.22} parent=19 // pred_fallthru
        _
    $region20: #{unet_forward.22} parent=5 // pred_fallthru
      _
    %p111 = scmp.le.s32.totalorder 1, %s8
    %p112 = scmp.lt.s32.totalorder %s8, 3
    %p113 = pnand %p111, %p112
    %p114 = pneg %p113
    // Predicated region
    $region25: #{unet_forward.22} parent=5 // pred_check
      _
    $region26: #{unet_forward.22} parent=5 // pred_check_branch
      %116 = sbr.rel (%p113) target = $region28
    $region27: #{unet_forward.22} parent=5 // pred_region
      %s117 = ssub.s32 %s8, 1
      %p118 = scmp.lt.s32.totalorder %s13, 1
      %s119 = scalar_select %p118, %s13, 1
      %s120 = smul.addr %s119, 4
      %s121 = smul.addr %s120, 8
      %s122 = scalar_lea.vmem %s0, %s121
      %p123 = pneg %p34
      %p124 = pneg %p31
      %p125 = pneg %p55
      %p126 = pneg %p52
      %p127 = pneg %p81
      %p128 = pneg %p78
      %p129 = scmp.lt.s32.totalorder %s13, 1
      %s130 = scalar_select %p129, %s13, 1
      %s131 = smul.addr %s130, 2
      %s132 = smul.addr %s131, 8
      %s133 = scalar_lea.vmem %s2, %s132
      %p134 = scmp.lt.s32.totalorder %s13, 1
      %s135 = scalar_select %p134, %s13, 1
      %s136 = smul.addr %s135, 4
      %s137 = smul.addr %s136, 8
      %s138 = scalar_lea.vmem %s0, %s137
      %p139 = scmp.lt.s32.totalorder %s13, 1
      %s140 = scalar_select %p139, %s13, 1
      %s141 = smul.addr %s140, 2
      %s142 = smul.addr %s141, 8
      %s143 = scalar_lea.vmem %s2, %s142
      %v144 = vld [vmem:[%s138] sm:$0xff]
      %v145 = vld [vmem:[%s138 + $0x8] sm:$0xff]
      %v146 = vld [vmem:[%s138 + $0x10] sm:$0xff]
      %v147 = vld [vmem:[%s138 + $0x18] sm:$0xff]
      %v148 = vld [vmem:[%s1] sm:$0xff]
      %v149 = vld [vmem:[%s1 + $0x8] sm:$0xff]
      %v150 = vld [vmem:[%s1 + $0x10] sm:$0xff]
      %v151 = vld [vmem:[%s1 + $0x18] sm:$0xff]
      %v152 = vld [vmem:[%s1 + $0x20] sm:$0xff]
      %v153 = vld [vmem:[%s1 + $0x28] sm:$0xff]
      %v154 = vld [vmem:[%s1 + $0x30] sm:$0xff]
      %v155 = vld [vmem:[%s1 + $0x38] sm:$0xff]
      %v156 = vld [vmem:[%s1 + $0x40] sm:$0xff]
      %v157 = vld [vmem:[%s1 + $0x48] sm:$0xff]
      %v158 = vld [vmem:[%s1 + $0x50] sm:$0xff]
      %v159 = vld [vmem:[%s1 + $0x58] sm:$0xff]
      %v160 = vld [vmem:[%s1 + $0x60] sm:$0xff]
      %v161 = vld [vmem:[%s1 + $0x68] sm:$0xff]
      %v162 = vld [vmem:[%s1 + $0x70] sm:$0xff]
      %v163 = vld [vmem:[%s1 + $0x78] sm:$0xff]
      %v164 = vld [vmem:[%s1 + $0x80] sm:$0xff]
      %v165 = vld [vmem:[%s1 + $0x88] sm:$0xff]
      %vm166 = vcmask 130048
      %v168 = vsel %vm166, %v145, 0
      %v171 = vsel %vm166, %v147, 0
      %173 = vmatprep.subr.mxu0 0.0
      %174 = vmatpush1.msra.mxu0 %v148
      %175 = vmatprep.subr.mxu0 0.0
      %176 = vmatpush1.msra.mxu0 %v149
      %177 = vmatprep.subr.mxu0 0.0
      %178 = vmatpush1.msra.mxu0 %v150
      %179 = vmatprep.subr.mxu0 0.0
      %180 = vmatpush1.msra.mxu0 %v151
      %181 = vmatprep.subr.mxu0 0.0
      %182 = vmatpush1.msra.mxu0 %v152
      %183 = vmatprep.subr.mxu0 0.0
      %184 = vmatpush1.msra.mxu0 %v153
      %185 = vmatprep.subr.mxu0 0.0
      %186 = vmatpush1.msra.mxu0 %v154
      %187 = vmatprep.subr.mxu0 0.0
      %188 = vmatpush1.msra.mxu0 %v155
      %189 = vmatprep.subr.mxu0 0.0
      %190 = vmatpush1.msra.mxu0 %v156
      %191 = vmatprep.subr.mxu0 0.0
      %192 = vmatpush1.msra.mxu0 %v157
      %193 = vmatprep.subr.mxu0 0.0
      %194 = vmatpush1.msra.mxu0 %v158
      %195 = vmatprep.subr.mxu0 0.0
      %196 = vmatpush1.msra.mxu0 %v159
      %197 = vmatprep.subr.mxu0 0.0
      %198 = vmatpush1.msra.mxu0 %v160
      %199 = vmatprep.subr.mxu0 0.0
      %200 = vmatpush1.msra.mxu0 %v161
      %201 = vmatprep.subr.mxu0 0.0
      %202 = vmatpush1.msra.mxu0 %v162
      %203 = vmatprep.subr.mxu0 0.0
      %204 = vmatpush1.msra.mxu0 %v163
      %205 = vmatprep.subr.mxu0 0.0
      %206 = vmatpush1.msra.mxu0 %v164
      %207 = vmatprep.subr.mxu0 0.0
      %208 = vmatpush1.msra.mxu0 %v165
      %209 = vmatprep.subr.mxu0 0.0
      %210 = vmatpush1.msra.mxu0 0.0
      %211 = vmatprep.subr.mxu0 0.0
      %212 = vmatpush1.msra.mxu0 0.0
      %213 = vmatprep.subr.mxu0 0.0
      %214 = vmatpush1.msra.mxu0 0.0
      %215 = vmatprep.subr.mxu0 0.0
      %216 = vmatpush1.msra.mxu0 0.0
      %217 = vmatprep.subr.mxu0 0.0
      %218 = vmatpush1.msra.mxu0 0.0
      %219 = vmatprep.subr.mxu0 0.0
      %220 = vmatpush1.msra.mxu0 0.0
      %221 = vmatprep.subr.mxu0 0.0
      %222 = vmatpush1.msra.mxu0 0.0
      %223 = vmatprep.subr.mxu0 0.0
      %224 = vmatpush1.msra.mxu0 0.0
      %225 = vmatprep.subr.mxu0 0.0
      %226 = vmatpush1.msra.mxu0 0.0
      %227 = vmatprep.subr.mxu0 0.0
      %228 = vmatpush1.msra.mxu0 0.0
      %229 = vmatprep.subr.mxu0 0.0
      %230 = vmatpush1.msra.mxu0 0.0
      %231 = vmatprep.subr.mxu0 0.0
      %232 = vmatpush1.msra.mxu0 0.0
      %233 = vmatprep.subr.mxu0 0.0
      %234 = vmatpush1.msra.mxu0 0.0
      %235 = vmatprep.subr.mxu0 0.0
      %236 = vmatpush1.msra.mxu0 0.0
      %237 = vmatprep.mubr.f32.mxu0 %v168
      %238 = vmatmul.mubr.f32.gmra.mrb[0].mxu0 %v144
      %v239 = vpop.f32.mrb[0].mxu0
      %v240 = vadd.f32 0.0, %v239
      %v241 = vpop.f32.mrb[0].mxu0
      %242 = vmatprep.mubr.f32.mxu0 %v171
      %243 = vmatmul.mubr.f32.gmra.mrb[0].mxu0 %v146
      %v244 = vpop.f32.mrb[0].mxu0
      %v245 = vadd.f32 0.0, %v244
      %v246 = vpop.f32.mrb[0].mxu0
      %247 = vdwg.mxu0
      %vm248 = vcmask 261120
      %v249 = vsel %vm248, %v240, 0.0
      %v250 = vsel %vm248, %v245, 0.0
      %v251 = vadd.f32 %v249, %v250
      %v252 = vrot.slane %v251, 4
      %v253 = vadd.f32 %v251, %v252
      %v254 = vrot.slane %v253, 2
      %v255 = vadd.f32 %v253, %v254
      %v256 = vrot.slane %v255, 1
      %v257 = vadd.f32 %v255, %v256
      %v258 = vmul.f32 %v240, %v240
      %v259 = vmul.f32 %v245, %v245
      %v260 = vsel %vm248, %v258, 0.0
      %v261 = vsel %vm248, %v259, 0.0
      %v262 = vadd.f32 %v260, %v261
      %v263 = vrot.slane %v262, 4
      %v264 = vadd.f32 %v262, %v263
      %v265 = vrot.slane %v264, 2
      %v266 = vadd.f32 %v264, %v265
      %v267 = vrot.slane %v266, 1
      %v268 = vadd.f32 %v266, %v267
      %v269 = vrcp.pop 16.0
      %v270 = vmul.f32 %v257, %v269
      %v271 = vmul.f32 %v268, %v269
      %v272 = vmul.f32 %v270, %v270
      %v273 = vsub.f32 %v271, %v272
      %v274 = vadd.f32 %v273, 1e-05
      %v275 = vrsqrt.pop %v274
      %v276 = vsub.f32 0.0, %v270
      %v277 = vmul.f32 %v276, %v275
      %v278 = vmul.f32 %v240, %v275
      %v279 = vmul.f32 %v245, %v275
      %v280 = vadd.f32 %v278, %v277
      %v281 = vadd.f32 %v279, %v277
      %vm282 = vcmp.ge.f32.partialorder %v280, 0.0
      %vm283 = vcmp.ge.f32.partialorder %v281, 0.0
      %v284 = vmul.f32 %v280, 0.2
      %v285 = vmul.f32 %v281, 0.2
      %v286 = vsel %vm282, %v280, %v284
      %v287 = vsel %vm283, %v281, %v285
      %288 = vst.msk [vmem:[%s143] sm:$0xff] %vm248, %v286
      %289 = vst.msk [vmem:[%s143 + $0x8] sm:$0xff] %vm248, %v287
      %p290 = scmp.lt.s32.totalorder %s13, 1
      %s291 = scalar_select %p290, %s13, 1
      %s292 = smul.addr %s291, 2
      %s293 = smul.addr %s292, 8
      %s294 = scalar_lea.vmem %s2, %s293
      // Predicated region
      $region29: #{unet_forward.22} parent=27 // pred_check
        %p295 = pneg %p78
      $region30: #{unet_forward.22} parent=27 // pred_check_branch
        %297 = sbr.rel (%p295) target = $region32
      $region31: #{unet_forward.22} parent=27 // pred_region
        _
      $region32: #{unet_forward.22} parent=27 // pred_fallthru
        _
    $region28: #{unet_forward.22} parent=5 // pred_fallthru
      _
    %p298 = scmp.le.s32.totalorder 2, %s8
    // Predicated region
    $region33: #{unet_forward.22} parent=5 // pred_check
      %p299 = pneg %p298
    $region34: #{unet_forward.22} parent=5 // pred_check_branch
      %301 = sbr.rel (%p299) target = $region36
    $region35: #{unet_forward.22} parent=5 // pred_region
      %s302 = ssub.s32 %s8, 2
      // Predicated region
      $region37: #{unet_forward.22} parent=35 // pred_check
        %p303 = pneg %p84
      $region38: #{unet_forward.22} parent=35 // pred_check_branch
        %305 = sbr.rel (%p303) target = $region40
      $region39: #{unet_forward.22} parent=35 // pred_region
        %p306 = scmp.lt.s32.totalorder %s14, 1
        %s307 = scalar_select %p306, %s14, 1
        %s308 = smul.addr %s307, 2
        %s309 = smul.addr %s308, 8
        %s310 = scalar_lea.vmem %s2, %s309
      $region40: #{unet_forward.22} parent=35 // pred_fallthru
        _
    $region36: #{unet_forward.22} parent=5 // pred_fallthru
      _
  $region6: #{unet_forward.22} parent=0 // loop_footer
    %s12 = sadd.s32 1, %s8
  $region7: #{unet_forward.22} parent=0 // loop_footer_branch
    %7 = sbr.rel target = $region3
  $region8: #{unet_forward.22} parent=0 // loop_exit
    _

// kernel: unet_forward.23
$region0: #{unet_forward.23}
  #allocation0 [shape = 'u32[]', space=smem, size = 0x4, offset = 0x4, fixed_abs, tag = 'smem constant byte address 0x4 - core index']
  #allocation1 [shape = 'u32[144,128]{1,0:T(1,128)}', space=vmem, size = 0x12000, scoped, tag = 'internal scratch']
  %s0 = inlined_call_operand.vmem [shape: f32[2,16,288], index: 0, kind: input, shape index: {}]
  %s1 = inlined_call_operand.vmem [shape: f32[288,32], index: 1, kind: input, shape index: {}]
  %s2 = inlined_call_operand.vmem [shape: f32[2,16,32], index: 2, kind: output, shape index: {}]
  %s3 = sld [smem:[#allocation0]]
  $region41: #{unet_forward.23} parent=0
    _
  %s5 = ssub.s32 1, %s3
  %s6 = scalar_select 0, %s5, %s3
  loop: start=0, step=1, limit=4
  $region2: #{unet_forward.23} parent=0 // loop_pre_header
    _
  $region3: #{unet_forward.23} parent=0 // loop_header
    %s8 = sphi 0, %s12
    %p9 = scmp.ge.s32.totalorder %s8, 4
    %s18 = sphi 0, %s20
    %s21 = sphi 0, %s18
    %s22 = sphi 0, %s21
    %s38 = sphi 0, %s22
    %s42 = sphi 0, %s42
    %s44 = sphi 0, %s42
    %s45 = sphi 0, %s44
    %s59 = sphi 0, %s45
    %s65 = sphi 0, %s67
    %s68 = sphi 0, %s65
    %s69 = sphi 0, %s68
    %s85 = sphi 0, %s69
  $region4: #{unet_forward.23} parent=0 // loop_header_branch
    %11 = sbr.rel (%p9) target = $region8
  $region5: #{unet_forward.23} parent=0 // loop_body
    %s13 = ssub.s32 %s8, 1
    %s14 = ssub.s32 %s8, 2
    %s15 = sadd.s32 %s8, 1
    %s16 = ssub.s32 %s8, %s15
    %p17 = scmp.eq.s32.totalorder %s16, 0
    %s19 = sadd.s32 %s18, 1
    %s20 = scalar_select %p17, %s18, %s19
    %p23 = pneg %p17
    %p24 = scmp.eq.s32.totalorder %s8, 1
    %p25 = por %p23, %p24
    %p26 = scmp.ne.s32.totalorder %s18, %s21
    %p27 = scmp.eq.s32.totalorder %s8, 0
    %p28 = por %p26, %p27
    %p29 = scmp.ne.s32.totalorder %s18, %s21
    %p30 = scmp.eq.s32.totalorder %s13, 1
    %p31 = por %p29, %p30
    %p32 = scmp.ne.s32.totalorder %s21, %s22
    %p33 = scmp.eq.s32.totalorder %s13, 0
    %p34 = por %p32, %p33
    %p35 = scmp.ne.s32.totalorder %s21, %s22
    %p36 = scmp.eq.s32.totalorder %s14, 1
    %p37 = por %p35, %p36
    %p39 = scmp.ne.s32.totalorder %s22, %s38
    %p40 = scmp.eq.s32.totalorder %s14, 0
    %p41 = por %p39, %p40
    %s43 = sadd.s32 %s42, 1
    %p46 = scmp.eq.s32.totalorder %s8, 1
    %p47 = scmp.ne.s32.totalorder %s42, %s44
    %p48 = scmp.eq.s32.totalorder %s8, 0
    %p49 = por %p47, %p48
    %p50 = scmp.ne.s32.totalorder %s42, %s44
    %p51 = scmp.eq.s32.totalorder %s13, 1
    %p52 = por %p50, %p51
    %p53 = scmp.ne.s32.totalorder %s44, %s45
    %p54 = scmp.eq.s32.totalorder %s13, 0
    %p55 = por %p53, %p54
    %p56 = scmp.ne.s32.totalorder %s44, %s45
    %p57 = scmp.eq.s32.totalorder %s14, 1
    %p58 = por %p56, %p57
    %p60 = scmp.ne.s32.totalorder %s45, %s59
    %p61 = scmp.eq.s32.totalorder %s14, 0
    %p62 = por %p60, %p61
    %s63 = ssub.s32 %s8, %s15
    %p64 = scmp.eq.s32.totalorder %s63, 0
    %s66 = sadd.s32 %s65, 1
    %s67 = scalar_select %p64, %s65, %s66
    %p70 = pneg %p64
    %p71 = scmp.eq.s32.totalorder %s8, 1
    %p72 = por %p70, %p71
    %p73 = scmp.ne.s32.totalorder %s65, %s68
    %p74 = scmp.eq.s32.totalorder %s8, 0
    %p75 = por %p73, %p74
    %p76 = scmp.ne.s32.totalorder %s65, %s68
    %p77 = scmp.eq.s32.totalorder %s13, 1
    %p78 = por %p76, %p77
    %p79 = scmp.ne.s32.totalorder %s68, %s69
    %p80 = scmp.eq.s32.totalorder %s13, 0
    %p81 = por %p79, %p80
    %p82 = scmp.ne.s32.totalorder %s68, %s69
    %p83 = scmp.eq.s32.totalorder %s14, 1
    %p84 = por %p82, %p83
    %p86 = scmp.ne.s32.totalorder %s69, %s85
    %p87 = scmp.eq.s32.totalorder %s14, 0
    %p88 = por %p86, %p87
    %p89 = scmp.le.s32.totalorder 1, %s8
    %p90 = scmp.lt.s32.totalorder %s8, 3
    %p91 = pnand %p89, %p90
    %p92 = pneg %p91
    // Predicated region
    $region9: #{unet_forward.23} parent=5 // pred_check
      _
    $region10: #{unet_forward.23} parent=5 // pred_check_branch
      %94 = sbr.rel (%p91) target = $region12
    $region11: #{unet_forward.23} parent=5 // pred_region
      %s95 = ssub.s32 %s8, 1
      // Predicated region
      $region13: #{unet_forward.23} parent=11 // pred_check
        %p96 = pneg %p55
      $region14: #{unet_forward.23} parent=11 // pred_check_branch
        %98 = sbr.rel (%p96) target = $region16
      $region15: #{unet_forward.23} parent=11 // pred_region
        _
      $region16: #{unet_forward.23} parent=11 // pred_fallthru
        _
    $region12: #{unet_forward.23} parent=5 // pred_fallthru
      _
    %p99 = scmp.lt.s32.totalorder %s8, 2
    // Predicated region
    $region17: #{unet_forward.23} parent=5 // pred_check
      %p100 = pneg %p99
    $region18: #{unet_forward.23} parent=5 // pred_check_branch
      %102 = sbr.rel (%p100) target = $region20
    $region19: #{unet_forward.23} parent=5 // pred_region
      // Predicated region
      $region21: #{unet_forward.23} parent=19 // pred_check
        %p103 = pneg %p28
      $region22: #{unet_forward.23} parent=19 // pred_check_branch
        %105 = sbr.rel (%p103) target = $region24
      $region23: #{unet_forward.23} parent=19 // pred_region
        %p106 = scmp.lt.s32.totalorder %s8, 1
        %s107 = scalar_select %p106, %s8, 1
        %s108 = smul.addr %s107, 6
        %s109 = smul.addr %s108, 8
        %s110 = scalar_lea.vmem %s0, %s109
      $region24: #{unet_forward.23} parent=19 // pred_fallthru
        _
    $region20: #{unet_forward.23} parent=5 // pred_fallthru
      _
    %p111 = scmp.le.s32.totalorder 1, %s8
    %p112 = scmp.lt.s32.totalorder %s8, 3
    %p113 = pnand %p111, %p112
    %p114 = pneg %p113
    // Predicated region
    $region25: #{unet_forward.23} parent=5 // pred_check
      _
    $region26: #{unet_forward.23} parent=5 // pred_check_branch
      %116 = sbr.rel (%p113) target = $region28
    $region27: #{unet_forward.23} parent=5 // pred_region
      %s117 = ssub.s32 %s8, 1
      %p118 = scmp.lt.s32.totalorder %s13, 1
      %s119 = scalar_select %p118, %s13, 1
      %s120 = smul.addr %s119, 6
      %s121 = smul.addr %s120, 8
      %s122 = scalar_lea.vmem %s0, %s121
      %p123 = pneg %p34
      %p124 = pneg %p31
      %p125 = pneg %p55
      %p126 = pneg %p52
      %p127 = pneg %p81
      %p128 = pneg %p78
      %p129 = scmp.lt.s32.totalorder %s13, 1
      %s130 = scalar_select %p129, %s13, 1
      %s131 = smul.addr %s130, 2
      %s132 = smul.addr %s131, 8
      %s133 = scalar_lea.vmem %s2, %s132
      %p134 = scmp.lt.s32.totalorder %s13, 1
      %s135 = scalar_select %p134, %s13, 1
      %s136 = smul.addr %s135, 6
      %s137 = smul.addr %s136, 8
      %s138 = scalar_lea.vmem %s0, %s137
      %p139 = scmp.lt.s32.totalorder %s13, 1
      %s140 = scalar_select %p139, %s13, 1
      %s141 = smul.addr %s140, 2
      %s142 = smul.addr %s141, 8
      %s143 = scalar_lea.vmem %s2, %s142
      %v144 = vld [vmem:[%s138] sm:$0xff]
      %v145 = vld [vmem:[%s138 + $0x8] sm:$0xff]
      %v146 = vld [vmem:[%s138 + $0x10] sm:$0xff]
      %v147 = vld [vmem:[%s138 + $0x18] sm:$0xff]
      %v148 = vld [vmem:[%s138 + $0x20] sm:$0xff]
      %v149 = vld [vmem:[%s138 + $0x28] sm:$0xff]
      %v150 = vld [vmem:[%s1] sm:$0xff]
      %v151 = vld [vmem:[%s1 + $0x8] sm:$0xff]
      %v152 = vld [vmem:[%s1 + $0x10] sm:$0xff]
      %v153 = vld [vmem:[%s1 + $0x18] sm:$0xff]
      %v154 = vld [vmem:[%s1 + $0x20] sm:$0xff]
      %v155 = vld [vmem:[%s1 + $0x28] sm:$0xff]
      %v156 = vld [vmem:[%s1 + $0x30] sm:$0xff]
      %v157 = vld [vmem:[%s1 + $0x38] sm:$0xff]
      %v158 = vld [vmem:[%s1 + $0x40] sm:$0xff]
      %v159 = vld [vmem:[%s1 + $0x48] sm:$0xff]
      %v160 = vld [vmem:[%s1 + $0x50] sm:$0xff]
      %v161 = vld [vmem:[%s1 + $0x58] sm:$0xff]
      %v162 = vld [vmem:[%s1 + $0x60] sm:$0xff]
      %v163 = vld [vmem:[%s1 + $0x68] sm:$0xff]
      %v164 = vld [vmem:[%s1 + $0x70] sm:$0xff]
      %v165 = vld [vmem:[%s1 + $0x78] sm:$0xff]
      %v166 = vld [vmem:[%s1 + $0x80] sm:$0xff]
      %v167 = vld [vmem:[%s1 + $0x88] sm:$0xff]
      %v168 = vld [vmem:[%s1 + $0x90] sm:$0xff]
      %v169 = vld [vmem:[%s1 + $0x98] sm:$0xff]
      %v170 = vld [vmem:[%s1 + $0xa0] sm:$0xff]
      %v171 = vld [vmem:[%s1 + $0xa8] sm:$0xff]
      %v172 = vld [vmem:[%s1 + $0xb0] sm:$0xff]
      %v173 = vld [vmem:[%s1 + $0xb8] sm:$0xff]
      %v174 = vld [vmem:[%s1 + $0xc0] sm:$0xff]
      %v175 = vld [vmem:[%s1 + $0xc8] sm:$0xff]
      %v176 = vld [vmem:[%s1 + $0xd0] sm:$0xff]
      %v177 = vld [vmem:[%s1 + $0xd8] sm:$0xff]
      %v178 = vld [vmem:[%s1 + $0xe0] sm:$0xff]
      %v179 = vld [vmem:[%s1 + $0xe8] sm:$0xff]
      %v180 = vld [vmem:[%s1 + $0xf0] sm:$0xff]
      %v181 = vld [vmem:[%s1 + $0xf8] sm:$0xff]
      %v182 = vld [vmem:[%s1 + $0x100] sm:$0xff]
      %v183 = vld [vmem:[%s1 + $0x108] sm:$0xff]
      %v184 = vld [vmem:[%s1 + $0x110] sm:$0xff]
      %v185 = vld [vmem:[%s1 + $0x118] sm:$0xff]
      %vm186 = vcmask 261120
      %v188 = vsel %vm186, %v146, 0
      %v191 = vsel %vm186, %v149, 0
      %193 = vmatprep.subr.mxu0 0.0
      %194 = vmatpush1.msra.mxu0 %v150
      %195 = vmatprep.subr.mxu0 0.0
      %196 = vmatpush1.msra.mxu0 %v151
      %197 = vmatprep.subr.mxu0 0.0
      %198 = vmatpush1.msra.mxu0 %v152
      %199 = vmatprep.subr.mxu0 0.0
      %200 = vmatpush1.msra.mxu0 %v153
      %201 = vmatprep.subr.mxu0 0.0
      %202 = vmatpush1.msra.mxu0 %v154
      %203 = vmatprep.subr.mxu0 0.0
      %204 = vmatpush1.msra.mxu0 %v155
      %205 = vmatprep.subr.mxu0 0.0
      %206 = vmatpush1.msra.mxu0 %v156
      %207 = vmatprep.subr.mxu0 0.0
      %208 = vmatpush1.msra.mxu0 %v157
      %209 = vmatprep.subr.mxu0 0.0
      %210 = vmatpush1.msra.mxu0 %v158
      %211 = vmatprep.subr.mxu0 0.0
      %212 = vmatpush1.msra.mxu0 %v159
      %213 = vmatprep.subr.mxu0 0.0
      %214 = vmatpush1.msra.mxu0 %v160
      %215 = vmatprep.subr.mxu0 0.0
      %216 = vmatpush1.msra.mxu0 %v161
      %217 = vmatprep.subr.mxu0 0.0
      %218 = vmatpush1.msra.mxu0 %v162
      %219 = vmatprep.subr.mxu0 0.0
      %220 = vmatpush1.msra.mxu0 %v163
      %221 = vmatprep.subr.mxu0 0.0
      %222 = vmatpush1.msra.mxu0 %v164
      %223 = vmatprep.subr.mxu0 0.0
      %224 = vmatpush1.msra.mxu0 %v165
      %225 = vmatprep.subr.mxu0 0.0
      %226 = vmatpush1.msra.mxu0 %v166
      %227 = vmatprep.subr.mxu0 0.0
      %228 = vmatpush1.msra.mxu0 %v167
      %229 = vmatprep.subr.mxu0 0.0
      %230 = vmatpush1.msra.mxu0 %v168
      %231 = vmatprep.subr.mxu0 0.0
      %232 = vmatpush1.msra.mxu0 %v169
      %233 = vmatprep.subr.mxu0 0.0
      %234 = vmatpush1.msra.mxu0 %v170
      %235 = vmatprep.subr.mxu0 0.0
      %236 = vmatpush1.msra.mxu0 %v171
      %237 = vmatprep.subr.mxu0 0.0
      %238 = vmatpush1.msra.mxu0 %v172
      %239 = vmatprep.subr.mxu0 0.0
      %240 = vmatpush1.msra.mxu0 %v173
      %241 = vmatprep.subr.mxu0 0.0
      %242 = vmatpush1.msra.mxu0 %v174
      %243 = vmatprep.subr.mxu0 0.0
      %244 = vmatpush1.msra.mxu0 %v175
      %245 = vmatprep.subr.mxu0 0.0
      %246 = vmatpush1.msra.mxu0 %v176
      %247 = vmatprep.subr.mxu0 0.0
      %248 = vmatpush1.msra.mxu0 %v177
      %249 = vmatprep.subr.mxu0 0.0
      %250 = vmatpush1.msra.mxu0 %v178
      %251 = vmatprep.subr.mxu0 0.0
      %252 = vmatpush1.msra.mxu0 %v179
      %253 = vmatprep.subr.mxu0 0.0
      %254 = vmatpush1.msra.mxu0 %v180
      %255 = vmatprep.subr.mxu0 0.0
      %256 = vmatpush1.msra.mxu0 %v181
      %257 = vmatprep.mubr.f32.mxu0 %v145
      %258 = vmatmul.mubr.f32.gmra.mrb[0].mxu0 %v144
      %v259 = vpop.f32.mrb[0].mxu0
      %v260 = vadd.f32 0.0, %v259
      %v261 = vpop.f32.mrb[0].mxu0
      %262 = vmatprep.mubr.f32.mxu0 %v148
      %263 = vmatmul.mubr.f32.gmra.mrb[0].mxu0 %v147
      %v264 = vpop.f32.mrb[0].mxu0
      %v265 = vadd.f32 0.0, %v264
      %v266 = vpop.f32.mrb[0].mxu0
      %267 = vdwg.mxu0
      %268 = vmatprep.subr.mxu0 0.0
      %269 = vmatpush1.msra.mxu0 %v182
      %270 = vmatprep.subr.mxu0 0.0
      %271 = vmatpush1.msra.mxu0 %v183
      %272 = vmatprep.subr.mxu0 0.0
      %273 = vmatpush1.msra.mxu0 %v184
      %274 = vmatprep.subr.mxu0 0.0
      %275 = vmatpush1.msra.mxu0 %v185
      %276 = vmatprep.subr.mxu0 0.0
      %277 = vmatpush1.msra.mxu0 0.0
      %278 = vmatprep.subr.mxu0 0.0
      %279 = vmatpush1.msra.mxu0 0.0
      %280 = vmatprep.subr.mxu0 0.0
      %281 = vmatpush1.msra.mxu0 0.0
      %282 = vmatprep.subr.mxu0 0.0
      %283 = vmatpush1.msra.mxu0 0.0
      %284 = vmatprep.subr.mxu0 0.0
      %285 = vmatpush1.msra.mxu0 0.0
      %286 = vmatprep.subr.mxu0 0.0
      %287 = vmatpush1.msra.mxu0 0.0
      %288 = vmatprep.subr.mxu0 0.0
      %289 = vmatpush1.msra.mxu0 0.0
      %290 = vmatprep.subr.mxu0 0.0
      %291 = vmatpush1.msra.mxu0 0.0
      %292 = vmatprep.subr.mxu0 0.0
      %293 = vmatpush1.msra.mxu0 0.0
      %294 = vmatprep.subr.mxu0 0.0
      %295 = vmatpush1.msra.mxu0 0.0
      %296 = vmatprep.subr.mxu0 0.0
      %297 = vmatpush1.msra.mxu0 0.0
      %298 = vmatprep.subr.mxu0 0.0
      %299 = vmatpush1.msra.mxu0 0.0
      %300 = vmatprep.subr.mxu0 0.0
      %301 = vmatpush1.msra.mxu0 0.0
      %302 = vmatprep.subr.mxu0 0.0
      %303 = vmatpush1.msra.mxu0 0.0
      %304 = vmatprep.subr.mxu0 0.0
      %305 = vmatpush1.msra.mxu0 0.0
      %306 = vmatprep.subr.mxu0 0.0
      %307 = vmatpush1.msra.mxu0 0.0
      %308 = vmatprep.subr.mxu0 0.0
      %309 = vmatpush1.msra.mxu0 0.0
      %310 = vmatprep.subr.mxu0 0.0
      %311 = vmatpush1.msra.mxu0 0.0
      %312 = vmatprep.subr.mxu0 0.0
      %313 = vmatpush1.msra.mxu0 0.0
      %314 = vmatprep.subr.mxu0 0.0
      %315 = vmatpush1.msra.mxu0 0.0
      %316 = vmatprep.subr.mxu0 0.0
      %317 = vmatpush1.msra.mxu0 0.0
      %318 = vmatprep.subr.mxu0 0.0
      %319 = vmatpush1.msra.mxu0 0.0
      %320 = vmatprep.subr.mxu0 0.0
      %321 = vmatpush1.msra.mxu0 0.0
      %322 = vmatprep.subr.mxu0 0.0
      %323 = vmatpush1.msra.mxu0 0.0
      %324 = vmatprep.subr.mxu0 0.0
      %325 = vmatpush1.msra.mxu0 0.0
      %326 = vmatprep.subr.mxu0 0.0
      %327 = vmatpush1.msra.mxu0 0.0
      %328 = vmatprep.subr.mxu0 0.0
      %329 = vmatpush1.msra.mxu0 0.0
      %330 = vmatprep.subr.mxu0 0.0
      %331 = vmatpush1.msra.mxu0 0.0
      %332 = vmatprep.mubr.f32.mxu0 0.0
      %333 = vmatmul.mubr.f32.gmra.mrb[0].mxu0 %v188
      %v334 = vpop.f32.mrb[0].mxu0
      %v335 = vadd.f32 %v260, %v334
      %v336 = vpop.f32.mrb[0].mxu0
      %337 = vmatprep.mubr.f32.mxu0 0.0
      %338 = vmatmul.mubr.f32.gmra.mrb[0].mxu0 %v191
      %v339 = vpop.f32.mrb[0].mxu0
      %v340 = vadd.f32 %v265, %v339
      %v341 = vpop.f32.mrb[0].mxu0
      %342 = vdwg.mxu0
      %v343 = vsel %vm186, %v335, 0.0
      %v344 = vsel %vm186, %v340, 0.0
      %v345 = vadd.f32 %v343, %v344
      %v346 = vrot.slane %v345, 4
      %v347 = vadd.f32 %v345, %v346
      %v348 = vrot.slane %v347, 2
      %v349 = vadd.f32 %v347, %v348
      %v350 = vrot.slane %v349, 1
      %v351 = vadd.f32 %v349, %v350
      %v352 = vmul.f32 %v335, %v335
      %v353 = vmul.f32 %v340, %v340
      %v354 = vsel %vm186, %v352, 0.0
      %v355 = vsel %vm186, %v353, 0.0
      %v356 = vadd.f32 %v354, %v355
      %v357 = vrot.slane %v356, 4
      %v358 = vadd.f32 %v356, %v357
      %v359 = vrot.slane %v358, 2
      %v360 = vadd.f32 %v358, %v359
      %v361 = vrot.slane %v360, 1
      %v362 = vadd.f32 %v360, %v361
      %v363 = vrcp.pop 16.0
      %v364 = vmul.f32 %v351, %v363
      %v365 = vmul.f32 %v362, %v363
      %v366 = vmul.f32 %v364, %v364
      %v367 = vsub.f32 %v365, %v366
      %v368 = vadd.f32 %v367, 1e-05
      %v369 = vrsqrt.pop %v368
      %v370 = vsub.f32 0.0, %v364
      %v371 = vmul.f32 %v370, %v369
      %v372 = vmul.f32 %v335, %v369
      %v373 = vmul.f32 %v340, %v369
      %v374 = vadd.f32 %v372, %v371
      %v375 = vadd.f32 %v373, %v371
      %vm376 = vcmp.ge.f32.partialorder %v374, 0.0
      %vm377 = vcmp.ge.f32.partialorder %v375, 0.0
      %v378 = vmul.f32 %v374, 0.2
      %v379 = vmul.f32 %v375, 0.2
      %v380 = vsel %vm376, %v374, %v378
      %v381 = vsel %vm377, %v375, %v379
      %382 = vst.msk [vmem:[%s143] sm:$0xff] %vm186, %v380
      %383 = vst.msk [vmem:[%s143 + $0x8] sm:$0xff] %vm186, %v381
      %p384 = scmp.lt.s32.totalorder %s13, 1
      %s385 = scalar_select %p384, %s13, 1
      %s386 = smul.addr %s385, 2
      %s387 = smul.addr %s386, 8
      %s388 = scalar_lea.vmem %s2, %s387
      // Predicated region
      $region29: #{unet_forward.23} parent=27 // pred_check
        %p389 = pneg %p78
      $region30: #{unet_forward.23} parent=27 // pred_check_branch
        %391 = sbr.rel (%p389) target = $region32
      $region31: #{unet_forward.23} parent=27 // pred_region
        _
      $region32: #{unet_forward.23} parent=27 // pred_fallthru
        _
    $region28: #{unet_forward.23} parent=5 // pred_fallthru
      _
    %p392 = scmp.le.s32.totalorder 2, %s8
    // Predicated region
    $region33: #{unet_forward.23} parent=5 // pred_check
      %p393 = pneg %p392
    $region34: #{unet_forward.23} parent=5 // pred_check_branch
      %395 = sbr.rel (%p393) target = $region36
    $region35: #{unet_forward.23} parent=5 // pred_region
      %s396 = ssub.s32 %s8, 2
      // Predicated region
      $region37: #{unet_forward.23} parent=35 // pred_check
        %p397 = pneg %p84
      $region38: #{unet_forward.23} parent=35 // pred_check_branch
        %399 = sbr.rel (%p397) target = $region40
      $region39: #{unet_forward.23} parent=35 // pred_region
        %p400 = scmp.lt.s32.totalorder %s14, 1
        %s401 = scalar_select %p400, %s14, 1
        %s402 = smul.addr %s401, 2
        %s403 = smul.addr %s402, 8
        %s404 = scalar_lea.vmem %s2, %s403
      $region40: #{unet_forward.23} parent=35 // pred_fallthru
        _
    $region36: #{unet_forward.23} parent=5 // pred_fallthru
      _
  $region6: #{unet_forward.23} parent=0 // loop_footer
    %s12 = sadd.s32 1, %s8
  $region7: #{unet_forward.23} parent=0 // loop_footer_branch
    %7 = sbr.rel target = $region3
  $region8: #{unet_forward.23} parent=0 // loop_exit
    _

// kernel: unet_forward.25
$region0: #{unet_forward.25}
  #allocation0 [shape = 'u32[]', space=smem, size = 0x4, offset = 0x4, fixed_abs, tag = 'smem constant byte address 0x4 - core index']
  #allocation1 [shape = 'u32[144,128]{1,0:T(1,128)}', space=vmem, size = 0x12000, scoped, tag = 'internal scratch']
  %s0 = inlined_call_operand.vmem [shape: f32[2,4,576], index: 0, kind: input, shape index: {}]
  %s1 = inlined_call_operand.vmem [shape: f32[576,64], index: 1, kind: input, shape index: {}]
  %s2 = inlined_call_operand.vmem [shape: f32[2,4,64], index: 2, kind: output, shape index: {}]
  %s3 = sld [smem:[#allocation0]]
  $region41: #{unet_forward.25} parent=0
    _
  %s5 = ssub.s32 1, %s3
  %s6 = scalar_select 0, %s5, %s3
  loop: start=0, step=1, limit=4
  $region2: #{unet_forward.25} parent=0 // loop_pre_header
    _
  $region3: #{unet_forward.25} parent=0 // loop_header
    %s8 = sphi 0, %s12
    %p9 = scmp.ge.s32.totalorder %s8, 4
    %s18 = sphi 0, %s20
    %s21 = sphi 0, %s18
    %s22 = sphi 0, %s21
    %s38 = sphi 0, %s22
    %s42 = sphi 0, %s42
    %s44 = sphi 0, %s42
    %s45 = sphi 0, %s44
    %s59 = sphi 0, %s45
    %s65 = sphi 0, %s67
    %s68 = sphi 0, %s65
    %s69 = sphi 0, %s68
    %s85 = sphi 0, %s69
  $region4: #{unet_forward.25} parent=0 // loop_header_branch
    %11 = sbr.rel (%p9) target = $region8
  $region5: #{unet_forward.25} parent=0 // loop_body
    %s13 = ssub.s32 %s8, 1
    %s14 = ssub.s32 %s8, 2
    %s15 = sadd.s32 %s8, 1
    %s16 = ssub.s32 %s8, %s15
    %p17 = scmp.eq.s32.totalorder %s16, 0
    %s19 = sadd.s32 %s18, 1
    %s20 = scalar_select %p17, %s18, %s19
    %p23 = pneg %p17
    %p24 = scmp.eq.s32.totalorder %s8, 1
    %p25 = por %p23, %p24
    %p26 = scmp.ne.s32.totalorder %s18, %s21
    %p27 = scmp.eq.s32.totalorder %s8, 0
    %p28 = por %p26, %p27
    %p29 = scmp.ne.s32.totalorder %s18, %s21
    %p30 = scmp.eq.s32.totalorder %s13, 1
    %p31 = por %p29, %p30
    %p32 = scmp.ne.s32.totalorder %s21, %s22
    %p33 = scmp.eq.s32.totalorder %s13, 0
    %p34 = por %p32, %p33
    %p35 = scmp.ne.s32.totalorder %s21, %s22
    %p36 = scmp.eq.s32.totalorder %s14, 1
    %p37 = por %p35, %p36
    %p39 = scmp.ne.s32.totalorder %s22, %s38
    %p40 = scmp.eq.s32.totalorder %s14, 0
    %p41 = por %p39, %p40
    %s43 = sadd.s32 %s42, 1
    %p46 = scmp.eq.s32.totalorder %s8, 1
    %p47 = scmp.ne.s32.totalorder %s42, %s44
    %p48 = scmp.eq.s32.totalorder %s8, 0
    %p49 = por %p47, %p48
    %p50 = scmp.ne.s32.totalorder %s42, %s44
    %p51 = scmp.eq.s32.totalorder %s13, 1
    %p52 = por %p50, %p51
    %p53 = scmp.ne.s32.totalorder %s44, %s45
    %p54 = scmp.eq.s32.totalorder %s13, 0
    %p55 = por %p53, %p54
    %p56 = scmp.ne.s32.totalorder %s44, %s45
    %p57 = scmp.eq.s32.totalorder %s14, 1
    %p58 = por %p56, %p57
    %p60 = scmp.ne.s32.totalorder %s45, %s59
    %p61 = scmp.eq.s32.totalorder %s14, 0
    %p62 = por %p60, %p61
    %s63 = ssub.s32 %s8, %s15
    %p64 = scmp.eq.s32.totalorder %s63, 0
    %s66 = sadd.s32 %s65, 1
    %s67 = scalar_select %p64, %s65, %s66
    %p70 = pneg %p64
    %p71 = scmp.eq.s32.totalorder %s8, 1
    %p72 = por %p70, %p71
    %p73 = scmp.ne.s32.totalorder %s65, %s68
    %p74 = scmp.eq.s32.totalorder %s8, 0
    %p75 = por %p73, %p74
    %p76 = scmp.ne.s32.totalorder %s65, %s68
    %p77 = scmp.eq.s32.totalorder %s13, 1
    %p78 = por %p76, %p77
    %p79 = scmp.ne.s32.totalorder %s68, %s69
    %p80 = scmp.eq.s32.totalorder %s13, 0
    %p81 = por %p79, %p80
    %p82 = scmp.ne.s32.totalorder %s68, %s69
    %p83 = scmp.eq.s32.totalorder %s14, 1
    %p84 = por %p82, %p83
    %p86 = scmp.ne.s32.totalorder %s69, %s85
    %p87 = scmp.eq.s32.totalorder %s14, 0
    %p88 = por %p86, %p87
    %p89 = scmp.le.s32.totalorder 1, %s8
    %p90 = scmp.lt.s32.totalorder %s8, 3
    %p91 = pnand %p89, %p90
    %p92 = pneg %p91
    // Predicated region
    $region9: #{unet_forward.25} parent=5 // pred_check
      _
    $region10: #{unet_forward.25} parent=5 // pred_check_branch
      %94 = sbr.rel (%p91) target = $region12
    $region11: #{unet_forward.25} parent=5 // pred_region
      %s95 = ssub.s32 %s8, 1
      // Predicated region
      $region13: #{unet_forward.25} parent=11 // pred_check
        %p96 = pneg %p55
      $region14: #{unet_forward.25} parent=11 // pred_check_branch
        %98 = sbr.rel (%p96) target = $region16
      $region15: #{unet_forward.25} parent=11 // pred_region
        _
      $region16: #{unet_forward.25} parent=11 // pred_fallthru
        _
    $region12: #{unet_forward.25} parent=5 // pred_fallthru
      _
    %p99 = scmp.lt.s32.totalorder %s8, 2
    // Predicated region
    $region17: #{unet_forward.25} parent=5 // pred_check
      %p100 = pneg %p99
    $region18: #{unet_forward.25} parent=5 // pred_check_branch
      %102 = sbr.rel (%p100) target = $region20
    $region19: #{unet_forward.25} parent=5 // pred_region
      // Predicated region
      $region21: #{unet_forward.25} parent=19 // pred_check
        %p103 = pneg %p28
      $region22: #{unet_forward.25} parent=19 // pred_check_branch
        %105 = sbr.rel (%p103) target = $region24
      $region23: #{unet_forward.25} parent=19 // pred_region
        %p106 = scmp.lt.s32.totalorder %s8, 1
        %s107 = scalar_select %p106, %s8, 1
        %s108 = smul.addr %s107, 5
        %s109 = smul.addr %s108, 4
        %s110 = scalar_lea.vmem %s0, %s109
      $region24: #{unet_forward.25} parent=19 // pred_fallthru
        _
    $region20: #{unet_forward.25} parent=5 // pred_fallthru
      _
    %p111 = scmp.le.s32.totalorder 1, %s8
    %p112 = scmp.lt.s32.totalorder %s8, 3
    %p113 = pnand %p111, %p112
    %p114 = pneg %p113
    // Predicated region
    $region25: #{unet_forward.25} parent=5 // pred_check
      _
    $region26: #{unet_forward.25} parent=5 // pred_check_branch
      %116 = sbr.rel (%p113) target = $region28
    $region27: #{unet_forward.25} parent=5 // pred_region
      %s117 = ssub.s32 %s8, 1
      %p118 = scmp.lt.s32.totalorder %s13, 1
      %s119 = scalar_select %p118, %s13, 1
      %s120 = smul.addr %s119, 5
      %s121 = smul.addr %s120, 4
      %s122 = scalar_lea.vmem %s0, %s121
      %p123 = pneg %p34
      %p124 = pneg %p31
      %p125 = pneg %p55
      %p126 = pneg %p52
      %p127 = pneg %p81
      %p128 = pneg %p78
      %p129 = scmp.lt.s32.totalorder %s13, 1
      %s130 = scalar_select %p129, %s13, 1
      %s131 = smul.addr %s130, 4
      %s132 = scalar_lea.vmem %s2, %s131
      %p133 = scmp.lt.s32.totalorder %s13, 1
      %s134 = scalar_select %p133, %s13, 1
      %s135 = smul.addr %s134, 5
      %s136 = smul.addr %s135, 4
      %s137 = scalar_lea.vmem %s0, %s136
      %p138 = scmp.lt.s32.totalorder %s13, 1
      %s139 = scalar_select %p138, %s13, 1
      %s140 = smul.addr %s139, 4
      %s141 = scalar_lea.vmem %s2, %s140
      %v142 = vld [vmem:[%s137] sm:$0xff]
      %v143 = vld [vmem:[%s137 + $0x8] sm:$0xff]
      %v144 = vld [vmem:[%s137 + $0x10] sm:$0xf]
      %v145 = vld [vmem:[%s1] sm:$0xff]
      %v146 = vld [vmem:[%s1 + $0x8] sm:$0xff]
      %v147 = vld [vmem:[%s1 + $0x10] sm:$0xff]
      %v148 = vld [vmem:[%s1 + $0x18] sm:$0xff]
      %v149 = vld [vmem:[%s1 + $0x20] sm:$0xff]
      %v150 = vld [vmem:[%s1 + $0x28] sm:$0xff]
      %v151 = vld [vmem:[%s1 + $0x30] sm:$0xff]
      %v152 = vld [vmem:[%s1 + $0x38] sm:$0xff]
      %v153 = vld [vmem:[%s1 + $0x40] sm:$0xff]
      %v154 = vld [vmem:[%s1 + $0x48] sm:$0xff]
      %v155 = vld [vmem:[%s1 + $0x50] sm:$0xff]
      %v156 = vld [vmem:[%s1 + $0x58] sm:$0xff]
      %v157 = vld [vmem:[%s1 + $0x60] sm:$0xff]
      %v158 = vld [vmem:[%s1 + $0x68] sm:$0xff]
      %v159 = vld [vmem:[%s1 + $0x70] sm:$0xff]
      %v160 = vld [vmem:[%s1 + $0x78] sm:$0xff]
      %v161 = vld [vmem:[%s1 + $0x80] sm:$0xff]
      %v162 = vld [vmem:[%s1 + $0x88] sm:$0xff]
      %v163 = vld [vmem:[%s1 + $0x90] sm:$0xff]
      %v164 = vld [vmem:[%s1 + $0x98] sm:$0xff]
      %v165 = vld [vmem:[%s1 + $0xa0] sm:$0xff]
      %v166 = vld [vmem:[%s1 + $0xa8] sm:$0xff]
      %v167 = vld [vmem:[%s1 + $0xb0] sm:$0xff]
      %v168 = vld [vmem:[%s1 + $0xb8] sm:$0xff]
      %v169 = vld [vmem:[%s1 + $0xc0] sm:$0xff]
      %v170 = vld [vmem:[%s1 + $0xc8] sm:$0xff]
      %v171 = vld [vmem:[%s1 + $0xd0] sm:$0xff]
      %v172 = vld [vmem:[%s1 + $0xd8] sm:$0xff]
      %v173 = vld [vmem:[%s1 + $0xe0] sm:$0xff]
      %v174 = vld [vmem:[%s1 + $0xe8] sm:$0xff]
      %v175 = vld [vmem:[%s1 + $0xf0] sm:$0xff]
      %v176 = vld [vmem:[%s1 + $0xf8] sm:$0xff]
      %v177 = vld [vmem:[%s1 + $0x100] sm:$0xff]
      %v178 = vld [vmem:[%s1 + $0x108] sm:$0xff]
      %v179 = vld [vmem:[%s1 + $0x110] sm:$0xff]
      %v180 = vld [vmem:[%s1 + $0x118] sm:$0xff]
      %v181 = vld [vmem:[%s1 + $0x120] sm:$0xff]
      %v182 = vld [vmem:[%s1 + $0x128] sm:$0xff]
      %v183 = vld [vmem:[%s1 + $0x130] sm:$0xff]
      %v184 = vld [vmem:[%s1 + $0x138] sm:$0xff]
      %v185 = vld [vmem:[%s1 + $0x140] sm:$0xff]
      %v186 = vld [vmem:[%s1 + $0x148] sm:$0xff]
      %v187 = vld [vmem:[%s1 + $0x150] sm:$0xff]
      %v188 = vld [vmem:[%s1 + $0x158] sm:$0xff]
      %v189 = vld [vmem:[%s1 + $0x160] sm:$0xff]
      %v190 = vld [vmem:[%s1 + $0x168] sm:$0xff]
      %v191 = vld [vmem:[%s1 + $0x170] sm:$0xff]
      %v192 = vld [vmem:[%s1 + $0x178] sm:$0xff]
      %v193 = vld [vmem:[%s1 + $0x180] sm:$0xff]
      %v194 = vld [vmem:[%s1 + $0x188] sm:$0xff]
      %v195 = vld [vmem:[%s1 + $0x190] sm:$0xff]
      %v196 = vld [vmem:[%s1 + $0x198] sm:$0xff]
      %v197 = vld [vmem:[%s1 + $0x1a0] sm:$0xff]
      %v198 = vld [vmem:[%s1 + $0x1a8] sm:$0xff]
      %v199 = vld [vmem:[%s1 + $0x1b0] sm:$0xff]
      %v200 = vld [vmem:[%s1 + $0x1b8] sm:$0xff]
      %v201 = vld [vmem:[%s1 + $0x1c0] sm:$0xff]
      %v202 = vld [vmem:[%s1 + $0x1c8] sm:$0xff]
      %v203 = vld [vmem:[%s1 + $0x1d0] sm:$0xff]
      %v204 = vld [vmem:[%s1 + $0x1d8] sm:$0xff]
      %v205 = vld [vmem:[%s1 + $0x1e0] sm:$0xff]
      %v206 = vld [vmem:[%s1 + $0x1e8] sm:$0xff]
      %v207 = vld [vmem:[%s1 + $0x1f0] sm:$0xff]
      %v208 = vld [vmem:[%s1 + $0x1f8] sm:$0xff]
      %v209 = vld [vmem:[%s1 + $0x200] sm:$0xff]
      %v210 = vld [vmem:[%s1 + $0x208] sm:$0xff]
      %v211 = vld [vmem:[%s1 + $0x210] sm:$0xff]
      %v212 = vld [vmem:[%s1 + $0x218] sm:$0xff]
      %v213 = vld [vmem:[%s1 + $0x220] sm:$0xff]
      %v214 = vld [vmem:[%s1 + $0x228] sm:$0xff]
      %v215 = vld [vmem:[%s1 + $0x230] sm:$0xff]
      %v216 = vld [vmem:[%s1 + $0x238] sm:$0xff]
      %v220 = vcombine.high %v142, %v142
      %v221 = vcombine.high %v143, %v143
      %vm224 = vcmask 523264
      %v225 = vsel %vm224, %v144, 0
      %227 = vmatprep.subr.mxu0 0.0
      %228 = vmatpush1.msra.mxu0 %v145
      %229 = vmatprep.subr.mxu0 0.0
      %230 = vmatpush1.msra.mxu0 %v146
      %231 = vmatprep.subr.mxu0 0.0
      %232 = vmatpush1.msra.mxu0 %v147
      %233 = vmatprep.subr.mxu0 0.0
      %234 = vmatpush1.msra.mxu0 %v148
      %235 = vmatprep.subr.mxu0 0.0
      %236 = vmatpush1.msra.mxu0 %v149
      %237 = vmatprep.subr.mxu0 0.0
      %238 = vmatpush1.msra.mxu0 %v150
      %239 = vmatprep.subr.mxu0 0.0
      %240 = vmatpush1.msra.mxu0 %v151
      %241 = vmatprep.subr.mxu0 0.0
      %242 = vmatpush1.msra.mxu0 %v152
      %243 = vmatprep.subr.mxu0 0.0
      %244 = vmatpush1.msra.mxu0 %v153
      %245 = vmatprep.subr.mxu0 0.0
      %246 = vmatpush1.msra.mxu0 %v154
      %247 = vmatprep.subr.mxu0 0.0
      %248 = vmatpush1.msra.mxu0 %v155
      %249 = vmatprep.subr.mxu0 0.0
      %250 = vmatpush1.msra.mxu0 %v156
      %251 = vmatprep.subr.mxu0 0.0
      %252 = vmatpush1.msra.mxu0 %v157
      %253 = vmatprep.subr.mxu0 0.0
      %254 = vmatpush1.msra.mxu0 %v158
      %255 = vmatprep.subr.mxu0 0.0
      %256 = vmatpush1.msra.mxu0 %v159
      %257 = vmatprep.subr.mxu0 0.0
      %258 = vmatpush1.msra.mxu0 %v160
      %259 = vmatprep.subr.mxu0 0.0
      %260 = vmatpush1.msra.mxu0 %v161
      %261 = vmatprep.subr.mxu0 0.0
      %262 = vmatpush1.msra.mxu0 %v162
      %263 = vmatprep.subr.mxu0 0.0
      %264 = vmatpush1.msra.mxu0 %v163
      %265 = vmatprep.subr.mxu0 0.0
      %266 = vmatpush1.msra.mxu0 %v164
      %267 = vmatprep.subr.mxu0 0.0
      %268 = vmatpush1.msra.mxu0 %v165
      %269 = vmatprep.subr.mxu0 0.0
      %270 = vmatpush1.msra.mxu0 %v166
      %271 = vmatprep.subr.mxu0 0.0
      %272 = vmatpush1.msra.mxu0 %v167
      %273 = vmatprep.subr.mxu0 0.0
      %274 = vmatpush1.msra.mxu0 %v168
      %275 = vmatprep.subr.mxu0 0.0
      %276 = vmatpush1.msra.mxu0 %v169
      %277 = vmatprep.subr.mxu0 0.0
      %278 = vmatpush1.msra.mxu0 %v170
      %279 = vmatprep.subr.mxu0 0.0
      %280 = vmatpush1.msra.mxu0 %v171
      %281 = vmatprep.subr.mxu0 0.0
      %282 = vmatpush1.msra.mxu0 %v172
      %283 = vmatprep.subr.mxu0 0.0
      %284 = vmatpush1.msra.mxu0 %v173
      %285 = vmatprep.subr.mxu0 0.0
      %286 = vmatpush1.msra.mxu0 %v174
      %287 = vmatprep.subr.mxu0 0.0
      %288 = vmatpush1.msra.mxu0 %v175
      %289 = vmatprep.subr.mxu0 0.0
      %290 = vmatpush1.msra.mxu0 %v176
      %291 = vmatprep.mubr.f32.mxu0 %v220
      %292 = vmatmul.mubr.f32.gmra.mrb[0].mxu0 %v142
      %v293 = vpop.f32.mrb[0].mxu0
      %v294 = vadd.f32 0.0, %v293
      %v295 = vpop.f32.mrb[0].mxu0
      %296 = vdwg.mxu0
      %297 = vmatprep.subr.mxu0 0.0
      %298 = vmatpush1.msra.mxu0 %v177
      %299 = vmatprep.subr.mxu0 0.0
      %300 = vmatpush1.msra.mxu0 %v178
      %301 = vmatprep.subr.mxu0 0.0
      %302 = vmatpush1.msra.mxu0 %v179
      %303 = vmatprep.subr.mxu0 0.0
      %304 = vmatpush1.msra.mxu0 %v180
      %305 = vmatprep.subr.mxu0 0.0
      %306 = vmatpush1.msra.mxu0 %v181
      %307 = vmatprep.subr.mxu0 0.0
      %308 = vmatpush1.msra.mxu0 %v182
      %309 = vmatprep.subr.mxu0 0.0
      %310 = vmatpush1.msra.mxu0 %v183
      %311 = vmatprep.subr.mxu0 0.0
      %312 = vmatpush1.msra.mxu0 %v184
      %313 = vmatprep.subr.mxu0 0.0
      %314 = vmatpush1.msra.mxu0 %v185
      %315 = vmatprep.subr.mxu0 0.0
      %316 = vmatpush1.msra.mxu0 %v186
      %317 = vmatprep.subr.mxu0 0.0
      %318 = vmatpush1.msra.mxu0 %v187
      %319 = vmatprep.subr.mxu0 0.0
      %320 = vmatpush1.msra.mxu0 %v188
      %321 = vmatprep.subr.mxu0 0.0
      %322 = vmatpush1.msra.mxu0 %v189
      %323 = vmatprep.subr.mxu0 0.0
      %324 = vmatpush1.msra.mxu0 %v190
      %325 = vmatprep.subr.mxu0 0.0
      %326 = vmatpush1.msra.mxu0 %v191
      %327 = vmatprep.subr.mxu0 0.0
      %328 = vmatpush1.msra.mxu0 %v192
      %329 = vmatprep.subr.mxu0 0.0
      %330 = vmatpush1.msra.mxu0 %v193
      %331 = vmatprep.subr.mxu0 0.0
      %332 = vmatpush1.msra.mxu0 %v194
      %333 = vmatprep.subr.mxu0 0.0
      %334 = vmatpush1.msra.mxu0 %v195
      %335 = vmatprep.subr.mxu0 0.0
      %336 = vmatpush1.msra.mxu0 %v196
      %337 = vmatprep.subr.mxu0 0.0
      %338 = vmatpush1.msra.mxu0 %v197
      %339 = vmatprep.subr.mxu0 0.0
      %340 = vmatpush1.msra.mxu0 %v198
      %341 = vmatprep.subr.mxu0 0.0
      %342 = vmatpush1.msra.mxu0 %v199
      %343 = vmatprep.subr.mxu0 0.0
      %344 = vmatpush1.msra.mxu0 %v200
      %345 = vmatprep.subr.mxu0 0.0
      %346 = vmatpush1.msra.mxu0 %v201
      %347 = vmatprep.subr.mxu0 0.0
      %348 = vmatpush1.msra.mxu0 %v202
      %349 = vmatprep.subr.mxu0 0.0
      %350 = vmatpush1.msra.mxu0 %v203
      %351 = vmatprep.subr.mxu0 0.0
      %352 = vmatpush1.msra.mxu0 %v204
      %353 = vmatprep.subr.mxu0 0.0
      %354 = vmatpush1.msra.mxu0 %v205
      %355 = vmatprep.subr.mxu0 0.0
      %356 = vmatpush1.msra.mxu0 %v206
      %357 = vmatprep.subr.mxu0 0.0
      %358 = vmatpush1.msra.mxu0 %v207
      %359 = vmatprep.subr.mxu0 0.0
      %360 = vmatpush1.msra.mxu0 %v208
      %361 = vmatprep.mubr.f32.mxu0 %v221
      %362 = vmatmul.mubr.f32.gmra.mrb[0].mxu0 %v143
      %v363 = vpop.f32.mrb[0].mxu0
      %v364 = vadd.f32 %v294, %v363
      %v365 = vpop.f32.mrb[0].mxu0
      %366 = vdwg.mxu0
      %367 = vmatprep.subr.mxu0 0.0
      %368 = vmatpush1.msra.mxu0 %v209
      %369 = vmatprep.subr.mxu0 0.0
      %370 = vmatpush1.msra.mxu0 %v210
      %371 = vmatprep.subr.mxu0 0.0
      %372 = vmatpush1.msra.mxu0 %v211
      %373 = vmatprep.subr.mxu0 0.0
      %374 = vmatpush1.msra.mxu0 %v212
      %375 = vmatprep.subr.mxu0 0.0
      %376 = vmatpush1.msra.mxu0 %v213
      %377 = vmatprep.subr.mxu0 0.0
      %378 = vmatpush1.msra.mxu0 %v214
      %379 = vmatprep.subr.mxu0 0.0
      %380 = vmatpush1.msra.mxu0 %v215
      %381 = vmatprep.subr.mxu0 0.0
      %382 = vmatpush1.msra.mxu0 %v216
      %383 = vmatprep.subr.mxu0 0.0
      %384 = vmatpush1.msra.mxu0 0.0
      %385 = vmatprep.subr.mxu0 0.0
      %386 = vmatpush1.msra.mxu0 0.0
      %387 = vmatprep.subr.mxu0 0.0
      %388 = vmatpush1.msra.mxu0 0.0
      %389 = vmatprep.subr.mxu0 0.0
      %390 = vmatpush1.msra.mxu0 0.0
      %391 = vmatprep.subr.mxu0 0.0
      %392 = vmatpush1.msra.mxu0 0.0
      %393 = vmatprep.subr.mxu0 0.0
      %394 = vmatpush1.msra.mxu0 0.0
      %395 = vmatprep.subr.mxu0 0.0
      %396 = vmatpush1.msra.mxu0 0.0
      %397 = vmatprep.subr.mxu0 0.0
      %398 = vmatpush1.msra.mxu0 0.0
      %399 = vmatprep.subr.mxu0 0.0
      %400 = vmatpush1.msra.mxu0 0.0
      %401 = vmatprep.subr.mxu0 0.0
      %402 = vmatpush1.msra.mxu0 0.0
      %403 = vmatprep.subr.mxu0 0.0
      %404 = vmatpush1.msra.mxu0 0.0
      %405 = vmatprep.subr.mxu0 0.0
      %406 = vmatpush1.msra.mxu0 0.0
      %407 = vmatprep.subr.mxu0 0.0
      %408 = vmatpush1.msra.mxu0 0.0
      %409 = vmatprep.subr.mxu0 0.0
      %410 = vmatpush1.msra.mxu0 0.0
      %411 = vmatprep.subr.mxu0 0.0
      %412 = vmatpush1.msra.mxu0 0.0
      %413 = vmatprep.subr.mxu0 0.0
      %414 = vmatpush1.msra.mxu0 0.0
      %415 = vmatprep.subr.mxu0 0.0
      %416 = vmatpush1.msra.mxu0 0.0
      %417 = vmatprep.subr.mxu0 0.0
      %418 = vmatpush1.msra.mxu0 0.0
      %419 = vmatprep.subr.mxu0 0.0
      %420 = vmatpush1.msra.mxu0 0.0
      %421 = vmatprep.subr.mxu0 0.0
      %422 = vmatpush1.msra.mxu0 0.0
      %423 = vmatprep.subr.mxu0 0.0
      %424 = vmatpush1.msra.mxu0 0.0
      %425 = vmatprep.subr.mxu0 0.0
      %426 = vmatpush1.msra.mxu0 0.0
      %427 = vmatprep.subr.mxu0 0.0
      %428 = vmatpush1.msra.mxu0 0.0
      %429 = vmatprep.subr.mxu0 0.0
      %430 = vmatpush1.msra.mxu0 0.0
      %431 = vmatprep.mubr.f32.mxu0 0.0
      %432 = vmatmul.mubr.f32.gmra.mrb[0].mxu0 %v225
      %v433 = vpop.f32.mrb[0].mxu0
      %v434 = vadd.f32 %v364, %v433
      %v435 = vpop.f32.mrb[0].mxu0
      %436 = vdwg.mxu0
      %vm437 = vcmask 519168
      %v438 = vsel %vm437, %v434, 0.0
      %v439 = vrot.slane %v438, 4
      %v440 = vadd.f32 %v438, %v439
      %v441 = vrot.slane %v440, 2
      %v442 = vadd.f32 %v440, %v441
      %v443 = vrot.slane %v442, 1
      %v444 = vadd.f32 %v442, %v443
      %v445 = vmul.f32 %v434, %v434
      %v446 = vsel %vm437, %v445, 0.0
      %v447 = vrot.slane %v446, 4
      %v448 = vadd.f32 %v446, %v447
      %v449 = vrot.slane %v448, 2
      %v450 = vadd.f32 %v448, %v449
      %v451 = vrot.slane %v450, 1
      %v452 = vadd.f32 %v450, %v451
      %v453 = vrcp.pop 4.0
      %v454 = vmul.f32 %v444, %v453
      %v455 = vmul.f32 %v452, %v453
      %v456 = vmul.f32 %v454, %v454
      %v457 = vsub.f32 %v455, %v456
      %v458 = vadd.f32 %v457, 1e-05
      %v459 = vrsqrt.pop %v458
      %v460 = vsub.f32 0.0, %v454
      %v461 = vmul.f32 %v460, %v459
      %v462 = vmul.f32 %v434, %v459
      %v463 = vadd.f32 %v462, %v461
      %vm464 = vcmp.ge.f32.partialorder %v463, 0.0
      %v465 = vmul.f32 %v463, 0.2
      %v466 = vsel %vm464, %v463, %v465
      %467 = vst.msk [vmem:[%s141] sm:$0xf] %vm437, %v466
      %p468 = scmp.lt.s32.totalorder %s13, 1
      %s469 = scalar_select %p468, %s13, 1
      %s470 = smul.addr %s469, 4
      %s471 = scalar_lea.vmem %s2, %s470
      // Predicated region
      $region29: #{unet_forward.25} parent=27 // pred_check
        %p472 = pneg %p78
      $region30: #{unet_forward.25} parent=27 // pred_check_branch
        %474 = sbr.rel (%p472) target = $region32
      $region31: #{unet_forward.25} parent=27 // pred_region
        _
      $region32: #{unet_forward.25} parent=27 // pred_fallthru
        _
    $region28: #{unet_forward.25} parent=5 // pred_fallthru
      _
    %p475 = scmp.le.s32.totalorder 2, %s8
    // Predicated region
    $region33: #{unet_forward.25} parent=5 // pred_check
      %p476 = pneg %p475
    $region34: #{unet_forward.25} parent=5 // pred_check_branch
      %478 = sbr.rel (%p476) target = $region36
    $region35: #{unet_forward.25} parent=5 // pred_region
      %s479 = ssub.s32 %s8, 2
      // Predicated region
      $region37: #{unet_forward.25} parent=35 // pred_check
        %p480 = pneg %p84
      $region38: #{unet_forward.25} parent=35 // pred_check_branch
        %482 = sbr.rel (%p480) target = $region40
      $region39: #{unet_forward.25} parent=35 // pred_region
        %p483 = scmp.lt.s32.totalorder %s14, 1
        %s484 = scalar_select %p483, %s14, 1
        %s485 = smul.addr %s484, 4
        %s486 = scalar_lea.vmem %s2, %s485
      $region40: #{unet_forward.25} parent=35 // pred_fallthru
        _
    $region36: #{unet_forward.25} parent=5 // pred_fallthru
      _
  $region6: #{unet_forward.25} parent=0 // loop_footer
    %s12 = sadd.s32 1, %s8
  $region7: #{unet_forward.25} parent=0 // loop_footer_branch
    %7 = sbr.rel target = $region3
  $region8: #{unet_forward.25} parent=0 // loop_exit
    _

// kernel: unet_forward.24
$region0: #{unet_forward.24}
  #allocation0 [shape = 'u32[]', space=smem, size = 0x4, offset = 0x4, fixed_abs, tag = 'smem constant byte address 0x4 - core index']
  #allocation1 [shape = 'u32[144,128]{1,0:T(1,128)}', space=vmem, size = 0x12000, scoped, tag = 'internal scratch']
  %s0 = inlined_call_operand.vmem [shape: f32[2,4,288], index: 0, kind: input, shape index: {}]
  %s1 = inlined_call_operand.vmem [shape: f32[288,64], index: 1, kind: input, shape index: {}]
  %s2 = inlined_call_operand.vmem [shape: f32[2,4,64], index: 2, kind: output, shape index: {}]
  %s3 = sld [smem:[#allocation0]]
  $region41: #{unet_forward.24} parent=0
    _
  %s5 = ssub.s32 1, %s3
  %s6 = scalar_select 0, %s5, %s3
  loop: start=0, step=1, limit=4
  $region2: #{unet_forward.24} parent=0 // loop_pre_header
    _
  $region3: #{unet_forward.24} parent=0 // loop_header
    %s8 = sphi 0, %s12
    %p9 = scmp.ge.s32.totalorder %s8, 4
    %s18 = sphi 0, %s20
    %s21 = sphi 0, %s18
    %s22 = sphi 0, %s21
    %s38 = sphi 0, %s22
    %s42 = sphi 0, %s42
    %s44 = sphi 0, %s42
    %s45 = sphi 0, %s44
    %s59 = sphi 0, %s45
    %s65 = sphi 0, %s67
    %s68 = sphi 0, %s65
    %s69 = sphi 0, %s68
    %s85 = sphi 0, %s69
  $region4: #{unet_forward.24} parent=0 // loop_header_branch
    %11 = sbr.rel (%p9) target = $region8
  $region5: #{unet_forward.24} parent=0 // loop_body
    %s13 = ssub.s32 %s8, 1
    %s14 = ssub.s32 %s8, 2
    %s15 = sadd.s32 %s8, 1
    %s16 = ssub.s32 %s8, %s15
    %p17 = scmp.eq.s32.totalorder %s16, 0
    %s19 = sadd.s32 %s18, 1
    %s20 = scalar_select %p17, %s18, %s19
    %p23 = pneg %p17
    %p24 = scmp.eq.s32.totalorder %s8, 1
    %p25 = por %p23, %p24
    %p26 = scmp.ne.s32.totalorder %s18, %s21
    %p27 = scmp.eq.s32.totalorder %s8, 0
    %p28 = por %p26, %p27
    %p29 = scmp.ne.s32.totalorder %s18, %s21
    %p30 = scmp.eq.s32.totalorder %s13, 1
    %p31 = por %p29, %p30
    %p32 = scmp.ne.s32.totalorder %s21, %s22
    %p33 = scmp.eq.s32.totalorder %s13, 0
    %p34 = por %p32, %p33
    %p35 = scmp.ne.s32.totalorder %s21, %s22
    %p36 = scmp.eq.s32.totalorder %s14, 1
    %p37 = por %p35, %p36
    %p39 = scmp.ne.s32.totalorder %s22, %s38
    %p40 = scmp.eq.s32.totalorder %s14, 0
    %p41 = por %p39, %p40
    %s43 = sadd.s32 %s42, 1
    %p46 = scmp.eq.s32.totalorder %s8, 1
    %p47 = scmp.ne.s32.totalorder %s42, %s44
    %p48 = scmp.eq.s32.totalorder %s8, 0
    %p49 = por %p47, %p48
    %p50 = scmp.ne.s32.totalorder %s42, %s44
    %p51 = scmp.eq.s32.totalorder %s13, 1
    %p52 = por %p50, %p51
    %p53 = scmp.ne.s32.totalorder %s44, %s45
    %p54 = scmp.eq.s32.totalorder %s13, 0
    %p55 = por %p53, %p54
    %p56 = scmp.ne.s32.totalorder %s44, %s45
    %p57 = scmp.eq.s32.totalorder %s14, 1
    %p58 = por %p56, %p57
    %p60 = scmp.ne.s32.totalorder %s45, %s59
    %p61 = scmp.eq.s32.totalorder %s14, 0
    %p62 = por %p60, %p61
    %s63 = ssub.s32 %s8, %s15
    %p64 = scmp.eq.s32.totalorder %s63, 0
    %s66 = sadd.s32 %s65, 1
    %s67 = scalar_select %p64, %s65, %s66
    %p70 = pneg %p64
    %p71 = scmp.eq.s32.totalorder %s8, 1
    %p72 = por %p70, %p71
    %p73 = scmp.ne.s32.totalorder %s65, %s68
    %p74 = scmp.eq.s32.totalorder %s8, 0
    %p75 = por %p73, %p74
    %p76 = scmp.ne.s32.totalorder %s65, %s68
    %p77 = scmp.eq.s32.totalorder %s13, 1
    %p78 = por %p76, %p77
    %p79 = scmp.ne.s32.totalorder %s68, %s69
    %p80 = scmp.eq.s32.totalorder %s13, 0
    %p81 = por %p79, %p80
    %p82 = scmp.ne.s32.totalorder %s68, %s69
    %p83 = scmp.eq.s32.totalorder %s14, 1
    %p84 = por %p82, %p83
    %p86 = scmp.ne.s32.totalorder %s69, %s85
    %p87 = scmp.eq.s32.totalorder %s14, 0
    %p88 = por %p86, %p87
    %p89 = scmp.le.s32.totalorder 1, %s8
    %p90 = scmp.lt.s32.totalorder %s8, 3
    %p91 = pnand %p89, %p90
    %p92 = pneg %p91
    // Predicated region
    $region9: #{unet_forward.24} parent=5 // pred_check
      _
    $region10: #{unet_forward.24} parent=5 // pred_check_branch
      %94 = sbr.rel (%p91) target = $region12
    $region11: #{unet_forward.24} parent=5 // pred_region
      %s95 = ssub.s32 %s8, 1
      // Predicated region
      $region13: #{unet_forward.24} parent=11 // pred_check
        %p96 = pneg %p55
      $region14: #{unet_forward.24} parent=11 // pred_check_branch
        %98 = sbr.rel (%p96) target = $region16
      $region15: #{unet_forward.24} parent=11 // pred_region
        _
      $region16: #{unet_forward.24} parent=11 // pred_fallthru
        _
    $region12: #{unet_forward.24} parent=5 // pred_fallthru
      _
    %p99 = scmp.lt.s32.totalorder %s8, 2
    // Predicated region
    $region17: #{unet_forward.24} parent=5 // pred_check
      %p100 = pneg %p99
    $region18: #{unet_forward.24} parent=5 // pred_check_branch
      %102 = sbr.rel (%p100) target = $region20
    $region19: #{unet_forward.24} parent=5 // pred_region
      // Predicated region
      $region21: #{unet_forward.24} parent=19 // pred_check
        %p103 = pneg %p28
      $region22: #{unet_forward.24} parent=19 // pred_check_branch
        %105 = sbr.rel (%p103) target = $region24
      $region23: #{unet_forward.24} parent=19 // pred_region
        %p106 = scmp.lt.s32.totalorder %s8, 1
        %s107 = scalar_select %p106, %s8, 1
        %s108 = smul.addr %s107, 3
        %s109 = smul.addr %s108, 4
        %s110 = scalar_lea.vmem %s0, %s109
      $region24: #{unet_forward.24} parent=19 // pred_fallthru
        _
    $region20: #{unet_forward.24} parent=5 // pred_fallthru
      _
    %p111 = scmp.le.s32.totalorder 1, %s8
    %p112 = scmp.lt.s32.totalorder %s8, 3
    %p113 = pnand %p111, %p112
    %p114 = pneg %p113
    // Predicated region
    $region25: #{unet_forward.24} parent=5 // pred_check
      _
    $region26: #{unet_forward.24} parent=5 // pred_check_branch
      %116 = sbr.rel (%p113) target = $region28
    $region27: #{unet_forward.24} parent=5 // pred_region
      %s117 = ssub.s32 %s8, 1
      %p118 = scmp.lt.s32.totalorder %s13, 1
      %s119 = scalar_select %p118, %s13, 1
      %s120 = smul.addr %s119, 3
      %s121 = smul.addr %s120, 4
      %s122 = scalar_lea.vmem %s0, %s121
      %p123 = pneg %p34
      %p124 = pneg %p31
      %p125 = pneg %p55
      %p126 = pneg %p52
      %p127 = pneg %p81
      %p128 = pneg %p78
      %p129 = scmp.lt.s32.totalorder %s13, 1
      %s130 = scalar_select %p129, %s13, 1
      %s131 = smul.addr %s130, 4
      %s132 = scalar_lea.vmem %s2, %s131
      %p133 = scmp.lt.s32.totalorder %s13, 1
      %s134 = scalar_select %p133, %s13, 1
      %s135 = smul.addr %s134, 3
      %s136 = smul.addr %s135, 4
      %s137 = scalar_lea.vmem %s0, %s136
      %p138 = scmp.lt.s32.totalorder %s13, 1
      %s139 = scalar_select %p138, %s13, 1
      %s140 = smul.addr %s139, 4
      %s141 = scalar_lea.vmem %s2, %s140
      %v142 = vld [vmem:[%s137] sm:$0xff]
      %v143 = vld [vmem:[%s137 + $0x8] sm:$0xf]
      %v144 = vld [vmem:[%s1] sm:$0xff]
      %v145 = vld [vmem:[%s1 + $0x8] sm:$0xff]
      %v146 = vld [vmem:[%s1 + $0x10] sm:$0xff]
      %v147 = vld [vmem:[%s1 + $0x18] sm:$0xff]
      %v148 = vld [vmem:[%s1 + $0x20] sm:$0xff]
      %v149 = vld [vmem:[%s1 + $0x28] sm:$0xff]
      %v150 = vld [vmem:[%s1 + $0x30] sm:$0xff]
      %v151 = vld [vmem:[%s1 + $0x38] sm:$0xff]
      %v152 = vld [vmem:[%s1 + $0x40] sm:$0xff]
      %v153 = vld [vmem:[%s1 + $0x48] sm:$0xff]
      %v154 = vld [vmem:[%s1 + $0x50] sm:$0xff]
      %v155 = vld [vmem:[%s1 + $0x58] sm:$0xff]
      %v156 = vld [vmem:[%s1 + $0x60] sm:$0xff]
      %v157 = vld [vmem:[%s1 + $0x68] sm:$0xff]
      %v158 = vld [vmem:[%s1 + $0x70] sm:$0xff]
      %v159 = vld [vmem:[%s1 + $0x78] sm:$0xff]
      %v160 = vld [vmem:[%s1 + $0x80] sm:$0xff]
      %v161 = vld [vmem:[%s1 + $0x88] sm:$0xff]
      %v162 = vld [vmem:[%s1 + $0x90] sm:$0xff]
      %v163 = vld [vmem:[%s1 + $0x98] sm:$0xff]
      %v164 = vld [vmem:[%s1 + $0xa0] sm:$0xff]
      %v165 = vld [vmem:[%s1 + $0xa8] sm:$0xff]
      %v166 = vld [vmem:[%s1 + $0xb0] sm:$0xff]
      %v167 = vld [vmem:[%s1 + $0xb8] sm:$0xff]
      %v168 = vld [vmem:[%s1 + $0xc0] sm:$0xff]
      %v169 = vld [vmem:[%s1 + $0xc8] sm:$0xff]
      %v170 = vld [vmem:[%s1 + $0xd0] sm:$0xff]
      %v171 = vld [vmem:[%s1 + $0xd8] sm:$0xff]
      %v172 = vld [vmem:[%s1 + $0xe0] sm:$0xff]
      %v173 = vld [vmem:[%s1 + $0xe8] sm:$0xff]
      %v174 = vld [vmem:[%s1 + $0xf0] sm:$0xff]
      %v175 = vld [vmem:[%s1 + $0xf8] sm:$0xff]
      %v176 = vld [vmem:[%s1 + $0x100] sm:$0xff]
      %v177 = vld [vmem:[%s1 + $0x108] sm:$0xff]
      %v178 = vld [vmem:[%s1 + $0x110] sm:$0xff]
      %v179 = vld [vmem:[%s1 + $0x118] sm:$0xff]
      %v182 = vcombine.high %v142, %v142
      %vm184 = vcmask 261120
      %v185 = vsel %vm184, %v143, 0
      %187 = vmatprep.subr.mxu0 0.0
      %188 = vmatpush1.msra.mxu0 %v144
      %189 = vmatprep.subr.mxu0 0.0
      %190 = vmatpush1.msra.mxu0 %v145
      %191 = vmatprep.subr.mxu0 0.0
      %192 = vmatpush1.msra.mxu0 %v146
      %193 = vmatprep.subr.mxu0 0.0
      %194 = vmatpush1.msra.mxu0 %v147
      %195 = vmatprep.subr.mxu0 0.0
      %196 = vmatpush1.msra.mxu0 %v148
      %197 = vmatprep.subr.mxu0 0.0
      %198 = vmatpush1.msra.mxu0 %v149
      %199 = vmatprep.subr.mxu0 0.0
      %200 = vmatpush1.msra.mxu0 %v150
      %201 = vmatprep.subr.mxu0 0.0
      %202 = vmatpush1.msra.mxu0 %v151
      %203 = vmatprep.subr.mxu0 0.0
      %204 = vmatpush1.msra.mxu0 %v152
      %205 = vmatprep.subr.mxu0 0.0
      %206 = vmatpush1.msra.mxu0 %v153
      %207 = vmatprep.subr.mxu0 0.0
      %208 = vmatpush1.msra.mxu0 %v154
      %209 = vmatprep.subr.mxu0 0.0
      %210 = vmatpush1.msra.mxu0 %v155
      %211 = vmatprep.subr.mxu0 0.0
      %212 = vmatpush1.msra.mxu0 %v156
      %213 = vmatprep.subr.mxu0 0.0
      %214 = vmatpush1.msra.mxu0 %v157
      %215 = vmatprep.subr.mxu0 0.0
      %216 = vmatpush1.msra.mxu0 %v158
      %217 = vmatprep.subr.mxu0 0.0
      %218 = vmatpush1.msra.mxu0 %v159
      %219 = vmatprep.subr.mxu0 0.0
      %220 = vmatpush1.msra.mxu0 %v160
      %221 = vmatprep.subr.mxu0 0.0
      %222 = vmatpush1.msra.mxu0 %v161
      %223 = vmatprep.subr.mxu0 0.0
      %224 = vmatpush1.msra.mxu0 %v162
      %225 = vmatprep.subr.mxu0 0.0
      %226 = vmatpush1.msra.mxu0 %v163
      %227 = vmatprep.subr.mxu0 0.0
      %228 = vmatpush1.msra.mxu0 %v164
      %229 = vmatprep.subr.mxu0 0.0
      %230 = vmatpush1.msra.mxu0 %v165
      %231 = vmatprep.subr.mxu0 0.0
      %232 = vmatpush1.msra.mxu0 %v166
      %233 = vmatprep.subr.mxu0 0.0
      %234 = vmatpush1.msra.mxu0 %v167
      %235 = vmatprep.subr.mxu0 0.0
      %236 = vmatpush1.msra.mxu0 %v168
      %237 = vmatprep.subr.mxu0 0.0
      %238 = vmatpush1.msra.mxu0 %v169
      %239 = vmatprep.subr.mxu0 0.0
      %240 = vmatpush1.msra.mxu0 %v170
      %241 = vmatprep.subr.mxu0 0.0
      %242 = vmatpush1.msra.mxu0 %v171
      %243 = vmatprep.subr.mxu0 0.0
      %244 = vmatpush1.msra.mxu0 %v172
      %245 = vmatprep.subr.mxu0 0.0
      %246 = vmatpush1.msra.mxu0 %v173
      %247 = vmatprep.subr.mxu0 0.0
      %248 = vmatpush1.msra.mxu0 %v174
      %249 = vmatprep.subr.mxu0 0.0
      %250 = vmatpush1.msra.mxu0 %v175
      %251 = vmatprep.mubr.f32.mxu0 %v182
      %252 = vmatmul.mubr.f32.gmra.mrb[0].mxu0 %v142
      %v253 = vpop.f32.mrb[0].mxu0
      %v254 = vadd.f32 0.0, %v253
      %v255 = vpop.f32.mrb[0].mxu0
      %256 = vdwg.mxu0
      %257 = vmatprep.subr.mxu0 0.0
      %258 = vmatpush1.msra.mxu0 %v176
      %259 = vmatprep.subr.mxu0 0.0
      %260 = vmatpush1.msra.mxu0 %v177
      %261 = vmatprep.subr.mxu0 0.0
      %262 = vmatpush1.msra.mxu0 %v178
      %263 = vmatprep.subr.mxu0 0.0
      %264 = vmatpush1.msra.mxu0 %v179
      %265 = vmatprep.subr.mxu0 0.0
      %266 = vmatpush1.msra.mxu0 0.0
      %267 = vmatprep.subr.mxu0 0.0
      %268 = vmatpush1.msra.mxu0 0.0
      %269 = vmatprep.subr.mxu0 0.0
      %270 = vmatpush1.msra.mxu0 0.0
      %271 = vmatprep.subr.mxu0 0.0
      %272 = vmatpush1.msra.mxu0 0.0
      %273 = vmatprep.subr.mxu0 0.0
      %274 = vmatpush1.msra.mxu0 0.0
      %275 = vmatprep.subr.mxu0 0.0
      %276 = vmatpush1.msra.mxu0 0.0
      %277 = vmatprep.subr.mxu0 0.0
      %278 = vmatpush1.msra.mxu0 0.0
      %279 = vmatprep.subr.mxu0 0.0
      %280 = vmatpush1.msra.mxu0 0.0
      %281 = vmatprep.subr.mxu0 0.0
      %282 = vmatpush1.msra.mxu0 0.0
      %283 = vmatprep.subr.mxu0 0.0
      %284 = vmatpush1.msra.mxu0 0.0
      %285 = vmatprep.subr.mxu0 0.0
      %286 = vmatpush1.msra.mxu0 0.0
      %287 = vmatprep.subr.mxu0 0.0
      %288 = vmatpush1.msra.mxu0 0.0
      %289 = vmatprep.subr.mxu0 0.0
      %290 = vmatpush1.msra.mxu0 0.0
      %291 = vmatprep.subr.mxu0 0.0
      %292 = vmatpush1.msra.mxu0 0.0
      %293 = vmatprep.subr.mxu0 0.0
      %294 = vmatpush1.msra.mxu0 0.0
      %295 = vmatprep.subr.mxu0 0.0
      %296 = vmatpush1.msra.mxu0 0.0
      %297 = vmatprep.subr.mxu0 0.0
      %298 = vmatpush1.msra.mxu0 0.0
      %299 = vmatprep.subr.mxu0 0.0
      %300 = vmatpush1.msra.mxu0 0.0
      %301 = vmatprep.subr.mxu0 0.0
      %302 = vmatpush1.msra.mxu0 0.0
      %303 = vmatprep.subr.mxu0 0.0
      %304 = vmatpush1.msra.mxu0 0.0
      %305 = vmatprep.subr.mxu0 0.0
      %306 = vmatpush1.msra.mxu0 0.0
      %307 = vmatprep.subr.mxu0 0.0
      %308 = vmatpush1.msra.mxu0 0.0
      %309 = vmatprep.subr.mxu0 0.0
      %310 = vmatpush1.msra.mxu0 0.0
      %311 = vmatprep.subr.mxu0 0.0
      %312 = vmatpush1.msra.mxu0 0.0
      %313 = vmatprep.subr.mxu0 0.0
      %314 = vmatpush1.msra.mxu0 0.0
      %315 = vmatprep.subr.mxu0 0.0
      %316 = vmatpush1.msra.mxu0 0.0
      %317 = vmatprep.subr.mxu0 0.0
      %318 = vmatpush1.msra.mxu0 0.0
      %319 = vmatprep.subr.mxu0 0.0
      %320 = vmatpush1.msra.mxu0 0.0
      %321 = vmatprep.mubr.f32.mxu0 0.0
      %322 = vmatmul.mubr.f32.gmra.mrb[0].mxu0 %v185
      %v323 = vpop.f32.mrb[0].mxu0
      %v324 = vadd.f32 %v254, %v323
      %v325 = vpop.f32.mrb[0].mxu0
      %326 = vdwg.mxu0
      %vm327 = vcmask 519168
      %v328 = vsel %vm327, %v324, 0.0
      %v329 = vrot.slane %v328, 4
      %v330 = vadd.f32 %v328, %v329
      %v331 = vrot.slane %v330, 2
      %v332 = vadd.f32 %v330, %v331
      %v333 = vrot.slane %v332, 1
      %v334 = vadd.f32 %v332, %v333
      %v335 = vmul.f32 %v324, %v324
      %v336 = vsel %vm327, %v335, 0.0
      %v337 = vrot.slane %v336, 4
      %v338 = vadd.f32 %v336, %v337
      %v339 = vrot.slane %v338, 2
      %v340 = vadd.f32 %v338, %v339
      %v341 = vrot.slane %v340, 1
      %v342 = vadd.f32 %v340, %v341
      %v343 = vrcp.pop 4.0
      %v344 = vmul.f32 %v334, %v343
      %v345 = vmul.f32 %v342, %v343
      %v346 = vmul.f32 %v344, %v344
      %v347 = vsub.f32 %v345, %v346
      %v348 = vadd.f32 %v347, 1e-05
      %v349 = vrsqrt.pop %v348
      %v350 = vsub.f32 0.0, %v344
      %v351 = vmul.f32 %v350, %v349
      %v352 = vmul.f32 %v324, %v349
      %v353 = vadd.f32 %v352, %v351
      %vm354 = vcmp.ge.f32.partialorder %v353, 0.0
      %v355 = vmul.f32 %v353, 0.2
      %v356 = vsel %vm354, %v353, %v355
      %357 = vst.msk [vmem:[%s141] sm:$0xf] %vm327, %v356
      %p358 = scmp.lt.s32.totalorder %s13, 1
      %s359 = scalar_select %p358, %s13, 1
      %s360 = smul.addr %s359, 4
      %s361 = scalar_lea.vmem %s2, %s360
      // Predicated region
      $region29: #{unet_forward.24} parent=27 // pred_check
        %p362 = pneg %p78
      $region30: #{unet_forward.24} parent=27 // pred_check_branch
        %364 = sbr.rel (%p362) target = $region32
      $region31: #{unet_forward.24} parent=27 // pred_region
        _
      $region32: #{unet_forward.24} parent=27 // pred_fallthru
        _
    $region28: #{unet_forward.24} parent=5 // pred_fallthru
      _
    %p365 = scmp.le.s32.totalorder 2, %s8
    // Predicated region
    $region33: #{unet_forward.24} parent=5 // pred_check
      %p366 = pneg %p365
    $region34: #{unet_forward.24} parent=5 // pred_check_branch
      %368 = sbr.rel (%p366) target = $region36
    $region35: #{unet_forward.24} parent=5 // pred_region
      %s369 = ssub.s32 %s8, 2
      // Predicated region
      $region37: #{unet_forward.24} parent=35 // pred_check
        %p370 = pneg %p84
      $region38: #{unet_forward.24} parent=35 // pred_check_branch
        %372 = sbr.rel (%p370) target = $region40
      $region39: #{unet_forward.24} parent=35 // pred_region
        %p373 = scmp.lt.s32.totalorder %s14, 1
        %s374 = scalar_select %p373, %s14, 1
        %s375 = smul.addr %s374, 4
        %s376 = scalar_lea.vmem %s2, %s375
      $region40: #{unet_forward.24} parent=35 // pred_fallthru
        _
    $region36: #{unet_forward.24} parent=5 // pred_fallthru
      _
  $region6: #{unet_forward.24} parent=0 // loop_footer
    %s12 = sadd.s32 1, %s8
  $region7: #{unet_forward.24} parent=0 // loop_footer_branch
    %7 = sbr.rel target = $region3
  $region8: #{unet_forward.24} parent=0 // loop_exit
    _

// kernel: unet_forward.26
$region0: #{unet_forward.26}
  #allocation0 [shape = 'u32[]', space=smem, size = 0x4, offset = 0x4, fixed_abs, tag = 'smem constant byte address 0x4 - core index']
  #allocation1 [shape = 'u32[144,128]{1,0:T(1,128)}', space=vmem, size = 0x12000, scoped, tag = 'internal scratch']
  %s0 = inlined_call_operand.vmem [shape: f32[2,4,64], index: 0, kind: input, shape index: {}]
  %s1 = inlined_call_operand.vmem [shape: f32[64,128], index: 1, kind: input, shape index: {}]
  %s2 = inlined_call_operand.vmem [shape: f32[2,4,128], index: 2, kind: output, shape index: {}]
  %s3 = sld [smem:[#allocation0]]
  $region41: #{unet_forward.26} parent=0
    _
  %s5 = ssub.s32 1, %s3
  %s6 = scalar_select 0, %s5, %s3
  loop: start=0, step=1, limit=4
  $region2: #{unet_forward.26} parent=0 // loop_pre_header
    _
  $region3: #{unet_forward.26} parent=0 // loop_header
    %s8 = sphi 0, %s12
    %p9 = scmp.ge.s32.totalorder %s8, 4
    %s18 = sphi 0, %s20
    %s21 = sphi 0, %s18
    %s22 = sphi 0, %s21
    %s38 = sphi 0, %s22
    %s42 = sphi 0, %s42
    %s44 = sphi 0, %s42
    %s45 = sphi 0, %s44
    %s59 = sphi 0, %s45
    %s65 = sphi 0, %s67
    %s68 = sphi 0, %s65
    %s69 = sphi 0, %s68
    %s85 = sphi 0, %s69
  $region4: #{unet_forward.26} parent=0 // loop_header_branch
    %11 = sbr.rel (%p9) target = $region8
  $region5: #{unet_forward.26} parent=0 // loop_body
    %s13 = ssub.s32 %s8, 1
    %s14 = ssub.s32 %s8, 2
    %s15 = sadd.s32 %s8, 1
    %s16 = ssub.s32 %s8, %s15
    %p17 = scmp.eq.s32.totalorder %s16, 0
    %s19 = sadd.s32 %s18, 1
    %s20 = scalar_select %p17, %s18, %s19
    %p23 = pneg %p17
    %p24 = scmp.eq.s32.totalorder %s8, 1
    %p25 = por %p23, %p24
    %p26 = scmp.ne.s32.totalorder %s18, %s21
    %p27 = scmp.eq.s32.totalorder %s8, 0
    %p28 = por %p26, %p27
    %p29 = scmp.ne.s32.totalorder %s18, %s21
    %p30 = scmp.eq.s32.totalorder %s13, 1
    %p31 = por %p29, %p30
    %p32 = scmp.ne.s32.totalorder %s21, %s22
    %p33 = scmp.eq.s32.totalorder %s13, 0
    %p34 = por %p32, %p33
    %p35 = scmp.ne.s32.totalorder %s21, %s22
    %p36 = scmp.eq.s32.totalorder %s14, 1
    %p37 = por %p35, %p36
    %p39 = scmp.ne.s32.totalorder %s22, %s38
    %p40 = scmp.eq.s32.totalorder %s14, 0
    %p41 = por %p39, %p40
    %s43 = sadd.s32 %s42, 1
    %p46 = scmp.eq.s32.totalorder %s8, 1
    %p47 = scmp.ne.s32.totalorder %s42, %s44
    %p48 = scmp.eq.s32.totalorder %s8, 0
    %p49 = por %p47, %p48
    %p50 = scmp.ne.s32.totalorder %s42, %s44
    %p51 = scmp.eq.s32.totalorder %s13, 1
    %p52 = por %p50, %p51
    %p53 = scmp.ne.s32.totalorder %s44, %s45
    %p54 = scmp.eq.s32.totalorder %s13, 0
    %p55 = por %p53, %p54
    %p56 = scmp.ne.s32.totalorder %s44, %s45
    %p57 = scmp.eq.s32.totalorder %s14, 1
    %p58 = por %p56, %p57
    %p60 = scmp.ne.s32.totalorder %s45, %s59
    %p61 = scmp.eq.s32.totalorder %s14, 0
    %p62 = por %p60, %p61
    %s63 = ssub.s32 %s8, %s15
    %p64 = scmp.eq.s32.totalorder %s63, 0
    %s66 = sadd.s32 %s65, 1
    %s67 = scalar_select %p64, %s65, %s66
    %p70 = pneg %p64
    %p71 = scmp.eq.s32.totalorder %s8, 1
    %p72 = por %p70, %p71
    %p73 = scmp.ne.s32.totalorder %s65, %s68
    %p74 = scmp.eq.s32.totalorder %s8, 0
    %p75 = por %p73, %p74
    %p76 = scmp.ne.s32.totalorder %s65, %s68
    %p77 = scmp.eq.s32.totalorder %s13, 1
    %p78 = por %p76, %p77
    %p79 = scmp.ne.s32.totalorder %s68, %s69
    %p80 = scmp.eq.s32.totalorder %s13, 0
    %p81 = por %p79, %p80
    %p82 = scmp.ne.s32.totalorder %s68, %s69
    %p83 = scmp.eq.s32.totalorder %s14, 1
    %p84 = por %p82, %p83
    %p86 = scmp.ne.s32.totalorder %s69, %s85
    %p87 = scmp.eq.s32.totalorder %s14, 0
    %p88 = por %p86, %p87
    %p89 = scmp.le.s32.totalorder 1, %s8
    %p90 = scmp.lt.s32.totalorder %s8, 3
    %p91 = pnand %p89, %p90
    %p92 = pneg %p91
    // Predicated region
    $region9: #{unet_forward.26} parent=5 // pred_check
      _
    $region10: #{unet_forward.26} parent=5 // pred_check_branch
      %94 = sbr.rel (%p91) target = $region12
    $region11: #{unet_forward.26} parent=5 // pred_region
      %s95 = ssub.s32 %s8, 1
      // Predicated region
      $region13: #{unet_forward.26} parent=11 // pred_check
        %p96 = pneg %p55
      $region14: #{unet_forward.26} parent=11 // pred_check_branch
        %98 = sbr.rel (%p96) target = $region16
      $region15: #{unet_forward.26} parent=11 // pred_region
        _
      $region16: #{unet_forward.26} parent=11 // pred_fallthru
        _
    $region12: #{unet_forward.26} parent=5 // pred_fallthru
      _
    %p99 = scmp.lt.s32.totalorder %s8, 2
    // Predicated region
    $region17: #{unet_forward.26} parent=5 // pred_check
      %p100 = pneg %p99
    $region18: #{unet_forward.26} parent=5 // pred_check_branch
      %102 = sbr.rel (%p100) target = $region20
    $region19: #{unet_forward.26} parent=5 // pred_region
      // Predicated region
      $region21: #{unet_forward.26} parent=19 // pred_check
        %p103 = pneg %p28
      $region22: #{unet_forward.26} parent=19 // pred_check_branch
        %105 = sbr.rel (%p103) target = $region24
      $region23: #{unet_forward.26} parent=19 // pred_region
        %p106 = scmp.lt.s32.totalorder %s8, 1
        %s107 = scalar_select %p106, %s8, 1
        %s108 = smul.addr %s107, 4
        %s109 = scalar_lea.vmem %s0, %s108
      $region24: #{unet_forward.26} parent=19 // pred_fallthru
        _
    $region20: #{unet_forward.26} parent=5 // pred_fallthru
      _
    %p110 = scmp.le.s32.totalorder 1, %s8
    %p111 = scmp.lt.s32.totalorder %s8, 3
    %p112 = pnand %p110, %p111
    %p113 = pneg %p112
    // Predicated region
    $region25: #{unet_forward.26} parent=5 // pred_check
      _
    $region26: #{unet_forward.26} parent=5 // pred_check_branch
      %115 = sbr.rel (%p112) target = $region28
    $region27: #{unet_forward.26} parent=5 // pred_region
      %s116 = ssub.s32 %s8, 1
      %p117 = scmp.lt.s32.totalorder %s13, 1
      %s118 = scalar_select %p117, %s13, 1
      %s119 = smul.addr %s118, 4
      %s120 = scalar_lea.vmem %s0, %s119
      %p121 = pneg %p34
      %p122 = pneg %p31
      %p123 = pneg %p55
      %p124 = pneg %p52
      %p125 = pneg %p81
      %p126 = pneg %p78
      %p127 = scmp.lt.s32.totalorder %s13, 1
      %s128 = scalar_select %p127, %s13, 1
      %s129 = smul.addr %s128, 4
      %s130 = scalar_lea.vmem %s2, %s129
      %p131 = scmp.lt.s32.totalorder %s13, 1
      %s132 = scalar_select %p131, %s13, 1
      %s133 = smul.addr %s132, 4
      %s134 = scalar_lea.vmem %s0, %s133
      %p135 = scmp.lt.s32.totalorder %s13, 1
      %s136 = scalar_select %p135, %s13, 1
      %s137 = smul.addr %s136, 4
      %s138 = scalar_lea.vmem %s2, %s137
      %v139 = vld [vmem:[%s134] sm:$0xf]
      %v140 = vld [vmem:[%s1] sm:$0xff]
      %v141 = vld [vmem:[%s1 + $0x8] sm:$0xff]
      %v142 = vld [vmem:[%s1 + $0x10] sm:$0xff]
      %v143 = vld [vmem:[%s1 + $0x18] sm:$0xff]
      %v144 = vld [vmem:[%s1 + $0x20] sm:$0xff]
      %v145 = vld [vmem:[%s1 + $0x28] sm:$0xff]
      %v146 = vld [vmem:[%s1 + $0x30] sm:$0xff]
      %v147 = vld [vmem:[%s1 + $0x38] sm:$0xff]
      %vm148 = vcmask 523264
      %v150 = vsel %vm148, %v139, 0
      %152 = vmatprep.subr.mxu0 0.0
      %153 = vmatpush1.msra.mxu0 %v140
      %154 = vmatprep.subr.mxu0 0.0
      %155 = vmatpush1.msra.mxu0 %v141
      %156 = vmatprep.subr.mxu0 0.0
      %157 = vmatpush1.msra.mxu0 %v142
      %158 = vmatprep.subr.mxu0 0.0
      %159 = vmatpush1.msra.mxu0 %v143
      %160 = vmatprep.subr.mxu0 0.0
      %161 = vmatpush1.msra.mxu0 %v144
      %162 = vmatprep.subr.mxu0 0.0
      %163 = vmatpush1.msra.mxu0 %v145
      %164 = vmatprep.subr.mxu0 0.0
      %165 = vmatpush1.msra.mxu0 %v146
      %166 = vmatprep.subr.mxu0 0.0
      %167 = vmatpush1.msra.mxu0 %v147
      %168 = vmatprep.subr.mxu0 0.0
      %169 = vmatpush1.msra.mxu0 0.0
      %170 = vmatprep.subr.mxu0 0.0
      %171 = vmatpush1.msra.mxu0 0.0
      %172 = vmatprep.subr.mxu0 0.0
      %173 = vmatpush1.msra.mxu0 0.0
      %174 = vmatprep.subr.mxu0 0.0
      %175 = vmatpush1.msra.mxu0 0.0
      %176 = vmatprep.subr.mxu0 0.0
      %177 = vmatpush1.msra.mxu0 0.0
      %178 = vmatprep.subr.mxu0 0.0
      %179 = vmatpush1.msra.mxu0 0.0
      %180 = vmatprep.subr.mxu0 0.0
      %181 = vmatpush1.msra.mxu0 0.0
      %182 = vmatprep.subr.mxu0 0.0
      %183 = vmatpush1.msra.mxu0 0.0
      %184 = vmatprep.subr.mxu0 0.0
      %185 = vmatpush1.msra.mxu0 0.0
      %186 = vmatprep.subr.mxu0 0.0
      %187 = vmatpush1.msra.mxu0 0.0
      %188 = vmatprep.subr.mxu0 0.0
      %189 = vmatpush1.msra.mxu0 0.0
      %190 = vmatprep.subr.mxu0 0.0
      %191 = vmatpush1.msra.mxu0 0.0
      %192 = vmatprep.subr.mxu0 0.0
      %193 = vmatpush1.msra.mxu0 0.0
      %194 = vmatprep.subr.mxu0 0.0
      %195 = vmatpush1.msra.mxu0 0.0
      %196 = vmatprep.subr.mxu0 0.0
      %197 = vmatpush1.msra.mxu0 0.0
      %198 = vmatprep.subr.mxu0 0.0
      %199 = vmatpush1.msra.mxu0 0.0
      %200 = vmatprep.subr.mxu0 0.0
      %201 = vmatpush1.msra.mxu0 0.0
      %202 = vmatprep.subr.mxu0 0.0
      %203 = vmatpush1.msra.mxu0 0.0
      %204 = vmatprep.subr.mxu0 0.0
      %205 = vmatpush1.msra.mxu0 0.0
      %206 = vmatprep.subr.mxu0 0.0
      %207 = vmatpush1.msra.mxu0 0.0
      %208 = vmatprep.subr.mxu0 0.0
      %209 = vmatpush1.msra.mxu0 0.0
      %210 = vmatprep.subr.mxu0 0.0
      %211 = vmatpush1.msra.mxu0 0.0
      %212 = vmatprep.subr.mxu0 0.0
      %213 = vmatpush1.msra.mxu0 0.0
      %214 = vmatprep.subr.mxu0 0.0
      %215 = vmatpush1.msra.mxu0 0.0
      %216 = vmatprep.mubr.f32.mxu0 0.0
      %217 = vmatmul.mubr.f32.gmra.mrb[0].mxu0 %v150
      %v218 = vpop.f32.mrb[0].mxu0
      %v219 = vadd.f32 0.0, %v218
      %v220 = vpop.f32.mrb[0].mxu0
      %221 = vdwg.mxu0
      %vm222 = vcmask 1043456
      %v223 = vsel %vm222, %v219, 0.0
      %v224 = vrot.slane %v223, 4
      %v225 = vadd.f32 %v223, %v224
      %v226 = vrot.slane %v225, 2
      %v227 = vadd.f32 %v225, %v226
      %v228 = vrot.slane %v227, 1
      %v229 = vadd.f32 %v227, %v228
      %v230 = vmul.f32 %v219, %v219
      %v231 = vsel %vm222, %v230, 0.0
      %v232 = vrot.slane %v231, 4
      %v233 = vadd.f32 %v231, %v232
      %v234 = vrot.slane %v233, 2
      %v235 = vadd.f32 %v233, %v234
      %v236 = vrot.slane %v235, 1
      %v237 = vadd.f32 %v235, %v236
      %239 = vrot.lane.b32.xlu0 %v229, 96
      %v240 = vpop.permute.xlu0 %239
      %v242 = vadd.f32 %v229, %v240
      %244 = vrot.lane.b32.xlu0 %v237, 96
      %v245 = vpop.permute.xlu0 %244
      %v247 = vadd.f32 %v237, %v245
      %248 = vrot.lane.b32.xlu0 %v229, 64
      %v249 = vpop.permute.xlu0 %248
      %v251 = vadd.f32 %v242, %v249
      %252 = vrot.lane.b32.xlu0 %v237, 64
      %v253 = vpop.permute.xlu0 %252
      %v255 = vadd.f32 %v247, %v253
      %256 = vrot.lane.b32.xlu0 %v229, 32
      %v257 = vpop.permute.xlu0 %256
      %v259 = vadd.f32 %v251, %v257
      %260 = vrot.lane.b32.xlu0 %v237, 32
      %v261 = vpop.permute.xlu0 %260
      %v263 = vadd.f32 %v255, %v261
      %v264 = vrcp.pop 16.0
      %v265 = vmul.f32 %v259, %v264
      %v266 = vmul.f32 %v263, %v264
      %v267 = vmul.f32 %v265, %v265
      %v268 = vsub.f32 %v266, %v267
      %v269 = vadd.f32 %v268, 1e-05
      %v270 = vrsqrt.pop %v269
      %v271 = vsub.f32 0.0, %v265
      %v272 = vmul.f32 %v271, %v270
      %274 = vrot.lane.b32.xlu0 %v270, 32
      %v275 = vpop.permute.xlu0 %274
      %277 = vrot.lane.b32.xlu0 %v270, 64
      %v278 = vpop.permute.xlu0 %277
      %280 = vrot.lane.b32.xlu0 %v270, 96
      %v281 = vpop.permute.xlu0 %280
      %vm283 = vcmask 261120
      %v284 = vsel %vm283, %v270, %v275
      %v285 = vsel %vm148, %v284, %v278
      %vm286 = vcmask 785408
      %v287 = vsel %vm286, %v285, %v281
      %289 = vrot.lane.b32.xlu0 %v272, 32
      %v290 = vpop.permute.xlu0 %289
      %292 = vrot.lane.b32.xlu0 %v272, 64
      %v293 = vpop.permute.xlu0 %292
      %295 = vrot.lane.b32.xlu0 %v272, 96
      %v296 = vpop.permute.xlu0 %295
      %v298 = vsel %vm283, %v272, %v290
      %v299 = vsel %vm148, %v298, %v293
      %v300 = vsel %vm286, %v299, %v296
      %v301 = vlaneseq
      %v302 = vshrl.u32 %v301, 7
      %v303 = vsub.s32 0, %v302
      %v304 = vrot.slane %v287, %v303
      %v305 = vmul.f32 %v219, %v304
      %v306 = vlaneseq
      %v307 = vshrl.u32 %v306, 7
      %v308 = vsub.s32 0, %v307
      %v309 = vrot.slane %v300, %v308
      %v310 = vadd.f32 %v305, %v309
      %vm311 = vcmp.ge.f32.partialorder %v310, 0.0
      %v312 = vmul.f32 %v310, 0.2
      %v313 = vsel %vm311, %v310, %v312
      %314 = vst [vmem:[%s138] sm:$0xf] %v313
      %p315 = scmp.lt.s32.totalorder %s13, 1
      %s316 = scalar_select %p315, %s13, 1
      %s317 = smul.addr %s316, 4
      %s318 = scalar_lea.vmem %s2, %s317
      // Predicated region
      $region29: #{unet_forward.26} parent=27 // pred_check
        %p319 = pneg %p78
      $region30: #{unet_forward.26} parent=27 // pred_check_branch
        %321 = sbr.rel (%p319) target = $region32
      $region31: #{unet_forward.26} parent=27 // pred_region
        _
      $region32: #{unet_forward.26} parent=27 // pred_fallthru
        _
    $region28: #{unet_forward.26} parent=5 // pred_fallthru
      _
    %p322 = scmp.le.s32.totalorder 2, %s8
    // Predicated region
    $region33: #{unet_forward.26} parent=5 // pred_check
      %p323 = pneg %p322
    $region34: #{unet_forward.26} parent=5 // pred_check_branch
      %325 = sbr.rel (%p323) target = $region36
    $region35: #{unet_forward.26} parent=5 // pred_region
      %s326 = ssub.s32 %s8, 2
      // Predicated region
      $region37: #{unet_forward.26} parent=35 // pred_check
        %p327 = pneg %p84
      $region38: #{unet_forward.26} parent=35 // pred_check_branch
        %329 = sbr.rel (%p327) target = $region40
      $region39: #{unet_forward.26} parent=35 // pred_region
        %p330 = scmp.lt.s32.totalorder %s14, 1
        %s331 = scalar_select %p330, %s14, 1
        %s332 = smul.addr %s331, 4
        %s333 = scalar_lea.vmem %s2, %s332
      $region40: #{unet_forward.26} parent=35 // pred_fallthru
        _
    $region36: #{unet_forward.26} parent=5 // pred_fallthru
      _
  $region6: #{unet_forward.26} parent=0 // loop_footer
    %s12 = sadd.s32 1, %s8
  $region7: #{unet_forward.26} parent=0 // loop_footer_branch
    %7 = sbr.rel target = $region3
  $region8: #{unet_forward.26} parent=0 // loop_exit
    _

// kernel: unet_forward.27
$region0: #{unet_forward.27}
  #allocation0 [shape = 'u32[]', space=smem, size = 0x4, offset = 0x4, fixed_abs, tag = 'smem constant byte address 0x4 - core index']
  #allocation1 [shape = 'u32[144,128]{1,0:T(1,128)}', space=vmem, size = 0x12000, scoped, tag = 'internal scratch']
  %s0 = inlined_call_operand.vmem [shape: f32[2,16,576], index: 0, kind: input, shape index: {}]
  %s1 = inlined_call_operand.vmem [shape: f32[576,32], index: 1, kind: input, shape index: {}]
  %s2 = inlined_call_operand.vmem [shape: f32[2,16,32], index: 2, kind: output, shape index: {}]
  %s3 = sld [smem:[#allocation0]]
  $region41: #{unet_forward.27} parent=0
    _
  %s5 = ssub.s32 1, %s3
  %s6 = scalar_select 0, %s5, %s3
  loop: start=0, step=1, limit=4
  $region2: #{unet_forward.27} parent=0 // loop_pre_header
    _
  $region3: #{unet_forward.27} parent=0 // loop_header
    %s8 = sphi 0, %s12
    %p9 = scmp.ge.s32.totalorder %s8, 4
    %s18 = sphi 0, %s20
    %s21 = sphi 0, %s18
    %s22 = sphi 0, %s21
    %s38 = sphi 0, %s22
    %s42 = sphi 0, %s42
    %s44 = sphi 0, %s42
    %s45 = sphi 0, %s44
    %s59 = sphi 0, %s45
    %s65 = sphi 0, %s67
    %s68 = sphi 0, %s65
    %s69 = sphi 0, %s68
    %s85 = sphi 0, %s69
  $region4: #{unet_forward.27} parent=0 // loop_header_branch
    %11 = sbr.rel (%p9) target = $region8
  $region5: #{unet_forward.27} parent=0 // loop_body
    %s13 = ssub.s32 %s8, 1
    %s14 = ssub.s32 %s8, 2
    %s15 = sadd.s32 %s8, 1
    %s16 = ssub.s32 %s8, %s15
    %p17 = scmp.eq.s32.totalorder %s16, 0
    %s19 = sadd.s32 %s18, 1
    %s20 = scalar_select %p17, %s18, %s19
    %p23 = pneg %p17
    %p24 = scmp.eq.s32.totalorder %s8, 1
    %p25 = por %p23, %p24
    %p26 = scmp.ne.s32.totalorder %s18, %s21
    %p27 = scmp.eq.s32.totalorder %s8, 0
    %p28 = por %p26, %p27
    %p29 = scmp.ne.s32.totalorder %s18, %s21
    %p30 = scmp.eq.s32.totalorder %s13, 1
    %p31 = por %p29, %p30
    %p32 = scmp.ne.s32.totalorder %s21, %s22
    %p33 = scmp.eq.s32.totalorder %s13, 0
    %p34 = por %p32, %p33
    %p35 = scmp.ne.s32.totalorder %s21, %s22
    %p36 = scmp.eq.s32.totalorder %s14, 1
    %p37 = por %p35, %p36
    %p39 = scmp.ne.s32.totalorder %s22, %s38
    %p40 = scmp.eq.s32.totalorder %s14, 0
    %p41 = por %p39, %p40
    %s43 = sadd.s32 %s42, 1
    %p46 = scmp.eq.s32.totalorder %s8, 1
    %p47 = scmp.ne.s32.totalorder %s42, %s44
    %p48 = scmp.eq.s32.totalorder %s8, 0
    %p49 = por %p47, %p48
    %p50 = scmp.ne.s32.totalorder %s42, %s44
    %p51 = scmp.eq.s32.totalorder %s13, 1
    %p52 = por %p50, %p51
    %p53 = scmp.ne.s32.totalorder %s44, %s45
    %p54 = scmp.eq.s32.totalorder %s13, 0
    %p55 = por %p53, %p54
    %p56 = scmp.ne.s32.totalorder %s44, %s45
    %p57 = scmp.eq.s32.totalorder %s14, 1
    %p58 = por %p56, %p57
    %p60 = scmp.ne.s32.totalorder %s45, %s59
    %p61 = scmp.eq.s32.totalorder %s14, 0
    %p62 = por %p60, %p61
    %s63 = ssub.s32 %s8, %s15
    %p64 = scmp.eq.s32.totalorder %s63, 0
    %s66 = sadd.s32 %s65, 1
    %s67 = scalar_select %p64, %s65, %s66
    %p70 = pneg %p64
    %p71 = scmp.eq.s32.totalorder %s8, 1
    %p72 = por %p70, %p71
    %p73 = scmp.ne.s32.totalorder %s65, %s68
    %p74 = scmp.eq.s32.totalorder %s8, 0
    %p75 = por %p73, %p74
    %p76 = scmp.ne.s32.totalorder %s65, %s68
    %p77 = scmp.eq.s32.totalorder %s13, 1
    %p78 = por %p76, %p77
    %p79 = scmp.ne.s32.totalorder %s68, %s69
    %p80 = scmp.eq.s32.totalorder %s13, 0
    %p81 = por %p79, %p80
    %p82 = scmp.ne.s32.totalorder %s68, %s69
    %p83 = scmp.eq.s32.totalorder %s14, 1
    %p84 = por %p82, %p83
    %p86 = scmp.ne.s32.totalorder %s69, %s85
    %p87 = scmp.eq.s32.totalorder %s14, 0
    %p88 = por %p86, %p87
    %p89 = scmp.le.s32.totalorder 1, %s8
    %p90 = scmp.lt.s32.totalorder %s8, 3
    %p91 = pnand %p89, %p90
    %p92 = pneg %p91
    // Predicated region
    $region9: #{unet_forward.27} parent=5 // pred_check
      _
    $region10: #{unet_forward.27} parent=5 // pred_check_branch
      %94 = sbr.rel (%p91) target = $region12
    $region11: #{unet_forward.27} parent=5 // pred_region
      %s95 = ssub.s32 %s8, 1
      // Predicated region
      $region13: #{unet_forward.27} parent=11 // pred_check
        %p96 = pneg %p55
      $region14: #{unet_forward.27} parent=11 // pred_check_branch
        %98 = sbr.rel (%p96) target = $region16
      $region15: #{unet_forward.27} parent=11 // pred_region
        _
      $region16: #{unet_forward.27} parent=11 // pred_fallthru
        _
    $region12: #{unet_forward.27} parent=5 // pred_fallthru
      _
    %p99 = scmp.lt.s32.totalorder %s8, 2
    // Predicated region
    $region17: #{unet_forward.27} parent=5 // pred_check
      %p100 = pneg %p99
    $region18: #{unet_forward.27} parent=5 // pred_check_branch
      %102 = sbr.rel (%p100) target = $region20
    $region19: #{unet_forward.27} parent=5 // pred_region
      // Predicated region
      $region21: #{unet_forward.27} parent=19 // pred_check
        %p103 = pneg %p28
      $region22: #{unet_forward.27} parent=19 // pred_check_branch
        %105 = sbr.rel (%p103) target = $region24
      $region23: #{unet_forward.27} parent=19 // pred_region
        %p106 = scmp.lt.s32.totalorder %s8, 1
        %s107 = scalar_select %p106, %s8, 1
        %s108 = smul.addr %s107, 10
        %s109 = smul.addr %s108, 8
        %s110 = scalar_lea.vmem %s0, %s109
      $region24: #{unet_forward.27} parent=19 // pred_fallthru
        _
    $region20: #{unet_forward.27} parent=5 // pred_fallthru
      _
    %p111 = scmp.le.s32.totalorder 1, %s8
    %p112 = scmp.lt.s32.totalorder %s8, 3
    %p113 = pnand %p111, %p112
    %p114 = pneg %p113
    // Predicated region
    $region25: #{unet_forward.27} parent=5 // pred_check
      _
    $region26: #{unet_forward.27} parent=5 // pred_check_branch
      %116 = sbr.rel (%p113) target = $region28
    $region27: #{unet_forward.27} parent=5 // pred_region
      %s117 = ssub.s32 %s8, 1
      %p118 = scmp.lt.s32.totalorder %s13, 1
      %s119 = scalar_select %p118, %s13, 1
      %s120 = smul.addr %s119, 10
      %s121 = smul.addr %s120, 8
      %s122 = scalar_lea.vmem %s0, %s121
      %p123 = pneg %p34
      %p124 = pneg %p31
      %p125 = pneg %p55
      %p126 = pneg %p52
      %p127 = pneg %p81
      %p128 = pneg %p78
      %p129 = scmp.lt.s32.totalorder %s13, 1
      %s130 = scalar_select %p129, %s13, 1
      %s131 = smul.addr %s130, 2
      %s132 = smul.addr %s131, 8
      %s133 = scalar_lea.vmem %s2, %s132
      %p134 = scmp.lt.s32.totalorder %s13, 1
      %s135 = scalar_select %p134, %s13, 1
      %s136 = smul.addr %s135, 10
      %s137 = smul.addr %s136, 8
      %s138 = scalar_lea.vmem %s0, %s137
      %p139 = scmp.lt.s32.totalorder %s13, 1
      %s140 = scalar_select %p139, %s13, 1
      %s141 = smul.addr %s140, 2
      %s142 = smul.addr %s141, 8
      %s143 = scalar_lea.vmem %s2, %s142
      %v144 = vld [vmem:[%s138] sm:$0xff]
      %v145 = vld [vmem:[%s138 + $0x8] sm:$0xff]
      %v146 = vld [vmem:[%s138 + $0x10] sm:$0xff]
      %v147 = vld [vmem:[%s138 + $0x18] sm:$0xff]
      %v148 = vld [vmem:[%s138 + $0x20] sm:$0xff]
      %v149 = vld [vmem:[%s138 + $0x28] sm:$0xff]
      %v150 = vld [vmem:[%s138 + $0x30] sm:$0xff]
      %v151 = vld [vmem:[%s138 + $0x38] sm:$0xff]
      %v152 = vld [vmem:[%s138 + $0x40] sm:$0xff]
      %v153 = vld [vmem:[%s138 + $0x48] sm:$0xff]
      %v154 = vld [vmem:[%s1] sm:$0xff]
      %v155 = vld [vmem:[%s1 + $0x8] sm:$0xff]
      %v156 = vld [vmem:[%s1 + $0x10] sm:$0xff]
      %v157 = vld [vmem:[%s1 + $0x18] sm:$0xff]
      %v158 = vld [vmem:[%s1 + $0x20] sm:$0xff]
      %v159 = vld [vmem:[%s1 + $0x28] sm:$0xff]
      %v160 = vld [vmem:[%s1 + $0x30] sm:$0xff]
      %v161 = vld [vmem:[%s1 + $0x38] sm:$0xff]
      %v162 = vld [vmem:[%s1 + $0x40] sm:$0xff]
      %v163 = vld [vmem:[%s1 + $0x48] sm:$0xff]
      %v164 = vld [vmem:[%s1 + $0x50] sm:$0xff]
      %v165 = vld [vmem:[%s1 + $0x58] sm:$0xff]
      %v166 = vld [vmem:[%s1 + $0x60] sm:$0xff]
      %v167 = vld [vmem:[%s1 + $0x68] sm:$0xff]
      %v168 = vld [vmem:[%s1 + $0x70] sm:$0xff]
      %v169 = vld [vmem:[%s1 + $0x78] sm:$0xff]
      %v170 = vld [vmem:[%s1 + $0x80] sm:$0xff]
      %v171 = vld [vmem:[%s1 + $0x88] sm:$0xff]
      %v172 = vld [vmem:[%s1 + $0x90] sm:$0xff]
      %v173 = vld [vmem:[%s1 + $0x98] sm:$0xff]
      %v174 = vld [vmem:[%s1 + $0xa0] sm:$0xff]
      %v175 = vld [vmem:[%s1 + $0xa8] sm:$0xff]
      %v176 = vld [vmem:[%s1 + $0xb0] sm:$0xff]
      %v177 = vld [vmem:[%s1 + $0xb8] sm:$0xff]
      %v178 = vld [vmem:[%s1 + $0xc0] sm:$0xff]
      %v179 = vld [vmem:[%s1 + $0xc8] sm:$0xff]
      %v180 = vld [vmem:[%s1 + $0xd0] sm:$0xff]
      %v181 = vld [vmem:[%s1 + $0xd8] sm:$0xff]
      %v182 = vld [vmem:[%s1 + $0xe0] sm:$0xff]
      %v183 = vld [vmem:[%s1 + $0xe8] sm:$0xff]
      %v184 = vld [vmem:[%s1 + $0xf0] sm:$0xff]
      %v185 = vld [vmem:[%s1 + $0xf8] sm:$0xff]
      %v186 = vld [vmem:[%s1 + $0x100] sm:$0xff]
      %v187 = vld [vmem:[%s1 + $0x108] sm:$0xff]
      %v188 = vld [vmem:[%s1 + $0x110] sm:$0xff]
      %v189 = vld [vmem:[%s1 + $0x118] sm:$0xff]
      %v190 = vld [vmem:[%s1 + $0x120] sm:$0xff]
      %v191 = vld [vmem:[%s1 + $0x128] sm:$0xff]
      %v192 = vld [vmem:[%s1 + $0x130] sm:$0xff]
      %v193 = vld [vmem:[%s1 + $0x138] sm:$0xff]
      %v194 = vld [vmem:[%s1 + $0x140] sm:$0xff]
      %v195 = vld [vmem:[%s1 + $0x148] sm:$0xff]
      %v196 = vld [vmem:[%s1 + $0x150] sm:$0xff]
      %v197 = vld [vmem:[%s1 + $0x158] sm:$0xff]
      %v198 = vld [vmem:[%s1 + $0x160] sm:$0xff]
      %v199 = vld [vmem:[%s1 + $0x168] sm:$0xff]
      %v200 = vld [vmem:[%s1 + $0x170] sm:$0xff]
      %v201 = vld [vmem:[%s1 + $0x178] sm:$0xff]
      %v202 = vld [vmem:[%s1 + $0x180] sm:$0xff]
      %v203 = vld [vmem:[%s1 + $0x188] sm:$0xff]
      %v204 = vld [vmem:[%s1 + $0x190] sm:$0xff]
      %v205 = vld [vmem:[%s1 + $0x198] sm:$0xff]
      %v206 = vld [vmem:[%s1 + $0x1a0] sm:$0xff]
      %v207 = vld [vmem:[%s1 + $0x1a8] sm:$0xff]
      %v208 = vld [vmem:[%s1 + $0x1b0] sm:$0xff]
      %v209 = vld [vmem:[%s1 + $0x1b8] sm:$0xff]
      %v210 = vld [vmem:[%s1 + $0x1c0] sm:$0xff]
      %v211 = vld [vmem:[%s1 + $0x1c8] sm:$0xff]
      %v212 = vld [vmem:[%s1 + $0x1d0] sm:$0xff]
      %v213 = vld [vmem:[%s1 + $0x1d8] sm:$0xff]
      %v214 = vld [vmem:[%s1 + $0x1e0] sm:$0xff]
      %v215 = vld [vmem:[%s1 + $0x1e8] sm:$0xff]
      %v216 = vld [vmem:[%s1 + $0x1f0] sm:$0xff]
      %v217 = vld [vmem:[%s1 + $0x1f8] sm:$0xff]
      %v218 = vld [vmem:[%s1 + $0x200] sm:$0xff]
      %v219 = vld [vmem:[%s1 + $0x208] sm:$0xff]
      %v220 = vld [vmem:[%s1 + $0x210] sm:$0xff]
      %v221 = vld [vmem:[%s1 + $0x218] sm:$0xff]
      %v222 = vld [vmem:[%s1 + $0x220] sm:$0xff]
      %v223 = vld [vmem:[%s1 + $0x228] sm:$0xff]
      %v224 = vld [vmem:[%s1 + $0x230] sm:$0xff]
      %v225 = vld [vmem:[%s1 + $0x238] sm:$0xff]
      %vm226 = vcmask 523264
      %v228 = vsel %vm226, %v148, 0
      %v231 = vsel %vm226, %v153, 0
      %233 = vmatprep.subr.mxu0 0.0
      %234 = vmatpush1.msra.mxu0 %v154
      %235 = vmatprep.subr.mxu0 0.0
      %236 = vmatpush1.msra.mxu0 %v155
      %237 = vmatprep.subr.mxu0 0.0
      %238 = vmatpush1.msra.mxu0 %v156
      %239 = vmatprep.subr.mxu0 0.0
      %240 = vmatpush1.msra.mxu0 %v157
      %241 = vmatprep.subr.mxu0 0.0
      %242 = vmatpush1.msra.mxu0 %v158
      %243 = vmatprep.subr.mxu0 0.0
      %244 = vmatpush1.msra.mxu0 %v159
      %245 = vmatprep.subr.mxu0 0.0
      %246 = vmatpush1.msra.mxu0 %v160
      %247 = vmatprep.subr.mxu0 0.0
      %248 = vmatpush1.msra.mxu0 %v161
      %249 = vmatprep.subr.mxu0 0.0
      %250 = vmatpush1.msra.mxu0 %v162
      %251 = vmatprep.subr.mxu0 0.0
      %252 = vmatpush1.msra.mxu0 %v163
      %253 = vmatprep.subr.mxu0 0.0
      %254 = vmatpush1.msra.mxu0 %v164
      %255 = vmatprep.subr.mxu0 0.0
      %256 = vmatpush1.msra.mxu0 %v165
      %257 = vmatprep.subr.mxu0 0.0
      %258 = vmatpush1.msra.mxu0 %v166
      %259 = vmatprep.subr.mxu0 0.0
      %260 = vmatpush1.msra.mxu0 %v167
      %261 = vmatprep.subr.mxu0 0.0
      %262 = vmatpush1.msra.mxu0 %v168
      %263 = vmatprep.subr.mxu0 0.0
      %264 = vmatpush1.msra.mxu0 %v169
      %265 = vmatprep.subr.mxu0 0.0
      %266 = vmatpush1.msra.mxu0 %v170
      %267 = vmatprep.subr.mxu0 0.0
      %268 = vmatpush1.msra.mxu0 %v171
      %269 = vmatprep.subr.mxu0 0.0
      %270 = vmatpush1.msra.mxu0 %v172
      %271 = vmatprep.subr.mxu0 0.0
      %272 = vmatpush1.msra.mxu0 %v173
      %273 = vmatprep.subr.mxu0 0.0
      %274 = vmatpush1.msra.mxu0 %v174
      %275 = vmatprep.subr.mxu0 0.0
      %276 = vmatpush1.msra.mxu0 %v175
      %277 = vmatprep.subr.mxu0 0.0
      %278 = vmatpush1.msra.mxu0 %v176
      %279 = vmatprep.subr.mxu0 0.0
      %280 = vmatpush1.msra.mxu0 %v177
      %281 = vmatprep.subr.mxu0 0.0
      %282 = vmatpush1.msra.mxu0 %v178
      %283 = vmatprep.subr.mxu0 0.0
      %284 = vmatpush1.msra.mxu0 %v179
      %285 = vmatprep.subr.mxu0 0.0
      %286 = vmatpush1.msra.mxu0 %v180
      %287 = vmatprep.subr.mxu0 0.0
      %288 = vmatpush1.msra.mxu0 %v181
      %289 = vmatprep.subr.mxu0 0.0
      %290 = vmatpush1.msra.mxu0 %v182
      %291 = vmatprep.subr.mxu0 0.0
      %292 = vmatpush1.msra.mxu0 %v183
      %293 = vmatprep.subr.mxu0 0.0
      %294 = vmatpush1.msra.mxu0 %v184
      %295 = vmatprep.subr.mxu0 0.0
      %296 = vmatpush1.msra.mxu0 %v185
      %297 = vmatprep.mubr.f32.mxu0 %v145
      %298 = vmatmul.mubr.f32.gmra.mrb[0].mxu0 %v144
      %v299 = vpop.f32.mrb[0].mxu0
      %v300 = vadd.f32 0.0, %v299
      %v301 = vpop.f32.mrb[0].mxu0
      %302 = vmatprep.mubr.f32.mxu0 %v150
      %303 = vmatmul.mubr.f32.gmra.mrb[0].mxu0 %v149
      %v304 = vpop.f32.mrb[0].mxu0
      %v305 = vadd.f32 0.0, %v304
      %v306 = vpop.f32.mrb[0].mxu0
      %307 = vdwg.mxu0
      %308 = vmatprep.subr.mxu0 0.0
      %309 = vmatpush1.msra.mxu0 %v186
      %310 = vmatprep.subr.mxu0 0.0
      %311 = vmatpush1.msra.mxu0 %v187
      %312 = vmatprep.subr.mxu0 0.0
      %313 = vmatpush1.msra.mxu0 %v188
      %314 = vmatprep.subr.mxu0 0.0
      %315 = vmatpush1.msra.mxu0 %v189
      %316 = vmatprep.subr.mxu0 0.0
      %317 = vmatpush1.msra.mxu0 %v190
      %318 = vmatprep.subr.mxu0 0.0
      %319 = vmatpush1.msra.mxu0 %v191
      %320 = vmatprep.subr.mxu0 0.0
      %321 = vmatpush1.msra.mxu0 %v192
      %322 = vmatprep.subr.mxu0 0.0
      %323 = vmatpush1.msra.mxu0 %v193
      %324 = vmatprep.subr.mxu0 0.0
      %325 = vmatpush1.msra.mxu0 %v194
      %326 = vmatprep.subr.mxu0 0.0
      %327 = vmatpush1.msra.mxu0 %v195
      %328 = vmatprep.subr.mxu0 0.0
      %329 = vmatpush1.msra.mxu0 %v196
      %330 = vmatprep.subr.mxu0 0.0
      %331 = vmatpush1.msra.mxu0 %v197
      %332 = vmatprep.subr.mxu0 0.0
      %333 = vmatpush1.msra.mxu0 %v198
      %334 = vmatprep.subr.mxu0 0.0
      %335 = vmatpush1.msra.mxu0 %v199
      %336 = vmatprep.subr.mxu0 0.0
      %337 = vmatpush1.msra.mxu0 %v200
      %338 = vmatprep.subr.mxu0 0.0
      %339 = vmatpush1.msra.mxu0 %v201
      %340 = vmatprep.subr.mxu0 0.0
      %341 = vmatpush1.msra.mxu0 %v202
      %342 = vmatprep.subr.mxu0 0.0
      %343 = vmatpush1.msra.mxu0 %v203
      %344 = vmatprep.subr.mxu0 0.0
      %345 = vmatpush1.msra.mxu0 %v204
      %346 = vmatprep.subr.mxu0 0.0
      %347 = vmatpush1.msra.mxu0 %v205
      %348 = vmatprep.subr.mxu0 0.0
      %349 = vmatpush1.msra.mxu0 %v206
      %350 = vmatprep.subr.mxu0 0.0
      %351 = vmatpush1.msra.mxu0 %v207
      %352 = vmatprep.subr.mxu0 0.0
      %353 = vmatpush1.msra.mxu0 %v208
      %354 = vmatprep.subr.mxu0 0.0
      %355 = vmatpush1.msra.mxu0 %v209
      %356 = vmatprep.subr.mxu0 0.0
      %357 = vmatpush1.msra.mxu0 %v210
      %358 = vmatprep.subr.mxu0 0.0
      %359 = vmatpush1.msra.mxu0 %v211
      %360 = vmatprep.subr.mxu0 0.0
      %361 = vmatpush1.msra.mxu0 %v212
      %362 = vmatprep.subr.mxu0 0.0
      %363 = vmatpush1.msra.mxu0 %v213
      %364 = vmatprep.subr.mxu0 0.0
      %365 = vmatpush1.msra.mxu0 %v214
      %366 = vmatprep.subr.mxu0 0.0
      %367 = vmatpush1.msra.mxu0 %v215
      %368 = vmatprep.subr.mxu0 0.0
      %369 = vmatpush1.msra.mxu0 %v216
      %370 = vmatprep.subr.mxu0 0.0
      %371 = vmatpush1.msra.mxu0 %v217
      %372 = vmatprep.mubr.f32.mxu0 %v147
      %373 = vmatmul.mubr.f32.gmra.mrb[0].mxu0 %v146
      %v374 = vpop.f32.mrb[0].mxu0
      %v375 = vadd.f32 %v300, %v374
      %v376 = vpop.f32.mrb[0].mxu0
      %377 = vmatprep.mubr.f32.mxu0 %v152
      %378 = vmatmul.mubr.f32.gmra.mrb[0].mxu0 %v151
      %v379 = vpop.f32.mrb[0].mxu0
      %v380 = vadd.f32 %v305, %v379
      %v381 = vpop.f32.mrb[0].mxu0
      %382 = vdwg.mxu0
      %383 = vmatprep.subr.mxu0 0.0
      %384 = vmatpush1.msra.mxu0 %v218
      %385 = vmatprep.subr.mxu0 0.0
      %386 = vmatpush1.msra.mxu0 %v219
      %387 = vmatprep.subr.mxu0 0.0
      %388 = vmatpush1.msra.mxu0 %v220
      %389 = vmatprep.subr.mxu0 0.0
      %390 = vmatpush1.msra.mxu0 %v221
      %391 = vmatprep.subr.mxu0 0.0
      %392 = vmatpush1.msra.mxu0 %v222
      %393 = vmatprep.subr.mxu0 0.0
      %394 = vmatpush1.msra.mxu0 %v223
      %395 = vmatprep.subr.mxu0 0.0
      %396 = vmatpush1.msra.mxu0 %v224
      %397 = vmatprep.subr.mxu0 0.0
      %398 = vmatpush1.msra.mxu0 %v225
      %399 = vmatprep.subr.mxu0 0.0
      %400 = vmatpush1.msra.mxu0 0.0
      %401 = vmatprep.subr.mxu0 0.0
      %402 = vmatpush1.msra.mxu0 0.0
      %403 = vmatprep.subr.mxu0 0.0
      %404 = vmatpush1.msra.mxu0 0.0
      %405 = vmatprep.subr.mxu0 0.0
      %406 = vmatpush1.msra.mxu0 0.0
      %407 = vmatprep.subr.mxu0 0.0
      %408 = vmatpush1.msra.mxu0 0.0
      %409 = vmatprep.subr.mxu0 0.0
      %410 = vmatpush1.msra.mxu0 0.0
      %411 = vmatprep.subr.mxu0 0.0
      %412 = vmatpush1.msra.mxu0 0.0
      %413 = vmatprep.subr.mxu0 0.0
      %414 = vmatpush1.msra.mxu0 0.0
      %415 = vmatprep.subr.mxu0 0.0
      %416 = vmatpush1.msra.mxu0 0.0
      %417 = vmatprep.subr.mxu0 0.0
      %418 = vmatpush1.msra.mxu0 0.0
      %419 = vmatprep.subr.mxu0 0.0
      %420 = vmatpush1.msra.mxu0 0.0
      %421 = vmatprep.subr.mxu0 0.0
      %422 = vmatpush1.msra.mxu0 0.0
      %423 = vmatprep.subr.mxu0 0.0
      %424 = vmatpush1.msra.mxu0 0.0
      %425 = vmatprep.subr.mxu0 0.0
      %426 = vmatpush1.msra.mxu0 0.0
      %427 = vmatprep.subr.mxu0 0.0
      %428 = vmatpush1.msra.mxu0 0.0
      %429 = vmatprep.subr.mxu0 0.0
      %430 = vmatpush1.msra.mxu0 0.0
      %431 = vmatprep.subr.mxu0 0.0
      %432 = vmatpush1.msra.mxu0 0.0
      %433 = vmatprep.subr.mxu0 0.0
      %434 = vmatpush1.msra.mxu0 0.0
      %435 = vmatprep.subr.mxu0 0.0
      %436 = vmatpush1.msra.mxu0 0.0
      %437 = vmatprep.subr.mxu0 0.0
      %438 = vmatpush1.msra.mxu0 0.0
      %439 = vmatprep.subr.mxu0 0.0
      %440 = vmatpush1.msra.mxu0 0.0
      %441 = vmatprep.subr.mxu0 0.0
      %442 = vmatpush1.msra.mxu0 0.0
      %443 = vmatprep.subr.mxu0 0.0
      %444 = vmatpush1.msra.mxu0 0.0
      %445 = vmatprep.subr.mxu0 0.0
      %446 = vmatpush1.msra.mxu0 0.0
      %447 = vmatprep.mubr.f32.mxu0 0.0
      %448 = vmatmul.mubr.f32.gmra.mrb[0].mxu0 %v228
      %v449 = vpop.f32.mrb[0].mxu0
      %v450 = vadd.f32 %v375, %v449
      %v451 = vpop.f32.mrb[0].mxu0
      %452 = vmatprep.mubr.f32.mxu0 0.0
      %453 = vmatmul.mubr.f32.gmra.mrb[0].mxu0 %v231
      %v454 = vpop.f32.mrb[0].mxu0
      %v455 = vadd.f32 %v380, %v454
      %v456 = vpop.f32.mrb[0].mxu0
      %457 = vdwg.mxu0
      %vm458 = vcmask 261120
      %v459 = vsel %vm458, %v450, 0.0
      %v460 = vsel %vm458, %v455, 0.0
      %v461 = vadd.f32 %v459, %v460
      %v462 = vrot.slane %v461, 4
      %v463 = vadd.f32 %v461, %v462
      %v464 = vrot.slane %v463, 2
      %v465 = vadd.f32 %v463, %v464
      %v466 = vrot.slane %v465, 1
      %v467 = vadd.f32 %v465, %v466
      %v468 = vmul.f32 %v450, %v450
      %v469 = vmul.f32 %v455, %v455
      %v470 = vsel %vm458, %v468, 0.0
      %v471 = vsel %vm458, %v469, 0.0
      %v472 = vadd.f32 %v470, %v471
      %v473 = vrot.slane %v472, 4
      %v474 = vadd.f32 %v472, %v473
      %v475 = vrot.slane %v474, 2
      %v476 = vadd.f32 %v474, %v475
      %v477 = vrot.slane %v476, 1
      %v478 = vadd.f32 %v476, %v477
      %v479 = vrcp.pop 16.0
      %v480 = vmul.f32 %v467, %v479
      %v481 = vmul.f32 %v478, %v479
      %v482 = vmul.f32 %v480, %v480
      %v483 = vsub.f32 %v481, %v482
      %v484 = vadd.f32 %v483, 1e-05
      %v485 = vrsqrt.pop %v484
      %v486 = vsub.f32 0.0, %v480
      %v487 = vmul.f32 %v486, %v485
      %v488 = vmul.f32 %v450, %v485
      %v489 = vmul.f32 %v455, %v485
      %v490 = vadd.f32 %v488, %v487
      %v491 = vadd.f32 %v489, %v487
      %vm492 = vcmp.ge.f32.partialorder %v490, 0.0
      %vm493 = vcmp.ge.f32.partialorder %v491, 0.0
      %v494 = vmul.f32 %v490, 0.2
      %v495 = vmul.f32 %v491, 0.2
      %v496 = vsel %vm492, %v490, %v494
      %v497 = vsel %vm493, %v491, %v495
      %498 = vst.msk [vmem:[%s143] sm:$0xff] %vm458, %v496
      %499 = vst.msk [vmem:[%s143 + $0x8] sm:$0xff] %vm458, %v497
      %p500 = scmp.lt.s32.totalorder %s13, 1
      %s501 = scalar_select %p500, %s13, 1
      %s502 = smul.addr %s501, 2
      %s503 = smul.addr %s502, 8
      %s504 = scalar_lea.vmem %s2, %s503
      // Predicated region
      $region29: #{unet_forward.27} parent=27 // pred_check
        %p505 = pneg %p78
      $region30: #{unet_forward.27} parent=27 // pred_check_branch
        %507 = sbr.rel (%p505) target = $region32
      $region31: #{unet_forward.27} parent=27 // pred_region
        _
      $region32: #{unet_forward.27} parent=27 // pred_fallthru
        _
    $region28: #{unet_forward.27} parent=5 // pred_fallthru
      _
    %p508 = scmp.le.s32.totalorder 2, %s8
    // Predicated region
    $region33: #{unet_forward.27} parent=5 // pred_check
      %p509 = pneg %p508
    $region34: #{unet_forward.27} parent=5 // pred_check_branch
      %511 = sbr.rel (%p509) target = $region36
    $region35: #{unet_forward.27} parent=5 // pred_region
      %s512 = ssub.s32 %s8, 2
      // Predicated region
      $region37: #{unet_forward.27} parent=35 // pred_check
        %p513 = pneg %p84
      $region38: #{unet_forward.27} parent=35 // pred_check_branch
        %515 = sbr.rel (%p513) target = $region40
      $region39: #{unet_forward.27} parent=35 // pred_region
        %p516 = scmp.lt.s32.totalorder %s14, 1
        %s517 = scalar_select %p516, %s14, 1
        %s518 = smul.addr %s517, 2
        %s519 = smul.addr %s518, 8
        %s520 = scalar_lea.vmem %s2, %s519
      $region40: #{unet_forward.27} parent=35 // pred_fallthru
        _
    $region36: #{unet_forward.27} parent=5 // pred_fallthru
      _
  $region6: #{unet_forward.27} parent=0 // loop_footer
    %s12 = sadd.s32 1, %s8
  $region7: #{unet_forward.27} parent=0 // loop_footer_branch
    %7 = sbr.rel target = $region3
  $region8: #{unet_forward.27} parent=0 // loop_exit
    _

// kernel: unet_forward.29
$region0: #{unet_forward.29}
  #allocation0 [shape = 'u32[]', space=smem, size = 0x4, offset = 0x4, fixed_abs, tag = 'smem constant byte address 0x4 - core index']
  #allocation1 [shape = 'u32[144,128]{1,0:T(1,128)}', space=vmem, size = 0x12000, scoped, tag = 'internal scratch']
  %s0 = inlined_call_operand.vmem [shape: f32[2,16,32], index: 0, kind: input, shape index: {}]
  %s1 = inlined_call_operand.vmem [shape: f32[32,64], index: 1, kind: input, shape index: {}]
  %s2 = inlined_call_operand.vmem [shape: f32[2,16,64], index: 2, kind: output, shape index: {}]
  %s3 = sld [smem:[#allocation0]]
  $region41: #{unet_forward.29} parent=0
    _
  %s5 = ssub.s32 1, %s3
  %s6 = scalar_select 0, %s5, %s3
  loop: start=0, step=1, limit=4
  $region2: #{unet_forward.29} parent=0 // loop_pre_header
    _
  $region3: #{unet_forward.29} parent=0 // loop_header
    %s8 = sphi 0, %s12
    %p9 = scmp.ge.s32.totalorder %s8, 4
    %s18 = sphi 0, %s20
    %s21 = sphi 0, %s18
    %s22 = sphi 0, %s21
    %s38 = sphi 0, %s22
    %s42 = sphi 0, %s42
    %s44 = sphi 0, %s42
    %s45 = sphi 0, %s44
    %s59 = sphi 0, %s45
    %s65 = sphi 0, %s67
    %s68 = sphi 0, %s65
    %s69 = sphi 0, %s68
    %s85 = sphi 0, %s69
  $region4: #{unet_forward.29} parent=0 // loop_header_branch
    %11 = sbr.rel (%p9) target = $region8
  $region5: #{unet_forward.29} parent=0 // loop_body
    %s13 = ssub.s32 %s8, 1
    %s14 = ssub.s32 %s8, 2
    %s15 = sadd.s32 %s8, 1
    %s16 = ssub.s32 %s8, %s15
    %p17 = scmp.eq.s32.totalorder %s16, 0
    %s19 = sadd.s32 %s18, 1
    %s20 = scalar_select %p17, %s18, %s19
    %p23 = pneg %p17
    %p24 = scmp.eq.s32.totalorder %s8, 1
    %p25 = por %p23, %p24
    %p26 = scmp.ne.s32.totalorder %s18, %s21
    %p27 = scmp.eq.s32.totalorder %s8, 0
    %p28 = por %p26, %p27
    %p29 = scmp.ne.s32.totalorder %s18, %s21
    %p30 = scmp.eq.s32.totalorder %s13, 1
    %p31 = por %p29, %p30
    %p32 = scmp.ne.s32.totalorder %s21, %s22
    %p33 = scmp.eq.s32.totalorder %s13, 0
    %p34 = por %p32, %p33
    %p35 = scmp.ne.s32.totalorder %s21, %s22
    %p36 = scmp.eq.s32.totalorder %s14, 1
    %p37 = por %p35, %p36
    %p39 = scmp.ne.s32.totalorder %s22, %s38
    %p40 = scmp.eq.s32.totalorder %s14, 0
    %p41 = por %p39, %p40
    %s43 = sadd.s32 %s42, 1
    %p46 = scmp.eq.s32.totalorder %s8, 1
    %p47 = scmp.ne.s32.totalorder %s42, %s44
    %p48 = scmp.eq.s32.totalorder %s8, 0
    %p49 = por %p47, %p48
    %p50 = scmp.ne.s32.totalorder %s42, %s44
    %p51 = scmp.eq.s32.totalorder %s13, 1
    %p52 = por %p50, %p51
    %p53 = scmp.ne.s32.totalorder %s44, %s45
    %p54 = scmp.eq.s32.totalorder %s13, 0
    %p55 = por %p53, %p54
    %p56 = scmp.ne.s32.totalorder %s44, %s45
    %p57 = scmp.eq.s32.totalorder %s14, 1
    %p58 = por %p56, %p57
    %p60 = scmp.ne.s32.totalorder %s45, %s59
    %p61 = scmp.eq.s32.totalorder %s14, 0
    %p62 = por %p60, %p61
    %s63 = ssub.s32 %s8, %s15
    %p64 = scmp.eq.s32.totalorder %s63, 0
    %s66 = sadd.s32 %s65, 1
    %s67 = scalar_select %p64, %s65, %s66
    %p70 = pneg %p64
    %p71 = scmp.eq.s32.totalorder %s8, 1
    %p72 = por %p70, %p71
    %p73 = scmp.ne.s32.totalorder %s65, %s68
    %p74 = scmp.eq.s32.totalorder %s8, 0
    %p75 = por %p73, %p74
    %p76 = scmp.ne.s32.totalorder %s65, %s68
    %p77 = scmp.eq.s32.totalorder %s13, 1
    %p78 = por %p76, %p77
    %p79 = scmp.ne.s32.totalorder %s68, %s69
    %p80 = scmp.eq.s32.totalorder %s13, 0
    %p81 = por %p79, %p80
    %p82 = scmp.ne.s32.totalorder %s68, %s69
    %p83 = scmp.eq.s32.totalorder %s14, 1
    %p84 = por %p82, %p83
    %p86 = scmp.ne.s32.totalorder %s69, %s85
    %p87 = scmp.eq.s32.totalorder %s14, 0
    %p88 = por %p86, %p87
    %p89 = scmp.le.s32.totalorder 1, %s8
    %p90 = scmp.lt.s32.totalorder %s8, 3
    %p91 = pnand %p89, %p90
    %p92 = pneg %p91
    // Predicated region
    $region9: #{unet_forward.29} parent=5 // pred_check
      _
    $region10: #{unet_forward.29} parent=5 // pred_check_branch
      %94 = sbr.rel (%p91) target = $region12
    $region11: #{unet_forward.29} parent=5 // pred_region
      %s95 = ssub.s32 %s8, 1
      // Predicated region
      $region13: #{unet_forward.29} parent=11 // pred_check
        %p96 = pneg %p55
      $region14: #{unet_forward.29} parent=11 // pred_check_branch
        %98 = sbr.rel (%p96) target = $region16
      $region15: #{unet_forward.29} parent=11 // pred_region
        _
      $region16: #{unet_forward.29} parent=11 // pred_fallthru
        _
    $region12: #{unet_forward.29} parent=5 // pred_fallthru
      _
    %p99 = scmp.lt.s32.totalorder %s8, 2
    // Predicated region
    $region17: #{unet_forward.29} parent=5 // pred_check
      %p100 = pneg %p99
    $region18: #{unet_forward.29} parent=5 // pred_check_branch
      %102 = sbr.rel (%p100) target = $region20
    $region19: #{unet_forward.29} parent=5 // pred_region
      // Predicated region
      $region21: #{unet_forward.29} parent=19 // pred_check
        %p103 = pneg %p28
      $region22: #{unet_forward.29} parent=19 // pred_check_branch
        %105 = sbr.rel (%p103) target = $region24
      $region23: #{unet_forward.29} parent=19 // pred_region
        %p106 = scmp.lt.s32.totalorder %s8, 1
        %s107 = scalar_select %p106, %s8, 1
        %s108 = smul.addr %s107, 2
        %s109 = smul.addr %s108, 8
        %s110 = scalar_lea.vmem %s0, %s109
      $region24: #{unet_forward.29} parent=19 // pred_fallthru
        _
    $region20: #{unet_forward.29} parent=5 // pred_fallthru
      _
    %p111 = scmp.le.s32.totalorder 1, %s8
    %p112 = scmp.lt.s32.totalorder %s8, 3
    %p113 = pnand %p111, %p112
    %p114 = pneg %p113
    // Predicated region
    $region25: #{unet_forward.29} parent=5 // pred_check
      _
    $region26: #{unet_forward.29} parent=5 // pred_check_branch
      %116 = sbr.rel (%p113) target = $region28
    $region27: #{unet_forward.29} parent=5 // pred_region
      %s117 = ssub.s32 %s8, 1
      %p118 = scmp.lt.s32.totalorder %s13, 1
      %s119 = scalar_select %p118, %s13, 1
      %s120 = smul.addr %s119, 2
      %s121 = smul.addr %s120, 8
      %s122 = scalar_lea.vmem %s0, %s121
      %p123 = pneg %p34
      %p124 = pneg %p31
      %p125 = pneg %p55
      %p126 = pneg %p52
      %p127 = pneg %p81
      %p128 = pneg %p78
      %p129 = scmp.lt.s32.totalorder %s13, 1
      %s130 = scalar_select %p129, %s13, 1
      %s131 = smul.addr %s130, 2
      %s132 = smul.addr %s131, 8
      %s133 = scalar_lea.vmem %s2, %s132
      %p134 = scmp.lt.s32.totalorder %s13, 1
      %s135 = scalar_select %p134, %s13, 1
      %s136 = smul.addr %s135, 2
      %s137 = smul.addr %s136, 8
      %s138 = scalar_lea.vmem %s0, %s137
      %p139 = scmp.lt.s32.totalorder %s13, 1
      %s140 = scalar_select %p139, %s13, 1
      %s141 = smul.addr %s140, 2
      %s142 = smul.addr %s141, 8
      %s143 = scalar_lea.vmem %s2, %s142
      %v144 = vld [vmem:[%s138] sm:$0xff]
      %v145 = vld [vmem:[%s138 + $0x8] sm:$0xff]
      %v146 = vld [vmem:[%s1] sm:$0xff]
      %v147 = vld [vmem:[%s1 + $0x8] sm:$0xff]
      %v148 = vld [vmem:[%s1 + $0x10] sm:$0xff]
      %v149 = vld [vmem:[%s1 + $0x18] sm:$0xff]
      %vm150 = vcmask 261120
      %v152 = vsel %vm150, %v144, 0
      %v155 = vsel %vm150, %v145, 0
      %157 = vmatprep.subr.mxu0 0.0
      %158 = vmatpush1.msra.mxu0 %v146
      %159 = vmatprep.subr.mxu0 0.0
      %160 = vmatpush1.msra.mxu0 %v147
      %161 = vmatprep.subr.mxu0 0.0
      %162 = vmatpush1.msra.mxu0 %v148
      %163 = vmatprep.subr.mxu0 0.0
      %164 = vmatpush1.msra.mxu0 %v149
      %165 = vmatprep.subr.mxu0 0.0
      %166 = vmatpush1.msra.mxu0 0.0
      %167 = vmatprep.subr.mxu0 0.0
      %168 = vmatpush1.msra.mxu0 0.0
      %169 = vmatprep.subr.mxu0 0.0
      %170 = vmatpush1.msra.mxu0 0.0
      %171 = vmatprep.subr.mxu0 0.0
      %172 = vmatpush1.msra.mxu0 0.0
      %173 = vmatprep.subr.mxu0 0.0
      %174 = vmatpush1.msra.mxu0 0.0
      %175 = vmatprep.subr.mxu0 0.0
      %176 = vmatpush1.msra.mxu0 0.0
      %177 = vmatprep.subr.mxu0 0.0
      %178 = vmatpush1.msra.mxu0 0.0
      %179 = vmatprep.subr.mxu0 0.0
      %180 = vmatpush1.msra.mxu0 0.0
      %181 = vmatprep.subr.mxu0 0.0
      %182 = vmatpush1.msra.mxu0 0.0
      %183 = vmatprep.subr.mxu0 0.0
      %184 = vmatpush1.msra.mxu0 0.0
      %185 = vmatprep.subr.mxu0 0.0
      %186 = vmatpush1.msra.mxu0 0.0
      %187 = vmatprep.subr.mxu0 0.0
      %188 = vmatpush1.msra.mxu0 0.0
      %189 = vmatprep.subr.mxu0 0.0
      %190 = vmatpush1.msra.mxu0 0.0
      %191 = vmatprep.subr.mxu0 0.0
      %192 = vmatpush1.msra.mxu0 0.0
      %193 = vmatprep.subr.mxu0 0.0
      %194 = vmatpush1.msra.mxu0 0.0
      %195 = vmatprep.subr.mxu0 0.0
      %196 = vmatpush1.msra.mxu0 0.0
      %197 = vmatprep.subr.mxu0 0.0
      %198 = vmatpush1.msra.mxu0 0.0
      %199 = vmatprep.subr.mxu0 0.0
      %200 = vmatpush1.msra.mxu0 0.0
      %201 = vmatprep.subr.mxu0 0.0
      %202 = vmatpush1.msra.mxu0 0.0
      %203 = vmatprep.subr.mxu0 0.0
      %204 = vmatpush1.msra.mxu0 0.0
      %205 = vmatprep.subr.mxu0 0.0
      %206 = vmatpush1.msra.mxu0 0.0
      %207 = vmatprep.subr.mxu0 0.0
      %208 = vmatpush1.msra.mxu0 0.0
      %209 = vmatprep.subr.mxu0 0.0
      %210 = vmatpush1.msra.mxu0 0.0
      %211 = vmatprep.subr.mxu0 0.0
      %212 = vmatpush1.msra.mxu0 0.0
      %213 = vmatprep.subr.mxu0 0.0
      %214 = vmatpush1.msra.mxu0 0.0
      %215 = vmatprep.subr.mxu0 0.0
      %216 = vmatpush1.msra.mxu0 0.0
      %217 = vmatprep.subr.mxu0 0.0
      %218 = vmatpush1.msra.mxu0 0.0
      %219 = vmatprep.subr.mxu0 0.0
      %220 = vmatpush1.msra.mxu0 0.0
      %221 = vmatprep.mubr.f32.mxu0 0.0
      %222 = vmatmul.mubr.f32.gmra.mrb[0].mxu0 %v152
      %v223 = vpop.f32.mrb[0].mxu0
      %v224 = vadd.f32 0.0, %v223
      %v225 = vpop.f32.mrb[0].mxu0
      %226 = vmatprep.mubr.f32.mxu0 0.0
      %227 = vmatmul.mubr.f32.gmra.mrb[0].mxu0 %v155
      %v228 = vpop.f32.mrb[0].mxu0
      %v229 = vadd.f32 0.0, %v228
      %v230 = vpop.f32.mrb[0].mxu0
      %231 = vdwg.mxu0
      %vm232 = vcmask 523264
      %v233 = vsel %vm232, %v224, 0.0
      %v234 = vsel %vm232, %v229, 0.0
      %v235 = vadd.f32 %v233, %v234
      %v236 = vrot.slane %v235, 4
      %v237 = vadd.f32 %v235, %v236
      %v238 = vrot.slane %v237, 2
      %v239 = vadd.f32 %v237, %v238
      %v240 = vrot.slane %v239, 1
      %v241 = vadd.f32 %v239, %v240
      %v242 = vmul.f32 %v224, %v224
      %v243 = vmul.f32 %v229, %v229
      %v244 = vsel %vm232, %v242, 0.0
      %v245 = vsel %vm232, %v243, 0.0
      %v246 = vadd.f32 %v244, %v245
      %v247 = vrot.slane %v246, 4
      %v248 = vadd.f32 %v246, %v247
      %v249 = vrot.slane %v248, 2
      %v250 = vadd.f32 %v248, %v249
      %v251 = vrot.slane %v250, 1
      %v252 = vadd.f32 %v250, %v251
      %254 = vrot.lane.b32.xlu0 %v241, 112
      %v255 = vpop.permute.xlu0 %254
      %v257 = vadd.f32 %v241, %v255
      %259 = vrot.lane.b32.xlu0 %v252, 112
      %v260 = vpop.permute.xlu0 %259
      %v262 = vadd.f32 %v252, %v260
      %263 = vrot.lane.b32.xlu0 %v241, 96
      %v264 = vpop.permute.xlu0 %263
      %v266 = vadd.f32 %v257, %v264
      %267 = vrot.lane.b32.xlu0 %v252, 96
      %v268 = vpop.permute.xlu0 %267
      %v270 = vadd.f32 %v262, %v268
      %271 = vrot.lane.b32.xlu0 %v241, 80
      %v272 = vpop.permute.xlu0 %271
      %v274 = vadd.f32 %v266, %v272
      %275 = vrot.lane.b32.xlu0 %v252, 80
      %v276 = vpop.permute.xlu0 %275
      %v278 = vadd.f32 %v270, %v276
      %v279 = vrcp.pop 64.0
      %v280 = vmul.f32 %v274, %v279
      %v281 = vmul.f32 %v278, %v279
      %v282 = vmul.f32 %v280, %v280
      %v283 = vsub.f32 %v281, %v282
      %v284 = vadd.f32 %v283, 1e-05
      %v285 = vrsqrt.pop %v284
      %v286 = vsub.f32 0.0, %v280
      %v287 = vmul.f32 %v286, %v285
      %289 = vrot.lane.b32.xlu0 %v285, 16
      %v290 = vpop.permute.xlu0 %289
      %292 = vrot.lane.b32.xlu0 %v285, 32
      %v293 = vpop.permute.xlu0 %292
      %295 = vrot.lane.b32.xlu0 %v285, 48
      %v296 = vpop.permute.xlu0 %295
      %vm298 = vcmask 130048
      %v299 = vsel %vm298, %v285, %v290
      %v300 = vsel %vm150, %v299, %v293
      %vm301 = vcmask 392192
      %v302 = vsel %vm301, %v300, %v296
      %304 = vrot.lane.b32.xlu0 %v287, 16
      %v305 = vpop.permute.xlu0 %304
      %307 = vrot.lane.b32.xlu0 %v287, 32
      %v308 = vpop.permute.xlu0 %307
      %310 = vrot.lane.b32.xlu0 %v287, 48
      %v311 = vpop.permute.xlu0 %310
      %v313 = vsel %vm298, %v287, %v305
      %v314 = vsel %vm150, %v313, %v308
      %v315 = vsel %vm301, %v314, %v311
      %v316 = vlaneseq
      %v317 = vshrl.u32 %v316, 7
      %v318 = vsub.s32 0, %v317
      %v319 = vrot.slane %v302, %v318
      %v320 = vmul.f32 %v224, %v319
      %v321 = vmul.f32 %v229, %v319
      %v322 = vlaneseq
      %v323 = vshrl.u32 %v322, 7
      %v324 = vsub.s32 0, %v323
      %v325 = vrot.slane %v315, %v324
      %v326 = vadd.f32 %v320, %v325
      %v327 = vadd.f32 %v321, %v325
      %vm328 = vcmp.ge.f32.partialorder %v326, 0.0
      %vm329 = vcmp.ge.f32.partialorder %v327, 0.0
      %v330 = vmul.f32 %v326, 0.2
      %v331 = vmul.f32 %v327, 0.2
      %v332 = vsel %vm328, %v326, %v330
      %v333 = vsel %vm329, %v327, %v331
      %334 = vst.msk [vmem:[%s143] sm:$0xff] %vm232, %v332
      %335 = vst.msk [vmem:[%s143 + $0x8] sm:$0xff] %vm232, %v333
      %p336 = scmp.lt.s32.totalorder %s13, 1
      %s337 = scalar_select %p336, %s13, 1
      %s338 = smul.addr %s337, 2
      %s339 = smul.addr %s338, 8
      %s340 = scalar_lea.vmem %s2, %s339
      // Predicated region
      $region29: #{unet_forward.29} parent=27 // pred_check
        %p341 = pneg %p78
      $region30: #{unet_forward.29} parent=27 // pred_check_branch
        %343 = sbr.rel (%p341) target = $region32
      $region31: #{unet_forward.29} parent=27 // pred_region
        _
      $region32: #{unet_forward.29} parent=27 // pred_fallthru
        _
    $region28: #{unet_forward.29} parent=5 // pred_fallthru
      _
    %p344 = scmp.le.s32.totalorder 2, %s8
    // Predicated region
    $region33: #{unet_forward.29} parent=5 // pred_check
      %p345 = pneg %p344
    $region34: #{unet_forward.29} parent=5 // pred_check_branch
      %347 = sbr.rel (%p345) target = $region36
    $region35: #{unet_forward.29} parent=5 // pred_region
      %s348 = ssub.s32 %s8, 2
      // Predicated region
      $region37: #{unet_forward.29} parent=35 // pred_check
        %p349 = pneg %p84
      $region38: #{unet_forward.29} parent=35 // pred_check_branch
        %351 = sbr.rel (%p349) target = $region40
      $region39: #{unet_forward.29} parent=35 // pred_region
        %p352 = scmp.lt.s32.totalorder %s14, 1
        %s353 = scalar_select %p352, %s14, 1
        %s354 = smul.addr %s353, 2
        %s355 = smul.addr %s354, 8
        %s356 = scalar_lea.vmem %s2, %s355
      $region40: #{unet_forward.29} parent=35 // pred_fallthru
        _
    $region36: #{unet_forward.29} parent=5 // pred_fallthru
      _
  $region6: #{unet_forward.29} parent=0 // loop_footer
    %s12 = sadd.s32 1, %s8
  $region7: #{unet_forward.29} parent=0 // loop_footer_branch
    %7 = sbr.rel target = $region3
  $region8: #{unet_forward.29} parent=0 // loop_exit
    _

// kernel: unet_forward.30
$region0: #{unet_forward.30}
  #allocation0 [shape = 'u32[]', space=smem, size = 0x4, offset = 0x4, fixed_abs, tag = 'smem constant byte address 0x4 - core index']
  #allocation1 [shape = 'u32[144,128]{1,0:T(1,128)}', space=vmem, size = 0x12000, scoped, tag = 'internal scratch']
  %s0 = inlined_call_operand.vmem [shape: f32[2,64,288], index: 0, kind: input, shape index: {}]
  %s1 = inlined_call_operand.vmem [shape: f32[288,16], index: 1, kind: input, shape index: {}]
  %s2 = inlined_call_operand.vmem [shape: f32[2,64,16], index: 2, kind: output, shape index: {}]
  %s3 = sld [smem:[#allocation0]]
  $region41: #{unet_forward.30} parent=0
    _
  %s5 = ssub.s32 1, %s3
  %s6 = scalar_select 0, %s5, %s3
  loop: start=0, step=1, limit=4
  $region2: #{unet_forward.30} parent=0 // loop_pre_header
    _
  $region3: #{unet_forward.30} parent=0 // loop_header
    %s8 = sphi 0, %s12
    %p9 = scmp.ge.s32.totalorder %s8, 4
    %s18 = sphi 0, %s20
    %s21 = sphi 0, %s18
    %s22 = sphi 0, %s21
    %s38 = sphi 0, %s22
    %s42 = sphi 0, %s42
    %s44 = sphi 0, %s42
    %s45 = sphi 0, %s44
    %s59 = sphi 0, %s45
    %s65 = sphi 0, %s67
    %s68 = sphi 0, %s65
    %s69 = sphi 0, %s68
    %s85 = sphi 0, %s69
  $region4: #{unet_forward.30} parent=0 // loop_header_branch
    %11 = sbr.rel (%p9) target = $region8
  $region5: #{unet_forward.30} parent=0 // loop_body
    %s13 = ssub.s32 %s8, 1
    %s14 = ssub.s32 %s8, 2
    %s15 = sadd.s32 %s8, 1
    %s16 = ssub.s32 %s8, %s15
    %p17 = scmp.eq.s32.totalorder %s16, 0
    %s19 = sadd.s32 %s18, 1
    %s20 = scalar_select %p17, %s18, %s19
    %p23 = pneg %p17
    %p24 = scmp.eq.s32.totalorder %s8, 1
    %p25 = por %p23, %p24
    %p26 = scmp.ne.s32.totalorder %s18, %s21
    %p27 = scmp.eq.s32.totalorder %s8, 0
    %p28 = por %p26, %p27
    %p29 = scmp.ne.s32.totalorder %s18, %s21
    %p30 = scmp.eq.s32.totalorder %s13, 1
    %p31 = por %p29, %p30
    %p32 = scmp.ne.s32.totalorder %s21, %s22
    %p33 = scmp.eq.s32.totalorder %s13, 0
    %p34 = por %p32, %p33
    %p35 = scmp.ne.s32.totalorder %s21, %s22
    %p36 = scmp.eq.s32.totalorder %s14, 1
    %p37 = por %p35, %p36
    %p39 = scmp.ne.s32.totalorder %s22, %s38
    %p40 = scmp.eq.s32.totalorder %s14, 0
    %p41 = por %p39, %p40
    %s43 = sadd.s32 %s42, 1
    %p46 = scmp.eq.s32.totalorder %s8, 1
    %p47 = scmp.ne.s32.totalorder %s42, %s44
    %p48 = scmp.eq.s32.totalorder %s8, 0
    %p49 = por %p47, %p48
    %p50 = scmp.ne.s32.totalorder %s42, %s44
    %p51 = scmp.eq.s32.totalorder %s13, 1
    %p52 = por %p50, %p51
    %p53 = scmp.ne.s32.totalorder %s44, %s45
    %p54 = scmp.eq.s32.totalorder %s13, 0
    %p55 = por %p53, %p54
    %p56 = scmp.ne.s32.totalorder %s44, %s45
    %p57 = scmp.eq.s32.totalorder %s14, 1
    %p58 = por %p56, %p57
    %p60 = scmp.ne.s32.totalorder %s45, %s59
    %p61 = scmp.eq.s32.totalorder %s14, 0
    %p62 = por %p60, %p61
    %s63 = ssub.s32 %s8, %s15
    %p64 = scmp.eq.s32.totalorder %s63, 0
    %s66 = sadd.s32 %s65, 1
    %s67 = scalar_select %p64, %s65, %s66
    %p70 = pneg %p64
    %p71 = scmp.eq.s32.totalorder %s8, 1
    %p72 = por %p70, %p71
    %p73 = scmp.ne.s32.totalorder %s65, %s68
    %p74 = scmp.eq.s32.totalorder %s8, 0
    %p75 = por %p73, %p74
    %p76 = scmp.ne.s32.totalorder %s65, %s68
    %p77 = scmp.eq.s32.totalorder %s13, 1
    %p78 = por %p76, %p77
    %p79 = scmp.ne.s32.totalorder %s68, %s69
    %p80 = scmp.eq.s32.totalorder %s13, 0
    %p81 = por %p79, %p80
    %p82 = scmp.ne.s32.totalorder %s68, %s69
    %p83 = scmp.eq.s32.totalorder %s14, 1
    %p84 = por %p82, %p83
    %p86 = scmp.ne.s32.totalorder %s69, %s85
    %p87 = scmp.eq.s32.totalorder %s14, 0
    %p88 = por %p86, %p87
    %p89 = scmp.le.s32.totalorder 1, %s8
    %p90 = scmp.lt.s32.totalorder %s8, 3
    %p91 = pnand %p89, %p90
    %p92 = pneg %p91
    // Predicated region
    $region9: #{unet_forward.30} parent=5 // pred_check
      _
    $region10: #{unet_forward.30} parent=5 // pred_check_branch
      %94 = sbr.rel (%p91) target = $region12
    $region11: #{unet_forward.30} parent=5 // pred_region
      %s95 = ssub.s32 %s8, 1
      // Predicated region
      $region13: #{unet_forward.30} parent=11 // pred_check
        %p96 = pneg %p55
      $region14: #{unet_forward.30} parent=11 // pred_check_branch
        %98 = sbr.rel (%p96) target = $region16
      $region15: #{unet_forward.30} parent=11 // pred_region
        _
      $region16: #{unet_forward.30} parent=11 // pred_fallthru
        _
    $region12: #{unet_forward.30} parent=5 // pred_fallthru
      _
    %p99 = scmp.lt.s32.totalorder %s8, 2
    // Predicated region
    $region17: #{unet_forward.30} parent=5 // pred_check
      %p100 = pneg %p99
    $region18: #{unet_forward.30} parent=5 // pred_check_branch
      %102 = sbr.rel (%p100) target = $region20
    $region19: #{unet_forward.30} parent=5 // pred_region
      // Predicated region
      $region21: #{unet_forward.30} parent=19 // pred_check
        %p103 = pneg %p28
      $region22: #{unet_forward.30} parent=19 // pred_check_branch
        %105 = sbr.rel (%p103) target = $region24
      $region23: #{unet_forward.30} parent=19 // pred_region
        %p106 = scmp.lt.s32.totalorder %s8, 1
        %s107 = scalar_select %p106, %s8, 1
        %s108 = smul.addr %s107, 24
        %s109 = smul.addr %s108, 8
        %s110 = scalar_lea.vmem %s0, %s109
      $region24: #{unet_forward.30} parent=19 // pred_fallthru
        _
    $region20: #{unet_forward.30} parent=5 // pred_fallthru
      _
    %p111 = scmp.le.s32.totalorder 1, %s8
    %p112 = scmp.lt.s32.totalorder %s8, 3
    %p113 = pnand %p111, %p112
    %p114 = pneg %p113
    // Predicated region
    $region25: #{unet_forward.30} parent=5 // pred_check
      _
    $region26: #{unet_forward.30} parent=5 // pred_check_branch
      %116 = sbr.rel (%p113) target = $region28
    $region27: #{unet_forward.30} parent=5 // pred_region
      %s117 = ssub.s32 %s8, 1
      %p118 = scmp.lt.s32.totalorder %s13, 1
      %s119 = scalar_select %p118, %s13, 1
      %s120 = smul.addr %s119, 24
      %s121 = smul.addr %s120, 8
      %s122 = scalar_lea.vmem %s0, %s121
      %p123 = pneg %p34
      %p124 = pneg %p31
      %p125 = pneg %p55
      %p126 = pneg %p52
      %p127 = pneg %p81
      %p128 = pneg %p78
      %p129 = scmp.lt.s32.totalorder %s13, 1
      %s130 = scalar_select %p129, %s13, 1
      %s131 = smul.addr %s130, 8
      %s132 = smul.addr %s131, 8
      %s133 = scalar_lea.vmem %s2, %s132
      %p134 = scmp.lt.s32.totalorder %s13, 1
      %s135 = scalar_select %p134, %s13, 1
      %s136 = smul.addr %s135, 24
      %s137 = smul.addr %s136, 8
      %s138 = scalar_lea.vmem %s0, %s137
      %p139 = scmp.lt.s32.totalorder %s13, 1
      %s140 = scalar_select %p139, %s13, 1
      %s141 = smul.addr %s140, 8
      %s142 = smul.addr %s141, 8
      %s143 = scalar_lea.vmem %s2, %s142
      %v144 = vld [vmem:[%s138] sm:$0xff]
      %v145 = vld [vmem:[%s138 + $0x8] sm:$0xff]
      %v146 = vld [vmem:[%s138 + $0x10] sm:$0xff]
      %v147 = vld [vmem:[%s138 + $0x18] sm:$0xff]
      %v148 = vld [vmem:[%s138 + $0x20] sm:$0xff]
      %v149 = vld [vmem:[%s138 + $0x28] sm:$0xff]
      %v150 = vld [vmem:[%s138 + $0x30] sm:$0xff]
      %v151 = vld [vmem:[%s138 + $0x38] sm:$0xff]
      %v152 = vld [vmem:[%s138 + $0x40] sm:$0xff]
      %v153 = vld [vmem:[%s138 + $0x48] sm:$0xff]
      %v154 = vld [vmem:[%s138 + $0x50] sm:$0xff]
      %v155 = vld [vmem:[%s138 + $0x58] sm:$0xff]
      %v156 = vld [vmem:[%s138 + $0x60] sm:$0xff]
      %v157 = vld [vmem:[%s138 + $0x68] sm:$0xff]
      %v158 = vld [vmem:[%s138 + $0x70] sm:$0xff]
      %v159 = vld [vmem:[%s138 + $0x78] sm:$0xff]
      %v160 = vld [vmem:[%s138 + $0x80] sm:$0xff]
      %v161 = vld [vmem:[%s138 + $0x88] sm:$0xff]
      %v162 = vld [vmem:[%s138 + $0x90] sm:$0xff]
      %v163 = vld [vmem:[%s138 + $0x98] sm:$0xff]
      %v164 = vld [vmem:[%s138 + $0xa0] sm:$0xff]
      %v165 = vld [vmem:[%s138 + $0xa8] sm:$0xff]
      %v166 = vld [vmem:[%s138 + $0xb0] sm:$0xff]
      %v167 = vld [vmem:[%s138 + $0xb8] sm:$0xff]
      %v168 = vld [vmem:[%s1] sm:$0xff]
      %v169 = vld [vmem:[%s1 + $0x8] sm:$0xff]
      %v170 = vld [vmem:[%s1 + $0x10] sm:$0xff]
      %v171 = vld [vmem:[%s1 + $0x18] sm:$0xff]
      %v172 = vld [vmem:[%s1 + $0x20] sm:$0xff]
      %v173 = vld [vmem:[%s1 + $0x28] sm:$0xff]
      %v174 = vld [vmem:[%s1 + $0x30] sm:$0xff]
      %v175 = vld [vmem:[%s1 + $0x38] sm:$0xff]
      %v176 = vld [vmem:[%s1 + $0x40] sm:$0xff]
      %v177 = vld [vmem:[%s1 + $0x48] sm:$0xff]
      %v178 = vld [vmem:[%s1 + $0x50] sm:$0xff]
      %v179 = vld [vmem:[%s1 + $0x58] sm:$0xff]
      %v180 = vld [vmem:[%s1 + $0x60] sm:$0xff]
      %v181 = vld [vmem:[%s1 + $0x68] sm:$0xff]
      %v182 = vld [vmem:[%s1 + $0x70] sm:$0xff]
      %v183 = vld [vmem:[%s1 + $0x78] sm:$0xff]
      %v184 = vld [vmem:[%s1 + $0x80] sm:$0xff]
      %v185 = vld [vmem:[%s1 + $0x88] sm:$0xff]
      %v186 = vld [vmem:[%s1 + $0x90] sm:$0xff]
      %v187 = vld [vmem:[%s1 + $0x98] sm:$0xff]
      %v188 = vld [vmem:[%s1 + $0xa0] sm:$0xff]
      %v189 = vld [vmem:[%s1 + $0xa8] sm:$0xff]
      %v190 = vld [vmem:[%s1 + $0xb0] sm:$0xff]
      %v191 = vld [vmem:[%s1 + $0xb8] sm:$0xff]
      %v192 = vld [vmem:[%s1 + $0xc0] sm:$0xff]
      %v193 = vld [vmem:[%s1 + $0xc8] sm:$0xff]
      %v194 = vld [vmem:[%s1 + $0xd0] sm:$0xff]
      %v195 = vld [vmem:[%s1 + $0xd8] sm:$0xff]
      %v196 = vld [vmem:[%s1 + $0xe0] sm:$0xff]
      %v197 = vld [vmem:[%s1 + $0xe8] sm:$0xff]
      %v198 = vld [vmem:[%s1 + $0xf0] sm:$0xff]
      %v199 = vld [vmem:[%s1 + $0xf8] sm:$0xff]
      %v200 = vld [vmem:[%s1 + $0x100] sm:$0xff]
      %v201 = vld [vmem:[%s1 + $0x108] sm:$0xff]
      %v202 = vld [vmem:[%s1 + $0x110] sm:$0xff]
      %v203 = vld [vmem:[%s1 + $0x118] sm:$0xff]
      %vm204 = vcmask 261120
      %v206 = vsel %vm204, %v146, 0
      %v209 = vsel %vm204, %v149, 0
      %v212 = vsel %vm204, %v152, 0
      %v215 = vsel %vm204, %v155, 0
      %v218 = vsel %vm204, %v158, 0
      %v221 = vsel %vm204, %v161, 0
      %v224 = vsel %vm204, %v164, 0
      %v227 = vsel %vm204, %v167, 0
      %229 = vmatprep.subr.mxu0 0.0
      %230 = vmatpush1.msra.mxu0 %v168
      %231 = vmatprep.subr.mxu0 0.0
      %232 = vmatpush1.msra.mxu0 %v169
      %233 = vmatprep.subr.mxu0 0.0
      %234 = vmatpush1.msra.mxu0 %v170
      %235 = vmatprep.subr.mxu0 0.0
      %236 = vmatpush1.msra.mxu0 %v171
      %237 = vmatprep.subr.mxu0 0.0
      %238 = vmatpush1.msra.mxu0 %v172
      %239 = vmatprep.subr.mxu0 0.0
      %240 = vmatpush1.msra.mxu0 %v173
      %241 = vmatprep.subr.mxu0 0.0
      %242 = vmatpush1.msra.mxu0 %v174
      %243 = vmatprep.subr.mxu0 0.0
      %244 = vmatpush1.msra.mxu0 %v175
      %245 = vmatprep.subr.mxu0 0.0
      %246 = vmatpush1.msra.mxu0 %v176
      %247 = vmatprep.subr.mxu0 0.0
      %248 = vmatpush1.msra.mxu0 %v177
      %249 = vmatprep.subr.mxu0 0.0
      %250 = vmatpush1.msra.mxu0 %v178
      %251 = vmatprep.subr.mxu0 0.0
      %252 = vmatpush1.msra.mxu0 %v179
      %253 = vmatprep.subr.mxu0 0.0
      %254 = vmatpush1.msra.mxu0 %v180
      %255 = vmatprep.subr.mxu0 0.0
      %256 = vmatpush1.msra.mxu0 %v181
      %257 = vmatprep.subr.mxu0 0.0
      %258 = vmatpush1.msra.mxu0 %v182
      %259 = vmatprep.subr.mxu0 0.0
      %260 = vmatpush1.msra.mxu0 %v183
      %261 = vmatprep.subr.mxu0 0.0
      %262 = vmatpush1.msra.mxu0 %v184
      %263 = vmatprep.subr.mxu0 0.0
      %264 = vmatpush1.msra.mxu0 %v185
      %265 = vmatprep.subr.mxu0 0.0
      %266 = vmatpush1.msra.mxu0 %v186
      %267 = vmatprep.subr.mxu0 0.0
      %268 = vmatpush1.msra.mxu0 %v187
      %269 = vmatprep.subr.mxu0 0.0
      %270 = vmatpush1.msra.mxu0 %v188
      %271 = vmatprep.subr.mxu0 0.0
      %272 = vmatpush1.msra.mxu0 %v189
      %273 = vmatprep.subr.mxu0 0.0
      %274 = vmatpush1.msra.mxu0 %v190
      %275 = vmatprep.subr.mxu0 0.0
      %276 = vmatpush1.msra.mxu0 %v191
      %277 = vmatprep.subr.mxu0 0.0
      %278 = vmatpush1.msra.mxu0 %v192
      %279 = vmatprep.subr.mxu0 0.0
      %280 = vmatpush1.msra.mxu0 %v193
      %281 = vmatprep.subr.mxu0 0.0
      %282 = vmatpush1.msra.mxu0 %v194
      %283 = vmatprep.subr.mxu0 0.0
      %284 = vmatpush1.msra.mxu0 %v195
      %285 = vmatprep.subr.mxu0 0.0
      %286 = vmatpush1.msra.mxu0 %v196
      %287 = vmatprep.subr.mxu0 0.0
      %288 = vmatpush1.msra.mxu0 %v197
      %289 = vmatprep.subr.mxu0 0.0
      %290 = vmatpush1.msra.mxu0 %v198
      %291 = vmatprep.subr.mxu0 0.0
      %292 = vmatpush1.msra.mxu0 %v199
      %293 = vmatprep.mubr.f32.mxu0 %v145
      %294 = vmatmul.mubr.f32.gmra.mrb[0].mxu0 %v144
      %v295 = vpop.f32.mrb[0].mxu0
      %v296 = vadd.f32 0.0, %v295
      %v297 = vpop.f32.mrb[0].mxu0
      %298 = vmatprep.mubr.f32.mxu0 %v148
      %299 = vmatmul.mubr.f32.gmra.mrb[0].mxu0 %v147
      %v300 = vpop.f32.mrb[0].mxu0
      %v301 = vadd.f32 0.0, %v300
      %v302 = vpop.f32.mrb[0].mxu0
      %303 = vmatprep.mubr.f32.mxu0 %v151
      %304 = vmatmul.mubr.f32.gmra.mrb[0].mxu0 %v150
      %v305 = vpop.f32.mrb[0].mxu0
      %v306 = vadd.f32 0.0, %v305
      %v307 = vpop.f32.mrb[0].mxu0
      %308 = vmatprep.mubr.f32.mxu0 %v154
      %309 = vmatmul.mubr.f32.gmra.mrb[0].mxu0 %v153
      %v310 = vpop.f32.mrb[0].mxu0
      %v311 = vadd.f32 0.0, %v310
      %v312 = vpop.f32.mrb[0].mxu0
      %313 = vmatprep.mubr.f32.mxu0 %v157
      %314 = vmatmul.mubr.f32.gmra.mrb[0].mxu0 %v156
      %v315 = vpop.f32.mrb[0].mxu0
      %v316 = vadd.f32 0.0, %v315
      %v317 = vpop.f32.mrb[0].mxu0
      %318 = vmatprep.mubr.f32.mxu0 %v160
      %319 = vmatmul.mubr.f32.gmra.mrb[0].mxu0 %v159
      %v320 = vpop.f32.mrb[0].mxu0
      %v321 = vadd.f32 0.0, %v320
      %v322 = vpop.f32.mrb[0].mxu0
      %323 = vmatprep.mubr.f32.mxu0 %v163
      %324 = vmatmul.mubr.f32.gmra.mrb[0].mxu0 %v162
      %v325 = vpop.f32.mrb[0].mxu0
      %v326 = vadd.f32 0.0, %v325
      %v327 = vpop.f32.mrb[0].mxu0
      %328 = vmatprep.mubr.f32.mxu0 %v166
      %329 = vmatmul.mubr.f32.gmra.mrb[0].mxu0 %v165
      %v330 = vpop.f32.mrb[0].mxu0
      %v331 = vadd.f32 0.0, %v330
      %v332 = vpop.f32.mrb[0].mxu0
      %333 = vdwg.mxu0
      %334 = vmatprep.subr.mxu0 0.0
      %335 = vmatpush1.msra.mxu0 %v200
      %336 = vmatprep.subr.mxu0 0.0
      %337 = vmatpush1.msra.mxu0 %v201
      %338 = vmatprep.subr.mxu0 0.0
      %339 = vmatpush1.msra.mxu0 %v202
      %340 = vmatprep.subr.mxu0 0.0
      %341 = vmatpush1.msra.mxu0 %v203
      %342 = vmatprep.subr.mxu0 0.0
      %343 = vmatpush1.msra.mxu0 0.0
      %344 = vmatprep.subr.mxu0 0.0
      %345 = vmatpush1.msra.mxu0 0.0
      %346 = vmatprep.subr.mxu0 0.0
      %347 = vmatpush1.msra.mxu0 0.0
      %348 = vmatprep.subr.mxu0 0.0
      %349 = vmatpush1.msra.mxu0 0.0
      %350 = vmatprep.subr.mxu0 0.0
      %351 = vmatpush1.msra.mxu0 0.0
      %352 = vmatprep.subr.mxu0 0.0
      %353 = vmatpush1.msra.mxu0 0.0
      %354 = vmatprep.subr.mxu0 0.0
      %355 = vmatpush1.msra.mxu0 0.0
      %356 = vmatprep.subr.mxu0 0.0
      %357 = vmatpush1.msra.mxu0 0.0
      %358 = vmatprep.subr.mxu0 0.0
      %359 = vmatpush1.msra.mxu0 0.0
      %360 = vmatprep.subr.mxu0 0.0
      %361 = vmatpush1.msra.mxu0 0.0
      %362 = vmatprep.subr.mxu0 0.0
      %363 = vmatpush1.msra.mxu0 0.0
      %364 = vmatprep.subr.mxu0 0.0
      %365 = vmatpush1.msra.mxu0 0.0
      %366 = vmatprep.subr.mxu0 0.0
      %367 = vmatpush1.msra.mxu0 0.0
      %368 = vmatprep.subr.mxu0 0.0
      %369 = vmatpush1.msra.mxu0 0.0
      %370 = vmatprep.subr.mxu0 0.0
      %371 = vmatpush1.msra.mxu0 0.0
      %372 = vmatprep.subr.mxu0 0.0
      %373 = vmatpush1.msra.mxu0 0.0
      %374 = vmatprep.subr.mxu0 0.0
      %375 = vmatpush1.msra.mxu0 0.0
      %376 = vmatprep.subr.mxu0 0.0
      %377 = vmatpush1.msra.mxu0 0.0
      %378 = vmatprep.subr.mxu0 0.0
      %379 = vmatpush1.msra.mxu0 0.0
      %380 = vmatprep.subr.mxu0 0.0
      %381 = vmatpush1.msra.mxu0 0.0
      %382 = vmatprep.subr.mxu0 0.0
      %383 = vmatpush1.msra.mxu0 0.0
      %384 = vmatprep.subr.mxu0 0.0
      %385 = vmatpush1.msra.mxu0 0.0
      %386 = vmatprep.subr.mxu0 0.0
      %387 = vmatpush1.msra.mxu0 0.0
      %388 = vmatprep.subr.mxu0 0.0
      %389 = vmatpush1.msra.mxu0 0.0
      %390 = vmatprep.subr.mxu0 0.0
      %391 = vmatpush1.msra.mxu0 0.0
      %392 = vmatprep.subr.mxu0 0.0
      %393 = vmatpush1.msra.mxu0 0.0
      %394 = vmatprep.subr.mxu0 0.0
      %395 = vmatpush1.msra.mxu0 0.0
      %396 = vmatprep.subr.mxu0 0.0
      %397 = vmatpush1.msra.mxu0 0.0
      %398 = vmatprep.mubr.f32.mxu0 0.0
      %399 = vmatmul.mubr.f32.gmra.mrb[0].mxu0 %v206
      %v400 = vpop.f32.mrb[0].mxu0
      %v401 = vadd.f32 %v296, %v400
      %v402 = vpop.f32.mrb[0].mxu0
      %403 = vmatprep.mubr.f32.mxu0 0.0
      %404 = vmatmul.mubr.f32.gmra.mrb[0].mxu0 %v209
      %v405 = vpop.f32.mrb[0].mxu0
      %v406 = vadd.f32 %v301, %v405
      %v407 = vpop.f32.mrb[0].mxu0
      %408 = vmatprep.mubr.f32.mxu0 0.0
      %409 = vmatmul.mubr.f32.gmra.mrb[0].mxu0 %v212
      %v410 = vpop.f32.mrb[0].mxu0
      %v411 = vadd.f32 %v306, %v410
      %v412 = vpop.f32.mrb[0].mxu0
      %413 = vmatprep.mubr.f32.mxu0 0.0
      %414 = vmatmul.mubr.f32.gmra.mrb[0].mxu0 %v215
      %v415 = vpop.f32.mrb[0].mxu0
      %v416 = vadd.f32 %v311, %v415
      %v417 = vpop.f32.mrb[0].mxu0
      %418 = vmatprep.mubr.f32.mxu0 0.0
      %419 = vmatmul.mubr.f32.gmra.mrb[0].mxu0 %v218
      %v420 = vpop.f32.mrb[0].mxu0
      %v421 = vadd.f32 %v316, %v420
      %v422 = vpop.f32.mrb[0].mxu0
      %423 = vmatprep.mubr.f32.mxu0 0.0
      %424 = vmatmul.mubr.f32.gmra.mrb[0].mxu0 %v221
      %v425 = vpop.f32.mrb[0].mxu0
      %v426 = vadd.f32 %v321, %v425
      %v427 = vpop.f32.mrb[0].mxu0
      %428 = vmatprep.mubr.f32.mxu0 0.0
      %429 = vmatmul.mubr.f32.gmra.mrb[0].mxu0 %v224
      %v430 = vpop.f32.mrb[0].mxu0
      %v431 = vadd.f32 %v326, %v430
      %v432 = vpop.f32.mrb[0].mxu0
      %433 = vmatprep.mubr.f32.mxu0 0.0
      %434 = vmatmul.mubr.f32.gmra.mrb[0].mxu0 %v227
      %v435 = vpop.f32.mrb[0].mxu0
      %v436 = vadd.f32 %v331, %v435
      %v437 = vpop.f32.mrb[0].mxu0
      %438 = vdwg.mxu0
      %vm439 = vcmask 130048
      %v440 = vsel %vm439, %v401, 0.0
      %v441 = vsel %vm439, %v406, 0.0
      %v442 = vadd.f32 %v440, %v441
      %v443 = vsel %vm439, %v411, 0.0
      %v444 = vadd.f32 %v442, %v443
      %v445 = vsel %vm439, %v416, 0.0
      %v446 = vadd.f32 %v444, %v445
      %v447 = vsel %vm439, %v421, 0.0
      %v448 = vadd.f32 %v446, %v447
      %v449 = vsel %vm439, %v426, 0.0
      %v450 = vadd.f32 %v448, %v449
      %v451 = vsel %vm439, %v431, 0.0
      %v452 = vadd.f32 %v450, %v451
      %v453 = vsel %vm439, %v436, 0.0
      %v454 = vadd.f32 %v452, %v453
      %v455 = vrot.slane %v454, 4
      %v456 = vadd.f32 %v454, %v455
      %v457 = vrot.slane %v456, 2
      %v458 = vadd.f32 %v456, %v457
      %v459 = vrot.slane %v458, 1
      %v460 = vadd.f32 %v458, %v459
      %v461 = vmul.f32 %v401, %v401
      %v462 = vmul.f32 %v406, %v406
      %v463 = vmul.f32 %v411, %v411
      %v464 = vmul.f32 %v416, %v416
      %v465 = vmul.f32 %v421, %v421
      %v466 = vmul.f32 %v426, %v426
      %v467 = vmul.f32 %v431, %v431
      %v468 = vmul.f32 %v436, %v436
      %v469 = vsel %vm439, %v461, 0.0
      %v470 = vsel %vm439, %v462, 0.0
      %v471 = vadd.f32 %v469, %v470
      %v472 = vsel %vm439, %v463, 0.0
      %v473 = vadd.f32 %v471, %v472
      %v474 = vsel %vm439, %v464, 0.0
      %v475 = vadd.f32 %v473, %v474
      %v476 = vsel %vm439, %v465, 0.0
      %v477 = vadd.f32 %v475, %v476
      %v478 = vsel %vm439, %v466, 0.0
      %v479 = vadd.f32 %v477, %v478
      %v480 = vsel %vm439, %v467, 0.0
      %v481 = vadd.f32 %v479, %v480
      %v482 = vsel %vm439, %v468, 0.0
      %v483 = vadd.f32 %v481, %v482
      %v484 = vrot.slane %v483, 4
      %v485 = vadd.f32 %v483, %v484
      %v486 = vrot.slane %v485, 2
      %v487 = vadd.f32 %v485, %v486
      %v488 = vrot.slane %v487, 1
      %v489 = vadd.f32 %v487, %v488
      %v490 = vrcp.pop 64.0
      %v491 = vmul.f32 %v460, %v490
      %v492 = vmul.f32 %v489, %v490
      %v493 = vmul.f32 %v491, %v491
      %v494 = vsub.f32 %v492, %v493
      %v495 = vadd.f32 %v494, 1e-05
      %v496 = vrsqrt.pop %v495
      %v497 = vsub.f32 0.0, %v491
      %v498 = vmul.f32 %v497, %v496
      %v499 = vmul.f32 %v401, %v496
      %v500 = vmul.f32 %v406, %v496
      %v501 = vmul.f32 %v411, %v496
      %v502 = vmul.f32 %v416, %v496
      %v503 = vmul.f32 %v421, %v496
      %v504 = vmul.f32 %v426, %v496
      %v505 = vmul.f32 %v431, %v496
      %v506 = vmul.f32 %v436, %v496
      %v507 = vadd.f32 %v499, %v498
      %v508 = vadd.f32 %v500, %v498
      %v509 = vadd.f32 %v501, %v498
      %v510 = vadd.f32 %v502, %v498
      %v511 = vadd.f32 %v503, %v498
      %v512 = vadd.f32 %v504, %v498
      %v513 = vadd.f32 %v505, %v498
      %v514 = vadd.f32 %v506, %v498
      %vm515 = vcmp.ge.f32.partialorder %v507, 0.0
      %vm516 = vcmp.ge.f32.partialorder %v508, 0.0
      %vm517 = vcmp.ge.f32.partialorder %v509, 0.0
      %vm518 = vcmp.ge.f32.partialorder %v510, 0.0
      %vm519 = vcmp.ge.f32.partialorder %v511, 0.0
      %vm520 = vcmp.ge.f32.partialorder %v512, 0.0
      %vm521 = vcmp.ge.f32.partialorder %v513, 0.0
      %vm522 = vcmp.ge.f32.partialorder %v514, 0.0
      %v523 = vmul.f32 %v507, 0.2
      %v524 = vmul.f32 %v508, 0.2
      %v525 = vmul.f32 %v509, 0.2
      %v526 = vmul.f32 %v510, 0.2
      %v527 = vmul.f32 %v511, 0.2
      %v528 = vmul.f32 %v512, 0.2
      %v529 = vmul.f32 %v513, 0.2
      %v530 = vmul.f32 %v514, 0.2
      %v531 = vsel %vm515, %v507, %v523
      %v532 = vsel %vm516, %v508, %v524
      %v533 = vsel %vm517, %v509, %v525
      %v534 = vsel %vm518, %v510, %v526
      %v535 = vsel %vm519, %v511, %v527
      %v536 = vsel %vm520, %v512, %v528
      %v537 = vsel %vm521, %v513, %v529
      %v538 = vsel %vm522, %v514, %v530
      %539 = vst.msk [vmem:[%s143] sm:$0xff] %vm439, %v531
      %540 = vst.msk [vmem:[%s143 + $0x8] sm:$0xff] %vm439, %v532
      %541 = vst.msk [vmem:[%s143 + $0x10] sm:$0xff] %vm439, %v533
      %542 = vst.msk [vmem:[%s143 + $0x18] sm:$0xff] %vm439, %v534
      %543 = vst.msk [vmem:[%s143 + $0x20] sm:$0xff] %vm439, %v535
      %544 = vst.msk [vmem:[%s143 + $0x28] sm:$0xff] %vm439, %v536
      %545 = vst.msk [vmem:[%s143 + $0x30] sm:$0xff] %vm439, %v537
      %546 = vst.msk [vmem:[%s143 + $0x38] sm:$0xff] %vm439, %v538
      %p547 = scmp.lt.s32.totalorder %s13, 1
      %s548 = scalar_select %p547, %s13, 1
      %s549 = smul.addr %s548, 8
      %s550 = smul.addr %s549, 8
      %s551 = scalar_lea.vmem %s2, %s550
      // Predicated region
      $region29: #{unet_forward.30} parent=27 // pred_check
        %p552 = pneg %p78
      $region30: #{unet_forward.30} parent=27 // pred_check_branch
        %554 = sbr.rel (%p552) target = $region32
      $region31: #{unet_forward.30} parent=27 // pred_region
        _
      $region32: #{unet_forward.30} parent=27 // pred_fallthru
        _
    $region28: #{unet_forward.30} parent=5 // pred_fallthru
      _
    %p555 = scmp.le.s32.totalorder 2, %s8
    // Predicated region
    $region33: #{unet_forward.30} parent=5 // pred_check
      %p556 = pneg %p555
    $region34: #{unet_forward.30} parent=5 // pred_check_branch
      %558 = sbr.rel (%p556) target = $region36
    $region35: #{unet_forward.30} parent=5 // pred_region
      %s559 = ssub.s32 %s8, 2
      // Predicated region
      $region37: #{unet_forward.30} parent=35 // pred_check
        %p560 = pneg %p84
      $region38: #{unet_forward.30} parent=35 // pred_check_branch
        %562 = sbr.rel (%p560) target = $region40
      $region39: #{unet_forward.30} parent=35 // pred_region
        %p563 = scmp.lt.s32.totalorder %s14, 1
        %s564 = scalar_select %p563, %s14, 1
        %s565 = smul.addr %s564, 8
        %s566 = smul.addr %s565, 8
        %s567 = scalar_lea.vmem %s2, %s566
      $region40: #{unet_forward.30} parent=35 // pred_fallthru
        _
    $region36: #{unet_forward.30} parent=5 // pred_fallthru
      _
  $region6: #{unet_forward.30} parent=0 // loop_footer
    %s12 = sadd.s32 1, %s8
  $region7: #{unet_forward.30} parent=0 // loop_footer_branch
    %7 = sbr.rel target = $region3
  $region8: #{unet_forward.30} parent=0 // loop_exit
    _

// kernel: unet_forward.32
$region0: #{unet_forward.32}
  #allocation0 [shape = 'u32[]', space=smem, size = 0x4, offset = 0x4, fixed_abs, tag = 'smem constant byte address 0x4 - core index']
  #allocation1 [shape = 'u32[144,128]{1,0:T(1,128)}', space=vmem, size = 0x12000, scoped, tag = 'internal scratch']
  %s0 = inlined_call_operand.vmem [shape: f32[2,64,16], index: 0, kind: input, shape index: {}]
  %s1 = inlined_call_operand.vmem [shape: f32[16,32], index: 1, kind: input, shape index: {}]
  %s2 = inlined_call_operand.vmem [shape: f32[2,64,32], index: 2, kind: output, shape index: {}]
  %s3 = sld [smem:[#allocation0]]
  $region41: #{unet_forward.32} parent=0
    _
  %s5 = ssub.s32 1, %s3
  %s6 = scalar_select 0, %s5, %s3
  loop: start=0, step=1, limit=4
  $region2: #{unet_forward.32} parent=0 // loop_pre_header
    _
  $region3: #{unet_forward.32} parent=0 // loop_header
    %s8 = sphi 0, %s12
    %p9 = scmp.ge.s32.totalorder %s8, 4
    %s18 = sphi 0, %s20
    %s21 = sphi 0, %s18
    %s22 = sphi 0, %s21
    %s38 = sphi 0, %s22
    %s42 = sphi 0, %s42
    %s44 = sphi 0, %s42
    %s45 = sphi 0, %s44
    %s59 = sphi 0, %s45
    %s65 = sphi 0, %s67
    %s68 = sphi 0, %s65
    %s69 = sphi 0, %s68
    %s85 = sphi 0, %s69
  $region4: #{unet_forward.32} parent=0 // loop_header_branch
    %11 = sbr.rel (%p9) target = $region8
  $region5: #{unet_forward.32} parent=0 // loop_body
    %s13 = ssub.s32 %s8, 1
    %s14 = ssub.s32 %s8, 2
    %s15 = sadd.s32 %s8, 1
    %s16 = ssub.s32 %s8, %s15
    %p17 = scmp.eq.s32.totalorder %s16, 0
    %s19 = sadd.s32 %s18, 1
    %s20 = scalar_select %p17, %s18, %s19
    %p23 = pneg %p17
    %p24 = scmp.eq.s32.totalorder %s8, 1
    %p25 = por %p23, %p24
    %p26 = scmp.ne.s32.totalorder %s18, %s21
    %p27 = scmp.eq.s32.totalorder %s8, 0
    %p28 = por %p26, %p27
    %p29 = scmp.ne.s32.totalorder %s18, %s21
    %p30 = scmp.eq.s32.totalorder %s13, 1
    %p31 = por %p29, %p30
    %p32 = scmp.ne.s32.totalorder %s21, %s22
    %p33 = scmp.eq.s32.totalorder %s13, 0
    %p34 = por %p32, %p33
    %p35 = scmp.ne.s32.totalorder %s21, %s22
    %p36 = scmp.eq.s32.totalorder %s14, 1
    %p37 = por %p35, %p36
    %p39 = scmp.ne.s32.totalorder %s22, %s38
    %p40 = scmp.eq.s32.totalorder %s14, 0
    %p41 = por %p39, %p40
    %s43 = sadd.s32 %s42, 1
    %p46 = scmp.eq.s32.totalorder %s8, 1
    %p47 = scmp.ne.s32.totalorder %s42, %s44
    %p48 = scmp.eq.s32.totalorder %s8, 0
    %p49 = por %p47, %p48
    %p50 = scmp.ne.s32.totalorder %s42, %s44
    %p51 = scmp.eq.s32.totalorder %s13, 1
    %p52 = por %p50, %p51
    %p53 = scmp.ne.s32.totalorder %s44, %s45
    %p54 = scmp.eq.s32.totalorder %s13, 0
    %p55 = por %p53, %p54
    %p56 = scmp.ne.s32.totalorder %s44, %s45
    %p57 = scmp.eq.s32.totalorder %s14, 1
    %p58 = por %p56, %p57
    %p60 = scmp.ne.s32.totalorder %s45, %s59
    %p61 = scmp.eq.s32.totalorder %s14, 0
    %p62 = por %p60, %p61
    %s63 = ssub.s32 %s8, %s15
    %p64 = scmp.eq.s32.totalorder %s63, 0
    %s66 = sadd.s32 %s65, 1
    %s67 = scalar_select %p64, %s65, %s66
    %p70 = pneg %p64
    %p71 = scmp.eq.s32.totalorder %s8, 1
    %p72 = por %p70, %p71
    %p73 = scmp.ne.s32.totalorder %s65, %s68
    %p74 = scmp.eq.s32.totalorder %s8, 0
    %p75 = por %p73, %p74
    %p76 = scmp.ne.s32.totalorder %s65, %s68
    %p77 = scmp.eq.s32.totalorder %s13, 1
    %p78 = por %p76, %p77
    %p79 = scmp.ne.s32.totalorder %s68, %s69
    %p80 = scmp.eq.s32.totalorder %s13, 0
    %p81 = por %p79, %p80
    %p82 = scmp.ne.s32.totalorder %s68, %s69
    %p83 = scmp.eq.s32.totalorder %s14, 1
    %p84 = por %p82, %p83
    %p86 = scmp.ne.s32.totalorder %s69, %s85
    %p87 = scmp.eq.s32.totalorder %s14, 0
    %p88 = por %p86, %p87
    %p89 = scmp.le.s32.totalorder 1, %s8
    %p90 = scmp.lt.s32.totalorder %s8, 3
    %p91 = pnand %p89, %p90
    %p92 = pneg %p91
    // Predicated region
    $region9: #{unet_forward.32} parent=5 // pred_check
      _
    $region10: #{unet_forward.32} parent=5 // pred_check_branch
      %94 = sbr.rel (%p91) target = $region12
    $region11: #{unet_forward.32} parent=5 // pred_region
      %s95 = ssub.s32 %s8, 1
      // Predicated region
      $region13: #{unet_forward.32} parent=11 // pred_check
        %p96 = pneg %p55
      $region14: #{unet_forward.32} parent=11 // pred_check_branch
        %98 = sbr.rel (%p96) target = $region16
      $region15: #{unet_forward.32} parent=11 // pred_region
        _
      $region16: #{unet_forward.32} parent=11 // pred_fallthru
        _
    $region12: #{unet_forward.32} parent=5 // pred_fallthru
      _
    %p99 = scmp.lt.s32.totalorder %s8, 2
    // Predicated region
    $region17: #{unet_forward.32} parent=5 // pred_check
      %p100 = pneg %p99
    $region18: #{unet_forward.32} parent=5 // pred_check_branch
      %102 = sbr.rel (%p100) target = $region20
    $region19: #{unet_forward.32} parent=5 // pred_region
      // Predicated region
      $region21: #{unet_forward.32} parent=19 // pred_check
        %p103 = pneg %p28
      $region22: #{unet_forward.32} parent=19 // pred_check_branch
        %105 = sbr.rel (%p103) target = $region24
      $region23: #{unet_forward.32} parent=19 // pred_region
        %p106 = scmp.lt.s32.totalorder %s8, 1
        %s107 = scalar_select %p106, %s8, 1
        %s108 = smul.addr %s107, 8
        %s109 = smul.addr %s108, 8
        %s110 = scalar_lea.vmem %s0, %s109
      $region24: #{unet_forward.32} parent=19 // pred_fallthru
        _
    $region20: #{unet_forward.32} parent=5 // pred_fallthru
      _
    %p111 = scmp.le.s32.totalorder 1, %s8
    %p112 = scmp.lt.s32.totalorder %s8, 3
    %p113 = pnand %p111, %p112
    %p114 = pneg %p113
    // Predicated region
    $region25: #{unet_forward.32} parent=5 // pred_check
      _
    $region26: #{unet_forward.32} parent=5 // pred_check_branch
      %116 = sbr.rel (%p113) target = $region28
    $region27: #{unet_forward.32} parent=5 // pred_region
      %s117 = ssub.s32 %s8, 1
      %p118 = scmp.lt.s32.totalorder %s13, 1
      %s119 = scalar_select %p118, %s13, 1
      %s120 = smul.addr %s119, 8
      %s121 = smul.addr %s120, 8
      %s122 = scalar_lea.vmem %s0, %s121
      %p123 = pneg %p34
      %p124 = pneg %p31
      %p125 = pneg %p55
      %p126 = pneg %p52
      %p127 = pneg %p81
      %p128 = pneg %p78
      %p129 = scmp.lt.s32.totalorder %s13, 1
      %s130 = scalar_select %p129, %s13, 1
      %s131 = smul.addr %s130, 8
      %s132 = smul.addr %s131, 8
      %s133 = scalar_lea.vmem %s2, %s132
      %p134 = scmp.lt.s32.totalorder %s13, 1
      %s135 = scalar_select %p134, %s13, 1
      %s136 = smul.addr %s135, 8
      %s137 = smul.addr %s136, 8
      %s138 = scalar_lea.vmem %s0, %s137
      %p139 = scmp.lt.s32.totalorder %s13, 1
      %s140 = scalar_select %p139, %s13, 1
      %s141 = smul.addr %s140, 8
      %s142 = smul.addr %s141, 8
      %s143 = scalar_lea.vmem %s2, %s142
      %v144 = vld [vmem:[%s138] sm:$0xff]
      %v145 = vld [vmem:[%s138 + $0x8] sm:$0xff]
      %v146 = vld [vmem:[%s138 + $0x10] sm:$0xff]
      %v147 = vld [vmem:[%s138 + $0x18] sm:$0xff]
      %v148 = vld [vmem:[%s138 + $0x20] sm:$0xff]
      %v149 = vld [vmem:[%s138 + $0x28] sm:$0xff]
      %v150 = vld [vmem:[%s138 + $0x30] sm:$0xff]
      %v151 = vld [vmem:[%s138 + $0x38] sm:$0xff]
      %v152 = vld [vmem:[%s1] sm:$0xff]
      %v153 = vld [vmem:[%s1 + $0x8] sm:$0xff]
      %vm154 = vcmask 130048
      %v156 = vsel %vm154, %v144, 0
      %v159 = vsel %vm154, %v145, 0
      %v162 = vsel %vm154, %v146, 0
      %v165 = vsel %vm154, %v147, 0
      %v168 = vsel %vm154, %v148, 0
      %v171 = vsel %vm154, %v149, 0
      %v174 = vsel %vm154, %v150, 0
      %v177 = vsel %vm154, %v151, 0
      %179 = vmatprep.subr.mxu0 0.0
      %180 = vmatpush1.msra.mxu0 %v152
      %181 = vmatprep.subr.mxu0 0.0
      %182 = vmatpush1.msra.mxu0 %v153
      %183 = vmatprep.subr.mxu0 0.0
      %184 = vmatpush1.msra.mxu0 0.0
      %185 = vmatprep.subr.mxu0 0.0
      %186 = vmatpush1.msra.mxu0 0.0
      %187 = vmatprep.subr.mxu0 0.0
      %188 = vmatpush1.msra.mxu0 0.0
      %189 = vmatprep.subr.mxu0 0.0
      %190 = vmatpush1.msra.mxu0 0.0
      %191 = vmatprep.subr.mxu0 0.0
      %192 = vmatpush1.msra.mxu0 0.0
      %193 = vmatprep.subr.mxu0 0.0
      %194 = vmatpush1.msra.mxu0 0.0
      %195 = vmatprep.subr.mxu0 0.0
      %196 = vmatpush1.msra.mxu0 0.0
      %197 = vmatprep.subr.mxu0 0.0
      %198 = vmatpush1.msra.mxu0 0.0
      %199 = vmatprep.subr.mxu0 0.0
      %200 = vmatpush1.msra.mxu0 0.0
      %201 = vmatprep.subr.mxu0 0.0
      %202 = vmatpush1.msra.mxu0 0.0
      %203 = vmatprep.subr.mxu0 0.0
      %204 = vmatpush1.msra.mxu0 0.0
      %205 = vmatprep.subr.mxu0 0.0
      %206 = vmatpush1.msra.mxu0 0.0
      %207 = vmatprep.subr.mxu0 0.0
      %208 = vmatpush1.msra.mxu0 0.0
      %209 = vmatprep.subr.mxu0 0.0
      %210 = vmatpush1.msra.mxu0 0.0
      %211 = vmatprep.subr.mxu0 0.0
      %212 = vmatpush1.msra.mxu0 0.0
      %213 = vmatprep.subr.mxu0 0.0
      %214 = vmatpush1.msra.mxu0 0.0
      %215 = vmatprep.subr.mxu0 0.0
      %216 = vmatpush1.msra.mxu0 0.0
      %217 = vmatprep.subr.mxu0 0.0
      %218 = vmatpush1.msra.mxu0 0.0
      %219 = vmatprep.subr.mxu0 0.0
      %220 = vmatpush1.msra.mxu0 0.0
      %221 = vmatprep.subr.mxu0 0.0
      %222 = vmatpush1.msra.mxu0 0.0
      %223 = vmatprep.subr.mxu0 0.0
      %224 = vmatpush1.msra.mxu0 0.0
      %225 = vmatprep.subr.mxu0 0.0
      %226 = vmatpush1.msra.mxu0 0.0
      %227 = vmatprep.subr.mxu0 0.0
      %228 = vmatpush1.msra.mxu0 0.0
      %229 = vmatprep.subr.mxu0 0.0
      %230 = vmatpush1.msra.mxu0 0.0
      %231 = vmatprep.subr.mxu0 0.0
      %232 = vmatpush1.msra.mxu0 0.0
      %233 = vmatprep.subr.mxu0 0.0
      %234 = vmatpush1.msra.mxu0 0.0
      %235 = vmatprep.subr.mxu0 0.0
      %236 = vmatpush1.msra.mxu0 0.0
      %237 = vmatprep.subr.mxu0 0.0
      %238 = vmatpush1.msra.mxu0 0.0
      %239 = vmatprep.subr.mxu0 0.0
      %240 = vmatpush1.msra.mxu0 0.0
      %241 = vmatprep.subr.mxu0 0.0
      %242 = vmatpush1.msra.mxu0 0.0
      %243 = vmatprep.mubr.f32.mxu0 0.0
      %244 = vmatmul.mubr.f32.gmra.mrb[0].mxu0 %v156
      %v245 = vpop.f32.mrb[0].mxu0
      %v246 = vadd.f32 0.0, %v245
      %v247 = vpop.f32.mrb[0].mxu0
      %248 = vmatprep.mubr.f32.mxu0 0.0
      %249 = vmatmul.mubr.f32.gmra.mrb[0].mxu0 %v159
      %v250 = vpop.f32.mrb[0].mxu0
      %v251 = vadd.f32 0.0, %v250
      %v252 = vpop.f32.mrb[0].mxu0
      %253 = vmatprep.mubr.f32.mxu0 0.0
      %254 = vmatmul.mubr.f32.gmra.mrb[0].mxu0 %v162
      %v255 = vpop.f32.mrb[0].mxu0
      %v256 = vadd.f32 0.0, %v255
      %v257 = vpop.f32.mrb[0].mxu0
      %258 = vmatprep.mubr.f32.mxu0 0.0
      %259 = vmatmul.mubr.f32.gmra.mrb[0].mxu0 %v165
      %v260 = vpop.f32.mrb[0].mxu0
      %v261 = vadd.f32 0.0, %v260
      %v262 = vpop.f32.mrb[0].mxu0
      %263 = vmatprep.mubr.f32.mxu0 0.0
      %264 = vmatmul.mubr.f32.gmra.mrb[0].mxu0 %v168
      %v265 = vpop.f32.mrb[0].mxu0
      %v266 = vadd.f32 0.0, %v265
      %v267 = vpop.f32.mrb[0].mxu0
      %268 = vmatprep.mubr.f32.mxu0 0.0
      %269 = vmatmul.mubr.f32.gmra.mrb[0].mxu0 %v171
      %v270 = vpop.f32.mrb[0].mxu0
      %v271 = vadd.f32 0.0, %v270
      %v272 = vpop.f32.mrb[0].mxu0
      %273 = vmatprep.mubr.f32.mxu0 0.0
      %274 = vmatmul.mubr.f32.gmra.mrb[0].mxu0 %v174
      %v275 = vpop.f32.mrb[0].mxu0
      %v276 = vadd.f32 0.0, %v275
      %v277 = vpop.f32.mrb[0].mxu0
      %278 = vmatprep.mubr.f32.mxu0 0.0
      %279 = vmatmul.mubr.f32.gmra.mrb[0].mxu0 %v177
      %v280 = vpop.f32.mrb[0].mxu0
      %v281 = vadd.f32 0.0, %v280
      %v282 = vpop.f32.mrb[0].mxu0
      %283 = vdwg.mxu0
      %vm284 = vcmask 261120
      %v285 = vsel %vm284, %v246, 0.0
      %v286 = vsel %vm284, %v251, 0.0
      %v287 = vadd.f32 %v285, %v286
      %v288 = vsel %vm284, %v256, 0.0
      %v289 = vadd.f32 %v287, %v288
      %v290 = vsel %vm284, %v261, 0.0
      %v291 = vadd.f32 %v289, %v290
      %v292 = vsel %vm284, %v266, 0.0
      %v293 = vadd.f32 %v291, %v292
      %v294 = vsel %vm284, %v271, 0.0
      %v295 = vadd.f32 %v293, %v294
      %v296 = vsel %vm284, %v276, 0.0
      %v297 = vadd.f32 %v295, %v296
      %v298 = vsel %vm284, %v281, 0.0
      %v299 = vadd.f32 %v297, %v298
      %v300 = vrot.slane %v299, 4
      %v301 = vadd.f32 %v299, %v300
      %v302 = vrot.slane %v301, 2
      %v303 = vadd.f32 %v301, %v302
      %v304 = vrot.slane %v303, 1
      %v305 = vadd.f32 %v303, %v304
      %v306 = vmul.f32 %v246, %v246
      %v307 = vmul.f32 %v251, %v251
      %v308 = vmul.f32 %v256, %v256
      %v309 = vmul.f32 %v261, %v261
      %v310 = vmul.f32 %v266, %v266
      %v311 = vmul.f32 %v271, %v271
      %v312 = vmul.f32 %v276, %v276
      %v313 = vmul.f32 %v281, %v281
      %v314 = vsel %vm284, %v306, 0.0
      %v315 = vsel %vm284, %v307, 0.0
      %v316 = vadd.f32 %v314, %v315
      %v317 = vsel %vm284, %v308, 0.0
      %v318 = vadd.f32 %v316, %v317
      %v319 = vsel %vm284, %v309, 0.0
      %v320 = vadd.f32 %v318, %v319
      %v321 = vsel %vm284, %v310, 0.0
      %v322 = vadd.f32 %v320, %v321
      %v323 = vsel %vm284, %v311, 0.0
      %v324 = vadd.f32 %v322, %v323
      %v325 = vsel %vm284, %v312, 0.0
      %v326 = vadd.f32 %v324, %v325
      %v327 = vsel %vm284, %v313, 0.0
      %v328 = vadd.f32 %v326, %v327
      %v329 = vrot.slane %v328, 4
      %v330 = vadd.f32 %v328, %v329
      %v331 = vrot.slane %v330, 2
      %v332 = vadd.f32 %v330, %v331
      %v333 = vrot.slane %v332, 1
      %v334 = vadd.f32 %v332, %v333
      %336 = vrot.lane.b32.xlu0 %v305, 120
      %v337 = vpop.permute.xlu0 %336
      %v339 = vadd.f32 %v305, %v337
      %341 = vrot.lane.b32.xlu0 %v334, 120
      %v342 = vpop.permute.xlu0 %341
      %v344 = vadd.f32 %v334, %v342
      %345 = vrot.lane.b32.xlu0 %v305, 112
      %v346 = vpop.permute.xlu0 %345
      %v348 = vadd.f32 %v339, %v346
      %349 = vrot.lane.b32.xlu0 %v334, 112
      %v350 = vpop.permute.xlu0 %349
      %v352 = vadd.f32 %v344, %v350
      %353 = vrot.lane.b32.xlu0 %v305, 104
      %v354 = vpop.permute.xlu0 %353
      %v356 = vadd.f32 %v348, %v354
      %357 = vrot.lane.b32.xlu0 %v334, 104
      %v358 = vpop.permute.xlu0 %357
      %v360 = vadd.f32 %v352, %v358
      %v361 = vrcp.pop 256.0
      %v362 = vmul.f32 %v356, %v361
      %v363 = vmul.f32 %v360, %v361
      %v364 = vmul.f32 %v362, %v362
      %v365 = vsub.f32 %v363, %v364
      %v366 = vadd.f32 %v365, 1e-05
      %v367 = vrsqrt.pop %v366
      %v368 = vsub.f32 0.0, %v362
      %v369 = vmul.f32 %v368, %v367
      %371 = vrot.lane.b32.xlu0 %v367, 8
      %v372 = vpop.permute.xlu0 %371
      %374 = vrot.lane.b32.xlu0 %v367, 16
      %v375 = vpop.permute.xlu0 %374
      %377 = vrot.lane.b32.xlu0 %v367, 24
      %v378 = vpop.permute.xlu0 %377
      %vm380 = vcmask 64512
      %v381 = vsel %vm380, %v367, %v372
      %v382 = vsel %vm154, %v381, %v375
      %vm383 = vcmask 195584
      %v384 = vsel %vm383, %v382, %v378
      %386 = vrot.lane.b32.xlu0 %v369, 8
      %v387 = vpop.permute.xlu0 %386
      %389 = vrot.lane.b32.xlu0 %v369, 16
      %v390 = vpop.permute.xlu0 %389
      %392 = vrot.lane.b32.xlu0 %v369, 24
      %v393 = vpop.permute.xlu0 %392
      %v395 = vsel %vm380, %v369, %v387
      %v396 = vsel %vm154, %v395, %v390
      %v397 = vsel %vm383, %v396, %v393
      %v398 = vlaneseq
      %v399 = vshrl.u32 %v398, 7
      %v400 = vsub.s32 0, %v399
      %v401 = vrot.slane %v384, %v400
      %v402 = vmul.f32 %v246, %v401
      %v403 = vmul.f32 %v251, %v401
      %v404 = vmul.f32 %v256, %v401
      %v405 = vmul.f32 %v261, %v401
      %v406 = vmul.f32 %v266, %v401
      %v407 = vmul.f32 %v271, %v401
      %v408 = vmul.f32 %v276, %v401
      %v409 = vmul.f32 %v281, %v401
      %v410 = vlaneseq
      %v411 = vshrl.u32 %v410, 7
      %v412 = vsub.s32 0, %v411
      %v413 = vrot.slane %v397, %v412
      %v414 = vadd.f32 %v402, %v413
      %v415 = vadd.f32 %v403, %v413
      %v416 = vadd.f32 %v404, %v413
      %v417 = vadd.f32 %v405, %v413
      %v418 = vadd.f32 %v406, %v413
      %v419 = vadd.f32 %v407, %v413
      %v420 = vadd.f32 %v408, %v413
      %v421 = vadd.f32 %v409, %v413
      %vm422 = vcmp.ge.f32.partialorder %v414, 0.0
      %vm423 = vcmp.ge.f32.partialorder %v415, 0.0
      %vm424 = vcmp.ge.f32.partialorder %v416, 0.0
      %vm425 = vcmp.ge.f32.partialorder %v417, 0.0
      %vm426 = vcmp.ge.f32.partialorder %v418, 0.0
      %vm427 = vcmp.ge.f32.partialorder %v419, 0.0
      %vm428 = vcmp.ge.f32.partialorder %v420, 0.0
      %vm429 = vcmp.ge.f32.partialorder %v421, 0.0
      %v430 = vmul.f32 %v414, 0.2
      %v431 = vmul.f32 %v415, 0.2
      %v432 = vmul.f32 %v416, 0.2
      %v433 = vmul.f32 %v417, 0.2
      %v434 = vmul.f32 %v418, 0.2
      %v435 = vmul.f32 %v419, 0.2
      %v436 = vmul.f32 %v420, 0.2
      %v437 = vmul.f32 %v421, 0.2
      %v438 = vsel %vm422, %v414, %v430
      %v439 = vsel %vm423, %v415, %v431
      %v440 = vsel %vm424, %v416, %v432
      %v441 = vsel %vm425, %v417, %v433
      %v442 = vsel %vm426, %v418, %v434
      %v443 = vsel %vm427, %v419, %v435
      %v444 = vsel %vm428, %v420, %v436
      %v445 = vsel %vm429, %v421, %v437
      %446 = vst.msk [vmem:[%s143] sm:$0xff] %vm284, %v438
      %447 = vst.msk [vmem:[%s143 + $0x8] sm:$0xff] %vm284, %v439
      %448 = vst.msk [vmem:[%s143 + $0x10] sm:$0xff] %vm284, %v440
      %449 = vst.msk [vmem:[%s143 + $0x18] sm:$0xff] %vm284, %v441
      %450 = vst.msk [vmem:[%s143 + $0x20] sm:$0xff] %vm284, %v442
      %451 = vst.msk [vmem:[%s143 + $0x28] sm:$0xff] %vm284, %v443
      %452 = vst.msk [vmem:[%s143 + $0x30] sm:$0xff] %vm284, %v444
      %453 = vst.msk [vmem:[%s143 + $0x38] sm:$0xff] %vm284, %v445
      %p454 = scmp.lt.s32.totalorder %s13, 1
      %s455 = scalar_select %p454, %s13, 1
      %s456 = smul.addr %s455, 8
      %s457 = smul.addr %s456, 8
      %s458 = scalar_lea.vmem %s2, %s457
      // Predicated region
      $region29: #{unet_forward.32} parent=27 // pred_check
        %p459 = pneg %p78
      $region30: #{unet_forward.32} parent=27 // pred_check_branch
        %461 = sbr.rel (%p459) target = $region32
      $region31: #{unet_forward.32} parent=27 // pred_region
        _
      $region32: #{unet_forward.32} parent=27 // pred_fallthru
        _
    $region28: #{unet_forward.32} parent=5 // pred_fallthru
      _
    %p462 = scmp.le.s32.totalorder 2, %s8
    // Predicated region
    $region33: #{unet_forward.32} parent=5 // pred_check
      %p463 = pneg %p462
    $region34: #{unet_forward.32} parent=5 // pred_check_branch
      %465 = sbr.rel (%p463) target = $region36
    $region35: #{unet_forward.32} parent=5 // pred_region
      %s466 = ssub.s32 %s8, 2
      // Predicated region
      $region37: #{unet_forward.32} parent=35 // pred_check
        %p467 = pneg %p84
      $region38: #{unet_forward.32} parent=35 // pred_check_branch
        %469 = sbr.rel (%p467) target = $region40
      $region39: #{unet_forward.32} parent=35 // pred_region
        %p470 = scmp.lt.s32.totalorder %s14, 1
        %s471 = scalar_select %p470, %s14, 1
        %s472 = smul.addr %s471, 8
        %s473 = smul.addr %s472, 8
        %s474 = scalar_lea.vmem %s2, %s473
      $region40: #{unet_forward.32} parent=35 // pred_fallthru
        _
    $region36: #{unet_forward.32} parent=5 // pred_fallthru
      _
  $region6: #{unet_forward.32} parent=0 // loop_footer
    %s12 = sadd.s32 1, %s8
  $region7: #{unet_forward.32} parent=0 // loop_footer_branch
    %7 = sbr.rel target = $region3
  $region8: #{unet_forward.32} parent=0 // loop_exit
    _

// kernel: unet_forward.33
$region0: #{unet_forward.33}
  #allocation0 [shape = 'u32[]', space=smem, size = 0x4, offset = 0x4, fixed_abs, tag = 'smem constant byte address 0x4 - core index']
  #allocation1 [shape = 'u32[144,128]{1,0:T(1,128)}', space=vmem, size = 0x12000, scoped, tag = 'internal scratch']
  %s0 = inlined_call_operand.vmem [shape: f32[2,256,144], index: 0, kind: input, shape index: {}]
  %s1 = inlined_call_operand.vmem [shape: f32[144,8], index: 1, kind: input, shape index: {}]
  %s2 = inlined_call_operand.vmem [shape: f32[2,256,8], index: 2, kind: output, shape index: {}]
  %s3 = sld [smem:[#allocation0]]
  $region41: #{unet_forward.33} parent=0
    _
  %s5 = ssub.s32 1, %s3
  %s6 = scalar_select 0, %s5, %s3
  loop: start=0, step=1, limit=4
  $region2: #{unet_forward.33} parent=0 // loop_pre_header
    _
  $region3: #{unet_forward.33} parent=0 // loop_header
    %s8 = sphi 0, %s12
    %p9 = scmp.ge.s32.totalorder %s8, 4
    %s18 = sphi 0, %s20
    %s21 = sphi 0, %s18
    %s22 = sphi 0, %s21
    %s38 = sphi 0, %s22
    %s42 = sphi 0, %s42
    %s44 = sphi 0, %s42
    %s45 = sphi 0, %s44
    %s59 = sphi 0, %s45
    %s65 = sphi 0, %s67
    %s68 = sphi 0, %s65
    %s69 = sphi 0, %s68
    %s85 = sphi 0, %s69
  $region4: #{unet_forward.33} parent=0 // loop_header_branch
    %11 = sbr.rel (%p9) target = $region8
  $region5: #{unet_forward.33} parent=0 // loop_body
    %s13 = ssub.s32 %s8, 1
    %s14 = ssub.s32 %s8, 2
    %s15 = sadd.s32 %s8, 1
    %s16 = ssub.s32 %s8, %s15
    %p17 = scmp.eq.s32.totalorder %s16, 0
    %s19 = sadd.s32 %s18, 1
    %s20 = scalar_select %p17, %s18, %s19
    %p23 = pneg %p17
    %p24 = scmp.eq.s32.totalorder %s8, 1
    %p25 = por %p23, %p24
    %p26 = scmp.ne.s32.totalorder %s18, %s21
    %p27 = scmp.eq.s32.totalorder %s8, 0
    %p28 = por %p26, %p27
    %p29 = scmp.ne.s32.totalorder %s18, %s21
    %p30 = scmp.eq.s32.totalorder %s13, 1
    %p31 = por %p29, %p30
    %p32 = scmp.ne.s32.totalorder %s21, %s22
    %p33 = scmp.eq.s32.totalorder %s13, 0
    %p34 = por %p32, %p33
    %p35 = scmp.ne.s32.totalorder %s21, %s22
    %p36 = scmp.eq.s32.totalorder %s14, 1
    %p37 = por %p35, %p36
    %p39 = scmp.ne.s32.totalorder %s22, %s38
    %p40 = scmp.eq.s32.totalorder %s14, 0
    %p41 = por %p39, %p40
    %s43 = sadd.s32 %s42, 1
    %p46 = scmp.eq.s32.totalorder %s8, 1
    %p47 = scmp.ne.s32.totalorder %s42, %s44
    %p48 = scmp.eq.s32.totalorder %s8, 0
    %p49 = por %p47, %p48
    %p50 = scmp.ne.s32.totalorder %s42, %s44
    %p51 = scmp.eq.s32.totalorder %s13, 1
    %p52 = por %p50, %p51
    %p53 = scmp.ne.s32.totalorder %s44, %s45
    %p54 = scmp.eq.s32.totalorder %s13, 0
    %p55 = por %p53, %p54
    %p56 = scmp.ne.s32.totalorder %s44, %s45
    %p57 = scmp.eq.s32.totalorder %s14, 1
    %p58 = por %p56, %p57
    %p60 = scmp.ne.s32.totalorder %s45, %s59
    %p61 = scmp.eq.s32.totalorder %s14, 0
    %p62 = por %p60, %p61
    %s63 = ssub.s32 %s8, %s15
    %p64 = scmp.eq.s32.totalorder %s63, 0
    %s66 = sadd.s32 %s65, 1
    %s67 = scalar_select %p64, %s65, %s66
    %p70 = pneg %p64
    %p71 = scmp.eq.s32.totalorder %s8, 1
    %p72 = por %p70, %p71
    %p73 = scmp.ne.s32.totalorder %s65, %s68
    %p74 = scmp.eq.s32.totalorder %s8, 0
    %p75 = por %p73, %p74
    %p76 = scmp.ne.s32.totalorder %s65, %s68
    %p77 = scmp.eq.s32.totalorder %s13, 1
    %p78 = por %p76, %p77
    %p79 = scmp.ne.s32.totalorder %s68, %s69
    %p80 = scmp.eq.s32.totalorder %s13, 0
    %p81 = por %p79, %p80
    %p82 = scmp.ne.s32.totalorder %s68, %s69
    %p83 = scmp.eq.s32.totalorder %s14, 1
    %p84 = por %p82, %p83
    %p86 = scmp.ne.s32.totalorder %s69, %s85
    %p87 = scmp.eq.s32.totalorder %s14, 0
    %p88 = por %p86, %p87
    %p89 = scmp.le.s32.totalorder 1, %s8
    %p90 = scmp.lt.s32.totalorder %s8, 3
    %p91 = pnand %p89, %p90
    %p92 = pneg %p91
    // Predicated region
    $region9: #{unet_forward.33} parent=5 // pred_check
      _
    $region10: #{unet_forward.33} parent=5 // pred_check_branch
      %94 = sbr.rel (%p91) target = $region12
    $region11: #{unet_forward.33} parent=5 // pred_region
      %s95 = ssub.s32 %s8, 1
      // Predicated region
      $region13: #{unet_forward.33} parent=11 // pred_check
        %p96 = pneg %p55
      $region14: #{unet_forward.33} parent=11 // pred_check_branch
        %98 = sbr.rel (%p96) target = $region16
      $region15: #{unet_forward.33} parent=11 // pred_region
        _
      $region16: #{unet_forward.33} parent=11 // pred_fallthru
        _
    $region12: #{unet_forward.33} parent=5 // pred_fallthru
      _
    %p99 = scmp.lt.s32.totalorder %s8, 2
    // Predicated region
    $region17: #{unet_forward.33} parent=5 // pred_check
      %p100 = pneg %p99
    $region18: #{unet_forward.33} parent=5 // pred_check_branch
      %102 = sbr.rel (%p100) target = $region20
    $region19: #{unet_forward.33} parent=5 // pred_region
      // Predicated region
      $region21: #{unet_forward.33} parent=19 // pred_check
        %p103 = pneg %p28
      $region22: #{unet_forward.33} parent=19 // pred_check_branch
        %105 = sbr.rel (%p103) target = $region24
      $region23: #{unet_forward.33} parent=19 // pred_region
        %p106 = scmp.lt.s32.totalorder %s8, 1
        %s107 = scalar_select %p106, %s8, 1
        %s108 = smul.addr %s107, 64
        %s109 = smul.addr %s108, 8
        %s110 = scalar_lea.vmem %s0, %s109
      $region24: #{unet_forward.33} parent=19 // pred_fallthru
        _
    $region20: #{unet_forward.33} parent=5 // pred_fallthru
      _
    %p111 = scmp.le.s32.totalorder 1, %s8
    %p112 = scmp.lt.s32.totalorder %s8, 3
    %p113 = pnand %p111, %p112
    %p114 = pneg %p113
    // Predicated region
    $region25: #{unet_forward.33} parent=5 // pred_check
      _
    $region26: #{unet_forward.33} parent=5 // pred_check_branch
      %116 = sbr.rel (%p113) target = $region28
    $region27: #{unet_forward.33} parent=5 // pred_region
      %s117 = ssub.s32 %s8, 1
      %p118 = scmp.lt.s32.totalorder %s13, 1
      %s119 = scalar_select %p118, %s13, 1
      %s120 = smul.addr %s119, 64
      %s121 = smul.addr %s120, 8
      %s122 = scalar_lea.vmem %s0, %s121
      %p123 = pneg %p34
      %p124 = pneg %p31
      %p125 = pneg %p55
      %p126 = pneg %p52
      %p127 = pneg %p81
      %p128 = pneg %p78
      %p129 = scmp.lt.s32.totalorder %s13, 1
      %s130 = scalar_select %p129, %s13, 1
      %s131 = smul.addr %s130, 32
      %s132 = smul.addr %s131, 8
      %s133 = scalar_lea.vmem %s2, %s132
      %p134 = scmp.lt.s32.totalorder %s13, 1
      %s135 = scalar_select %p134, %s13, 1
      %s136 = smul.addr %s135, 64
      %s137 = smul.addr %s136, 8
      %s138 = scalar_lea.vmem %s0, %s137
      %p139 = scmp.lt.s32.totalorder %s13, 1
      %s140 = scalar_select %p139, %s13, 1
      %s141 = smul.addr %s140, 32
      %s142 = smul.addr %s141, 8
      %s143 = scalar_lea.vmem %s2, %s142
      %v144 = vld [vmem:[%s138] sm:$0xff]
      %v145 = vld [vmem:[%s138 + $0x8] sm:$0xff]
      %v146 = vld [vmem:[%s138 + $0x10] sm:$0xff]
      %v147 = vld [vmem:[%s138 + $0x18] sm:$0xff]
      %v148 = vld [vmem:[%s138 + $0x20] sm:$0xff]
      %v149 = vld [vmem:[%s138 + $0x28] sm:$0xff]
      %v150 = vld [vmem:[%s138 + $0x30] sm:$0xff]
      %v151 = vld [vmem:[%s138 + $0x38] sm:$0xff]
      %v152 = vld [vmem:[%s138 + $0x40] sm:$0xff]
      %v153 = vld [vmem:[%s138 + $0x48] sm:$0xff]
      %v154 = vld [vmem:[%s138 + $0x50] sm:$0xff]
      %v155 = vld [vmem:[%s138 + $0x58] sm:$0xff]
      %v156 = vld [vmem:[%s138 + $0x60] sm:$0xff]
      %v157 = vld [vmem:[%s138 + $0x68] sm:$0xff]
      %v158 = vld [vmem:[%s138 + $0x70] sm:$0xff]
      %v159 = vld [vmem:[%s138 + $0x78] sm:$0xff]
      %v160 = vld [vmem:[%s138 + $0x80] sm:$0xff]
      %v161 = vld [vmem:[%s138 + $0x88] sm:$0xff]
      %v162 = vld [vmem:[%s138 + $0x90] sm:$0xff]
      %v163 = vld [vmem:[%s138 + $0x98] sm:$0xff]
      %v164 = vld [vmem:[%s138 + $0xa0] sm:$0xff]
      %v165 = vld [vmem:[%s138 + $0xa8] sm:$0xff]
      %v166 = vld [vmem:[%s138 + $0xb0] sm:$0xff]
      %v167 = vld [vmem:[%s138 + $0xb8] sm:$0xff]
      %v168 = vld [vmem:[%s138 + $0xc0] sm:$0xff]
      %v169 = vld [vmem:[%s138 + $0xc8] sm:$0xff]
      %v170 = vld [vmem:[%s138 + $0xd0] sm:$0xff]
      %v171 = vld [vmem:[%s138 + $0xd8] sm:$0xff]
      %v172 = vld [vmem:[%s138 + $0xe0] sm:$0xff]
      %v173 = vld [vmem:[%s138 + $0xe8] sm:$0xff]
      %v174 = vld [vmem:[%s138 + $0xf0] sm:$0xff]
      %v175 = vld [vmem:[%s138 + $0xf8] sm:$0xff]
      %v176 = vld [vmem:[%s138 + $0x100] sm:$0xff]
      %v177 = vld [vmem:[%s138 + $0x108] sm:$0xff]
      %v178 = vld [vmem:[%s138 + $0x110] sm:$0xff]
      %v179 = vld [vmem:[%s138 + $0x118] sm:$0xff]
      %v180 = vld [vmem:[%s138 + $0x120] sm:$0xff]
      %v181 = vld [vmem:[%s138 + $0x128] sm:$0xff]
      %v182 = vld [vmem:[%s138 + $0x130] sm:$0xff]
      %v183 = vld [vmem:[%s138 + $0x138] sm:$0xff]
      %v184 = vld [vmem:[%s138 + $0x140] sm:$0xff]
      %v185 = vld [vmem:[%s138 + $0x148] sm:$0xff]
      %v186 = vld [vmem:[%s138 + $0x150] sm:$0xff]
      %v187 = vld [vmem:[%s138 + $0x158] sm:$0xff]
      %v188 = vld [vmem:[%s138 + $0x160] sm:$0xff]
      %v189 = vld [vmem:[%s138 + $0x168] sm:$0xff]
      %v190 = vld [vmem:[%s138 + $0x170] sm:$0xff]
      %v191 = vld [vmem:[%s138 + $0x178] sm:$0xff]
      %v192 = vld [vmem:[%s138 + $0x180] sm:$0xff]
      %v193 = vld [vmem:[%s138 + $0x188] sm:$0xff]
      %v194 = vld [vmem:[%s138 + $0x190] sm:$0xff]
      %v195 = vld [vmem:[%s138 + $0x198] sm:$0xff]
      %v196 = vld [vmem:[%s138 + $0x1a0] sm:$0xff]
      %v197 = vld [vmem:[%s138 + $0x1a8] sm:$0xff]
      %v198 = vld [vmem:[%s138 + $0x1b0] sm:$0xff]
      %v199 = vld [vmem:[%s138 + $0x1b8] sm:$0xff]
      %v200 = vld [vmem:[%s138 + $0x1c0] sm:$0xff]
      %v201 = vld [vmem:[%s138 + $0x1c8] sm:$0xff]
      %v202 = vld [vmem:[%s138 + $0x1d0] sm:$0xff]
      %v203 = vld [vmem:[%s138 + $0x1d8] sm:$0xff]
      %v204 = vld [vmem:[%s138 + $0x1e0] sm:$0xff]
      %v205 = vld [vmem:[%s138 + $0x1e8] sm:$0xff]
      %v206 = vld [vmem:[%s138 + $0x1f0] sm:$0xff]
      %v207 = vld [vmem:[%s138 + $0x1f8] sm:$0xff]
      %v208 = vld [vmem:[%s1] sm:$0xff]
      %v209 = vld [vmem:[%s1 + $0x8] sm:$0xff]
      %v210 = vld [vmem:[%s1 + $0x10] sm:$0xff]
      %v211 = vld [vmem:[%s1 + $0x18] sm:$0xff]
      %v212 = vld [vmem:[%s1 + $0x20] sm:$0xff]
      %v213 = vld [vmem:[%s1 + $0x28] sm:$0xff]
      %v214 = vld [vmem:[%s1 + $0x30] sm:$0xff]
      %v215 = vld [vmem:[%s1 + $0x38] sm:$0xff]
      %v216 = vld [vmem:[%s1 + $0x40] sm:$0xff]
      %v217 = vld [vmem:[%s1 + $0x48] sm:$0xff]
      %v218 = vld [vmem:[%s1 + $0x50] sm:$0xff]
      %v219 = vld [vmem:[%s1 + $0x58] sm:$0xff]
      %v220 = vld [vmem:[%s1 + $0x60] sm:$0xff]
      %v221 = vld [vmem:[%s1 + $0x68] sm:$0xff]
      %v222 = vld [vmem:[%s1 + $0x70] sm:$0xff]
      %v223 = vld [vmem:[%s1 + $0x78] sm:$0xff]
      %v224 = vld [vmem:[%s1 + $0x80] sm:$0xff]
      %v225 = vld [vmem:[%s1 + $0x88] sm:$0xff]
      %vm226 = vcmask 130048
      %v228 = vsel %vm226, %v145, 0
      %v231 = vsel %vm226, %v147, 0
      %v234 = vsel %vm226, %v149, 0
      %v237 = vsel %vm226, %v151, 0
      %v240 = vsel %vm226, %v153, 0
      %v243 = vsel %vm226, %v155, 0
      %v246 = vsel %vm226, %v157, 0
      %v249 = vsel %vm226, %v159, 0
      %v252 = vsel %vm226, %v161, 0
      %v255 = vsel %vm226, %v163, 0
      %v258 = vsel %vm226, %v165, 0
      %v261 = vsel %vm226, %v167, 0
      %v264 = vsel %vm226, %v169, 0
      %v267 = vsel %vm226, %v171, 0
      %v270 = vsel %vm226, %v173, 0
      %v273 = vsel %vm226, %v175, 0
      %v276 = vsel %vm226, %v177, 0
      %v279 = vsel %vm226, %v179, 0
      %v282 = vsel %vm226, %v181, 0
      %v285 = vsel %vm226, %v183, 0
      %v288 = vsel %vm226, %v185, 0
      %v291 = vsel %vm226, %v187, 0
      %v294 = vsel %vm226, %v189, 0
      %v297 = vsel %vm226, %v191, 0
      %v300 = vsel %vm226, %v193, 0
      %v303 = vsel %vm226, %v195, 0
      %v306 = vsel %vm226, %v197, 0
      %v309 = vsel %vm226, %v199, 0
      %v312 = vsel %vm226, %v201, 0
      %v315 = vsel %vm226, %v203, 0
      %v318 = vsel %vm226, %v205, 0
      %v321 = vsel %vm226, %v207, 0
      %323 = vmatprep.subr.mxu0 0.0
      %324 = vmatpush1.msra.mxu0 %v208
      %325 = vmatprep.subr.mxu0 0.0
      %326 = vmatpush1.msra.mxu0 %v209
      %327 = vmatprep.subr.mxu0 0.0
      %328 = vmatpush1.msra.mxu0 %v210
      %329 = vmatprep.subr.mxu0 0.0
      %330 = vmatpush1.msra.mxu0 %v211
      %331 = vmatprep.subr.mxu0 0.0
      %332 = vmatpush1.msra.mxu0 %v212
      %333 = vmatprep.subr.mxu0 0.0
      %334 = vmatpush1.msra.mxu0 %v213
      %335 = vmatprep.subr.mxu0 0.0
      %336 = vmatpush1.msra.mxu0 %v214
      %337 = vmatprep.subr.mxu0 0.0
      %338 = vmatpush1.msra.mxu0 %v215
      %339 = vmatprep.subr.mxu0 0.0
      %340 = vmatpush1.msra.mxu0 %v216
      %341 = vmatprep.subr.mxu0 0.0
      %342 = vmatpush1.msra.mxu0 %v217
      %343 = vmatprep.subr.mxu0 0.0
      %344 = vmatpush1.msra.mxu0 %v218
      %345 = vmatprep.subr.mxu0 0.0
      %346 = vmatpush1.msra.mxu0 %v219
      %347 = vmatprep.subr.mxu0 0.0
      %348 = vmatpush1.msra.mxu0 %v220
      %349 = vmatprep.subr.mxu0 0.0
      %350 = vmatpush1.msra.mxu0 %v221
      %351 = vmatprep.subr.mxu0 0.0
      %352 = vmatpush1.msra.mxu0 %v222
      %353 = vmatprep.subr.mxu0 0.0
      %354 = vmatpush1.msra.mxu0 %v223
      %355 = vmatprep.subr.mxu0 0.0
      %356 = vmatpush1.msra.mxu0 %v224
      %357 = vmatprep.subr.mxu0 0.0
      %358 = vmatpush1.msra.mxu0 %v225
      %359 = vmatprep.subr.mxu0 0.0
      %360 = vmatpush1.msra.mxu0 0.0
      %361 = vmatprep.subr.mxu0 0.0
      %362 = vmatpush1.msra.mxu0 0.0
      %363 = vmatprep.subr.mxu0 0.0
      %364 = vmatpush1.msra.mxu0 0.0
      %365 = vmatprep.subr.mxu0 0.0
      %366 = vmatpush1.msra.mxu0 0.0
      %367 = vmatprep.subr.mxu0 0.0
      %368 = vmatpush1.msra.mxu0 0.0
      %369 = vmatprep.subr.mxu0 0.0
      %370 = vmatpush1.msra.mxu0 0.0
      %371 = vmatprep.subr.mxu0 0.0
      %372 = vmatpush1.msra.mxu0 0.0
      %373 = vmatprep.subr.mxu0 0.0
      %374 = vmatpush1.msra.mxu0 0.0
      %375 = vmatprep.subr.mxu0 0.0
      %376 = vmatpush1.msra.mxu0 0.0
      %377 = vmatprep.subr.mxu0 0.0
      %378 = vmatpush1.msra.mxu0 0.0
      %379 = vmatprep.subr.mxu0 0.0
      %380 = vmatpush1.msra.mxu0 0.0
      %381 = vmatprep.subr.mxu0 0.0
      %382 = vmatpush1.msra.mxu0 0.0
      %383 = vmatprep.subr.mxu0 0.0
      %384 = vmatpush1.msra.mxu0 0.0
      %385 = vmatprep.subr.mxu0 0.0
      %386 = vmatpush1.msra.mxu0 0.0
      %387 = vmatprep.mubr.f32.mxu0 %v228
      %388 = vmatmul.mubr.f32.gmra.mrb[0].mxu0 %v144
      %v389 = vpop.f32.mrb[0].mxu0
      %v390 = vadd.f32 0.0, %v389
      %v391 = vpop.f32.mrb[0].mxu0
      %392 = vmatprep.mubr.f32.mxu0 %v231
      %393 = vmatmul.mubr.f32.gmra.mrb[0].mxu0 %v146
      %v394 = vpop.f32.mrb[0].mxu0
      %v395 = vadd.f32 0.0, %v394
      %v396 = vpop.f32.mrb[0].mxu0
      %397 = vmatprep.mubr.f32.mxu0 %v234
      %398 = vmatmul.mubr.f32.gmra.mrb[0].mxu0 %v148
      %v399 = vpop.f32.mrb[0].mxu0
      %v400 = vadd.f32 0.0, %v399
      %v401 = vpop.f32.mrb[0].mxu0
      %402 = vmatprep.mubr.f32.mxu0 %v237
      %403 = vmatmul.mubr.f32.gmra.mrb[0].mxu0 %v150
      %v404 = vpop.f32.mrb[0].mxu0
      %v405 = vadd.f32 0.0, %v404
      %v406 = vpop.f32.mrb[0].mxu0
      %407 = vmatprep.mubr.f32.mxu0 %v240
      %408 = vmatmul.mubr.f32.gmra.mrb[0].mxu0 %v152
      %v409 = vpop.f32.mrb[0].mxu0
      %v410 = vadd.f32 0.0, %v409
      %v411 = vpop.f32.mrb[0].mxu0
      %412 = vmatprep.mubr.f32.mxu0 %v243
      %413 = vmatmul.mubr.f32.gmra.mrb[0].mxu0 %v154
      %v414 = vpop.f32.mrb[0].mxu0
      %v415 = vadd.f32 0.0, %v414
      %v416 = vpop.f32.mrb[0].mxu0
      %417 = vmatprep.mubr.f32.mxu0 %v246
      %418 = vmatmul.mubr.f32.gmra.mrb[0].mxu0 %v156
      %v419 = vpop.f32.mrb[0].mxu0
      %v420 = vadd.f32 0.0, %v419
      %v421 = vpop.f32.mrb[0].mxu0
      %422 = vmatprep.mubr.f32.mxu0 %v249
      %423 = vmatmul.mubr.f32.gmra.mrb[0].mxu0 %v158
      %v424 = vpop.f32.mrb[0].mxu0
      %v425 = vadd.f32 0.0, %v424
      %v426 = vpop.f32.mrb[0].mxu0
      %427 = vmatprep.mubr.f32.mxu0 %v252
      %428 = vmatmul.mubr.f32.gmra.mrb[0].mxu0 %v160
      %v429 = vpop.f32.mrb[0].mxu0
      %v430 = vadd.f32 0.0, %v429
      %v431 = vpop.f32.mrb[0].mxu0
      %432 = vmatprep.mubr.f32.mxu0 %v255
      %433 = vmatmul.mubr.f32.gmra.mrb[0].mxu0 %v162
      %v434 = vpop.f32.mrb[0].mxu0
      %v435 = vadd.f32 0.0, %v434
      %v436 = vpop.f32.mrb[0].mxu0
      %437 = vmatprep.mubr.f32.mxu0 %v258
      %438 = vmatmul.mubr.f32.gmra.mrb[0].mxu0 %v164
      %v439 = vpop.f32.mrb[0].mxu0
      %v440 = vadd.f32 0.0, %v439
      %v441 = vpop.f32.mrb[0].mxu0
      %442 = vmatprep.mubr.f32.mxu0 %v261
      %443 = vmatmul.mubr.f32.gmra.mrb[0].mxu0 %v166
      %v444 = vpop.f32.mrb[0].mxu0
      %v445 = vadd.f32 0.0, %v444
      %v446 = vpop.f32.mrb[0].mxu0
      %447 = vmatprep.mubr.f32.mxu0 %v264
      %448 = vmatmul.mubr.f32.gmra.mrb[0].mxu0 %v168
      %v449 = vpop.f32.mrb[0].mxu0
      %v450 = vadd.f32 0.0, %v449
      %v451 = vpop.f32.mrb[0].mxu0
      %452 = vmatprep.mubr.f32.mxu0 %v267
      %453 = vmatmul.mubr.f32.gmra.mrb[0].mxu0 %v170
      %v454 = vpop.f32.mrb[0].mxu0
      %v455 = vadd.f32 0.0, %v454
      %v456 = vpop.f32.mrb[0].mxu0
      %457 = vmatprep.mubr.f32.mxu0 %v270
      %458 = vmatmul.mubr.f32.gmra.mrb[0].mxu0 %v172
      %v459 = vpop.f32.mrb[0].mxu0
      %v460 = vadd.f32 0.0, %v459
      %v461 = vpop.f32.mrb[0].mxu0
      %462 = vmatprep.mubr.f32.mxu0 %v273
      %463 = vmatmul.mubr.f32.gmra.mrb[0].mxu0 %v174
      %v464 = vpop.f32.mrb[0].mxu0
      %v465 = vadd.f32 0.0, %v464
      %v466 = vpop.f32.mrb[0].mxu0
      %467 = vmatprep.mubr.f32.mxu0 %v276
      %468 = vmatmul.mubr.f32.gmra.mrb[0].mxu0 %v176
      %v469 = vpop.f32.mrb[0].mxu0
      %v470 = vadd.f32 0.0, %v469
      %v471 = vpop.f32.mrb[0].mxu0
      %472 = vmatprep.mubr.f32.mxu0 %v279
      %473 = vmatmul.mubr.f32.gmra.mrb[0].mxu0 %v178
      %v474 = vpop.f32.mrb[0].mxu0
      %v475 = vadd.f32 0.0, %v474
      %v476 = vpop.f32.mrb[0].mxu0
      %477 = vmatprep.mubr.f32.mxu0 %v282
      %478 = vmatmul.mubr.f32.gmra.mrb[0].mxu0 %v180
      %v479 = vpop.f32.mrb[0].mxu0
      %v480 = vadd.f32 0.0, %v479
      %v481 = vpop.f32.mrb[0].mxu0
      %482 = vmatprep.mubr.f32.mxu0 %v285
      %483 = vmatmul.mubr.f32.gmra.mrb[0].mxu0 %v182
      %v484 = vpop.f32.mrb[0].mxu0
      %v485 = vadd.f32 0.0, %v484
      %v486 = vpop.f32.mrb[0].mxu0
      %487 = vmatprep.mubr.f32.mxu0 %v288
      %488 = vmatmul.mubr.f32.gmra.mrb[0].mxu0 %v184
      %v489 = vpop.f32.mrb[0].mxu0
      %v490 = vadd.f32 0.0, %v489
      %v491 = vpop.f32.mrb[0].mxu0
      %492 = vmatprep.mubr.f32.mxu0 %v291
      %493 = vmatmul.mubr.f32.gmra.mrb[0].mxu0 %v186
      %v494 = vpop.f32.mrb[0].mxu0
      %v495 = vadd.f32 0.0, %v494
      %v496 = vpop.f32.mrb[0].mxu0
      %497 = vmatprep.mubr.f32.mxu0 %v294
      %498 = vmatmul.mubr.f32.gmra.mrb[0].mxu0 %v188
      %v499 = vpop.f32.mrb[0].mxu0
      %v500 = vadd.f32 0.0, %v499
      %v501 = vpop.f32.mrb[0].mxu0
      %502 = vmatprep.mubr.f32.mxu0 %v297
      %503 = vmatmul.mubr.f32.gmra.mrb[0].mxu0 %v190
      %v504 = vpop.f32.mrb[0].mxu0
      %v505 = vadd.f32 0.0, %v504
      %v506 = vpop.f32.mrb[0].mxu0
      %507 = vmatprep.mubr.f32.mxu0 %v300
      %508 = vmatmul.mubr.f32.gmra.mrb[0].mxu0 %v192
      %v509 = vpop.f32.mrb[0].mxu0
      %v510 = vadd.f32 0.0, %v509
      %v511 = vpop.f32.mrb[0].mxu0
      %512 = vmatprep.mubr.f32.mxu0 %v303
      %513 = vmatmul.mubr.f32.gmra.mrb[0].mxu0 %v194
      %v514 = vpop.f32.mrb[0].mxu0
      %v515 = vadd.f32 0.0, %v514
      %v516 = vpop.f32.mrb[0].mxu0
      %517 = vmatprep.mubr.f32.mxu0 %v306
      %518 = vmatmul.mubr.f32.gmra.mrb[0].mxu0 %v196
      %v519 = vpop.f32.mrb[0].mxu0
      %v520 = vadd.f32 0.0, %v519
      %v521 = vpop.f32.mrb[0].mxu0
      %522 = vmatprep.mubr.f32.mxu0 %v309
      %523 = vmatmul.mubr.f32.gmra.mrb[0].mxu0 %v198
      %v524 = vpop.f32.mrb[0].mxu0
      %v525 = vadd.f32 0.0, %v524
      %v526 = vpop.f32.mrb[0].mxu0
      %527 = vmatprep.mubr.f32.mxu0 %v312
      %528 = vmatmul.mubr.f32.gmra.mrb[0].mxu0 %v200
      %v529 = vpop.f32.mrb[0].mxu0
      %v530 = vadd.f32 0.0, %v529
      %v531 = vpop.f32.mrb[0].mxu0
      %532 = vmatprep.mubr.f32.mxu0 %v315
      %533 = vmatmul.mubr.f32.gmra.mrb[0].mxu0 %v202
      %v534 = vpop.f32.mrb[0].mxu0
      %v535 = vadd.f32 0.0, %v534
      %v536 = vpop.f32.mrb[0].mxu0
      %537 = vmatprep.mubr.f32.mxu0 %v318
      %538 = vmatmul.mubr.f32.gmra.mrb[0].mxu0 %v204
      %v539 = vpop.f32.mrb[0].mxu0
      %v540 = vadd.f32 0.0, %v539
      %v541 = vpop.f32.mrb[0].mxu0
      %542 = vmatprep.mubr.f32.mxu0 %v321
      %543 = vmatmul.mubr.f32.gmra.mrb[0].mxu0 %v206
      %v544 = vpop.f32.mrb[0].mxu0
      %v545 = vadd.f32 0.0, %v544
      %v546 = vpop.f32.mrb[0].mxu0
      %547 = vdwg.mxu0
      %vm548 = vcmask 64512
      %v549 = vsel %vm548, %v390, 0.0
      %v550 = vsel %vm548, %v395, 0.0
      %v551 = vadd.f32 %v549, %v550
      %v552 = vsel %vm548, %v400, 0.0
      %v553 = vadd.f32 %v551, %v552
      %v554 = vsel %vm548, %v405, 0.0
      %v555 = vadd.f32 %v553, %v554
      %v556 = vsel %vm548, %v410, 0.0
      %v557 = vadd.f32 %v555, %v556
      %v558 = vsel %vm548, %v415, 0.0
      %v559 = vadd.f32 %v557, %v558
      %v560 = vsel %vm548, %v420, 0.0
      %v561 = vadd.f32 %v559, %v560
      %v562 = vsel %vm548, %v425, 0.0
      %v563 = vadd.f32 %v561, %v562
      %v564 = vsel %vm548, %v430, 0.0
      %v565 = vadd.f32 %v563, %v564
      %v566 = vsel %vm548, %v435, 0.0
      %v567 = vadd.f32 %v565, %v566
      %v568 = vsel %vm548, %v440, 0.0
      %v569 = vadd.f32 %v567, %v568
      %v570 = vsel %vm548, %v445, 0.0
      %v571 = vadd.f32 %v569, %v570
      %v572 = vsel %vm548, %v450, 0.0
      %v573 = vadd.f32 %v571, %v572
      %v574 = vsel %vm548, %v455, 0.0
      %v575 = vadd.f32 %v573, %v574
      %v576 = vsel %vm548, %v460, 0.0
      %v577 = vadd.f32 %v575, %v576
      %v578 = vsel %vm548, %v465, 0.0
      %v579 = vadd.f32 %v577, %v578
      %v580 = vsel %vm548, %v470, 0.0
      %v581 = vadd.f32 %v579, %v580
      %v582 = vsel %vm548, %v475, 0.0
      %v583 = vadd.f32 %v581, %v582
      %v584 = vsel %vm548, %v480, 0.0
      %v585 = vadd.f32 %v583, %v584
      %v586 = vsel %vm548, %v485, 0.0
      %v587 = vadd.f32 %v585, %v586
      %v588 = vsel %vm548, %v490, 0.0
      %v589 = vadd.f32 %v587, %v588
      %v590 = vsel %vm548, %v495, 0.0
      %v591 = vadd.f32 %v589, %v590
      %v592 = vsel %vm548, %v500, 0.0
      %v593 = vadd.f32 %v591, %v592
      %v594 = vsel %vm548, %v505, 0.0
      %v595 = vadd.f32 %v593, %v594
      %v596 = vsel %vm548, %v510, 0.0
      %v597 = vadd.f32 %v595, %v596
      %v598 = vsel %vm548, %v515, 0.0
      %v599 = vadd.f32 %v597, %v598
      %v600 = vsel %vm548, %v520, 0.0
      %v601 = vadd.f32 %v599, %v600
      %v602 = vsel %vm548, %v525, 0.0
      %v603 = vadd.f32 %v601, %v602
      %v604 = vsel %vm548, %v530, 0.0
      %v605 = vadd.f32 %v603, %v604
      %v606 = vsel %vm548, %v535, 0.0
      %v607 = vadd.f32 %v605, %v606
      %v608 = vsel %vm548, %v540, 0.0
      %v609 = vadd.f32 %v607, %v608
      %v610 = vsel %vm548, %v545, 0.0
      %v611 = vadd.f32 %v609, %v610
      %v612 = vrot.slane %v611, 4
      %v613 = vadd.f32 %v611, %v612
      %v614 = vrot.slane %v613, 2
      %v615 = vadd.f32 %v613, %v614
      %v616 = vrot.slane %v615, 1
      %v617 = vadd.f32 %v615, %v616
      %v618 = vmul.f32 %v390, %v390
      %v619 = vmul.f32 %v395, %v395
      %v620 = vmul.f32 %v400, %v400
      %v621 = vmul.f32 %v405, %v405
      %v622 = vmul.f32 %v410, %v410
      %v623 = vmul.f32 %v415, %v415
      %v624 = vmul.f32 %v420, %v420
      %v625 = vmul.f32 %v425, %v425
      %v626 = vmul.f32 %v430, %v430
      %v627 = vmul.f32 %v435, %v435
      %v628 = vmul.f32 %v440, %v440
      %v629 = vmul.f32 %v445, %v445
      %v630 = vmul.f32 %v450, %v450
      %v631 = vmul.f32 %v455, %v455
      %v632 = vmul.f32 %v460, %v460
      %v633 = vmul.f32 %v465, %v465
      %v634 = vmul.f32 %v470, %v470
      %v635 = vmul.f32 %v475, %v475
      %v636 = vmul.f32 %v480, %v480
      %v637 = vmul.f32 %v485, %v485
      %v638 = vmul.f32 %v490, %v490
      %v639 = vmul.f32 %v495, %v495
      %v640 = vmul.f32 %v500, %v500
      %v641 = vmul.f32 %v505, %v505
      %v642 = vmul.f32 %v510, %v510
      %v643 = vmul.f32 %v515, %v515
      %v644 = vmul.f32 %v520, %v520
      %v645 = vmul.f32 %v525, %v525
      %v646 = vmul.f32 %v530, %v530
      %v647 = vmul.f32 %v535, %v535
      %v648 = vmul.f32 %v540, %v540
      %v649 = vmul.f32 %v545, %v545
      %v650 = vsel %vm548, %v618, 0.0
      %v651 = vsel %vm548, %v619, 0.0
      %v652 = vadd.f32 %v650, %v651
      %v653 = vsel %vm548, %v620, 0.0
      %v654 = vadd.f32 %v652, %v653
      %v655 = vsel %vm548, %v621, 0.0
      %v656 = vadd.f32 %v654, %v655
      %v657 = vsel %vm548, %v622, 0.0
      %v658 = vadd.f32 %v656, %v657
      %v659 = vsel %vm548, %v623, 0.0
      %v660 = vadd.f32 %v658, %v659
      %v661 = vsel %vm548, %v624, 0.0
      %v662 = vadd.f32 %v660, %v661
      %v663 = vsel %vm548, %v625, 0.0
      %v664 = vadd.f32 %v662, %v663
      %v665 = vsel %vm548, %v626, 0.0
      %v666 = vadd.f32 %v664, %v665
      %v667 = vsel %vm548, %v627, 0.0
      %v668 = vadd.f32 %v666, %v667
      %v669 = vsel %vm548, %v628, 0.0
      %v670 = vadd.f32 %v668, %v669
      %v671 = vsel %vm548, %v629, 0.0
      %v672 = vadd.f32 %v670, %v671
      %v673 = vsel %vm548, %v630, 0.0
      %v674 = vadd.f32 %v672, %v673
      %v675 = vsel %vm548, %v631, 0.0
      %v676 = vadd.f32 %v674, %v675
      %v677 = vsel %vm548, %v632, 0.0
      %v678 = vadd.f32 %v676, %v677
      %v679 = vsel %vm548, %v633, 0.0
      %v680 = vadd.f32 %v678, %v679
      %v681 = vsel %vm548, %v634, 0.0
      %v682 = vadd.f32 %v680, %v681
      %v683 = vsel %vm548, %v635, 0.0
      %v684 = vadd.f32 %v682, %v683
      %v685 = vsel %vm548, %v636, 0.0
      %v686 = vadd.f32 %v684, %v685
      %v687 = vsel %vm548, %v637, 0.0
      %v688 = vadd.f32 %v686, %v687
      %v689 = vsel %vm548, %v638, 0.0
      %v690 = vadd.f32 %v688, %v689
      %v691 = vsel %vm548, %v639, 0.0
      %v692 = vadd.f32 %v690, %v691
      %v693 = vsel %vm548, %v640, 0.0
      %v694 = vadd.f32 %v692, %v693
      %v695 = vsel %vm548, %v641, 0.0
      %v696 = vadd.f32 %v694, %v695
      %v697 = vsel %vm548, %v642, 0.0
      %v698 = vadd.f32 %v696, %v697
      %v699 = vsel %vm548, %v643, 0.0
      %v700 = vadd.f32 %v698, %v699
      %v701 = vsel %vm548, %v644, 0.0
      %v702 = vadd.f32 %v700, %v701
      %v703 = vsel %vm548, %v645, 0.0
      %v704 = vadd.f32 %v702, %v703
      %v705 = vsel %vm548, %v646, 0.0
      %v706 = vadd.f32 %v704, %v705
      %v707 = vsel %vm548, %v647, 0.0
      %v708 = vadd.f32 %v706, %v707
      %v709 = vsel %vm548, %v648, 0.0
      %v710 = vadd.f32 %v708, %v709
      %v711 = vsel %vm548, %v649, 0.0
      %v712 = vadd.f32 %v710, %v711
      %v713 = vrot.slane %v712, 4
      %v714 = vadd.f32 %v712, %v713
      %v715 = vrot.slane %v714, 2
      %v716 = vadd.f32 %v714, %v715
      %v717 = vrot.slane %v716, 1
      %v718 = vadd.f32 %v716, %v717
      %v719 = vrcp.pop 256.0
      %v720 = vmul.f32 %v617, %v719
      %v721 = vmul.f32 %v718, %v719
      %v722 = vmul.f32 %v720, %v720
      %v723 = vsub.f32 %v721, %v722
      %v724 = vadd.f32 %v723, 1e-05
      %v725 = vrsqrt.pop %v724
      %v726 = vsub.f32 0.0, %v720
      %v727 = vmul.f32 %v726, %v725
      %v728 = vmul.f32 %v390, %v725
      %v729 = vmul.f32 %v395, %v725
      %v730 = vmul.f32 %v400, %v725
      %v731 = vmul.f32 %v405, %v725
      %v732 = vmul.f32 %v410, %v725
      %v733 = vmul.f32 %v415, %v725
      %v734 = vmul.f32 %v420, %v725
      %v735 = vmul.f32 %v425, %v725
      %v736 = vmul.f32 %v430, %v725
      %v737 = vmul.f32 %v435, %v725
      %v738 = vmul.f32 %v440, %v725
      %v739 = vmul.f32 %v445, %v725
      %v740 = vmul.f32 %v450, %v725
      %v741 = vmul.f32 %v455, %v725
      %v742 = vmul.f32 %v460, %v725
      %v743 = vmul.f32 %v465, %v725
      %v744 = vmul.f32 %v470, %v725
      %v745 = vmul.f32 %v475, %v725
      %v746 = vmul.f32 %v480, %v725
      %v747 = vmul.f32 %v485, %v725
      %v748 = vmul.f32 %v490, %v725
      %v749 = vmul.f32 %v495, %v725
      %v750 = vmul.f32 %v500, %v725
      %v751 = vmul.f32 %v505, %v725
      %v752 = vmul.f32 %v510, %v725
      %v753 = vmul.f32 %v515, %v725
      %v754 = vmul.f32 %v520, %v725
      %v755 = vmul.f32 %v525, %v725
      %v756 = vmul.f32 %v530, %v725
      %v757 = vmul.f32 %v535, %v725
      %v758 = vmul.f32 %v540, %v725
      %v759 = vmul.f32 %v545, %v725
      %v760 = vadd.f32 %v728, %v727
      %v761 = vadd.f32 %v729, %v727
      %v762 = vadd.f32 %v730, %v727
      %v763 = vadd.f32 %v731, %v727
      %v764 = vadd.f32 %v732, %v727
      %v765 = vadd.f32 %v733, %v727
      %v766 = vadd.f32 %v734, %v727
      %v767 = vadd.f32 %v735, %v727
      %v768 = vadd.f32 %v736, %v727
      %v769 = vadd.f32 %v737, %v727
      %v770 = vadd.f32 %v738, %v727
      %v771 = vadd.f32 %v739, %v727
      %v772 = vadd.f32 %v740, %v727
      %v773 = vadd.f32 %v741, %v727
      %v774 = vadd.f32 %v742, %v727
      %v775 = vadd.f32 %v743, %v727
      %v776 = vadd.f32 %v744, %v727
      %v777 = vadd.f32 %v745, %v727
      %v778 = vadd.f32 %v746, %v727
      %v779 = vadd.f32 %v747, %v727
      %v780 = vadd.f32 %v748, %v727
      %v781 = vadd.f32 %v749, %v727
      %v782 = vadd.f32 %v750, %v727
      %v783 = vadd.f32 %v751, %v727
      %v784 = vadd.f32 %v752, %v727
      %v785 = vadd.f32 %v753, %v727
      %v786 = vadd.f32 %v754, %v727
      %v787 = vadd.f32 %v755, %v727
      %v788 = vadd.f32 %v756, %v727
      %v789 = vadd.f32 %v757, %v727
      %v790 = vadd.f32 %v758, %v727
      %v791 = vadd.f32 %v759, %v727
      %vm792 = vcmp.ge.f32.partialorder %v760, 0.0
      %vm793 = vcmp.ge.f32.partialorder %v761, 0.0
      %vm794 = vcmp.ge.f32.partialorder %v762, 0.0
      %vm795 = vcmp.ge.f32.partialorder %v763, 0.0
      %vm796 = vcmp.ge.f32.partialorder %v764, 0.0
      %vm797 = vcmp.ge.f32.partialorder %v765, 0.0
      %vm798 = vcmp.ge.f32.partialorder %v766, 0.0
      %vm799 = vcmp.ge.f32.partialorder %v767, 0.0
      %vm800 = vcmp.ge.f32.partialorder %v768, 0.0
      %vm801 = vcmp.ge.f32.partialorder %v769, 0.0
      %vm802 = vcmp.ge.f32.partialorder %v770, 0.0
      %vm803 = vcmp.ge.f32.partialorder %v771, 0.0
      %vm804 = vcmp.ge.f32.partialorder %v772, 0.0
      %vm805 = vcmp.ge.f32.partialorder %v773, 0.0
      %vm806 = vcmp.ge.f32.partialorder %v774, 0.0
      %vm807 = vcmp.ge.f32.partialorder %v775, 0.0
      %vm808 = vcmp.ge.f32.partialorder %v776, 0.0
      %vm809 = vcmp.ge.f32.partialorder %v777, 0.0
      %vm810 = vcmp.ge.f32.partialorder %v778, 0.0
      %vm811 = vcmp.ge.f32.partialorder %v779, 0.0
      %vm812 = vcmp.ge.f32.partialorder %v780, 0.0
      %vm813 = vcmp.ge.f32.partialorder %v781, 0.0
      %vm814 = vcmp.ge.f32.partialorder %v782, 0.0
      %vm815 = vcmp.ge.f32.partialorder %v783, 0.0
      %vm816 = vcmp.ge.f32.partialorder %v784, 0.0
      %vm817 = vcmp.ge.f32.partialorder %v785, 0.0
      %vm818 = vcmp.ge.f32.partialorder %v786, 0.0
      %vm819 = vcmp.ge.f32.partialorder %v787, 0.0
      %vm820 = vcmp.ge.f32.partialorder %v788, 0.0
      %vm821 = vcmp.ge.f32.partialorder %v789, 0.0
      %vm822 = vcmp.ge.f32.partialorder %v790, 0.0
      %vm823 = vcmp.ge.f32.partialorder %v791, 0.0
      %v824 = vmul.f32 %v760, 0.2
      %v825 = vmul.f32 %v761, 0.2
      %v826 = vmul.f32 %v762, 0.2
      %v827 = vmul.f32 %v763, 0.2
      %v828 = vmul.f32 %v764, 0.2
      %v829 = vmul.f32 %v765, 0.2
      %v830 = vmul.f32 %v766, 0.2
      %v831 = vmul.f32 %v767, 0.2
      %v832 = vmul.f32 %v768, 0.2
      %v833 = vmul.f32 %v769, 0.2
      %v834 = vmul.f32 %v770, 0.2
      %v835 = vmul.f32 %v771, 0.2
      %v836 = vmul.f32 %v772, 0.2
      %v837 = vmul.f32 %v773, 0.2
      %v838 = vmul.f32 %v774, 0.2
      %v839 = vmul.f32 %v775, 0.2
      %v840 = vmul.f32 %v776, 0.2
      %v841 = vmul.f32 %v777, 0.2
      %v842 = vmul.f32 %v778, 0.2
      %v843 = vmul.f32 %v779, 0.2
      %v844 = vmul.f32 %v780, 0.2
      %v845 = vmul.f32 %v781, 0.2
      %v846 = vmul.f32 %v782, 0.2
      %v847 = vmul.f32 %v783, 0.2
      %v848 = vmul.f32 %v784, 0.2
      %v849 = vmul.f32 %v785, 0.2
      %v850 = vmul.f32 %v786, 0.2
      %v851 = vmul.f32 %v787, 0.2
      %v852 = vmul.f32 %v788, 0.2
      %v853 = vmul.f32 %v789, 0.2
      %v854 = vmul.f32 %v790, 0.2
      %v855 = vmul.f32 %v791, 0.2
      %v856 = vsel %vm792, %v760, %v824
      %v857 = vsel %vm793, %v761, %v825
      %v858 = vsel %vm794, %v762, %v826
      %v859 = vsel %vm795, %v763, %v827
      %v860 = vsel %vm796, %v764, %v828
      %v861 = vsel %vm797, %v765, %v829
      %v862 = vsel %vm798, %v766, %v830
      %v863 = vsel %vm799, %v767, %v831
      %v864 = vsel %vm800, %v768, %v832
      %v865 = vsel %vm801, %v769, %v833
      %v866 = vsel %vm802, %v770, %v834
      %v867 = vsel %vm803, %v771, %v835
      %v868 = vsel %vm804, %v772, %v836
      %v869 = vsel %vm805, %v773, %v837
      %v870 = vsel %vm806, %v774, %v838
      %v871 = vsel %vm807, %v775, %v839
      %v872 = vsel %vm808, %v776, %v840
      %v873 = vsel %vm809, %v777, %v841
      %v874 = vsel %vm810, %v778, %v842
      %v875 = vsel %vm811, %v779, %v843
      %v876 = vsel %vm812, %v780, %v844
      %v877 = vsel %vm813, %v781, %v845
      %v878 = vsel %vm814, %v782, %v846
      %v879 = vsel %vm815, %v783, %v847
      %v880 = vsel %vm816, %v784, %v848
      %v881 = vsel %vm817, %v785, %v849
      %v882 = vsel %vm818, %v786, %v850
      %v883 = vsel %vm819, %v787, %v851
      %v884 = vsel %vm820, %v788, %v852
      %v885 = vsel %vm821, %v789, %v853
      %v886 = vsel %vm822, %v790, %v854
      %v887 = vsel %vm823, %v791, %v855
      %888 = vst.msk [vmem:[%s143] sm:$0xff] %vm548, %v856
      %889 = vst.msk [vmem:[%s143 + $0x8] sm:$0xff] %vm548, %v857
      %890 = vst.msk [vmem:[%s143 + $0x10] sm:$0xff] %vm548, %v858
      %891 = vst.msk [vmem:[%s143 + $0x18] sm:$0xff] %vm548, %v859
      %892 = vst.msk [vmem:[%s143 + $0x20] sm:$0xff] %vm548, %v860
      %893 = vst.msk [vmem:[%s143 + $0x28] sm:$0xff] %vm548, %v861
      %894 = vst.msk [vmem:[%s143 + $0x30] sm:$0xff] %vm548, %v862
      %895 = vst.msk [vmem:[%s143 + $0x38] sm:$0xff] %vm548, %v863
      %896 = vst.msk [vmem:[%s143 + $0x40] sm:$0xff] %vm548, %v864
      %897 = vst.msk [vmem:[%s143 + $0x48] sm:$0xff] %vm548, %v865
      %898 = vst.msk [vmem:[%s143 + $0x50] sm:$0xff] %vm548, %v866
      %899 = vst.msk [vmem:[%s143 + $0x58] sm:$0xff] %vm548, %v867
      %900 = vst.msk [vmem:[%s143 + $0x60] sm:$0xff] %vm548, %v868
      %901 = vst.msk [vmem:[%s143 + $0x68] sm:$0xff] %vm548, %v869
      %902 = vst.msk [vmem:[%s143 + $0x70] sm:$0xff] %vm548, %v870
      %903 = vst.msk [vmem:[%s143 + $0x78] sm:$0xff] %vm548, %v871
      %904 = vst.msk [vmem:[%s143 + $0x80] sm:$0xff] %vm548, %v872
      %905 = vst.msk [vmem:[%s143 + $0x88] sm:$0xff] %vm548, %v873
      %906 = vst.msk [vmem:[%s143 + $0x90] sm:$0xff] %vm548, %v874
      %907 = vst.msk [vmem:[%s143 + $0x98] sm:$0xff] %vm548, %v875
      %908 = vst.msk [vmem:[%s143 + $0xa0] sm:$0xff] %vm548, %v876
      %909 = vst.msk [vmem:[%s143 + $0xa8] sm:$0xff] %vm548, %v877
      %910 = vst.msk [vmem:[%s143 + $0xb0] sm:$0xff] %vm548, %v878
      %911 = vst.msk [vmem:[%s143 + $0xb8] sm:$0xff] %vm548, %v879
      %912 = vst.msk [vmem:[%s143 + $0xc0] sm:$0xff] %vm548, %v880
      %913 = vst.msk [vmem:[%s143 + $0xc8] sm:$0xff] %vm548, %v881
      %914 = vst.msk [vmem:[%s143 + $0xd0] sm:$0xff] %vm548, %v882
      %915 = vst.msk [vmem:[%s143 + $0xd8] sm:$0xff] %vm548, %v883
      %916 = vst.msk [vmem:[%s143 + $0xe0] sm:$0xff] %vm548, %v884
      %917 = vst.msk [vmem:[%s143 + $0xe8] sm:$0xff] %vm548, %v885
      %918 = vst.msk [vmem:[%s143 + $0xf0] sm:$0xff] %vm548, %v886
      %919 = vst.msk [vmem:[%s143 + $0xf8] sm:$0xff] %vm548, %v887
      %p920 = scmp.lt.s32.totalorder %s13, 1
      %s921 = scalar_select %p920, %s13, 1
      %s922 = smul.addr %s921, 32
      %s923 = smul.addr %s922, 8
      %s924 = scalar_lea.vmem %s2, %s923
      // Predicated region
      $region29: #{unet_forward.33} parent=27 // pred_check
        %p925 = pneg %p78
      $region30: #{unet_forward.33} parent=27 // pred_check_branch
        %927 = sbr.rel (%p925) target = $region32
      $region31: #{unet_forward.33} parent=27 // pred_region
        _
      $region32: #{unet_forward.33} parent=27 // pred_fallthru
        _
    $region28: #{unet_forward.33} parent=5 // pred_fallthru
      _
    %p928 = scmp.le.s32.totalorder 2, %s8
    // Predicated region
    $region33: #{unet_forward.33} parent=5 // pred_check
      %p929 = pneg %p928
    $region34: #{unet_forward.33} parent=5 // pred_check_branch
      %931 = sbr.rel (%p929) target = $region36
    $region35: #{unet_forward.33} parent=5 // pred_region
      %s932 = ssub.s32 %s8, 2
      // Predicated region
      $region37: #{unet_forward.33} parent=35 // pred_check
        %p933 = pneg %p84
      $region38: #{unet_forward.33} parent=35 // pred_check_branch
        %935 = sbr.rel (%p933) target = $region40
      $region39: #{unet_forward.33} parent=35 // pred_region
        %p936 = scmp.lt.s32.totalorder %s14, 1
        %s937 = scalar_select %p936, %s14, 1
        %s938 = smul.addr %s937, 32
        %s939 = smul.addr %s938, 8
        %s940 = scalar_lea.vmem %s2, %s939
      $region40: #{unet_forward.33} parent=35 // pred_fallthru
        _
    $region36: #{unet_forward.33} parent=5 // pred_fallthru
      _
  $region6: #{unet_forward.33} parent=0 // loop_footer
    %s12 = sadd.s32 1, %s8
  $region7: #{unet_forward.33} parent=0 // loop_footer_branch
    %7 = sbr.rel target = $region3
  $region8: #{unet_forward.33} parent=0 // loop_exit
    _

// kernel: unet_forward.35
$region0: #{unet_forward.35}
  #allocation0 [shape = 'u32[]', space=smem, size = 0x4, offset = 0x4, fixed_abs, tag = 'smem constant byte address 0x4 - core index']
  #allocation1 [shape = 'u32[144,128]{1,0:T(1,128)}', space=vmem, size = 0x12000, scoped, tag = 'internal scratch']
  %s0 = inlined_call_operand.vmem [shape: f32[2,256,8], index: 0, kind: input, shape index: {}]
  %s1 = inlined_call_operand.vmem [shape: f32[8,4], index: 1, kind: input, shape index: {}]
  %s2 = inlined_call_operand.vmem [shape: f32[1,4], index: 2, kind: input, shape index: {}]
  %s3 = inlined_call_operand.vmem [shape: f32[2,256,4], index: 3, kind: output, shape index: {}]
  %s4 = sld [smem:[#allocation0]]
  $region45: #{unet_forward.35} parent=0
    _
  %s6 = ssub.s32 1, %s4
  %s7 = scalar_select 0, %s6, %s4
  loop: start=0, step=1, limit=4
  $region2: #{unet_forward.35} parent=0 // loop_pre_header
    _
  $region3: #{unet_forward.35} parent=0 // loop_header
    %s9 = sphi 0, %s13
    %p10 = scmp.ge.s32.totalorder %s9, 4
    %s19 = sphi 0, %s21
    %s22 = sphi 0, %s19
    %s23 = sphi 0, %s22
    %s39 = sphi 0, %s23
    %s43 = sphi 0, %s43
    %s45 = sphi 0, %s43
    %s46 = sphi 0, %s45
    %s60 = sphi 0, %s46
    %s64 = sphi 0, %s64
    %s66 = sphi 0, %s64
    %s67 = sphi 0, %s66
    %s81 = sphi 0, %s67
    %s87 = sphi 0, %s89
    %s90 = sphi 0, %s87
    %s91 = sphi 0, %s90
    %s107 = sphi 0, %s91
  $region4: #{unet_forward.35} parent=0 // loop_header_branch
    %12 = sbr.rel (%p10) target = $region8
  $region5: #{unet_forward.35} parent=0 // loop_body
    %s14 = ssub.s32 %s9, 1
    %s15 = ssub.s32 %s9, 2
    %s16 = sadd.s32 %s9, 1
    %s17 = ssub.s32 %s9, %s16
    %p18 = scmp.eq.s32.totalorder %s17, 0
    %s20 = sadd.s32 %s19, 1
    %s21 = scalar_select %p18, %s19, %s20
    %p24 = pneg %p18
    %p25 = scmp.eq.s32.totalorder %s9, 1
    %p26 = por %p24, %p25
    %p27 = scmp.ne.s32.totalorder %s19, %s22
    %p28 = scmp.eq.s32.totalorder %s9, 0
    %p29 = por %p27, %p28
    %p30 = scmp.ne.s32.totalorder %s19, %s22
    %p31 = scmp.eq.s32.totalorder %s14, 1
    %p32 = por %p30, %p31
    %p33 = scmp.ne.s32.totalorder %s22, %s23
    %p34 = scmp.eq.s32.totalorder %s14, 0
    %p35 = por %p33, %p34
    %p36 = scmp.ne.s32.totalorder %s22, %s23
    %p37 = scmp.eq.s32.totalorder %s15, 1
    %p38 = por %p36, %p37
    %p40 = scmp.ne.s32.totalorder %s23, %s39
    %p41 = scmp.eq.s32.totalorder %s15, 0
    %p42 = por %p40, %p41
    %s44 = sadd.s32 %s43, 1
    %p47 = scmp.eq.s32.totalorder %s9, 1
    %p48 = scmp.ne.s32.totalorder %s43, %s45
    %p49 = scmp.eq.s32.totalorder %s9, 0
    %p50 = por %p48, %p49
    %p51 = scmp.ne.s32.totalorder %s43, %s45
    %p52 = scmp.eq.s32.totalorder %s14, 1
    %p53 = por %p51, %p52
    %p54 = scmp.ne.s32.totalorder %s45, %s46
    %p55 = scmp.eq.s32.totalorder %s14, 0
    %p56 = por %p54, %p55
    %p57 = scmp.ne.s32.totalorder %s45, %s46
    %p58 = scmp.eq.s32.totalorder %s15, 1
    %p59 = por %p57, %p58
    %p61 = scmp.ne.s32.totalorder %s46, %s60
    %p62 = scmp.eq.s32.totalorder %s15, 0
    %p63 = por %p61, %p62
    %s65 = sadd.s32 %s64, 1
    %p68 = scmp.eq.s32.totalorder %s9, 1
    %p69 = scmp.ne.s32.totalorder %s64, %s66
    %p70 = scmp.eq.s32.totalorder %s9, 0
    %p71 = por %p69, %p70
    %p72 = scmp.ne.s32.totalorder %s64, %s66
    %p73 = scmp.eq.s32.totalorder %s14, 1
    %p74 = por %p72, %p73
    %p75 = scmp.ne.s32.totalorder %s66, %s67
    %p76 = scmp.eq.s32.totalorder %s14, 0
    %p77 = por %p75, %p76
    %p78 = scmp.ne.s32.totalorder %s66, %s67
    %p79 = scmp.eq.s32.totalorder %s15, 1
    %p80 = por %p78, %p79
    %p82 = scmp.ne.s32.totalorder %s67, %s81
    %p83 = scmp.eq.s32.totalorder %s15, 0
    %p84 = por %p82, %p83
    %s85 = ssub.s32 %s9, %s16
    %p86 = scmp.eq.s32.totalorder %s85, 0
    %s88 = sadd.s32 %s87, 1
    %s89 = scalar_select %p86, %s87, %s88
    %p92 = pneg %p86
    %p93 = scmp.eq.s32.totalorder %s9, 1
    %p94 = por %p92, %p93
    %p95 = scmp.ne.s32.totalorder %s87, %s90
    %p96 = scmp.eq.s32.totalorder %s9, 0
    %p97 = por %p95, %p96
    %p98 = scmp.ne.s32.totalorder %s87, %s90
    %p99 = scmp.eq.s32.totalorder %s14, 1
    %p100 = por %p98, %p99
    %p101 = scmp.ne.s32.totalorder %s90, %s91
    %p102 = scmp.eq.s32.totalorder %s14, 0
    %p103 = por %p101, %p102
    %p104 = scmp.ne.s32.totalorder %s90, %s91
    %p105 = scmp.eq.s32.totalorder %s15, 1
    %p106 = por %p104, %p105
    %p108 = scmp.ne.s32.totalorder %s91, %s107
    %p109 = scmp.eq.s32.totalorder %s15, 0
    %p110 = por %p108, %p109
    %p111 = scmp.le.s32.totalorder 1, %s9
    %p112 = scmp.lt.s32.totalorder %s9, 3
    %p113 = pnand %p111, %p112
    %p114 = pneg %p113
    // Predicated region
    $region9: #{unet_forward.35} parent=5 // pred_check
      _
    $region10: #{unet_forward.35} parent=5 // pred_check_branch
      %116 = sbr.rel (%p113) target = $region12
    $region11: #{unet_forward.35} parent=5 // pred_region
      %s117 = ssub.s32 %s9, 1
      // Predicated region
      $region13: #{unet_forward.35} parent=11 // pred_check
        %p118 = pneg %p56
      $region14: #{unet_forward.35} parent=11 // pred_check_branch
        %120 = sbr.rel (%p118) target = $region16
      $region15: #{unet_forward.35} parent=11 // pred_region
        _
      $region16: #{unet_forward.35} parent=11 // pred_fallthru
        _
      // Predicated region
      $region17: #{unet_forward.35} parent=11 // pred_check
        %p121 = pneg %p77
      $region18: #{unet_forward.35} parent=11 // pred_check_branch
        %123 = sbr.rel (%p121) target = $region20
      $region19: #{unet_forward.35} parent=11 // pred_region
        _
      $region20: #{unet_forward.35} parent=11 // pred_fallthru
        _
    $region12: #{unet_forward.35} parent=5 // pred_fallthru
      _
    %p124 = scmp.lt.s32.totalorder %s9, 2
    // Predicated region
    $region21: #{unet_forward.35} parent=5 // pred_check
      %p125 = pneg %p124
    $region22: #{unet_forward.35} parent=5 // pred_check_branch
      %127 = sbr.rel (%p125) target = $region24
    $region23: #{unet_forward.35} parent=5 // pred_region
      // Predicated region
      $region25: #{unet_forward.35} parent=23 // pred_check
        %p128 = pneg %p29
      $region26: #{unet_forward.35} parent=23 // pred_check_branch
        %130 = sbr.rel (%p128) target = $region28
      $region27: #{unet_forward.35} parent=23 // pred_region
        %p131 = scmp.lt.s32.totalorder %s9, 1
        %s132 = scalar_select %p131, %s9, 1
        %s133 = smul.addr %s132, 32
        %s134 = smul.addr %s133, 8
        %s135 = scalar_lea.vmem %s0, %s134
      $region28: #{unet_forward.35} parent=23 // pred_fallthru
        _
    $region24: #{unet_forward.35} parent=5 // pred_fallthru
      _
    %p136 = scmp.le.s32.totalorder 1, %s9
    %p137 = scmp.lt.s32.totalorder %s9, 3
    %p138 = pnand %p136, %p137
    %p139 = pneg %p138
    // Predicated region
    $region29: #{unet_forward.35} parent=5 // pred_check
      _
    $region30: #{unet_forward.35} parent=5 // pred_check_branch
      %141 = sbr.rel (%p138) target = $region32
    $region31: #{unet_forward.35} parent=5 // pred_region
      %s142 = ssub.s32 %s9, 1
      %p143 = scmp.lt.s32.totalorder %s14, 1
      %s144 = scalar_select %p143, %s14, 1
      %s145 = smul.addr %s144, 32
      %s146 = smul.addr %s145, 8
      %s147 = scalar_lea.vmem %s0, %s146
      %p148 = pneg %p35
      %p149 = pneg %p32
      %p150 = pneg %p56
      %p151 = pneg %p53
      %p152 = pneg %p77
      %p153 = pneg %p74
      %p154 = pneg %p103
      %p155 = pneg %p100
      %p156 = scmp.lt.s32.totalorder %s14, 1
      %s157 = scalar_select %p156, %s14, 1
      %s158 = smul.addr %s157, 32
      %s159 = smul.addr %s158, 8
      %s160 = scalar_lea.vmem %s3, %s159
      %p161 = scmp.lt.s32.totalorder %s14, 1
      %s162 = scalar_select %p161, %s14, 1
      %s163 = smul.addr %s162, 32
      %s164 = smul.addr %s163, 8
      %s165 = scalar_lea.vmem %s0, %s164
      %p166 = scmp.lt.s32.totalorder %s14, 1
      %s167 = scalar_select %p166, %s14, 1
      %s168 = smul.addr %s167, 32
      %s169 = smul.addr %s168, 8
      %s170 = scalar_lea.vmem %s3, %s169
      %v171 = vld [vmem:[%s165] sm:$0xff]
      %v172 = vld [vmem:[%s165 + $0x8] sm:$0xff]
      %v173 = vld [vmem:[%s165 + $0x10] sm:$0xff]
      %v174 = vld [vmem:[%s165 + $0x18] sm:$0xff]
      %v175 = vld [vmem:[%s165 + $0x20] sm:$0xff]
      %v176 = vld [vmem:[%s165 + $0x28] sm:$0xff]
      %v177 = vld [vmem:[%s165 + $0x30] sm:$0xff]
      %v178 = vld [vmem:[%s165 + $0x38] sm:$0xff]
      %v179 = vld [vmem:[%s165 + $0x40] sm:$0xff]
      %v180 = vld [vmem:[%s165 + $0x48] sm:$0xff]
      %v181 = vld [vmem:[%s165 + $0x50] sm:$0xff]
      %v182 = vld [vmem:[%s165 + $0x58] sm:$0xff]
      %v183 = vld [vmem:[%s165 + $0x60] sm:$0xff]
      %v184 = vld [vmem:[%s165 + $0x68] sm:$0xff]
      %v185 = vld [vmem:[%s165 + $0x70] sm:$0xff]
      %v186 = vld [vmem:[%s165 + $0x78] sm:$0xff]
      %v187 = vld [vmem:[%s165 + $0x80] sm:$0xff]
      %v188 = vld [vmem:[%s165 + $0x88] sm:$0xff]
      %v189 = vld [vmem:[%s165 + $0x90] sm:$0xff]
      %v190 = vld [vmem:[%s165 + $0x98] sm:$0xff]
      %v191 = vld [vmem:[%s165 + $0xa0] sm:$0xff]
      %v192 = vld [vmem:[%s165 + $0xa8] sm:$0xff]
      %v193 = vld [vmem:[%s165 + $0xb0] sm:$0xff]
      %v194 = vld [vmem:[%s165 + $0xb8] sm:$0xff]
      %v195 = vld [vmem:[%s165 + $0xc0] sm:$0xff]
      %v196 = vld [vmem:[%s165 + $0xc8] sm:$0xff]
      %v197 = vld [vmem:[%s165 + $0xd0] sm:$0xff]
      %v198 = vld [vmem:[%s165 + $0xd8] sm:$0xff]
      %v199 = vld [vmem:[%s165 + $0xe0] sm:$0xff]
      %v200 = vld [vmem:[%s165 + $0xe8] sm:$0xff]
      %v201 = vld [vmem:[%s165 + $0xf0] sm:$0xff]
      %v202 = vld [vmem:[%s165 + $0xf8] sm:$0xff]
      %v203 = vld [vmem:[%s1] sm:$0xff]
      %v204 = vld [vmem:[%s2] sm:$0x1]
      %v206 = vlaneseq
      %v207 = vshrl.u32 %v206, 7
      %v208 = vsub.s32 0, %v207
      %v209 = vrot.slane %v204, %v208
      %vm211 = vcmask 64512
      %v213 = vsel %vm211, %v171, 0
      %v216 = vsel %vm211, %v172, 0
      %v219 = vsel %vm211, %v173, 0
      %v222 = vsel %vm211, %v174, 0
      %v225 = vsel %vm211, %v175, 0
      %v228 = vsel %vm211, %v176, 0
      %v231 = vsel %vm211, %v177, 0
      %v234 = vsel %vm211, %v178, 0
      %v237 = vsel %vm211, %v179, 0
      %v240 = vsel %vm211, %v180, 0
      %v243 = vsel %vm211, %v181, 0
      %v246 = vsel %vm211, %v182, 0
      %v249 = vsel %vm211, %v183, 0
      %v252 = vsel %vm211, %v184, 0
      %v255 = vsel %vm211, %v185, 0
      %v258 = vsel %vm211, %v186, 0
      %v261 = vsel %vm211, %v187, 0
      %v264 = vsel %vm211, %v188, 0
      %v267 = vsel %vm211, %v189, 0
      %v270 = vsel %vm211, %v190, 0
      %v273 = vsel %vm211, %v191, 0
      %v276 = vsel %vm211, %v192, 0
      %v279 = vsel %vm211, %v193, 0
      %v282 = vsel %vm211, %v194, 0
      %v285 = vsel %vm211, %v195, 0
      %v288 = vsel %vm211, %v196, 0
      %v291 = vsel %vm211, %v197, 0
      %v294 = vsel %vm211, %v198, 0
      %v297 = vsel %vm211, %v199, 0
      %v300 = vsel %vm211, %v200, 0
      %v303 = vsel %vm211, %v201, 0
      %v306 = vsel %vm211, %v202, 0
      %308 = vmatprep.subr.mxu0 0.0
      %309 = vmatpush1.msra.mxu0 %v203
      %310 = vmatprep.subr.mxu0 0.0
      %311 = vmatpush1.msra.mxu0 0.0
      %312 = vmatprep.subr.mxu0 0.0
      %313 = vmatpush1.msra.mxu0 0.0
      %314 = vmatprep.subr.mxu0 0.0
      %315 = vmatpush1.msra.mxu0 0.0
      %316 = vmatprep.subr.mxu0 0.0
      %317 = vmatpush1.msra.mxu0 0.0
      %318 = vmatprep.subr.mxu0 0.0
      %319 = vmatpush1.msra.mxu0 0.0
      %320 = vmatprep.subr.mxu0 0.0
      %321 = vmatpush1.msra.mxu0 0.0
      %322 = vmatprep.subr.mxu0 0.0
      %323 = vmatpush1.msra.mxu0 0.0
      %324 = vmatprep.subr.mxu0 0.0
      %325 = vmatpush1.msra.mxu0 0.0
      %326 = vmatprep.subr.mxu0 0.0
      %327 = vmatpush1.msra.mxu0 0.0
      %328 = vmatprep.subr.mxu0 0.0
      %329 = vmatpush1.msra.mxu0 0.0
      %330 = vmatprep.subr.mxu0 0.0
      %331 = vmatpush1.msra.mxu0 0.0
      %332 = vmatprep.subr.mxu0 0.0
      %333 = vmatpush1.msra.mxu0 0.0
      %334 = vmatprep.subr.mxu0 0.0
      %335 = vmatpush1.msra.mxu0 0.0
      %336 = vmatprep.subr.mxu0 0.0
      %337 = vmatpush1.msra.mxu0 0.0
      %338 = vmatprep.subr.mxu0 0.0
      %339 = vmatpush1.msra.mxu0 0.0
      %340 = vmatprep.subr.mxu0 0.0
      %341 = vmatpush1.msra.mxu0 0.0
      %342 = vmatprep.subr.mxu0 0.0
      %343 = vmatpush1.msra.mxu0 0.0
      %344 = vmatprep.subr.mxu0 0.0
      %345 = vmatpush1.msra.mxu0 0.0
      %346 = vmatprep.subr.mxu0 0.0
      %347 = vmatpush1.msra.mxu0 0.0
      %348 = vmatprep.subr.mxu0 0.0
      %349 = vmatpush1.msra.mxu0 0.0
      %350 = vmatprep.subr.mxu0 0.0
      %351 = vmatpush1.msra.mxu0 0.0
      %352 = vmatprep.subr.mxu0 0.0
      %353 = vmatpush1.msra.mxu0 0.0
      %354 = vmatprep.subr.mxu0 0.0
      %355 = vmatpush1.msra.mxu0 0.0
      %356 = vmatprep.subr.mxu0 0.0
      %357 = vmatpush1.msra.mxu0 0.0
      %358 = vmatprep.subr.mxu0 0.0
      %359 = vmatpush1.msra.mxu0 0.0
      %360 = vmatprep.subr.mxu0 0.0
      %361 = vmatpush1.msra.mxu0 0.0
      %362 = vmatprep.subr.mxu0 0.0
      %363 = vmatpush1.msra.mxu0 0.0
      %364 = vmatprep.subr.mxu0 0.0
      %365 = vmatpush1.msra.mxu0 0.0
      %366 = vmatprep.subr.mxu0 0.0
      %367 = vmatpush1.msra.mxu0 0.0
      %368 = vmatprep.subr.mxu0 0.0
      %369 = vmatpush1.msra.mxu0 0.0
      %370 = vmatprep.subr.mxu0 0.0
      %371 = vmatpush1.msra.mxu0 0.0
      %372 = vmatprep.mubr.f32.mxu0 0.0
      %373 = vmatmul.mubr.f32.gmra.mrb[0].mxu0 %v213
      %v374 = vpop.f32.mrb[0].mxu0
      %v375 = vadd.f32 %v209, %v374
      %v376 = vpop.f32.mrb[0].mxu0
      %377 = vmatprep.mubr.f32.mxu0 0.0
      %378 = vmatmul.mubr.f32.gmra.mrb[0].mxu0 %v216
      %v379 = vpop.f32.mrb[0].mxu0
      %v380 = vadd.f32 %v209, %v379
      %v381 = vpop.f32.mrb[0].mxu0
      %382 = vmatprep.mubr.f32.mxu0 0.0
      %383 = vmatmul.mubr.f32.gmra.mrb[0].mxu0 %v219
      %v384 = vpop.f32.mrb[0].mxu0
      %v385 = vadd.f32 %v209, %v384
      %v386 = vpop.f32.mrb[0].mxu0
      %387 = vmatprep.mubr.f32.mxu0 0.0
      %388 = vmatmul.mubr.f32.gmra.mrb[0].mxu0 %v222
      %v389 = vpop.f32.mrb[0].mxu0
      %v390 = vadd.f32 %v209, %v389
      %v391 = vpop.f32.mrb[0].mxu0
      %392 = vmatprep.mubr.f32.mxu0 0.0
      %393 = vmatmul.mubr.f32.gmra.mrb[0].mxu0 %v225
      %v394 = vpop.f32.mrb[0].mxu0
      %v395 = vadd.f32 %v209, %v394
      %v396 = vpop.f32.mrb[0].mxu0
      %397 = vmatprep.mubr.f32.mxu0 0.0
      %398 = vmatmul.mubr.f32.gmra.mrb[0].mxu0 %v228
      %v399 = vpop.f32.mrb[0].mxu0
      %v400 = vadd.f32 %v209, %v399
      %v401 = vpop.f32.mrb[0].mxu0
      %402 = vmatprep.mubr.f32.mxu0 0.0
      %403 = vmatmul.mubr.f32.gmra.mrb[0].mxu0 %v231
      %v404 = vpop.f32.mrb[0].mxu0
      %v405 = vadd.f32 %v209, %v404
      %v406 = vpop.f32.mrb[0].mxu0
      %407 = vmatprep.mubr.f32.mxu0 0.0
      %408 = vmatmul.mubr.f32.gmra.mrb[0].mxu0 %v234
      %v409 = vpop.f32.mrb[0].mxu0
      %v410 = vadd.f32 %v209, %v409
      %v411 = vpop.f32.mrb[0].mxu0
      %412 = vmatprep.mubr.f32.mxu0 0.0
      %413 = vmatmul.mubr.f32.gmra.mrb[0].mxu0 %v237
      %v414 = vpop.f32.mrb[0].mxu0
      %v415 = vadd.f32 %v209, %v414
      %v416 = vpop.f32.mrb[0].mxu0
      %417 = vmatprep.mubr.f32.mxu0 0.0
      %418 = vmatmul.mubr.f32.gmra.mrb[0].mxu0 %v240
      %v419 = vpop.f32.mrb[0].mxu0
      %v420 = vadd.f32 %v209, %v419
      %v421 = vpop.f32.mrb[0].mxu0
      %422 = vmatprep.mubr.f32.mxu0 0.0
      %423 = vmatmul.mubr.f32.gmra.mrb[0].mxu0 %v243
      %v424 = vpop.f32.mrb[0].mxu0
      %v425 = vadd.f32 %v209, %v424
      %v426 = vpop.f32.mrb[0].mxu0
      %427 = vmatprep.mubr.f32.mxu0 0.0
      %428 = vmatmul.mubr.f32.gmra.mrb[0].mxu0 %v246
      %v429 = vpop.f32.mrb[0].mxu0
      %v430 = vadd.f32 %v209, %v429
      %v431 = vpop.f32.mrb[0].mxu0
      %432 = vmatprep.mubr.f32.mxu0 0.0
      %433 = vmatmul.mubr.f32.gmra.mrb[0].mxu0 %v249
      %v434 = vpop.f32.mrb[0].mxu0
      %v435 = vadd.f32 %v209, %v434
      %v436 = vpop.f32.mrb[0].mxu0
      %437 = vmatprep.mubr.f32.mxu0 0.0
      %438 = vmatmul.mubr.f32.gmra.mrb[0].mxu0 %v252
      %v439 = vpop.f32.mrb[0].mxu0
      %v440 = vadd.f32 %v209, %v439
      %v441 = vpop.f32.mrb[0].mxu0
      %442 = vmatprep.mubr.f32.mxu0 0.0
      %443 = vmatmul.mubr.f32.gmra.mrb[0].mxu0 %v255
      %v444 = vpop.f32.mrb[0].mxu0
      %v445 = vadd.f32 %v209, %v444
      %v446 = vpop.f32.mrb[0].mxu0
      %447 = vmatprep.mubr.f32.mxu0 0.0
      %448 = vmatmul.mubr.f32.gmra.mrb[0].mxu0 %v258
      %v449 = vpop.f32.mrb[0].mxu0
      %v450 = vadd.f32 %v209, %v449
      %v451 = vpop.f32.mrb[0].mxu0
      %452 = vmatprep.mubr.f32.mxu0 0.0
      %453 = vmatmul.mubr.f32.gmra.mrb[0].mxu0 %v261
      %v454 = vpop.f32.mrb[0].mxu0
      %v455 = vadd.f32 %v209, %v454
      %v456 = vpop.f32.mrb[0].mxu0
      %457 = vmatprep.mubr.f32.mxu0 0.0
      %458 = vmatmul.mubr.f32.gmra.mrb[0].mxu0 %v264
      %v459 = vpop.f32.mrb[0].mxu0
      %v460 = vadd.f32 %v209, %v459
      %v461 = vpop.f32.mrb[0].mxu0
      %462 = vmatprep.mubr.f32.mxu0 0.0
      %463 = vmatmul.mubr.f32.gmra.mrb[0].mxu0 %v267
      %v464 = vpop.f32.mrb[0].mxu0
      %v465 = vadd.f32 %v209, %v464
      %v466 = vpop.f32.mrb[0].mxu0
      %467 = vmatprep.mubr.f32.mxu0 0.0
      %468 = vmatmul.mubr.f32.gmra.mrb[0].mxu0 %v270
      %v469 = vpop.f32.mrb[0].mxu0
      %v470 = vadd.f32 %v209, %v469
      %v471 = vpop.f32.mrb[0].mxu0
      %472 = vmatprep.mubr.f32.mxu0 0.0
      %473 = vmatmul.mubr.f32.gmra.mrb[0].mxu0 %v273
      %v474 = vpop.f32.mrb[0].mxu0
      %v475 = vadd.f32 %v209, %v474
      %v476 = vpop.f32.mrb[0].mxu0
      %477 = vmatprep.mubr.f32.mxu0 0.0
      %478 = vmatmul.mubr.f32.gmra.mrb[0].mxu0 %v276
      %v479 = vpop.f32.mrb[0].mxu0
      %v480 = vadd.f32 %v209, %v479
      %v481 = vpop.f32.mrb[0].mxu0
      %482 = vmatprep.mubr.f32.mxu0 0.0
      %483 = vmatmul.mubr.f32.gmra.mrb[0].mxu0 %v279
      %v484 = vpop.f32.mrb[0].mxu0
      %v485 = vadd.f32 %v209, %v484
      %v486 = vpop.f32.mrb[0].mxu0
      %487 = vmatprep.mubr.f32.mxu0 0.0
      %488 = vmatmul.mubr.f32.gmra.mrb[0].mxu0 %v282
      %v489 = vpop.f32.mrb[0].mxu0
      %v490 = vadd.f32 %v209, %v489
      %v491 = vpop.f32.mrb[0].mxu0
      %492 = vmatprep.mubr.f32.mxu0 0.0
      %493 = vmatmul.mubr.f32.gmra.mrb[0].mxu0 %v285
      %v494 = vpop.f32.mrb[0].mxu0
      %v495 = vadd.f32 %v209, %v494
      %v496 = vpop.f32.mrb[0].mxu0
      %497 = vmatprep.mubr.f32.mxu0 0.0
      %498 = vmatmul.mubr.f32.gmra.mrb[0].mxu0 %v288
      %v499 = vpop.f32.mrb[0].mxu0
      %v500 = vadd.f32 %v209, %v499
      %v501 = vpop.f32.mrb[0].mxu0
      %502 = vmatprep.mubr.f32.mxu0 0.0
      %503 = vmatmul.mubr.f32.gmra.mrb[0].mxu0 %v291
      %v504 = vpop.f32.mrb[0].mxu0
      %v505 = vadd.f32 %v209, %v504
      %v506 = vpop.f32.mrb[0].mxu0
      %507 = vmatprep.mubr.f32.mxu0 0.0
      %508 = vmatmul.mubr.f32.gmra.mrb[0].mxu0 %v294
      %v509 = vpop.f32.mrb[0].mxu0
      %v510 = vadd.f32 %v209, %v509
      %v511 = vpop.f32.mrb[0].mxu0
      %512 = vmatprep.mubr.f32.mxu0 0.0
      %513 = vmatmul.mubr.f32.gmra.mrb[0].mxu0 %v297
      %v514 = vpop.f32.mrb[0].mxu0
      %v515 = vadd.f32 %v209, %v514
      %v516 = vpop.f32.mrb[0].mxu0
      %517 = vmatprep.mubr.f32.mxu0 0.0
      %518 = vmatmul.mubr.f32.gmra.mrb[0].mxu0 %v300
      %v519 = vpop.f32.mrb[0].mxu0
      %v520 = vadd.f32 %v209, %v519
      %v521 = vpop.f32.mrb[0].mxu0
      %522 = vmatprep.mubr.f32.mxu0 0.0
      %523 = vmatmul.mubr.f32.gmra.mrb[0].mxu0 %v303
      %v524 = vpop.f32.mrb[0].mxu0
      %v525 = vadd.f32 %v209, %v524
      %v526 = vpop.f32.mrb[0].mxu0
      %527 = vmatprep.mubr.f32.mxu0 0.0
      %528 = vmatmul.mubr.f32.gmra.mrb[0].mxu0 %v306
      %v529 = vpop.f32.mrb[0].mxu0
      %v530 = vadd.f32 %v209, %v529
      %v531 = vpop.f32.mrb[0].mxu0
      %532 = vdwg.mxu0
      %vm533 = vcmask 31744
      %534 = vst.msk [vmem:[%s170] sm:$0xff] %vm533, %v375
      %535 = vst.msk [vmem:[%s170 + $0x8] sm:$0xff] %vm533, %v380
      %536 = vst.msk [vmem:[%s170 + $0x10] sm:$0xff] %vm533, %v385
      %537 = vst.msk [vmem:[%s170 + $0x18] sm:$0xff] %vm533, %v390
      %538 = vst.msk [vmem:[%s170 + $0x20] sm:$0xff] %vm533, %v395
      %539 = vst.msk [vmem:[%s170 + $0x28] sm:$0xff] %vm533, %v400
      %540 = vst.msk [vmem:[%s170 + $0x30] sm:$0xff] %vm533, %v405
      %541 = vst.msk [vmem:[%s170 + $0x38] sm:$0xff] %vm533, %v410
      %542 = vst.msk [vmem:[%s170 + $0x40] sm:$0xff] %vm533, %v415
      %543 = vst.msk [vmem:[%s170 + $0x48] sm:$0xff] %vm533, %v420
      %544 = vst.msk [vmem:[%s170 + $0x50] sm:$0xff] %vm533, %v425
      %545 = vst.msk [vmem:[%s170 + $0x58] sm:$0xff] %vm533, %v430
      %546 = vst.msk [vmem:[%s170 + $0x60] sm:$0xff] %vm533, %v435
      %547 = vst.msk [vmem:[%s170 + $0x68] sm:$0xff] %vm533, %v440
      %548 = vst.msk [vmem:[%s170 + $0x70] sm:$0xff] %vm533, %v445
      %549 = vst.msk [vmem:[%s170 + $0x78] sm:$0xff] %vm533, %v450
      %550 = vst.msk [vmem:[%s170 + $0x80] sm:$0xff] %vm533, %v455
      %551 = vst.msk [vmem:[%s170 + $0x88] sm:$0xff] %vm533, %v460
      %552 = vst.msk [vmem:[%s170 + $0x90] sm:$0xff] %vm533, %v465
      %553 = vst.msk [vmem:[%s170 + $0x98] sm:$0xff] %vm533, %v470
      %554 = vst.msk [vmem:[%s170 + $0xa0] sm:$0xff] %vm533, %v475
      %555 = vst.msk [vmem:[%s170 + $0xa8] sm:$0xff] %vm533, %v480
      %556 = vst.msk [vmem:[%s170 + $0xb0] sm:$0xff] %vm533, %v485
      %557 = vst.msk [vmem:[%s170 + $0xb8] sm:$0xff] %vm533, %v490
      %558 = vst.msk [vmem:[%s170 + $0xc0] sm:$0xff] %vm533, %v495
      %559 = vst.msk [vmem:[%s170 + $0xc8] sm:$0xff] %vm533, %v500
      %560 = vst.msk [vmem:[%s170 + $0xd0] sm:$0xff] %vm533, %v505
      %561 = vst.msk [vmem:[%s170 + $0xd8] sm:$0xff] %vm533, %v510
      %562 = vst.msk [vmem:[%s170 + $0xe0] sm:$0xff] %vm533, %v515
      %563 = vst.msk [vmem:[%s170 + $0xe8] sm:$0xff] %vm533, %v520
      %564 = vst.msk [vmem:[%s170 + $0xf0] sm:$0xff] %vm533, %v525
      %565 = vst.msk [vmem:[%s170 + $0xf8] sm:$0xff] %vm533, %v530
      %p566 = scmp.lt.s32.totalorder %s14, 1
      %s567 = scalar_select %p566, %s14, 1
      %s568 = smul.addr %s567, 32
      %s569 = smul.addr %s568, 8
      %s570 = scalar_lea.vmem %s3, %s569
      // Predicated region
      $region33: #{unet_forward.35} parent=31 // pred_check
        %p571 = pneg %p100
      $region34: #{unet_forward.35} parent=31 // pred_check_branch
        %573 = sbr.rel (%p571) target = $region36
      $region35: #{unet_forward.35} parent=31 // pred_region
        _
      $region36: #{unet_forward.35} parent=31 // pred_fallthru
        _
    $region32: #{unet_forward.35} parent=5 // pred_fallthru
      _
    %p574 = scmp.le.s32.totalorder 2, %s9
    // Predicated region
    $region37: #{unet_forward.35} parent=5 // pred_check
      %p575 = pneg %p574
    $region38: #{unet_forward.35} parent=5 // pred_check_branch
      %577 = sbr.rel (%p575) target = $region40
    $region39: #{unet_forward.35} parent=5 // pred_region
      %s578 = ssub.s32 %s9, 2
      // Predicated region
      $region41: #{unet_forward.35} parent=39 // pred_check
        %p579 = pneg %p106
      $region42: #{unet_forward.35} parent=39 // pred_check_branch
        %581 = sbr.rel (%p579) target = $region44
      $region43: #{unet_forward.35} parent=39 // pred_region
        %p582 = scmp.lt.s32.totalorder %s15, 1
        %s583 = scalar_select %p582, %s15, 1
        %s584 = smul.addr %s583, 32
        %s585 = smul.addr %s584, 8
        %s586 = scalar_lea.vmem %s3, %s585
      $region44: #{unet_forward.35} parent=39 // pred_fallthru
        _
    $region40: #{unet_forward.35} parent=5 // pred_fallthru
      _
  $region6: #{unet_forward.35} parent=0 // loop_footer
    %s13 = sadd.s32 1, %s9
  $region7: #{unet_forward.35} parent=0 // loop_footer_branch
    %8 = sbr.rel target = $region3
  $region8: #{unet_forward.35} parent=0 // loop_exit
    _

</llo_original>
